<compile_context>
chip_gen: v7x
topology: tpu7x:2x2x1
jax: 0.10.0
libtpu: 0.0.40
codegen_flags: <defaults>
</compile_context>

<pallas_src>
import functools

import jax
import jax.numpy as jnp
from jax.experimental import pallas as pl
from jax.experimental.pallas import tpu as pltpu


# ----------------------------------------------------------------------------
# In-kernel math helpers.
# ----------------------------------------------------------------------------
def _layer_norm2d(x, g, b, eps=1e-5):
    mu = jnp.mean(x, axis=-1, keepdims=True)
    var = jnp.mean((x - mu) ** 2, axis=-1, keepdims=True)
    return (x - mu) * jax.lax.rsqrt(var + eps) * g + b


def _layer_math(tgt_ref, mem_ref, qpos_ref, pos_ref,
                w_in_s_ref, b_in_s_ref, wo_s_ref, bo_s_ref,
                w_in_c_ref, b_in_c_ref, wo_c_ref, bo_c_ref,
                w1_ref, b1_ref, w2_ref, b2_ref,
                ln_g_ref, ln_b_ref,
                *, nhead, need_att):
    """Shared body of one DETR decoder layer for a (NB, T, D) batch block."""
    NB, T, D = tgt_ref.shape
    S = mem_ref.shape[1]
    hd = D // nhead
    scale = 1.0 / float(hd) ** 0.5
    f32, bf16 = jnp.float32, jnp.bfloat16

    # Flatten (NB, seq, D) -> (NB*seq, D) so projections / FFN get a fat M dim.
    tgt = tgt_ref[...].reshape(NB * T, D).astype(f32)
    qpos = qpos_ref[...].reshape(NB * T, D).astype(f32)
    mem = mem_ref[...].reshape(NB * S, D).astype(f32)
    pos = pos_ref[...].reshape(NB * S, D).astype(f32)

    def ln(x, idx):
        return _layer_norm2d(x, ln_g_ref[idx:idx + 1, :], ln_b_ref[idx:idx + 1, :])

    def mm(x_f32, w):
        # bf16 MXU matmul with f32 accumulation.
        return jnp.dot(x_f32.astype(bf16), w.astype(bf16),
                       preferred_element_type=f32)

    def attention(Q, K, V, Tq, Tk, wo_ref, bo_ref, want_att):
        # Q/K/V: (NB*Tq, D) / (NB*Tk, D) f32 projections.
        Qb = (Q * scale).astype(bf16).reshape(NB, Tq, D)
        Kb = K.astype(bf16).reshape(NB, Tk, D)
        Vb = V.astype(bf16).reshape(NB, Tk, D)
        out_acc = None
        att_sum = None
        # Head loop is unrolled at trace time; head outputs are folded directly
        # into the output projection (no lane-dim concat / relayout).
        for h in range(nhead):
            c0 = h * hd
            qh = Qb[:, :, c0:c0 + hd]
            kh = Kb[:, :, c0:c0 + hd]
            vh = Vb[:, :, c0:c0 + hd]
            scores = jnp.einsum('bqd,bkd->bqk', qh, kh,
                                preferred_element_type=f32)        # (NB,Tq,Tk) f32
            scores = scores - jnp.max(scores, axis=-1, keepdims=True)
            p = jnp.exp(scores)
            inv = pl.reciprocal(jnp.sum(p, axis=-1, keepdims=True), approx=True)
            ho = jnp.einsum('bqk,bkd->bqd', p.astype(bf16), vh,
                            preferred_element_type=f32)            # (NB,Tq,hd)
            ho = ho * inv      # normalize after attn@V (hd-wide VPU mul, not Tk-wide)
            contrib = jnp.dot(ho.reshape(NB * Tq, hd).astype(bf16),
                              wo_ref[c0:c0 + hd, :].astype(bf16),
                              preferred_element_type=f32)          # (NB*Tq, D)
            out_acc = contrib if out_acc is None else out_acc + contrib
            if want_att:
                attn = p * inv
                att_sum = attn if att_sum is None else att_sum + attn
        out = out_acc + bo_ref[...]
        att = None if not want_att else att_sum * (1.0 / nhead)
        return out, att

    D3 = 3 * D

    # ---- self attention (q = k = tgt + query_pos, v = tgt) ----
    sa_qk_in = tgt + qpos
    qk = mm(sa_qk_in, w_in_s_ref[:, 0:2 * D]) + b_in_s_ref[:, 0:2 * D]  # fused Q,K
    Qs = qk[:, 0:D]
    Ks = qk[:, D:2 * D]
    Vs = mm(tgt, w_in_s_ref[:, 2 * D:D3]) + b_in_s_ref[:, 2 * D:D3]
    sa_out, _ = attention(Qs, Ks, Vs, T, T, wo_s_ref, bo_s_ref, False)
    x = ln(tgt + sa_out, 0)

    # ---- cross attention (q = x + query_pos, k = memory + pos, v = memory) ----
    Qc = mm(x + qpos, w_in_c_ref[:, 0:D]) + b_in_c_ref[:, 0:D]
    Kc = mm(mem + pos, w_in_c_ref[:, D:2 * D]) + b_in_c_ref[:, D:2 * D]
    Vc = mm(mem, w_in_c_ref[:, 2 * D:D3]) + b_in_c_ref[:, 2 * D:D3]
    ca_out, att = attention(Qc, Kc, Vc, T, S, wo_c_ref, bo_c_ref, need_att)
    x2 = ln(x + ca_out, 1)

    # ---- feed forward (ReLU) ----
    hmid = jnp.maximum(mm(x2, w1_ref[...]) + b1_ref[...], 0.0)
    ffn = mm(hmid, w2_ref[...]) + b2_ref[...]
    out = ln(x2 + ffn, 2)
    return out, ca_out, att


# ----------------------------------------------------------------------------
# Pallas kernels: intermediate layer (output only) and last layer (fused final
# norm + attention-weights / cross-attn-output writeback).
# ----------------------------------------------------------------------------
def _decoder_layer_kernel(tgt_ref, mem_ref, qpos_ref, pos_ref,
                          w_in_s_ref, b_in_s_ref, wo_s_ref, bo_s_ref,
                          w_in_c_ref, b_in_c_ref, wo_c_ref, bo_c_ref,
                          w1_ref, b1_ref, w2_ref, b2_ref,
                          ln_g_ref, ln_b_ref,
                          out_ref, *, nhead):
    NB, T, D = tgt_ref.shape
    out, _, _ = _layer_math(
        tgt_ref, mem_ref, qpos_ref, pos_ref,
        w_in_s_ref, b_in_s_ref, wo_s_ref, bo_s_ref,
        w_in_c_ref, b_in_c_ref, wo_c_ref, bo_c_ref,
        w1_ref, b1_ref, w2_ref, b2_ref, ln_g_ref, ln_b_ref,
        nhead=nhead, need_att=False)
    out_ref[...] = out.reshape(NB, T, D).astype(out_ref.dtype)


def _decoder_last_layer_kernel(tgt_ref, mem_ref, qpos_ref, pos_ref,
                               w_in_s_ref, b_in_s_ref, wo_s_ref, bo_s_ref,
                               w_in_c_ref, b_in_c_ref, wo_c_ref, bo_c_ref,
                               w1_ref, b1_ref, w2_ref, b2_ref,
                               ln_g_ref, ln_b_ref, fn_g_ref, fn_b_ref,
                               out_ref, full_ref, att_ref, *, nhead):
    NB, T, D = tgt_ref.shape
    out, ca_out, att = _layer_math(
        tgt_ref, mem_ref, qpos_ref, pos_ref,
        w_in_s_ref, b_in_s_ref, wo_s_ref, bo_s_ref,
        w_in_c_ref, b_in_c_ref, wo_c_ref, bo_c_ref,
        w1_ref, b1_ref, w2_ref, b2_ref, ln_g_ref, ln_b_ref,
        nhead=nhead, need_att=True)
    # Fused final decoder LayerNorm (self.norm) — applies only to `output`.
    out = _layer_norm2d(out, fn_g_ref[...], fn_b_ref[...])
    out_ref[...] = out.reshape(NB, T, D).astype(out_ref.dtype)
    full_ref[...] = ca_out.reshape(NB, T, D).astype(full_ref.dtype)
    att_ref[...] = att.astype(att_ref.dtype)


# ----------------------------------------------------------------------------
# Wrapper: one decoder layer via pallas_call, grid over batch blocks.
# ----------------------------------------------------------------------------
_WEIGHT_ORDER = ["w_in_s", "b_in_s", "wo_s", "bo_s",
                 "w_in_c", "b_in_c", "wo_c", "bo_c",
                 "w1", "b1", "w2", "b2", "ln_g", "ln_b"]

_SINGLE_BUFFER_WEIGHTS = [True]   # flips to False if pl.Buffered(1) unsupported


def _const_spec(arr, single_buffer):
    nd = arr.ndim
    idx = lambda b, _nd=nd: (0,) * _nd
    if single_buffer:
        # Constant index map -> single-buffer the resident weights (halves weight VMEM).
        return pl.BlockSpec(arr.shape, idx, pipeline_mode=pl.Buffered(1))
    return pl.BlockSpec(arr.shape, idx)


def _choose_nb(B, T, S, D, F):
    """Pick batch-elements-per-grid-step (fatten M) under a VMEM activation budget."""
    per_b = 4 * (6 * T * D + 3 * S * D + 2 * T * S + T * F)   # rough f32 bytes
    budget = 8 * 1024 * 1024
    nb = max(1, min(B, budget // max(per_b, 1)))
    # keep >= 2 grid steps so the parallel axis can shard across v7x's two TCs
    while nb > 1 and (B // nb) < 2:
        nb -= 1
    while B % nb != 0:
        nb -= 1
    return nb


def decoder_layer(tgt_btd, mem_bsd, qpos_btd, pos_bsd, params, nhead,
                  *, last=False, final_norm=None):
    B, T, D = tgt_btd.shape
    S = mem_bsd.shape[1]
    F = params["w1"].shape[1]
    NB = _choose_nb(B, T, S, D, F)

    weights = [params[k] for k in _WEIGHT_ORDER]
    extra = []
    if last:
        fn_g, fn_b = final_norm
        extra = [jnp.asarray(fn_g, jnp.float32).reshape(1, D),
                 jnp.asarray(fn_b, jnp.float32).reshape(1, D)]

    def batch_spec(seq, width):
        return pl.BlockSpec((NB, seq, width), lambda b: (b, 0, 0))

    def run(single_buffer):
        in_specs = [batch_spec(T, D), batch_spec(S, D),
                    batch_spec(T, D), batch_spec(S, D)]
        in_specs += [_const_spec(w, single_buffer) for w in weights + extra]
        if last:
            kernel = functools.partial(_decoder_last_layer_kernel, nhead=nhead)
            out_specs = [batch_spec(T, D),
                         batch_spec(T, D),
                         pl.BlockSpec((NB, T, S), lambda b: (b, 0, 0))]
            out_shape = [jax.ShapeDtypeStruct((B, T, D), jnp.float32),
                         jax.ShapeDtypeStruct((B, T, D), jnp.float32),
                         jax.ShapeDtypeStruct((B, T, S), jnp.float32)]
        else:
            kernel = functools.partial(_decoder_layer_kernel, nhead=nhead)
            out_specs = batch_spec(T, D)
            out_shape = jax.ShapeDtypeStruct((B, T, D), jnp.float32)
        return pl.pallas_call(
            kernel,
            grid=(B // NB,),
            in_specs=in_specs,
            out_specs=out_specs,
            out_shape=out_shape,
            compiler_params=pltpu.CompilerParams(
                dimension_semantics=("parallel",),
                vmem_limit_bytes=64 * 1024 * 1024),
        )(tgt_btd, mem_bsd, qpos_btd, pos_bsd, *weights, *extra)

    if _SINGLE_BUFFER_WEIGHTS[0]:
        try:
            return run(True)
        except Exception:      # pl.Buffered(1) not supported on this jax build
            _SINGLE_BUFFER_WEIGHTS[0] = False
    return run(False)


# ----------------------------------------------------------------------------
# Parameter init (deterministic, synthetic).  Matmul weights that are used whole
# or lane-sliced are stored bf16 (MXU-native, half the DMA); out-proj weights
# (sublane-sliced per head) and all biases / LN params stay f32.
# ----------------------------------------------------------------------------
def init_layer_params(key, d_model, dim_ff):
    ks = jax.random.split(key, 6)
    s = 0.1
    f32, bf16 = jnp.float32, jnp.bfloat16
    return {
        "w_in_s": (s * jax.random.normal(ks[0], (d_model, 3 * d_model), f32)).astype(bf16),
        "w_in_c": (s * jax.random.normal(ks[1], (d_model, 3 * d_model), f32)).astype(bf16),
        "w1":     (s * jax.random.normal(ks[2], (d_model, dim_ff), f32)).astype(bf16),
        "w2":     (s * jax.random.normal(ks[3], (dim_ff, d_model), f32)).astype(bf16),
        "wo_s":   s * jax.random.normal(ks[4], (d_model, d_model), f32),
        "wo_c":   s * jax.random.normal(ks[5], (d_model, d_model), f32),
        "b_in_s": jnp.zeros((1, 3 * d_model), f32),
        "bo_s":   jnp.zeros((1, d_model), f32),
        "b_in_c": jnp.zeros((1, 3 * d_model), f32),
        "bo_c":   jnp.zeros((1, d_model), f32),
        "b1":     jnp.zeros((1, dim_ff), f32),
        "b2":     jnp.zeros((1, d_model), f32),
        "ln_g":   jnp.ones((3, d_model), f32),
        "ln_b":   jnp.zeros((3, d_model), f32),
    }


# ----------------------------------------------------------------------------
# TransformerDecoder forward (return_intermediate=False path).
# ----------------------------------------------------------------------------
def transformer_decoder(tgt_tbd, memory_sbd, pos_sbd, query_pos_tbd,
                        layers_params, norm_params, nhead):
    # PyTorch I/O convention: (T, B, D) / (S, B, D).  Kernel layout: (B, T, D).
    tgt = jnp.transpose(tgt_tbd, (1, 0, 2))
    mem = jnp.transpose(memory_sbd, (1, 0, 2))
    pos = jnp.transpose(pos_sbd, (1, 0, 2))
    qpos = jnp.transpose(query_pos_tbd, (1, 0, 2))

    assert norm_params is not None  # TODO(synk): norm=None path not fused/handled

    output = tgt
    output_full = None
    output_att = None
    n_layers = len(layers_params)
    for i, params in enumerate(layers_params):
        if i < n_layers - 1:
            # Intermediate layers: their output_full / output_att are discarded by
            # the module, so skip computing / writing them entirely.
            output = decoder_layer(output, mem, qpos, pos, params, nhead, last=False)
        else:
            # Last layer: emit full/att and fuse the final decoder LayerNorm.
            output, output_full, output_att = decoder_layer(
                output, mem, qpos, pos, params, nhead,
                last=True, final_norm=norm_params)

    # back to PyTorch layout and unsqueeze(0), matching the torch module's return
    out = jnp.transpose(output, (1, 0, 2))[None]              # (1, T, B, D)
    out_full = jnp.transpose(output_full, (1, 0, 2))[None]    # (1, T, B, D)
    out_att = output_att[None]                                # (1, B, T, S)
    return out, out_full, out_att


if __name__ == "__main__":
    B, T, S, D, NHEAD, FF, NUM_LAYERS = 2, 8, 16, 32, 4, 64, 2

    key = jax.random.PRNGKey(0)
    k_in, k_params = jax.random.split(key)
    k_tgt, k_mem, k_pos, k_qpos = jax.random.split(k_in, 4)

    tgt = jax.random.normal(k_tgt, (T, B, D), jnp.float32)
    memory = jax.random.normal(k_mem, (S, B, D), jnp.float32)
    pos = jax.random.normal(k_pos, (S, B, D), jnp.float32)
    query_pos = jax.random.normal(k_qpos, (T, B, D), jnp.float32)

    layer_keys = jax.random.split(k_params, NUM_LAYERS)
    layers_params = [init_layer_params(lk, D, FF) for lk in layer_keys]
    norm_params = (jnp.ones((D,), jnp.float32), jnp.zeros((D,), jnp.float32))

    out, out_full, out_att = transformer_decoder(
        tgt, memory, pos, query_pos, layers_params, norm_params, NHEAD)
    jax.block_until_ready((out, out_full, out_att))

    assert out.shape == (1, T, B, D)
    assert out_full.shape == (1, T, B, D)
    assert out_att.shape == (1, B, T, S)
    assert bool(jnp.all(jnp.isfinite(out)))
    assert bool(jnp.all(jnp.isfinite(out_full)))
    assert bool(jnp.all(jnp.isfinite(out_att)))
    print("KERNEL_OK")
</pallas_src>

<mosaic_0001>
module attributes {stable_mosaic.version = 11 : i64} {
  func.func @_decoder_layer_kernel(%arg0: i32, %arg1: memref<1x8x32xf32, #tpu.memory_space<vmem>>, %arg2: memref<1x16x32xf32, #tpu.memory_space<vmem>>, %arg3: memref<1x8x32xf32, #tpu.memory_space<vmem>>, %arg4: memref<1x16x32xf32, #tpu.memory_space<vmem>>, %arg5: memref<32x96xbf16, #tpu.memory_space<vmem>>, %arg6: memref<1x96xf32, #tpu.memory_space<vmem>>, %arg7: memref<32x32xf32, #tpu.memory_space<vmem>>, %arg8: memref<1x32xf32, #tpu.memory_space<vmem>>, %arg9: memref<32x96xbf16, #tpu.memory_space<vmem>>, %arg10: memref<1x96xf32, #tpu.memory_space<vmem>>, %arg11: memref<32x32xf32, #tpu.memory_space<vmem>>, %arg12: memref<1x32xf32, #tpu.memory_space<vmem>>, %arg13: memref<32x64xbf16, #tpu.memory_space<vmem>>, %arg14: memref<1x64xf32, #tpu.memory_space<vmem>>, %arg15: memref<64x32xbf16, #tpu.memory_space<vmem>>, %arg16: memref<1x32xf32, #tpu.memory_space<vmem>>, %arg17: memref<3x32xf32, #tpu.memory_space<vmem>>, %arg18: memref<3x32xf32, #tpu.memory_space<vmem>>, %arg19: memref<1x8x32xf32, #tpu.memory_space<vmem>>) attributes {dimension_semantics = [#tpu.dimension_semantics<parallel>], iteration_bounds = array<i64: 2>, scalar_prefetch = 0 : i64, scratch_operands = 0 : i64, tpu.core_type = #tpu.core_type<tc>, window_params = [{transform_indices = @transform_0, window_bounds = array<i64: 1, 8, 32>}, {transform_indices = @transform_1, window_bounds = array<i64: 1, 16, 32>}, {transform_indices = @transform_2, window_bounds = array<i64: 1, 8, 32>}, {transform_indices = @transform_3, window_bounds = array<i64: 1, 16, 32>}, {pipeline_mode = #tpu.pipeline_mode<synchronous>, transform_indices = @transform_4, window_bounds = array<i64: 32, 96>}, {pipeline_mode = #tpu.pipeline_mode<synchronous>, transform_indices = @transform_5, window_bounds = array<i64: 1, 96>}, {pipeline_mode = #tpu.pipeline_mode<synchronous>, transform_indices = @transform_6, window_bounds = array<i64: 32, 32>}, {pipeline_mode = #tpu.pipeline_mode<synchronous>, transform_indices = @transform_7, window_bounds = array<i64: 1, 32>}, {pipeline_mode = #tpu.pipeline_mode<synchronous>, transform_indices = @transform_8, window_bounds = array<i64: 32, 96>}, {pipeline_mode = #tpu.pipeline_mode<synchronous>, transform_indices = @transform_9, window_bounds = array<i64: 1, 96>}, {pipeline_mode = #tpu.pipeline_mode<synchronous>, transform_indices = @transform_10, window_bounds = array<i64: 32, 32>}, {pipeline_mode = #tpu.pipeline_mode<synchronous>, transform_indices = @transform_11, window_bounds = array<i64: 1, 32>}, {pipeline_mode = #tpu.pipeline_mode<synchronous>, transform_indices = @transform_12, window_bounds = array<i64: 32, 64>}, {pipeline_mode = #tpu.pipeline_mode<synchronous>, transform_indices = @transform_13, window_bounds = array<i64: 1, 64>}, {pipeline_mode = #tpu.pipeline_mode<synchronous>, transform_indices = @transform_14, window_bounds = array<i64: 64, 32>}, {pipeline_mode = #tpu.pipeline_mode<synchronous>, transform_indices = @transform_15, window_bounds = array<i64: 1, 32>}, {pipeline_mode = #tpu.pipeline_mode<synchronous>, transform_indices = @transform_16, window_bounds = array<i64: 3, 32>}, {pipeline_mode = #tpu.pipeline_mode<synchronous>, transform_indices = @transform_17, window_bounds = array<i64: 3, 32>}, {transform_indices = @transform_18, window_bounds = array<i64: 1, 8, 32>}]} {
    %c0 = arith.constant 0 : index
    %c0_0 = arith.constant 0 : index
    %c0_1 = arith.constant 0 : index
    %0 = vector.load %arg1[%c0, %c0_0, %c0_1] : memref<1x8x32xf32, #tpu.memory_space<vmem>>, vector<1x8x32xf32>
    %1 = vector.shape_cast %0 : vector<1x8x32xf32> to vector<8x32xf32>
    %c0_2 = arith.constant 0 : index
    %c0_3 = arith.constant 0 : index
    %c0_4 = arith.constant 0 : index
    %2 = vector.load %arg3[%c0_2, %c0_3, %c0_4] : memref<1x8x32xf32, #tpu.memory_space<vmem>>, vector<1x8x32xf32>
    %3 = vector.shape_cast %2 : vector<1x8x32xf32> to vector<8x32xf32>
    %c0_5 = arith.constant 0 : index
    %c0_6 = arith.constant 0 : index
    %c0_7 = arith.constant 0 : index
    %4 = vector.load %arg2[%c0_5, %c0_6, %c0_7] : memref<1x16x32xf32, #tpu.memory_space<vmem>>, vector<1x16x32xf32>
    %5 = vector.shape_cast %4 : vector<1x16x32xf32> to vector<16x32xf32>
    %c0_8 = arith.constant 0 : index
    %c0_9 = arith.constant 0 : index
    %c0_10 = arith.constant 0 : index
    %6 = vector.load %arg4[%c0_8, %c0_9, %c0_10] : memref<1x16x32xf32, #tpu.memory_space<vmem>>, vector<1x16x32xf32>
    %7 = vector.shape_cast %6 : vector<1x16x32xf32> to vector<16x32xf32>
    %8 = arith.addf %1, %3 : vector<8x32xf32>
    %c0_11 = arith.constant 0 : index
    %c0_12 = arith.constant 0 : index
    %9 = vector.load %arg5[%c0_11, %c0_12] : memref<32x96xbf16, #tpu.memory_space<vmem>>, vector<32x64xbf16>
    %10 = arith.truncf %8 : vector<8x32xf32> to vector<8x32xbf16>
    %cst = arith.constant dense<0.000000e+00> : vector<8x64xf32>
    %11 = tpu.matmul %10, %9, %cst {dimension_numbers = #tpu.dot_dimension_numbers<[1], [0], [0], [1], [0, 0, 1, 1], [], []>} : vector<8x32xbf16>, vector<32x64xbf16>, vector<8x64xf32> -> vector<8x64xf32>
    %c0_13 = arith.constant 0 : index
    %c0_14 = arith.constant 0 : index
    %12 = vector.load %arg6[%c0_13, %c0_14] : memref<1x96xf32, #tpu.memory_space<vmem>>, vector<1x64xf32>
    %13 = vector.broadcast %12 : vector<1x64xf32> to vector<8x64xf32>
    %14 = arith.addf %11, %13 : vector<8x64xf32>
    %15 = vector.extract_strided_slice %14 {offsets = [0, 0], sizes = [8, 32], strides = [1, 1]} : vector<8x64xf32> to vector<8x32xf32>
    %16 = vector.extract_strided_slice %14 {offsets = [0, 32], sizes = [8, 32], strides = [1, 1]} : vector<8x64xf32> to vector<8x32xf32>
    %c0_15 = arith.constant 0 : index
    %c64 = arith.constant 64 : index
    %17 = vector.load %arg5[%c0_15, %c64] : memref<32x96xbf16, #tpu.memory_space<vmem>>, vector<32x32xbf16>
    %18 = arith.truncf %1 : vector<8x32xf32> to vector<8x32xbf16>
    %cst_16 = arith.constant dense<0.000000e+00> : vector<8x32xf32>
    %19 = tpu.matmul %18, %17, %cst_16 {dimension_numbers = #tpu.dot_dimension_numbers<[1], [0], [0], [1], [0, 0, 1, 1], [], []>} : vector<8x32xbf16>, vector<32x32xbf16>, vector<8x32xf32> -> vector<8x32xf32>
    %c0_17 = arith.constant 0 : index
    %c64_18 = arith.constant 64 : index
    %20 = vector.load %arg6[%c0_17, %c64_18] : memref<1x96xf32, #tpu.memory_space<vmem>>, vector<1x32xf32>
    %21 = vector.broadcast %20 : vector<1x32xf32> to vector<8x32xf32>
    %22 = arith.addf %19, %21 : vector<8x32xf32>
    %cst_19 = arith.constant 0.353553385 : f32
    %23 = vector.broadcast %cst_19 : f32 to vector<8x32xf32>
    %24 = arith.mulf %15, %23 : vector<8x32xf32>
    %25 = arith.truncf %24 : vector<8x32xf32> to vector<8x32xbf16>
    %26 = vector.shape_cast %25 : vector<8x32xbf16> to vector<1x8x32xbf16>
    %27 = arith.truncf %16 : vector<8x32xf32> to vector<8x32xbf16>
    %28 = vector.shape_cast %27 : vector<8x32xbf16> to vector<1x8x32xbf16>
    %29 = arith.truncf %22 : vector<8x32xf32> to vector<8x32xbf16>
    %30 = vector.shape_cast %29 : vector<8x32xbf16> to vector<1x8x32xbf16>
    %31 = vector.extract_strided_slice %26 {offsets = [0, 0, 0], sizes = [1, 8, 8], strides = [1, 1, 1]} : vector<1x8x32xbf16> to vector<1x8x8xbf16>
    %32 = vector.extract_strided_slice %28 {offsets = [0, 0, 0], sizes = [1, 8, 8], strides = [1, 1, 1]} : vector<1x8x32xbf16> to vector<1x8x8xbf16>
    %33 = vector.extract_strided_slice %30 {offsets = [0, 0, 0], sizes = [1, 8, 8], strides = [1, 1, 1]} : vector<1x8x32xbf16> to vector<1x8x8xbf16>
    "tpu.trace_start"() <{level = 10 : i32, message = "bqd,bkd->bqk"}> : () -> ()
    %cst_20 = arith.constant dense<0.000000e+00> : vector<1x8x8xf32>
    %34 = tpu.matmul %31, %32, %cst_20 {dimension_numbers = #tpu.dot_dimension_numbers<[2], [2], [1], [1], [0, 0, 0, 1, 1, 1], [0], [0]>} : vector<1x8x8xbf16>, vector<1x8x8xbf16>, vector<1x8x8xf32> -> vector<1x8x8xf32>
    "tpu.trace_stop"() : () -> ()
    %cst_21 = arith.constant dense<0xFF800000> : vector<1x8xf32>
    %35 = vector.multi_reduction <maximumf>, %34, %cst_21 [2] : vector<1x8x8xf32> to vector<1x8xf32>
    %36 = vector.shape_cast %35 : vector<1x8xf32> to vector<1x8x1xf32>
    %37 = vector.broadcast %36 : vector<1x8x1xf32> to vector<1x8x8xf32>
    %38 = arith.subf %34, %37 : vector<1x8x8xf32>
    %39 = math.exp %38 : vector<1x8x8xf32>
    %cst_22 = arith.constant dense<0.000000e+00> : vector<1x8xf32>
    %40 = vector.multi_reduction <add>, %39, %cst_22 [2] : vector<1x8x8xf32> to vector<1x8xf32>
    %41 = vector.shape_cast %40 : vector<1x8xf32> to vector<1x8x1xf32>
    %42 = tpu.reciprocal %41 {approx = true} : vector<1x8x1xf32> -> vector<1x8x1xf32>
    %43 = arith.truncf %39 : vector<1x8x8xf32> to vector<1x8x8xbf16>
    "tpu.trace_start"() <{level = 10 : i32, message = "bqk,bkd->bqd"}> : () -> ()
    %cst_23 = arith.constant dense<0.000000e+00> : vector<1x8x8xf32>
    %44 = tpu.matmul %43, %33, %cst_23 {dimension_numbers = #tpu.dot_dimension_numbers<[2], [1], [1], [2], [0, 0, 0, 1, 1, 2], [0], [0]>} : vector<1x8x8xbf16>, vector<1x8x8xbf16>, vector<1x8x8xf32> -> vector<1x8x8xf32>
    "tpu.trace_stop"() : () -> ()
    %45 = vector.broadcast %42 : vector<1x8x1xf32> to vector<1x8x8xf32>
    %46 = arith.mulf %44, %45 : vector<1x8x8xf32>
    %47 = vector.shape_cast %46 : vector<1x8x8xf32> to vector<8x8xf32>
    %48 = arith.truncf %47 : vector<8x8xf32> to vector<8x8xbf16>
    %c0_24 = arith.constant 0 : index
    %c0_25 = arith.constant 0 : index
    %49 = vector.load %arg7[%c0_24, %c0_25] : memref<32x32xf32, #tpu.memory_space<vmem>>, vector<8x32xf32>
    %50 = arith.truncf %49 : vector<8x32xf32> to vector<8x32xbf16>
    %cst_26 = arith.constant dense<0.000000e+00> : vector<8x32xf32>
    %51 = tpu.matmul %48, %50, %cst_26 {dimension_numbers = #tpu.dot_dimension_numbers<[1], [0], [0], [1], [0, 0, 1, 1], [], []>} : vector<8x8xbf16>, vector<8x32xbf16>, vector<8x32xf32> -> vector<8x32xf32>
    %52 = vector.extract_strided_slice %26 {offsets = [0, 0, 8], sizes = [1, 8, 8], strides = [1, 1, 1]} : vector<1x8x32xbf16> to vector<1x8x8xbf16>
    %53 = vector.extract_strided_slice %28 {offsets = [0, 0, 8], sizes = [1, 8, 8], strides = [1, 1, 1]} : vector<1x8x32xbf16> to vector<1x8x8xbf16>
    %54 = vector.extract_strided_slice %30 {offsets = [0, 0, 8], sizes = [1, 8, 8], strides = [1, 1, 1]} : vector<1x8x32xbf16> to vector<1x8x8xbf16>
    "tpu.trace_start"() <{level = 10 : i32, message = "bqd,bkd->bqk"}> : () -> ()
    %cst_27 = arith.constant dense<0.000000e+00> : vector<1x8x8xf32>
    %55 = tpu.matmul %52, %53, %cst_27 {dimension_numbers = #tpu.dot_dimension_numbers<[2], [2], [1], [1], [0, 0, 0, 1, 1, 1], [0], [0]>} : vector<1x8x8xbf16>, vector<1x8x8xbf16>, vector<1x8x8xf32> -> vector<1x8x8xf32>
    "tpu.trace_stop"() : () -> ()
    %cst_28 = arith.constant dense<0xFF800000> : vector<1x8xf32>
    %56 = vector.multi_reduction <maximumf>, %55, %cst_28 [2] : vector<1x8x8xf32> to vector<1x8xf32>
    %57 = vector.shape_cast %56 : vector<1x8xf32> to vector<1x8x1xf32>
    %58 = vector.broadcast %57 : vector<1x8x1xf32> to vector<1x8x8xf32>
    %59 = arith.subf %55, %58 : vector<1x8x8xf32>
    %60 = math.exp %59 : vector<1x8x8xf32>
    %cst_29 = arith.constant dense<0.000000e+00> : vector<1x8xf32>
    %61 = vector.multi_reduction <add>, %60, %cst_29 [2] : vector<1x8x8xf32> to vector<1x8xf32>
    %62 = vector.shape_cast %61 : vector<1x8xf32> to vector<1x8x1xf32>
    %63 = tpu.reciprocal %62 {approx = true} : vector<1x8x1xf32> -> vector<1x8x1xf32>
    %64 = arith.truncf %60 : vector<1x8x8xf32> to vector<1x8x8xbf16>
    "tpu.trace_start"() <{level = 10 : i32, message = "bqk,bkd->bqd"}> : () -> ()
    %cst_30 = arith.constant dense<0.000000e+00> : vector<1x8x8xf32>
    %65 = tpu.matmul %64, %54, %cst_30 {dimension_numbers = #tpu.dot_dimension_numbers<[2], [1], [1], [2], [0, 0, 0, 1, 1, 2], [0], [0]>} : vector<1x8x8xbf16>, vector<1x8x8xbf16>, vector<1x8x8xf32> -> vector<1x8x8xf32>
    "tpu.trace_stop"() : () -> ()
    %66 = vector.broadcast %63 : vector<1x8x1xf32> to vector<1x8x8xf32>
    %67 = arith.mulf %65, %66 : vector<1x8x8xf32>
    %68 = vector.shape_cast %67 : vector<1x8x8xf32> to vector<8x8xf32>
    %69 = arith.truncf %68 : vector<8x8xf32> to vector<8x8xbf16>
    %c8 = arith.constant 8 : index
    %c0_31 = arith.constant 0 : index
    %70 = vector.load %arg7[%c8, %c0_31] : memref<32x32xf32, #tpu.memory_space<vmem>>, vector<8x32xf32>
    %71 = arith.truncf %70 : vector<8x32xf32> to vector<8x32xbf16>
    %cst_32 = arith.constant dense<0.000000e+00> : vector<8x32xf32>
    %72 = tpu.matmul %69, %71, %cst_32 {dimension_numbers = #tpu.dot_dimension_numbers<[1], [0], [0], [1], [0, 0, 1, 1], [], []>} : vector<8x8xbf16>, vector<8x32xbf16>, vector<8x32xf32> -> vector<8x32xf32>
    %73 = arith.addf %51, %72 : vector<8x32xf32>
    %74 = vector.extract_strided_slice %26 {offsets = [0, 0, 16], sizes = [1, 8, 8], strides = [1, 1, 1]} : vector<1x8x32xbf16> to vector<1x8x8xbf16>
    %75 = vector.extract_strided_slice %28 {offsets = [0, 0, 16], sizes = [1, 8, 8], strides = [1, 1, 1]} : vector<1x8x32xbf16> to vector<1x8x8xbf16>
    %76 = vector.extract_strided_slice %30 {offsets = [0, 0, 16], sizes = [1, 8, 8], strides = [1, 1, 1]} : vector<1x8x32xbf16> to vector<1x8x8xbf16>
    "tpu.trace_start"() <{level = 10 : i32, message = "bqd,bkd->bqk"}> : () -> ()
    %cst_33 = arith.constant dense<0.000000e+00> : vector<1x8x8xf32>
    %77 = tpu.matmul %74, %75, %cst_33 {dimension_numbers = #tpu.dot_dimension_numbers<[2], [2], [1], [1], [0, 0, 0, 1, 1, 1], [0], [0]>} : vector<1x8x8xbf16>, vector<1x8x8xbf16>, vector<1x8x8xf32> -> vector<1x8x8xf32>
    "tpu.trace_stop"() : () -> ()
    %cst_34 = arith.constant dense<0xFF800000> : vector<1x8xf32>
    %78 = vector.multi_reduction <maximumf>, %77, %cst_34 [2] : vector<1x8x8xf32> to vector<1x8xf32>
    %79 = vector.shape_cast %78 : vector<1x8xf32> to vector<1x8x1xf32>
    %80 = vector.broadcast %79 : vector<1x8x1xf32> to vector<1x8x8xf32>
    %81 = arith.subf %77, %80 : vector<1x8x8xf32>
    %82 = math.exp %81 : vector<1x8x8xf32>
    %cst_35 = arith.constant dense<0.000000e+00> : vector<1x8xf32>
    %83 = vector.multi_reduction <add>, %82, %cst_35 [2] : vector<1x8x8xf32> to vector<1x8xf32>
    %84 = vector.shape_cast %83 : vector<1x8xf32> to vector<1x8x1xf32>
    %85 = tpu.reciprocal %84 {approx = true} : vector<1x8x1xf32> -> vector<1x8x1xf32>
    %86 = arith.truncf %82 : vector<1x8x8xf32> to vector<1x8x8xbf16>
    "tpu.trace_start"() <{level = 10 : i32, message = "bqk,bkd->bqd"}> : () -> ()
    %cst_36 = arith.constant dense<0.000000e+00> : vector<1x8x8xf32>
    %87 = tpu.matmul %86, %76, %cst_36 {dimension_numbers = #tpu.dot_dimension_numbers<[2], [1], [1], [2], [0, 0, 0, 1, 1, 2], [0], [0]>} : vector<1x8x8xbf16>, vector<1x8x8xbf16>, vector<1x8x8xf32> -> vector<1x8x8xf32>
    "tpu.trace_stop"() : () -> ()
    %88 = vector.broadcast %85 : vector<1x8x1xf32> to vector<1x8x8xf32>
    %89 = arith.mulf %87, %88 : vector<1x8x8xf32>
    %90 = vector.shape_cast %89 : vector<1x8x8xf32> to vector<8x8xf32>
    %91 = arith.truncf %90 : vector<8x8xf32> to vector<8x8xbf16>
    %c16 = arith.constant 16 : index
    %c0_37 = arith.constant 0 : index
    %92 = vector.load %arg7[%c16, %c0_37] : memref<32x32xf32, #tpu.memory_space<vmem>>, vector<8x32xf32>
    %93 = arith.truncf %92 : vector<8x32xf32> to vector<8x32xbf16>
    %cst_38 = arith.constant dense<0.000000e+00> : vector<8x32xf32>
    %94 = tpu.matmul %91, %93, %cst_38 {dimension_numbers = #tpu.dot_dimension_numbers<[1], [0], [0], [1], [0, 0, 1, 1], [], []>} : vector<8x8xbf16>, vector<8x32xbf16>, vector<8x32xf32> -> vector<8x32xf32>
    %95 = arith.addf %73, %94 : vector<8x32xf32>
    %96 = vector.extract_strided_slice %26 {offsets = [0, 0, 24], sizes = [1, 8, 8], strides = [1, 1, 1]} : vector<1x8x32xbf16> to vector<1x8x8xbf16>
    %97 = vector.extract_strided_slice %28 {offsets = [0, 0, 24], sizes = [1, 8, 8], strides = [1, 1, 1]} : vector<1x8x32xbf16> to vector<1x8x8xbf16>
    %98 = vector.extract_strided_slice %30 {offsets = [0, 0, 24], sizes = [1, 8, 8], strides = [1, 1, 1]} : vector<1x8x32xbf16> to vector<1x8x8xbf16>
    "tpu.trace_start"() <{level = 10 : i32, message = "bqd,bkd->bqk"}> : () -> ()
    %cst_39 = arith.constant dense<0.000000e+00> : vector<1x8x8xf32>
    %99 = tpu.matmul %96, %97, %cst_39 {dimension_numbers = #tpu.dot_dimension_numbers<[2], [2], [1], [1], [0, 0, 0, 1, 1, 1], [0], [0]>} : vector<1x8x8xbf16>, vector<1x8x8xbf16>, vector<1x8x8xf32> -> vector<1x8x8xf32>
    "tpu.trace_stop"() : () -> ()
    %cst_40 = arith.constant dense<0xFF800000> : vector<1x8xf32>
    %100 = vector.multi_reduction <maximumf>, %99, %cst_40 [2] : vector<1x8x8xf32> to vector<1x8xf32>
    %101 = vector.shape_cast %100 : vector<1x8xf32> to vector<1x8x1xf32>
    %102 = vector.broadcast %101 : vector<1x8x1xf32> to vector<1x8x8xf32>
    %103 = arith.subf %99, %102 : vector<1x8x8xf32>
    %104 = math.exp %103 : vector<1x8x8xf32>
    %cst_41 = arith.constant dense<0.000000e+00> : vector<1x8xf32>
    %105 = vector.multi_reduction <add>, %104, %cst_41 [2] : vector<1x8x8xf32> to vector<1x8xf32>
    %106 = vector.shape_cast %105 : vector<1x8xf32> to vector<1x8x1xf32>
    %107 = tpu.reciprocal %106 {approx = true} : vector<1x8x1xf32> -> vector<1x8x1xf32>
    %108 = arith.truncf %104 : vector<1x8x8xf32> to vector<1x8x8xbf16>
    "tpu.trace_start"() <{level = 10 : i32, message = "bqk,bkd->bqd"}> : () -> ()
    %cst_42 = arith.constant dense<0.000000e+00> : vector<1x8x8xf32>
    %109 = tpu.matmul %108, %98, %cst_42 {dimension_numbers = #tpu.dot_dimension_numbers<[2], [1], [1], [2], [0, 0, 0, 1, 1, 2], [0], [0]>} : vector<1x8x8xbf16>, vector<1x8x8xbf16>, vector<1x8x8xf32> -> vector<1x8x8xf32>
    "tpu.trace_stop"() : () -> ()
    %110 = vector.broadcast %107 : vector<1x8x1xf32> to vector<1x8x8xf32>
    %111 = arith.mulf %109, %110 : vector<1x8x8xf32>
    %112 = vector.shape_cast %111 : vector<1x8x8xf32> to vector<8x8xf32>
    %113 = arith.truncf %112 : vector<8x8xf32> to vector<8x8xbf16>
    %c24 = arith.constant 24 : index
    %c0_43 = arith.constant 0 : index
    %114 = vector.load %arg7[%c24, %c0_43] : memref<32x32xf32, #tpu.memory_space<vmem>>, vector<8x32xf32>
    %115 = arith.truncf %114 : vector<8x32xf32> to vector<8x32xbf16>
    %cst_44 = arith.constant dense<0.000000e+00> : vector<8x32xf32>
    %116 = tpu.matmul %113, %115, %cst_44 {dimension_numbers = #tpu.dot_dimension_numbers<[1], [0], [0], [1], [0, 0, 1, 1], [], []>} : vector<8x8xbf16>, vector<8x32xbf16>, vector<8x32xf32> -> vector<8x32xf32>
    %117 = arith.addf %95, %116 : vector<8x32xf32>
    %c0_45 = arith.constant 0 : index
    %c0_46 = arith.constant 0 : index
    %118 = vector.load %arg8[%c0_45, %c0_46] : memref<1x32xf32, #tpu.memory_space<vmem>>, vector<1x32xf32>
    %119 = vector.broadcast %118 : vector<1x32xf32> to vector<8x32xf32>
    %120 = arith.addf %117, %119 : vector<8x32xf32>
    %121 = arith.addf %1, %120 : vector<8x32xf32>
    %c0_47 = arith.constant 0 : index
    %c0_48 = arith.constant 0 : index
    %122 = vector.load %arg17[%c0_47, %c0_48] : memref<3x32xf32, #tpu.memory_space<vmem>>, vector<1x32xf32>
    %c0_49 = arith.constant 0 : index
    %c0_50 = arith.constant 0 : index
    %123 = vector.load %arg18[%c0_49, %c0_50] : memref<3x32xf32, #tpu.memory_space<vmem>>, vector<1x32xf32>
    %cst_51 = arith.constant dense<0.000000e+00> : vector<8xf32>
    %124 = vector.multi_reduction <add>, %121, %cst_51 [1] : vector<8x32xf32> to vector<8xf32>
    %125 = vector.shape_cast %124 : vector<8xf32> to vector<8x1xf32>
    %cst_52 = arith.constant 3.200000e+01 : f32
    %126 = vector.broadcast %cst_52 : f32 to vector<8x1xf32>
    %127 = arith.divf %125, %126 : vector<8x1xf32>
    %128 = vector.broadcast %127 : vector<8x1xf32> to vector<8x32xf32>
    %129 = arith.subf %121, %128 : vector<8x32xf32>
    %130 = arith.mulf %129, %129 : vector<8x32xf32>
    %cst_53 = arith.constant dense<0.000000e+00> : vector<8xf32>
    %131 = vector.multi_reduction <add>, %130, %cst_53 [1] : vector<8x32xf32> to vector<8xf32>
    %132 = vector.shape_cast %131 : vector<8xf32> to vector<8x1xf32>
    %cst_54 = arith.constant 3.200000e+01 : f32
    %133 = vector.broadcast %cst_54 : f32 to vector<8x1xf32>
    %134 = arith.divf %132, %133 : vector<8x1xf32>
    %135 = vector.broadcast %127 : vector<8x1xf32> to vector<8x32xf32>
    %136 = arith.subf %121, %135 : vector<8x32xf32>
    %cst_55 = arith.constant 9.99999974E-6 : f32
    %137 = vector.broadcast %cst_55 : f32 to vector<8x1xf32>
    %138 = arith.addf %134, %137 : vector<8x1xf32>
    %139 = math.rsqrt %138 : vector<8x1xf32>
    %140 = vector.broadcast %139 : vector<8x1xf32> to vector<8x32xf32>
    %141 = arith.mulf %136, %140 : vector<8x32xf32>
    %142 = vector.broadcast %122 : vector<1x32xf32> to vector<8x32xf32>
    %143 = arith.mulf %141, %142 : vector<8x32xf32>
    %144 = vector.broadcast %123 : vector<1x32xf32> to vector<8x32xf32>
    %145 = arith.addf %143, %144 : vector<8x32xf32>
    %146 = arith.addf %145, %3 : vector<8x32xf32>
    %c0_56 = arith.constant 0 : index
    %c0_57 = arith.constant 0 : index
    %147 = vector.load %arg9[%c0_56, %c0_57] : memref<32x96xbf16, #tpu.memory_space<vmem>>, vector<32x32xbf16>
    %148 = arith.truncf %146 : vector<8x32xf32> to vector<8x32xbf16>
    %cst_58 = arith.constant dense<0.000000e+00> : vector<8x32xf32>
    %149 = tpu.matmul %148, %147, %cst_58 {dimension_numbers = #tpu.dot_dimension_numbers<[1], [0], [0], [1], [0, 0, 1, 1], [], []>} : vector<8x32xbf16>, vector<32x32xbf16>, vector<8x32xf32> -> vector<8x32xf32>
    %c0_59 = arith.constant 0 : index
    %c0_60 = arith.constant 0 : index
    %150 = vector.load %arg10[%c0_59, %c0_60] : memref<1x96xf32, #tpu.memory_space<vmem>>, vector<1x32xf32>
    %151 = vector.broadcast %150 : vector<1x32xf32> to vector<8x32xf32>
    %152 = arith.addf %149, %151 : vector<8x32xf32>
    %153 = arith.addf %5, %7 : vector<16x32xf32>
    %c0_61 = arith.constant 0 : index
    %c32 = arith.constant 32 : index
    %154 = vector.load %arg9[%c0_61, %c32] : memref<32x96xbf16, #tpu.memory_space<vmem>>, vector<32x32xbf16>
    %155 = arith.truncf %153 : vector<16x32xf32> to vector<16x32xbf16>
    %cst_62 = arith.constant dense<0.000000e+00> : vector<16x32xf32>
    %156 = tpu.matmul %155, %154, %cst_62 {dimension_numbers = #tpu.dot_dimension_numbers<[1], [0], [0], [1], [0, 0, 1, 1], [], []>} : vector<16x32xbf16>, vector<32x32xbf16>, vector<16x32xf32> -> vector<16x32xf32>
    %c0_63 = arith.constant 0 : index
    %c32_64 = arith.constant 32 : index
    %157 = vector.load %arg10[%c0_63, %c32_64] : memref<1x96xf32, #tpu.memory_space<vmem>>, vector<1x32xf32>
    %158 = vector.broadcast %157 : vector<1x32xf32> to vector<16x32xf32>
    %159 = arith.addf %156, %158 : vector<16x32xf32>
    %c0_65 = arith.constant 0 : index
    %c64_66 = arith.constant 64 : index
    %160 = vector.load %arg9[%c0_65, %c64_66] : memref<32x96xbf16, #tpu.memory_space<vmem>>, vector<32x32xbf16>
    %161 = arith.truncf %5 : vector<16x32xf32> to vector<16x32xbf16>
    %cst_67 = arith.constant dense<0.000000e+00> : vector<16x32xf32>
    %162 = tpu.matmul %161, %160, %cst_67 {dimension_numbers = #tpu.dot_dimension_numbers<[1], [0], [0], [1], [0, 0, 1, 1], [], []>} : vector<16x32xbf16>, vector<32x32xbf16>, vector<16x32xf32> -> vector<16x32xf32>
    %c0_68 = arith.constant 0 : index
    %c64_69 = arith.constant 64 : index
    %163 = vector.load %arg10[%c0_68, %c64_69] : memref<1x96xf32, #tpu.memory_space<vmem>>, vector<1x32xf32>
    %164 = vector.broadcast %163 : vector<1x32xf32> to vector<16x32xf32>
    %165 = arith.addf %162, %164 : vector<16x32xf32>
    %cst_70 = arith.constant 0.353553385 : f32
    %166 = vector.broadcast %cst_70 : f32 to vector<8x32xf32>
    %167 = arith.mulf %152, %166 : vector<8x32xf32>
    %168 = arith.truncf %167 : vector<8x32xf32> to vector<8x32xbf16>
    %169 = vector.shape_cast %168 : vector<8x32xbf16> to vector<1x8x32xbf16>
    %170 = arith.truncf %159 : vector<16x32xf32> to vector<16x32xbf16>
    %171 = vector.shape_cast %170 : vector<16x32xbf16> to vector<1x16x32xbf16>
    %172 = arith.truncf %165 : vector<16x32xf32> to vector<16x32xbf16>
    %173 = vector.shape_cast %172 : vector<16x32xbf16> to vector<1x16x32xbf16>
    %174 = vector.extract_strided_slice %169 {offsets = [0, 0, 0], sizes = [1, 8, 8], strides = [1, 1, 1]} : vector<1x8x32xbf16> to vector<1x8x8xbf16>
    %175 = vector.extract_strided_slice %171 {offsets = [0, 0, 0], sizes = [1, 16, 8], strides = [1, 1, 1]} : vector<1x16x32xbf16> to vector<1x16x8xbf16>
    %176 = vector.extract_strided_slice %173 {offsets = [0, 0, 0], sizes = [1, 16, 8], strides = [1, 1, 1]} : vector<1x16x32xbf16> to vector<1x16x8xbf16>
    "tpu.trace_start"() <{level = 10 : i32, message = "bqd,bkd->bqk"}> : () -> ()
    %cst_71 = arith.constant dense<0.000000e+00> : vector<1x8x16xf32>
    %177 = tpu.matmul %174, %175, %cst_71 {dimension_numbers = #tpu.dot_dimension_numbers<[2], [2], [1], [1], [0, 0, 0, 1, 1, 1], [0], [0]>} : vector<1x8x8xbf16>, vector<1x16x8xbf16>, vector<1x8x16xf32> -> vector<1x8x16xf32>
    "tpu.trace_stop"() : () -> ()
    %cst_72 = arith.constant dense<0xFF800000> : vector<1x8xf32>
    %178 = vector.multi_reduction <maximumf>, %177, %cst_72 [2] : vector<1x8x16xf32> to vector<1x8xf32>
    %179 = vector.shape_cast %178 : vector<1x8xf32> to vector<1x8x1xf32>
    %180 = vector.broadcast %179 : vector<1x8x1xf32> to vector<1x8x16xf32>
    %181 = arith.subf %177, %180 : vector<1x8x16xf32>
    %182 = math.exp %181 : vector<1x8x16xf32>
    %cst_73 = arith.constant dense<0.000000e+00> : vector<1x8xf32>
    %183 = vector.multi_reduction <add>, %182, %cst_73 [2] : vector<1x8x16xf32> to vector<1x8xf32>
    %184 = vector.shape_cast %183 : vector<1x8xf32> to vector<1x8x1xf32>
    %185 = tpu.reciprocal %184 {approx = true} : vector<1x8x1xf32> -> vector<1x8x1xf32>
    %186 = arith.truncf %182 : vector<1x8x16xf32> to vector<1x8x16xbf16>
    "tpu.trace_start"() <{level = 10 : i32, message = "bqk,bkd->bqd"}> : () -> ()
    %cst_74 = arith.constant dense<0.000000e+00> : vector<1x8x8xf32>
    %187 = tpu.matmul %186, %176, %cst_74 {dimension_numbers = #tpu.dot_dimension_numbers<[2], [1], [1], [2], [0, 0, 0, 1, 1, 2], [0], [0]>} : vector<1x8x16xbf16>, vector<1x16x8xbf16>, vector<1x8x8xf32> -> vector<1x8x8xf32>
    "tpu.trace_stop"() : () -> ()
    %188 = vector.broadcast %185 : vector<1x8x1xf32> to vector<1x8x8xf32>
    %189 = arith.mulf %187, %188 : vector<1x8x8xf32>
    %190 = vector.shape_cast %189 : vector<1x8x8xf32> to vector<8x8xf32>
    %191 = arith.truncf %190 : vector<8x8xf32> to vector<8x8xbf16>
    %c0_75 = arith.constant 0 : index
    %c0_76 = arith.constant 0 : index
    %192 = vector.load %arg11[%c0_75, %c0_76] : memref<32x32xf32, #tpu.memory_space<vmem>>, vector<8x32xf32>
    %193 = arith.truncf %192 : vector<8x32xf32> to vector<8x32xbf16>
    %cst_77 = arith.constant dense<0.000000e+00> : vector<8x32xf32>
    %194 = tpu.matmul %191, %193, %cst_77 {dimension_numbers = #tpu.dot_dimension_numbers<[1], [0], [0], [1], [0, 0, 1, 1], [], []>} : vector<8x8xbf16>, vector<8x32xbf16>, vector<8x32xf32> -> vector<8x32xf32>
    %195 = vector.extract_strided_slice %169 {offsets = [0, 0, 8], sizes = [1, 8, 8], strides = [1, 1, 1]} : vector<1x8x32xbf16> to vector<1x8x8xbf16>
    %196 = vector.extract_strided_slice %171 {offsets = [0, 0, 8], sizes = [1, 16, 8], strides = [1, 1, 1]} : vector<1x16x32xbf16> to vector<1x16x8xbf16>
    %197 = vector.extract_strided_slice %173 {offsets = [0, 0, 8], sizes = [1, 16, 8], strides = [1, 1, 1]} : vector<1x16x32xbf16> to vector<1x16x8xbf16>
    "tpu.trace_start"() <{level = 10 : i32, message = "bqd,bkd->bqk"}> : () -> ()
    %cst_78 = arith.constant dense<0.000000e+00> : vector<1x8x16xf32>
    %198 = tpu.matmul %195, %196, %cst_78 {dimension_numbers = #tpu.dot_dimension_numbers<[2], [2], [1], [1], [0, 0, 0, 1, 1, 1], [0], [0]>} : vector<1x8x8xbf16>, vector<1x16x8xbf16>, vector<1x8x16xf32> -> vector<1x8x16xf32>
    "tpu.trace_stop"() : () -> ()
    %cst_79 = arith.constant dense<0xFF800000> : vector<1x8xf32>
    %199 = vector.multi_reduction <maximumf>, %198, %cst_79 [2] : vector<1x8x16xf32> to vector<1x8xf32>
    %200 = vector.shape_cast %199 : vector<1x8xf32> to vector<1x8x1xf32>
    %201 = vector.broadcast %200 : vector<1x8x1xf32> to vector<1x8x16xf32>
    %202 = arith.subf %198, %201 : vector<1x8x16xf32>
    %203 = math.exp %202 : vector<1x8x16xf32>
    %cst_80 = arith.constant dense<0.000000e+00> : vector<1x8xf32>
    %204 = vector.multi_reduction <add>, %203, %cst_80 [2] : vector<1x8x16xf32> to vector<1x8xf32>
    %205 = vector.shape_cast %204 : vector<1x8xf32> to vector<1x8x1xf32>
    %206 = tpu.reciprocal %205 {approx = true} : vector<1x8x1xf32> -> vector<1x8x1xf32>
    %207 = arith.truncf %203 : vector<1x8x16xf32> to vector<1x8x16xbf16>
    "tpu.trace_start"() <{level = 10 : i32, message = "bqk,bkd->bqd"}> : () -> ()
    %cst_81 = arith.constant dense<0.000000e+00> : vector<1x8x8xf32>
    %208 = tpu.matmul %207, %197, %cst_81 {dimension_numbers = #tpu.dot_dimension_numbers<[2], [1], [1], [2], [0, 0, 0, 1, 1, 2], [0], [0]>} : vector<1x8x16xbf16>, vector<1x16x8xbf16>, vector<1x8x8xf32> -> vector<1x8x8xf32>
    "tpu.trace_stop"() : () -> ()
    %209 = vector.broadcast %206 : vector<1x8x1xf32> to vector<1x8x8xf32>
    %210 = arith.mulf %208, %209 : vector<1x8x8xf32>
    %211 = vector.shape_cast %210 : vector<1x8x8xf32> to vector<8x8xf32>
    %212 = arith.truncf %211 : vector<8x8xf32> to vector<8x8xbf16>
    %c8_82 = arith.constant 8 : index
    %c0_83 = arith.constant 0 : index
    %213 = vector.load %arg11[%c8_82, %c0_83] : memref<32x32xf32, #tpu.memory_space<vmem>>, vector<8x32xf32>
    %214 = arith.truncf %213 : vector<8x32xf32> to vector<8x32xbf16>
    %cst_84 = arith.constant dense<0.000000e+00> : vector<8x32xf32>
    %215 = tpu.matmul %212, %214, %cst_84 {dimension_numbers = #tpu.dot_dimension_numbers<[1], [0], [0], [1], [0, 0, 1, 1], [], []>} : vector<8x8xbf16>, vector<8x32xbf16>, vector<8x32xf32> -> vector<8x32xf32>
    %216 = arith.addf %194, %215 : vector<8x32xf32>
    %217 = vector.extract_strided_slice %169 {offsets = [0, 0, 16], sizes = [1, 8, 8], strides = [1, 1, 1]} : vector<1x8x32xbf16> to vector<1x8x8xbf16>
    %218 = vector.extract_strided_slice %171 {offsets = [0, 0, 16], sizes = [1, 16, 8], strides = [1, 1, 1]} : vector<1x16x32xbf16> to vector<1x16x8xbf16>
    %219 = vector.extract_strided_slice %173 {offsets = [0, 0, 16], sizes = [1, 16, 8], strides = [1, 1, 1]} : vector<1x16x32xbf16> to vector<1x16x8xbf16>
    "tpu.trace_start"() <{level = 10 : i32, message = "bqd,bkd->bqk"}> : () -> ()
    %cst_85 = arith.constant dense<0.000000e+00> : vector<1x8x16xf32>
    %220 = tpu.matmul %217, %218, %cst_85 {dimension_numbers = #tpu.dot_dimension_numbers<[2], [2], [1], [1], [0, 0, 0, 1, 1, 1], [0], [0]>} : vector<1x8x8xbf16>, vector<1x16x8xbf16>, vector<1x8x16xf32> -> vector<1x8x16xf32>
    "tpu.trace_stop"() : () -> ()
    %cst_86 = arith.constant dense<0xFF800000> : vector<1x8xf32>
    %221 = vector.multi_reduction <maximumf>, %220, %cst_86 [2] : vector<1x8x16xf32> to vector<1x8xf32>
    %222 = vector.shape_cast %221 : vector<1x8xf32> to vector<1x8x1xf32>
    %223 = vector.broadcast %222 : vector<1x8x1xf32> to vector<1x8x16xf32>
    %224 = arith.subf %220, %223 : vector<1x8x16xf32>
    %225 = math.exp %224 : vector<1x8x16xf32>
    %cst_87 = arith.constant dense<0.000000e+00> : vector<1x8xf32>
    %226 = vector.multi_reduction <add>, %225, %cst_87 [2] : vector<1x8x16xf32> to vector<1x8xf32>
    %227 = vector.shape_cast %226 : vector<1x8xf32> to vector<1x8x1xf32>
    %228 = tpu.reciprocal %227 {approx = true} : vector<1x8x1xf32> -> vector<1x8x1xf32>
    %229 = arith.truncf %225 : vector<1x8x16xf32> to vector<1x8x16xbf16>
    "tpu.trace_start"() <{level = 10 : i32, message = "bqk,bkd->bqd"}> : () -> ()
    %cst_88 = arith.constant dense<0.000000e+00> : vector<1x8x8xf32>
    %230 = tpu.matmul %229, %219, %cst_88 {dimension_numbers = #tpu.dot_dimension_numbers<[2], [1], [1], [2], [0, 0, 0, 1, 1, 2], [0], [0]>} : vector<1x8x16xbf16>, vector<1x16x8xbf16>, vector<1x8x8xf32> -> vector<1x8x8xf32>
    "tpu.trace_stop"() : () -> ()
    %231 = vector.broadcast %228 : vector<1x8x1xf32> to vector<1x8x8xf32>
    %232 = arith.mulf %230, %231 : vector<1x8x8xf32>
    %233 = vector.shape_cast %232 : vector<1x8x8xf32> to vector<8x8xf32>
    %234 = arith.truncf %233 : vector<8x8xf32> to vector<8x8xbf16>
    %c16_89 = arith.constant 16 : index
    %c0_90 = arith.constant 0 : index
    %235 = vector.load %arg11[%c16_89, %c0_90] : memref<32x32xf32, #tpu.memory_space<vmem>>, vector<8x32xf32>
    %236 = arith.truncf %235 : vector<8x32xf32> to vector<8x32xbf16>
    %cst_91 = arith.constant dense<0.000000e+00> : vector<8x32xf32>
    %237 = tpu.matmul %234, %236, %cst_91 {dimension_numbers = #tpu.dot_dimension_numbers<[1], [0], [0], [1], [0, 0, 1, 1], [], []>} : vector<8x8xbf16>, vector<8x32xbf16>, vector<8x32xf32> -> vector<8x32xf32>
    %238 = arith.addf %216, %237 : vector<8x32xf32>
    %239 = vector.extract_strided_slice %169 {offsets = [0, 0, 24], sizes = [1, 8, 8], strides = [1, 1, 1]} : vector<1x8x32xbf16> to vector<1x8x8xbf16>
    %240 = vector.extract_strided_slice %171 {offsets = [0, 0, 24], sizes = [1, 16, 8], strides = [1, 1, 1]} : vector<1x16x32xbf16> to vector<1x16x8xbf16>
    %241 = vector.extract_strided_slice %173 {offsets = [0, 0, 24], sizes = [1, 16, 8], strides = [1, 1, 1]} : vector<1x16x32xbf16> to vector<1x16x8xbf16>
    "tpu.trace_start"() <{level = 10 : i32, message = "bqd,bkd->bqk"}> : () -> ()
    %cst_92 = arith.constant dense<0.000000e+00> : vector<1x8x16xf32>
    %242 = tpu.matmul %239, %240, %cst_92 {dimension_numbers = #tpu.dot_dimension_numbers<[2], [2], [1], [1], [0, 0, 0, 1, 1, 1], [0], [0]>} : vector<1x8x8xbf16>, vector<1x16x8xbf16>, vector<1x8x16xf32> -> vector<1x8x16xf32>
    "tpu.trace_stop"() : () -> ()
    %cst_93 = arith.constant dense<0xFF800000> : vector<1x8xf32>
    %243 = vector.multi_reduction <maximumf>, %242, %cst_93 [2] : vector<1x8x16xf32> to vector<1x8xf32>
    %244 = vector.shape_cast %243 : vector<1x8xf32> to vector<1x8x1xf32>
    %245 = vector.broadcast %244 : vector<1x8x1xf32> to vector<1x8x16xf32>
    %246 = arith.subf %242, %245 : vector<1x8x16xf32>
    %247 = math.exp %246 : vector<1x8x16xf32>
    %cst_94 = arith.constant dense<0.000000e+00> : vector<1x8xf32>
    %248 = vector.multi_reduction <add>, %247, %cst_94 [2] : vector<1x8x16xf32> to vector<1x8xf32>
    %249 = vector.shape_cast %248 : vector<1x8xf32> to vector<1x8x1xf32>
    %250 = tpu.reciprocal %249 {approx = true} : vector<1x8x1xf32> -> vector<1x8x1xf32>
    %251 = arith.truncf %247 : vector<1x8x16xf32> to vector<1x8x16xbf16>
    "tpu.trace_start"() <{level = 10 : i32, message = "bqk,bkd->bqd"}> : () -> ()
    %cst_95 = arith.constant dense<0.000000e+00> : vector<1x8x8xf32>
    %252 = tpu.matmul %251, %241, %cst_95 {dimension_numbers = #tpu.dot_dimension_numbers<[2], [1], [1], [2], [0, 0, 0, 1, 1, 2], [0], [0]>} : vector<1x8x16xbf16>, vector<1x16x8xbf16>, vector<1x8x8xf32> -> vector<1x8x8xf32>
    "tpu.trace_stop"() : () -> ()
    %253 = vector.broadcast %250 : vector<1x8x1xf32> to vector<1x8x8xf32>
    %254 = arith.mulf %252, %253 : vector<1x8x8xf32>
    %255 = vector.shape_cast %254 : vector<1x8x8xf32> to vector<8x8xf32>
    %256 = arith.truncf %255 : vector<8x8xf32> to vector<8x8xbf16>
    %c24_96 = arith.constant 24 : index
    %c0_97 = arith.constant 0 : index
    %257 = vector.load %arg11[%c24_96, %c0_97] : memref<32x32xf32, #tpu.memory_space<vmem>>, vector<8x32xf32>
    %258 = arith.truncf %257 : vector<8x32xf32> to vector<8x32xbf16>
    %cst_98 = arith.constant dense<0.000000e+00> : vector<8x32xf32>
    %259 = tpu.matmul %256, %258, %cst_98 {dimension_numbers = #tpu.dot_dimension_numbers<[1], [0], [0], [1], [0, 0, 1, 1], [], []>} : vector<8x8xbf16>, vector<8x32xbf16>, vector<8x32xf32> -> vector<8x32xf32>
    %260 = arith.addf %238, %259 : vector<8x32xf32>
    %c0_99 = arith.constant 0 : index
    %c0_100 = arith.constant 0 : index
    %261 = vector.load %arg12[%c0_99, %c0_100] : memref<1x32xf32, #tpu.memory_space<vmem>>, vector<1x32xf32>
    %262 = vector.broadcast %261 : vector<1x32xf32> to vector<8x32xf32>
    %263 = arith.addf %260, %262 : vector<8x32xf32>
    %264 = arith.addf %145, %263 : vector<8x32xf32>
    %c1 = arith.constant 1 : index
    %c0_101 = arith.constant 0 : index
    %265 = vector.load %arg17[%c1, %c0_101] : memref<3x32xf32, #tpu.memory_space<vmem>>, vector<1x32xf32>
    %c1_102 = arith.constant 1 : index
    %c0_103 = arith.constant 0 : index
    %266 = vector.load %arg18[%c1_102, %c0_103] : memref<3x32xf32, #tpu.memory_space<vmem>>, vector<1x32xf32>
    %cst_104 = arith.constant dense<0.000000e+00> : vector<8xf32>
    %267 = vector.multi_reduction <add>, %264, %cst_104 [1] : vector<8x32xf32> to vector<8xf32>
    %268 = vector.shape_cast %267 : vector<8xf32> to vector<8x1xf32>
    %cst_105 = arith.constant 3.200000e+01 : f32
    %269 = vector.broadcast %cst_105 : f32 to vector<8x1xf32>
    %270 = arith.divf %268, %269 : vector<8x1xf32>
    %271 = vector.broadcast %270 : vector<8x1xf32> to vector<8x32xf32>
    %272 = arith.subf %264, %271 : vector<8x32xf32>
    %273 = arith.mulf %272, %272 : vector<8x32xf32>
    %cst_106 = arith.constant dense<0.000000e+00> : vector<8xf32>
    %274 = vector.multi_reduction <add>, %273, %cst_106 [1] : vector<8x32xf32> to vector<8xf32>
    %275 = vector.shape_cast %274 : vector<8xf32> to vector<8x1xf32>
    %cst_107 = arith.constant 3.200000e+01 : f32
    %276 = vector.broadcast %cst_107 : f32 to vector<8x1xf32>
    %277 = arith.divf %275, %276 : vector<8x1xf32>
    %278 = vector.broadcast %270 : vector<8x1xf32> to vector<8x32xf32>
    %279 = arith.subf %264, %278 : vector<8x32xf32>
    %cst_108 = arith.constant 9.99999974E-6 : f32
    %280 = vector.broadcast %cst_108 : f32 to vector<8x1xf32>
    %281 = arith.addf %277, %280 : vector<8x1xf32>
    %282 = math.rsqrt %281 : vector<8x1xf32>
    %283 = vector.broadcast %282 : vector<8x1xf32> to vector<8x32xf32>
    %284 = arith.mulf %279, %283 : vector<8x32xf32>
    %285 = vector.broadcast %265 : vector<1x32xf32> to vector<8x32xf32>
    %286 = arith.mulf %284, %285 : vector<8x32xf32>
    %287 = vector.broadcast %266 : vector<1x32xf32> to vector<8x32xf32>
    %288 = arith.addf %286, %287 : vector<8x32xf32>
    %c0_109 = arith.constant 0 : index
    %c0_110 = arith.constant 0 : index
    %289 = vector.load %arg13[%c0_109, %c0_110] : memref<32x64xbf16, #tpu.memory_space<vmem>>, vector<32x64xbf16>
    %290 = arith.truncf %288 : vector<8x32xf32> to vector<8x32xbf16>
    %cst_111 = arith.constant dense<0.000000e+00> : vector<8x64xf32>
    %291 = tpu.matmul %290, %289, %cst_111 {dimension_numbers = #tpu.dot_dimension_numbers<[1], [0], [0], [1], [0, 0, 1, 1], [], []>} : vector<8x32xbf16>, vector<32x64xbf16>, vector<8x64xf32> -> vector<8x64xf32>
    %c0_112 = arith.constant 0 : index
    %c0_113 = arith.constant 0 : index
    %292 = vector.load %arg14[%c0_112, %c0_113] : memref<1x64xf32, #tpu.memory_space<vmem>>, vector<1x64xf32>
    %293 = vector.broadcast %292 : vector<1x64xf32> to vector<8x64xf32>
    %294 = arith.addf %291, %293 : vector<8x64xf32>
    %cst_114 = arith.constant 0.000000e+00 : f32
    %295 = vector.broadcast %cst_114 : f32 to vector<8x64xf32>
    %296 = arith.maximumf %294, %295 : vector<8x64xf32>
    %c0_115 = arith.constant 0 : index
    %c0_116 = arith.constant 0 : index
    %297 = vector.load %arg15[%c0_115, %c0_116] : memref<64x32xbf16, #tpu.memory_space<vmem>>, vector<64x32xbf16>
    %298 = arith.truncf %296 : vector<8x64xf32> to vector<8x64xbf16>
    %cst_117 = arith.constant dense<0.000000e+00> : vector<8x32xf32>
    %299 = tpu.matmul %298, %297, %cst_117 {dimension_numbers = #tpu.dot_dimension_numbers<[1], [0], [0], [1], [0, 0, 1, 1], [], []>} : vector<8x64xbf16>, vector<64x32xbf16>, vector<8x32xf32> -> vector<8x32xf32>
    %c0_118 = arith.constant 0 : index
    %c0_119 = arith.constant 0 : index
    %300 = vector.load %arg16[%c0_118, %c0_119] : memref<1x32xf32, #tpu.memory_space<vmem>>, vector<1x32xf32>
    %301 = vector.broadcast %300 : vector<1x32xf32> to vector<8x32xf32>
    %302 = arith.addf %299, %301 : vector<8x32xf32>
    %303 = arith.addf %288, %302 : vector<8x32xf32>
    %c2 = arith.constant 2 : index
    %c0_120 = arith.constant 0 : index
    %304 = vector.load %arg17[%c2, %c0_120] : memref<3x32xf32, #tpu.memory_space<vmem>>, vector<1x32xf32>
    %c2_121 = arith.constant 2 : index
    %c0_122 = arith.constant 0 : index
    %305 = vector.load %arg18[%c2_121, %c0_122] : memref<3x32xf32, #tpu.memory_space<vmem>>, vector<1x32xf32>
    %cst_123 = arith.constant dense<0.000000e+00> : vector<8xf32>
    %306 = vector.multi_reduction <add>, %303, %cst_123 [1] : vector<8x32xf32> to vector<8xf32>
    %307 = vector.shape_cast %306 : vector<8xf32> to vector<8x1xf32>
    %cst_124 = arith.constant 3.200000e+01 : f32
    %308 = vector.broadcast %cst_124 : f32 to vector<8x1xf32>
    %309 = arith.divf %307, %308 : vector<8x1xf32>
    %310 = vector.broadcast %309 : vector<8x1xf32> to vector<8x32xf32>
    %311 = arith.subf %303, %310 : vector<8x32xf32>
    %312 = arith.mulf %311, %311 : vector<8x32xf32>
    %cst_125 = arith.constant dense<0.000000e+00> : vector<8xf32>
    %313 = vector.multi_reduction <add>, %312, %cst_125 [1] : vector<8x32xf32> to vector<8xf32>
    %314 = vector.shape_cast %313 : vector<8xf32> to vector<8x1xf32>
    %cst_126 = arith.constant 3.200000e+01 : f32
    %315 = vector.broadcast %cst_126 : f32 to vector<8x1xf32>
    %316 = arith.divf %314, %315 : vector<8x1xf32>
    %317 = vector.broadcast %309 : vector<8x1xf32> to vector<8x32xf32>
    %318 = arith.subf %303, %317 : vector<8x32xf32>
    %cst_127 = arith.constant 9.99999974E-6 : f32
    %319 = vector.broadcast %cst_127 : f32 to vector<8x1xf32>
    %320 = arith.addf %316, %319 : vector<8x1xf32>
    %321 = math.rsqrt %320 : vector<8x1xf32>
    %322 = vector.broadcast %321 : vector<8x1xf32> to vector<8x32xf32>
    %323 = arith.mulf %318, %322 : vector<8x32xf32>
    %324 = vector.broadcast %304 : vector<1x32xf32> to vector<8x32xf32>
    %325 = arith.mulf %323, %324 : vector<8x32xf32>
    %326 = vector.broadcast %305 : vector<1x32xf32> to vector<8x32xf32>
    %327 = arith.addf %325, %326 : vector<8x32xf32>
    %328 = vector.shape_cast %327 : vector<8x32xf32> to vector<1x8x32xf32>
    %c0_128 = arith.constant 0 : index
    %c0_129 = arith.constant 0 : index
    %c0_130 = arith.constant 0 : index
    %329 = vector.load %arg19[%c0_128, %c0_129, %c0_130] : memref<1x8x32xf32, #tpu.memory_space<vmem>>, vector<1x8x32xf32>
    tpu.vector_store %arg19[%c0_128, %c0_129, %c0_130], %328 {strides = array<i32>} : memref<1x8x32xf32, #tpu.memory_space<vmem>>, vector<1x8x32xf32>,
    return
  }
  func.func @transform_0(%arg0: i32) -> (i32, i32, i32) {
    %c0_i32 = arith.constant 0 : i32
    %c0_i32_0 = arith.constant 0 : i32
    %c0_i32_1 = arith.constant 0 : i32
    return %arg0, %c0_i32, %c0_i32_0 : i32, i32, i32
  }
  func.func @transform_1(%arg0: i32) -> (i32, i32, i32) {
    %c0_i32 = arith.constant 0 : i32
    %c0_i32_0 = arith.constant 0 : i32
    %c0_i32_1 = arith.constant 0 : i32
    return %arg0, %c0_i32, %c0_i32_0 : i32, i32, i32
  }
  func.func @transform_2(%arg0: i32) -> (i32, i32, i32) {
    %c0_i32 = arith.constant 0 : i32
    %c0_i32_0 = arith.constant 0 : i32
    %c0_i32_1 = arith.constant 0 : i32
    return %arg0, %c0_i32, %c0_i32_0 : i32, i32, i32
  }
  func.func @transform_3(%arg0: i32) -> (i32, i32, i32) {
    %c0_i32 = arith.constant 0 : i32
    %c0_i32_0 = arith.constant 0 : i32
    %c0_i32_1 = arith.constant 0 : i32
    return %arg0, %c0_i32, %c0_i32_0 : i32, i32, i32
  }
  func.func @transform_4(%arg0: i32) -> (i32, i32) {
    %c0_i32 = arith.constant 0 : i32
    %c0_i32_0 = arith.constant 0 : i32
    %c0_i32_1 = arith.constant 0 : i32
    return %c0_i32, %c0_i32_0 : i32, i32
  }
  func.func @transform_5(%arg0: i32) -> (i32, i32) {
    %c0_i32 = arith.constant 0 : i32
    %c0_i32_0 = arith.constant 0 : i32
    %c0_i32_1 = arith.constant 0 : i32
    return %c0_i32, %c0_i32_0 : i32, i32
  }
  func.func @transform_6(%arg0: i32) -> (i32, i32) {
    %c0_i32 = arith.constant 0 : i32
    %c0_i32_0 = arith.constant 0 : i32
    %c0_i32_1 = arith.constant 0 : i32
    return %c0_i32, %c0_i32_0 : i32, i32
  }
  func.func @transform_7(%arg0: i32) -> (i32, i32) {
    %c0_i32 = arith.constant 0 : i32
    %c0_i32_0 = arith.constant 0 : i32
    %c0_i32_1 = arith.constant 0 : i32
    return %c0_i32, %c0_i32_0 : i32, i32
  }
  func.func @transform_8(%arg0: i32) -> (i32, i32) {
    %c0_i32 = arith.constant 0 : i32
    %c0_i32_0 = arith.constant 0 : i32
    %c0_i32_1 = arith.constant 0 : i32
    return %c0_i32, %c0_i32_0 : i32, i32
  }
  func.func @transform_9(%arg0: i32) -> (i32, i32) {
    %c0_i32 = arith.constant 0 : i32
    %c0_i32_0 = arith.constant 0 : i32
    %c0_i32_1 = arith.constant 0 : i32
    return %c0_i32, %c0_i32_0 : i32, i32
  }
  func.func @transform_10(%arg0: i32) -> (i32, i32) {
    %c0_i32 = arith.constant 0 : i32
    %c0_i32_0 = arith.constant 0 : i32
    %c0_i32_1 = arith.constant 0 : i32
    return %c0_i32, %c0_i32_0 : i32, i32
  }
  func.func @transform_11(%arg0: i32) -> (i32, i32) {
    %c0_i32 = arith.constant 0 : i32
    %c0_i32_0 = arith.constant 0 : i32
    %c0_i32_1 = arith.constant 0 : i32
    return %c0_i32, %c0_i32_0 : i32, i32
  }
  func.func @transform_12(%arg0: i32) -> (i32, i32) {
    %c0_i32 = arith.constant 0 : i32
    %c0_i32_0 = arith.constant 0 : i32
    %c0_i32_1 = arith.constant 0 : i32
    return %c0_i32, %c0_i32_0 : i32, i32
  }
  func.func @transform_13(%arg0: i32) -> (i32, i32) {
    %c0_i32 = arith.constant 0 : i32
    %c0_i32_0 = arith.constant 0 : i32
    %c0_i32_1 = arith.constant 0 : i32
    return %c0_i32, %c0_i32_0 : i32, i32
  }
  func.func @transform_14(%arg0: i32) -> (i32, i32) {
    %c0_i32 = arith.constant 0 : i32
    %c0_i32_0 = arith.constant 0 : i32
    %c0_i32_1 = arith.constant 0 : i32
    return %c0_i32, %c0_i32_0 : i32, i32
  }
  func.func @transform_15(%arg0: i32) -> (i32, i32) {
    %c0_i32 = arith.constant 0 : i32
    %c0_i32_0 = arith.constant 0 : i32
    %c0_i32_1 = arith.constant 0 : i32
    return %c0_i32, %c0_i32_0 : i32, i32
  }
  func.func @transform_16(%arg0: i32) -> (i32, i32) {
    %c0_i32 = arith.constant 0 : i32
    %c0_i32_0 = arith.constant 0 : i32
    %c0_i32_1 = arith.constant 0 : i32
    return %c0_i32, %c0_i32_0 : i32, i32
  }
  func.func @transform_17(%arg0: i32) -> (i32, i32) {
    %c0_i32 = arith.constant 0 : i32
    %c0_i32_0 = arith.constant 0 : i32
    %c0_i32_1 = arith.constant 0 : i32
    return %c0_i32, %c0_i32_0 : i32, i32
  }
  func.func @transform_18(%arg0: i32) -> (i32, i32, i32) {
    %c0_i32 = arith.constant 0 : i32
    %c0_i32_0 = arith.constant 0 : i32
    %c0_i32_1 = arith.constant 0 : i32
    return %arg0, %c0_i32, %c0_i32_0 : i32, i32, i32
  }
}

module attributes {stable_mosaic.version = 11 : i64} {
  func.func @_decoder_layer_kernel(%arg0: i32, %arg1: memref<1x8x32xf32, #tpu.memory_space<vmem>>, %arg2: memref<1x16x32xf32, #tpu.memory_space<vmem>>, %arg3: memref<1x8x32xf32, #tpu.memory_space<vmem>>, %arg4: memref<1x16x32xf32, #tpu.memory_space<vmem>>, %arg5: memref<32x96xbf16, #tpu.memory_space<vmem>>, %arg6: memref<1x96xf32, #tpu.memory_space<vmem>>, %arg7: memref<32x32xf32, #tpu.memory_space<vmem>>, %arg8: memref<1x32xf32, #tpu.memory_space<vmem>>, %arg9: memref<32x96xbf16, #tpu.memory_space<vmem>>, %arg10: memref<1x96xf32, #tpu.memory_space<vmem>>, %arg11: memref<32x32xf32, #tpu.memory_space<vmem>>, %arg12: memref<1x32xf32, #tpu.memory_space<vmem>>, %arg13: memref<32x64xbf16, #tpu.memory_space<vmem>>, %arg14: memref<1x64xf32, #tpu.memory_space<vmem>>, %arg15: memref<64x32xbf16, #tpu.memory_space<vmem>>, %arg16: memref<1x32xf32, #tpu.memory_space<vmem>>, %arg17: memref<3x32xf32, #tpu.memory_space<vmem>>, %arg18: memref<3x32xf32, #tpu.memory_space<vmem>>, %arg19: memref<1x8x32xf32, #tpu.memory_space<vmem>>) attributes {dimension_semantics = [#tpu.dimension_semantics<parallel>], iteration_bounds = array<i64: 2>, scalar_prefetch = 0 : i64, scratch_operands = 0 : i64, tpu.core_type = #tpu.core_type<tc>, window_params = [{transform_indices = @transform_0, window_bounds = array<i64: 1, 8, 32>}, {transform_indices = @transform_1, window_bounds = array<i64: 1, 16, 32>}, {transform_indices = @transform_2, window_bounds = array<i64: 1, 8, 32>}, {transform_indices = @transform_3, window_bounds = array<i64: 1, 16, 32>}, {pipeline_mode = #tpu.pipeline_mode<synchronous>, transform_indices = @transform_4, window_bounds = array<i64: 32, 96>}, {pipeline_mode = #tpu.pipeline_mode<synchronous>, transform_indices = @transform_5, window_bounds = array<i64: 1, 96>}, {pipeline_mode = #tpu.pipeline_mode<synchronous>, transform_indices = @transform_6, window_bounds = array<i64: 32, 32>}, {pipeline_mode = #tpu.pipeline_mode<synchronous>, transform_indices = @transform_7, window_bounds = array<i64: 1, 32>}, {pipeline_mode = #tpu.pipeline_mode<synchronous>, transform_indices = @transform_8, window_bounds = array<i64: 32, 96>}, {pipeline_mode = #tpu.pipeline_mode<synchronous>, transform_indices = @transform_9, window_bounds = array<i64: 1, 96>}, {pipeline_mode = #tpu.pipeline_mode<synchronous>, transform_indices = @transform_10, window_bounds = array<i64: 32, 32>}, {pipeline_mode = #tpu.pipeline_mode<synchronous>, transform_indices = @transform_11, window_bounds = array<i64: 1, 32>}, {pipeline_mode = #tpu.pipeline_mode<synchronous>, transform_indices = @transform_12, window_bounds = array<i64: 32, 64>}, {pipeline_mode = #tpu.pipeline_mode<synchronous>, transform_indices = @transform_13, window_bounds = array<i64: 1, 64>}, {pipeline_mode = #tpu.pipeline_mode<synchronous>, transform_indices = @transform_14, window_bounds = array<i64: 64, 32>}, {pipeline_mode = #tpu.pipeline_mode<synchronous>, transform_indices = @transform_15, window_bounds = array<i64: 1, 32>}, {pipeline_mode = #tpu.pipeline_mode<synchronous>, transform_indices = @transform_16, window_bounds = array<i64: 3, 32>}, {pipeline_mode = #tpu.pipeline_mode<synchronous>, transform_indices = @transform_17, window_bounds = array<i64: 3, 32>}, {transform_indices = @transform_18, window_bounds = array<i64: 1, 8, 32>}]} {
    %c0 = arith.constant 0 : index
    %c0_0 = arith.constant 0 : index
    %c0_1 = arith.constant 0 : index
    %0 = vector.load %arg1[%c0, %c0_0, %c0_1] : memref<1x8x32xf32, #tpu.memory_space<vmem>>, vector<1x8x32xf32>
    %1 = vector.shape_cast %0 : vector<1x8x32xf32> to vector<8x32xf32>
    %c0_2 = arith.constant 0 : index
    %c0_3 = arith.constant 0 : index
    %c0_4 = arith.constant 0 : index
    %2 = vector.load %arg3[%c0_2, %c0_3, %c0_4] : memref<1x8x32xf32, #tpu.memory_space<vmem>>, vector<1x8x32xf32>
    %3 = vector.shape_cast %2 : vector<1x8x32xf32> to vector<8x32xf32>
    %c0_5 = arith.constant 0 : index
    %c0_6 = arith.constant 0 : index
    %c0_7 = arith.constant 0 : index
    %4 = vector.load %arg2[%c0_5, %c0_6, %c0_7] : memref<1x16x32xf32, #tpu.memory_space<vmem>>, vector<1x16x32xf32>
    %5 = vector.shape_cast %4 : vector<1x16x32xf32> to vector<16x32xf32>
    %c0_8 = arith.constant 0 : index
    %c0_9 = arith.constant 0 : index
    %c0_10 = arith.constant 0 : index
    %6 = vector.load %arg4[%c0_8, %c0_9, %c0_10] : memref<1x16x32xf32, #tpu.memory_space<vmem>>, vector<1x16x32xf32>
    %7 = vector.shape_cast %6 : vector<1x16x32xf32> to vector<16x32xf32>
    %8 = arith.addf %1, %3 : vector<8x32xf32>
    %c0_11 = arith.constant 0 : index
    %c0_12 = arith.constant 0 : index
    %9 = vector.load %arg5[%c0_11, %c0_12] : memref<32x96xbf16, #tpu.memory_space<vmem>>, vector<32x64xbf16>
    %10 = arith.truncf %8 : vector<8x32xf32> to vector<8x32xbf16>
    %cst = arith.constant dense<0.000000e+00> : vector<8x64xf32>
    %11 = tpu.matmul %10, %9, %cst {dimension_numbers = #tpu.dot_dimension_numbers<[1], [0], [0], [1], [0, 0, 1, 1], [], []>} : vector<8x32xbf16>, vector<32x64xbf16>, vector<8x64xf32> -> vector<8x64xf32>
    %c0_13 = arith.constant 0 : index
    %c0_14 = arith.constant 0 : index
    %12 = vector.load %arg6[%c0_13, %c0_14] : memref<1x96xf32, #tpu.memory_space<vmem>>, vector<1x64xf32>
    %13 = vector.broadcast %12 : vector<1x64xf32> to vector<8x64xf32>
    %14 = arith.addf %11, %13 : vector<8x64xf32>
    %15 = vector.extract_strided_slice %14 {offsets = [0, 0], sizes = [8, 32], strides = [1, 1]} : vector<8x64xf32> to vector<8x32xf32>
    %16 = vector.extract_strided_slice %14 {offsets = [0, 32], sizes = [8, 32], strides = [1, 1]} : vector<8x64xf32> to vector<8x32xf32>
    %c0_15 = arith.constant 0 : index
    %c64 = arith.constant 64 : index
    %17 = vector.load %arg5[%c0_15, %c64] : memref<32x96xbf16, #tpu.memory_space<vmem>>, vector<32x32xbf16>
    %18 = arith.truncf %1 : vector<8x32xf32> to vector<8x32xbf16>
    %cst_16 = arith.constant dense<0.000000e+00> : vector<8x32xf32>
    %19 = tpu.matmul %18, %17, %cst_16 {dimension_numbers = #tpu.dot_dimension_numbers<[1], [0], [0], [1], [0, 0, 1, 1], [], []>} : vector<8x32xbf16>, vector<32x32xbf16>, vector<8x32xf32> -> vector<8x32xf32>
    %c0_17 = arith.constant 0 : index
    %c64_18 = arith.constant 64 : index
    %20 = vector.load %arg6[%c0_17, %c64_18] : memref<1x96xf32, #tpu.memory_space<vmem>>, vector<1x32xf32>
    %21 = vector.broadcast %20 : vector<1x32xf32> to vector<8x32xf32>
    %22 = arith.addf %19, %21 : vector<8x32xf32>
    %cst_19 = arith.constant 0.353553385 : f32
    %23 = vector.broadcast %cst_19 : f32 to vector<8x32xf32>
    %24 = arith.mulf %15, %23 : vector<8x32xf32>
    %25 = arith.truncf %24 : vector<8x32xf32> to vector<8x32xbf16>
    %26 = vector.shape_cast %25 : vector<8x32xbf16> to vector<1x8x32xbf16>
    %27 = arith.truncf %16 : vector<8x32xf32> to vector<8x32xbf16>
    %28 = vector.shape_cast %27 : vector<8x32xbf16> to vector<1x8x32xbf16>
    %29 = arith.truncf %22 : vector<8x32xf32> to vector<8x32xbf16>
    %30 = vector.shape_cast %29 : vector<8x32xbf16> to vector<1x8x32xbf16>
    %31 = vector.extract_strided_slice %26 {offsets = [0, 0, 0], sizes = [1, 8, 8], strides = [1, 1, 1]} : vector<1x8x32xbf16> to vector<1x8x8xbf16>
    %32 = vector.extract_strided_slice %28 {offsets = [0, 0, 0], sizes = [1, 8, 8], strides = [1, 1, 1]} : vector<1x8x32xbf16> to vector<1x8x8xbf16>
    %33 = vector.extract_strided_slice %30 {offsets = [0, 0, 0], sizes = [1, 8, 8], strides = [1, 1, 1]} : vector<1x8x32xbf16> to vector<1x8x8xbf16>
    "tpu.trace_start"() <{level = 10 : i32, message = "bqd,bkd->bqk"}> : () -> ()
    %cst_20 = arith.constant dense<0.000000e+00> : vector<1x8x8xf32>
    %34 = tpu.matmul %31, %32, %cst_20 {dimension_numbers = #tpu.dot_dimension_numbers<[2], [2], [1], [1], [0, 0, 0, 1, 1, 1], [0], [0]>} : vector<1x8x8xbf16>, vector<1x8x8xbf16>, vector<1x8x8xf32> -> vector<1x8x8xf32>
    "tpu.trace_stop"() : () -> ()
    %cst_21 = arith.constant dense<0xFF800000> : vector<1x8xf32>
    %35 = vector.multi_reduction <maximumf>, %34, %cst_21 [2] : vector<1x8x8xf32> to vector<1x8xf32>
    %36 = vector.shape_cast %35 : vector<1x8xf32> to vector<1x8x1xf32>
    %37 = vector.broadcast %36 : vector<1x8x1xf32> to vector<1x8x8xf32>
    %38 = arith.subf %34, %37 : vector<1x8x8xf32>
    %39 = math.exp %38 : vector<1x8x8xf32>
    %cst_22 = arith.constant dense<0.000000e+00> : vector<1x8xf32>
    %40 = vector.multi_reduction <add>, %39, %cst_22 [2] : vector<1x8x8xf32> to vector<1x8xf32>
    %41 = vector.shape_cast %40 : vector<1x8xf32> to vector<1x8x1xf32>
    %42 = tpu.reciprocal %41 {approx = true} : vector<1x8x1xf32> -> vector<1x8x1xf32>
    %43 = arith.truncf %39 : vector<1x8x8xf32> to vector<1x8x8xbf16>
    "tpu.trace_start"() <{level = 10 : i32, message = "bqk,bkd->bqd"}> : () -> ()
    %cst_23 = arith.constant dense<0.000000e+00> : vector<1x8x8xf32>
    %44 = tpu.matmul %43, %33, %cst_23 {dimension_numbers = #tpu.dot_dimension_numbers<[2], [1], [1], [2], [0, 0, 0, 1, 1, 2], [0], [0]>} : vector<1x8x8xbf16>, vector<1x8x8xbf16>, vector<1x8x8xf32> -> vector<1x8x8xf32>
    "tpu.trace_stop"() : () -> ()
    %45 = vector.broadcast %42 : vector<1x8x1xf32> to vector<1x8x8xf32>
    %46 = arith.mulf %44, %45 : vector<1x8x8xf32>
    %47 = vector.shape_cast %46 : vector<1x8x8xf32> to vector<8x8xf32>
    %48 = arith.truncf %47 : vector<8x8xf32> to vector<8x8xbf16>
    %c0_24 = arith.constant 0 : index
    %c0_25 = arith.constant 0 : index
    %49 = vector.load %arg7[%c0_24, %c0_25] : memref<32x32xf32, #tpu.memory_space<vmem>>, vector<8x32xf32>
    %50 = arith.truncf %49 : vector<8x32xf32> to vector<8x32xbf16>
    %cst_26 = arith.constant dense<0.000000e+00> : vector<8x32xf32>
    %51 = tpu.matmul %48, %50, %cst_26 {dimension_numbers = #tpu.dot_dimension_numbers<[1], [0], [0], [1], [0, 0, 1, 1], [], []>} : vector<8x8xbf16>, vector<8x32xbf16>, vector<8x32xf32> -> vector<8x32xf32>
    %52 = vector.extract_strided_slice %26 {offsets = [0, 0, 8], sizes = [1, 8, 8], strides = [1, 1, 1]} : vector<1x8x32xbf16> to vector<1x8x8xbf16>
    %53 = vector.extract_strided_slice %28 {offsets = [0, 0, 8], sizes = [1, 8, 8], strides = [1, 1, 1]} : vector<1x8x32xbf16> to vector<1x8x8xbf16>
    %54 = vector.extract_strided_slice %30 {offsets = [0, 0, 8], sizes = [1, 8, 8], strides = [1, 1, 1]} : vector<1x8x32xbf16> to vector<1x8x8xbf16>
    "tpu.trace_start"() <{level = 10 : i32, message = "bqd,bkd->bqk"}> : () -> ()
    %cst_27 = arith.constant dense<0.000000e+00> : vector<1x8x8xf32>
    %55 = tpu.matmul %52, %53, %cst_27 {dimension_numbers = #tpu.dot_dimension_numbers<[2], [2], [1], [1], [0, 0, 0, 1, 1, 1], [0], [0]>} : vector<1x8x8xbf16>, vector<1x8x8xbf16>, vector<1x8x8xf32> -> vector<1x8x8xf32>
    "tpu.trace_stop"() : () -> ()
    %cst_28 = arith.constant dense<0xFF800000> : vector<1x8xf32>
    %56 = vector.multi_reduction <maximumf>, %55, %cst_28 [2] : vector<1x8x8xf32> to vector<1x8xf32>
    %57 = vector.shape_cast %56 : vector<1x8xf32> to vector<1x8x1xf32>
    %58 = vector.broadcast %57 : vector<1x8x1xf32> to vector<1x8x8xf32>
    %59 = arith.subf %55, %58 : vector<1x8x8xf32>
    %60 = math.exp %59 : vector<1x8x8xf32>
    %cst_29 = arith.constant dense<0.000000e+00> : vector<1x8xf32>
    %61 = vector.multi_reduction <add>, %60, %cst_29 [2] : vector<1x8x8xf32> to vector<1x8xf32>
    %62 = vector.shape_cast %61 : vector<1x8xf32> to vector<1x8x1xf32>
    %63 = tpu.reciprocal %62 {approx = true} : vector<1x8x1xf32> -> vector<1x8x1xf32>
    %64 = arith.truncf %60 : vector<1x8x8xf32> to vector<1x8x8xbf16>
    "tpu.trace_start"() <{level = 10 : i32, message = "bqk,bkd->bqd"}> : () -> ()
    %cst_30 = arith.constant dense<0.000000e+00> : vector<1x8x8xf32>
    %65 = tpu.matmul %64, %54, %cst_30 {dimension_numbers = #tpu.dot_dimension_numbers<[2], [1], [1], [2], [0, 0, 0, 1, 1, 2], [0], [0]>} : vector<1x8x8xbf16>, vector<1x8x8xbf16>, vector<1x8x8xf32> -> vector<1x8x8xf32>
    "tpu.trace_stop"() : () -> ()
    %66 = vector.broadcast %63 : vector<1x8x1xf32> to vector<1x8x8xf32>
    %67 = arith.mulf %65, %66 : vector<1x8x8xf32>
    %68 = vector.shape_cast %67 : vector<1x8x8xf32> to vector<8x8xf32>
    %69 = arith.truncf %68 : vector<8x8xf32> to vector<8x8xbf16>
    %c8 = arith.constant 8 : index
    %c0_31 = arith.constant 0 : index
    %70 = vector.load %arg7[%c8, %c0_31] : memref<32x32xf32, #tpu.memory_space<vmem>>, vector<8x32xf32>
    %71 = arith.truncf %70 : vector<8x32xf32> to vector<8x32xbf16>
    %cst_32 = arith.constant dense<0.000000e+00> : vector<8x32xf32>
    %72 = tpu.matmul %69, %71, %cst_32 {dimension_numbers = #tpu.dot_dimension_numbers<[1], [0], [0], [1], [0, 0, 1, 1], [], []>} : vector<8x8xbf16>, vector<8x32xbf16>, vector<8x32xf32> -> vector<8x32xf32>
    %73 = arith.addf %51, %72 : vector<8x32xf32>
    %74 = vector.extract_strided_slice %26 {offsets = [0, 0, 16], sizes = [1, 8, 8], strides = [1, 1, 1]} : vector<1x8x32xbf16> to vector<1x8x8xbf16>
    %75 = vector.extract_strided_slice %28 {offsets = [0, 0, 16], sizes = [1, 8, 8], strides = [1, 1, 1]} : vector<1x8x32xbf16> to vector<1x8x8xbf16>
    %76 = vector.extract_strided_slice %30 {offsets = [0, 0, 16], sizes = [1, 8, 8], strides = [1, 1, 1]} : vector<1x8x32xbf16> to vector<1x8x8xbf16>
    "tpu.trace_start"() <{level = 10 : i32, message = "bqd,bkd->bqk"}> : () -> ()
    %cst_33 = arith.constant dense<0.000000e+00> : vector<1x8x8xf32>
    %77 = tpu.matmul %74, %75, %cst_33 {dimension_numbers = #tpu.dot_dimension_numbers<[2], [2], [1], [1], [0, 0, 0, 1, 1, 1], [0], [0]>} : vector<1x8x8xbf16>, vector<1x8x8xbf16>, vector<1x8x8xf32> -> vector<1x8x8xf32>
    "tpu.trace_stop"() : () -> ()
    %cst_34 = arith.constant dense<0xFF800000> : vector<1x8xf32>
    %78 = vector.multi_reduction <maximumf>, %77, %cst_34 [2] : vector<1x8x8xf32> to vector<1x8xf32>
    %79 = vector.shape_cast %78 : vector<1x8xf32> to vector<1x8x1xf32>
    %80 = vector.broadcast %79 : vector<1x8x1xf32> to vector<1x8x8xf32>
    %81 = arith.subf %77, %80 : vector<1x8x8xf32>
    %82 = math.exp %81 : vector<1x8x8xf32>
    %cst_35 = arith.constant dense<0.000000e+00> : vector<1x8xf32>
    %83 = vector.multi_reduction <add>, %82, %cst_35 [2] : vector<1x8x8xf32> to vector<1x8xf32>
    %84 = vector.shape_cast %83 : vector<1x8xf32> to vector<1x8x1xf32>
    %85 = tpu.reciprocal %84 {approx = true} : vector<1x8x1xf32> -> vector<1x8x1xf32>
    %86 = arith.truncf %82 : vector<1x8x8xf32> to vector<1x8x8xbf16>
    "tpu.trace_start"() <{level = 10 : i32, message = "bqk,bkd->bqd"}> : () -> ()
    %cst_36 = arith.constant dense<0.000000e+00> : vector<1x8x8xf32>
    %87 = tpu.matmul %86, %76, %cst_36 {dimension_numbers = #tpu.dot_dimension_numbers<[2], [1], [1], [2], [0, 0, 0, 1, 1, 2], [0], [0]>} : vector<1x8x8xbf16>, vector<1x8x8xbf16>, vector<1x8x8xf32> -> vector<1x8x8xf32>
    "tpu.trace_stop"() : () -> ()
    %88 = vector.broadcast %85 : vector<1x8x1xf32> to vector<1x8x8xf32>
    %89 = arith.mulf %87, %88 : vector<1x8x8xf32>
    %90 = vector.shape_cast %89 : vector<1x8x8xf32> to vector<8x8xf32>
    %91 = arith.truncf %90 : vector<8x8xf32> to vector<8x8xbf16>
    %c16 = arith.constant 16 : index
    %c0_37 = arith.constant 0 : index
    %92 = vector.load %arg7[%c16, %c0_37] : memref<32x32xf32, #tpu.memory_space<vmem>>, vector<8x32xf32>
    %93 = arith.truncf %92 : vector<8x32xf32> to vector<8x32xbf16>
    %cst_38 = arith.constant dense<0.000000e+00> : vector<8x32xf32>
    %94 = tpu.matmul %91, %93, %cst_38 {dimension_numbers = #tpu.dot_dimension_numbers<[1], [0], [0], [1], [0, 0, 1, 1], [], []>} : vector<8x8xbf16>, vector<8x32xbf16>, vector<8x32xf32> -> vector<8x32xf32>
    %95 = arith.addf %73, %94 : vector<8x32xf32>
    %96 = vector.extract_strided_slice %26 {offsets = [0, 0, 24], sizes = [1, 8, 8], strides = [1, 1, 1]} : vector<1x8x32xbf16> to vector<1x8x8xbf16>
    %97 = vector.extract_strided_slice %28 {offsets = [0, 0, 24], sizes = [1, 8, 8], strides = [1, 1, 1]} : vector<1x8x32xbf16> to vector<1x8x8xbf16>
    %98 = vector.extract_strided_slice %30 {offsets = [0, 0, 24], sizes = [1, 8, 8], strides = [1, 1, 1]} : vector<1x8x32xbf16> to vector<1x8x8xbf16>
    "tpu.trace_start"() <{level = 10 : i32, message = "bqd,bkd->bqk"}> : () -> ()
    %cst_39 = arith.constant dense<0.000000e+00> : vector<1x8x8xf32>
    %99 = tpu.matmul %96, %97, %cst_39 {dimension_numbers = #tpu.dot_dimension_numbers<[2], [2], [1], [1], [0, 0, 0, 1, 1, 1], [0], [0]>} : vector<1x8x8xbf16>, vector<1x8x8xbf16>, vector<1x8x8xf32> -> vector<1x8x8xf32>
    "tpu.trace_stop"() : () -> ()
    %cst_40 = arith.constant dense<0xFF800000> : vector<1x8xf32>
    %100 = vector.multi_reduction <maximumf>, %99, %cst_40 [2] : vector<1x8x8xf32> to vector<1x8xf32>
    %101 = vector.shape_cast %100 : vector<1x8xf32> to vector<1x8x1xf32>
    %102 = vector.broadcast %101 : vector<1x8x1xf32> to vector<1x8x8xf32>
    %103 = arith.subf %99, %102 : vector<1x8x8xf32>
    %104 = math.exp %103 : vector<1x8x8xf32>
    %cst_41 = arith.constant dense<0.000000e+00> : vector<1x8xf32>
    %105 = vector.multi_reduction <add>, %104, %cst_41 [2] : vector<1x8x8xf32> to vector<1x8xf32>
    %106 = vector.shape_cast %105 : vector<1x8xf32> to vector<1x8x1xf32>
    %107 = tpu.reciprocal %106 {approx = true} : vector<1x8x1xf32> -> vector<1x8x1xf32>
    %108 = arith.truncf %104 : vector<1x8x8xf32> to vector<1x8x8xbf16>
    "tpu.trace_start"() <{level = 10 : i32, message = "bqk,bkd->bqd"}> : () -> ()
    %cst_42 = arith.constant dense<0.000000e+00> : vector<1x8x8xf32>
    %109 = tpu.matmul %108, %98, %cst_42 {dimension_numbers = #tpu.dot_dimension_numbers<[2], [1], [1], [2], [0, 0, 0, 1, 1, 2], [0], [0]>} : vector<1x8x8xbf16>, vector<1x8x8xbf16>, vector<1x8x8xf32> -> vector<1x8x8xf32>
    "tpu.trace_stop"() : () -> ()
    %110 = vector.broadcast %107 : vector<1x8x1xf32> to vector<1x8x8xf32>
    %111 = arith.mulf %109, %110 : vector<1x8x8xf32>
    %112 = vector.shape_cast %111 : vector<1x8x8xf32> to vector<8x8xf32>
    %113 = arith.truncf %112 : vector<8x8xf32> to vector<8x8xbf16>
    %c24 = arith.constant 24 : index
    %c0_43 = arith.constant 0 : index
    %114 = vector.load %arg7[%c24, %c0_43] : memref<32x32xf32, #tpu.memory_space<vmem>>, vector<8x32xf32>
    %115 = arith.truncf %114 : vector<8x32xf32> to vector<8x32xbf16>
    %cst_44 = arith.constant dense<0.000000e+00> : vector<8x32xf32>
    %116 = tpu.matmul %113, %115, %cst_44 {dimension_numbers = #tpu.dot_dimension_numbers<[1], [0], [0], [1], [0, 0, 1, 1], [], []>} : vector<8x8xbf16>, vector<8x32xbf16>, vector<8x32xf32> -> vector<8x32xf32>
    %117 = arith.addf %95, %116 : vector<8x32xf32>
    %c0_45 = arith.constant 0 : index
    %c0_46 = arith.constant 0 : index
    %118 = vector.load %arg8[%c0_45, %c0_46] : memref<1x32xf32, #tpu.memory_space<vmem>>, vector<1x32xf32>
    %119 = vector.broadcast %118 : vector<1x32xf32> to vector<8x32xf32>
    %120 = arith.addf %117, %119 : vector<8x32xf32>
    %121 = arith.addf %1, %120 : vector<8x32xf32>
    %c0_47 = arith.constant 0 : index
    %c0_48 = arith.constant 0 : index
    %122 = vector.load %arg17[%c0_47, %c0_48] : memref<3x32xf32, #tpu.memory_space<vmem>>, vector<1x32xf32>
    %c0_49 = arith.constant 0 : index
    %c0_50 = arith.constant 0 : index
    %123 = vector.load %arg18[%c0_49, %c0_50] : memref<3x32xf32, #tpu.memory_space<vmem>>, vector<1x32xf32>
    %cst_51 = arith.constant dense<0.000000e+00> : vector<8xf32>
    %124 = vector.multi_reduction <add>, %121, %cst_51 [1] : vector<8x32xf32> to vector<8xf32>
    %125 = vector.shape_cast %124 : vector<8xf32> to vector<8x1xf32>
    %cst_52 = arith.constant 3.200000e+01 : f32
    %126 = vector.broadcast %cst_52 : f32 to vector<8x1xf32>
    %127 = arith.divf %125, %126 : vector<8x1xf32>
    %128 = vector.broadcast %127 : vector<8x1xf32> to vector<8x32xf32>
    %129 = arith.subf %121, %128 : vector<8x32xf32>
    %130 = arith.mulf %129, %129 : vector<8x32xf32>
    %cst_53 = arith.constant dense<0.000000e+00> : vector<8xf32>
    %131 = vector.multi_reduction <add>, %130, %cst_53 [1] : vector<8x32xf32> to vector<8xf32>
    %132 = vector.shape_cast %131 : vector<8xf32> to vector<8x1xf32>
    %cst_54 = arith.constant 3.200000e+01 : f32
    %133 = vector.broadcast %cst_54 : f32 to vector<8x1xf32>
    %134 = arith.divf %132, %133 : vector<8x1xf32>
    %135 = vector.broadcast %127 : vector<8x1xf32> to vector<8x32xf32>
    %136 = arith.subf %121, %135 : vector<8x32xf32>
    %cst_55 = arith.constant 9.99999974E-6 : f32
    %137 = vector.broadcast %cst_55 : f32 to vector<8x1xf32>
    %138 = arith.addf %134, %137 : vector<8x1xf32>
    %139 = math.rsqrt %138 : vector<8x1xf32>
    %140 = vector.broadcast %139 : vector<8x1xf32> to vector<8x32xf32>
    %141 = arith.mulf %136, %140 : vector<8x32xf32>
    %142 = vector.broadcast %122 : vector<1x32xf32> to vector<8x32xf32>
    %143 = arith.mulf %141, %142 : vector<8x32xf32>
    %144 = vector.broadcast %123 : vector<1x32xf32> to vector<8x32xf32>
    %145 = arith.addf %143, %144 : vector<8x32xf32>
    %146 = arith.addf %145, %3 : vector<8x32xf32>
    %c0_56 = arith.constant 0 : index
    %c0_57 = arith.constant 0 : index
    %147 = vector.load %arg9[%c0_56, %c0_57] : memref<32x96xbf16, #tpu.memory_space<vmem>>, vector<32x32xbf16>
    %148 = arith.truncf %146 : vector<8x32xf32> to vector<8x32xbf16>
    %cst_58 = arith.constant dense<0.000000e+00> : vector<8x32xf32>
    %149 = tpu.matmul %148, %147, %cst_58 {dimension_numbers = #tpu.dot_dimension_numbers<[1], [0], [0], [1], [0, 0, 1, 1], [], []>} : vector<8x32xbf16>, vector<32x32xbf16>, vector<8x32xf32> -> vector<8x32xf32>
    %c0_59 = arith.constant 0 : index
    %c0_60 = arith.constant 0 : index
    %150 = vector.load %arg10[%c0_59, %c0_60] : memref<1x96xf32, #tpu.memory_space<vmem>>, vector<1x32xf32>
    %151 = vector.broadcast %150 : vector<1x32xf32> to vector<8x32xf32>
    %152 = arith.addf %149, %151 : vector<8x32xf32>
    %153 = arith.addf %5, %7 : vector<16x32xf32>
    %c0_61 = arith.constant 0 : index
    %c32 = arith.constant 32 : index
    %154 = vector.load %arg9[%c0_61, %c32] : memref<32x96xbf16, #tpu.memory_space<vmem>>, vector<32x32xbf16>
    %155 = arith.truncf %153 : vector<16x32xf32> to vector<16x32xbf16>
    %cst_62 = arith.constant dense<0.000000e+00> : vector<16x32xf32>
    %156 = tpu.matmul %155, %154, %cst_62 {dimension_numbers = #tpu.dot_dimension_numbers<[1], [0], [0], [1], [0, 0, 1, 1], [], []>} : vector<16x32xbf16>, vector<32x32xbf16>, vector<16x32xf32> -> vector<16x32xf32>
    %c0_63 = arith.constant 0 : index
    %c32_64 = arith.constant 32 : index
    %157 = vector.load %arg10[%c0_63, %c32_64] : memref<1x96xf32, #tpu.memory_space<vmem>>, vector<1x32xf32>
    %158 = vector.broadcast %157 : vector<1x32xf32> to vector<16x32xf32>
    %159 = arith.addf %156, %158 : vector<16x32xf32>
    %c0_65 = arith.constant 0 : index
    %c64_66 = arith.constant 64 : index
    %160 = vector.load %arg9[%c0_65, %c64_66] : memref<32x96xbf16, #tpu.memory_space<vmem>>, vector<32x32xbf16>
    %161 = arith.truncf %5 : vector<16x32xf32> to vector<16x32xbf16>
    %cst_67 = arith.constant dense<0.000000e+00> : vector<16x32xf32>
    %162 = tpu.matmul %161, %160, %cst_67 {dimension_numbers = #tpu.dot_dimension_numbers<[1], [0], [0], [1], [0, 0, 1, 1], [], []>} : vector<16x32xbf16>, vector<32x32xbf16>, vector<16x32xf32> -> vector<16x32xf32>
    %c0_68 = arith.constant 0 : index
    %c64_69 = arith.constant 64 : index
    %163 = vector.load %arg10[%c0_68, %c64_69] : memref<1x96xf32, #tpu.memory_space<vmem>>, vector<1x32xf32>
    %164 = vector.broadcast %163 : vector<1x32xf32> to vector<16x32xf32>
    %165 = arith.addf %162, %164 : vector<16x32xf32>
    %cst_70 = arith.constant 0.353553385 : f32
    %166 = vector.broadcast %cst_70 : f32 to vector<8x32xf32>
    %167 = arith.mulf %152, %166 : vector<8x32xf32>
    %168 = arith.truncf %167 : vector<8x32xf32> to vector<8x32xbf16>
    %169 = vector.shape_cast %168 : vector<8x32xbf16> to vector<1x8x32xbf16>
    %170 = arith.truncf %159 : vector<16x32xf32> to vector<16x32xbf16>
    %171 = vector.shape_cast %170 : vector<16x32xbf16> to vector<1x16x32xbf16>
    %172 = arith.truncf %165 : vector<16x32xf32> to vector<16x32xbf16>
    %173 = vector.shape_cast %172 : vector<16x32xbf16> to vector<1x16x32xbf16>
    %174 = vector.extract_strided_slice %169 {offsets = [0, 0, 0], sizes = [1, 8, 8], strides = [1, 1, 1]} : vector<1x8x32xbf16> to vector<1x8x8xbf16>
    %175 = vector.extract_strided_slice %171 {offsets = [0, 0, 0], sizes = [1, 16, 8], strides = [1, 1, 1]} : vector<1x16x32xbf16> to vector<1x16x8xbf16>
    %176 = vector.extract_strided_slice %173 {offsets = [0, 0, 0], sizes = [1, 16, 8], strides = [1, 1, 1]} : vector<1x16x32xbf16> to vector<1x16x8xbf16>
    "tpu.trace_start"() <{level = 10 : i32, message = "bqd,bkd->bqk"}> : () -> ()
    %cst_71 = arith.constant dense<0.000000e+00> : vector<1x8x16xf32>
    %177 = tpu.matmul %174, %175, %cst_71 {dimension_numbers = #tpu.dot_dimension_numbers<[2], [2], [1], [1], [0, 0, 0, 1, 1, 1], [0], [0]>} : vector<1x8x8xbf16>, vector<1x16x8xbf16>, vector<1x8x16xf32> -> vector<1x8x16xf32>
    "tpu.trace_stop"() : () -> ()
    %cst_72 = arith.constant dense<0xFF800000> : vector<1x8xf32>
    %178 = vector.multi_reduction <maximumf>, %177, %cst_72 [2] : vector<1x8x16xf32> to vector<1x8xf32>
    %179 = vector.shape_cast %178 : vector<1x8xf32> to vector<1x8x1xf32>
    %180 = vector.broadcast %179 : vector<1x8x1xf32> to vector<1x8x16xf32>
    %181 = arith.subf %177, %180 : vector<1x8x16xf32>
    %182 = math.exp %181 : vector<1x8x16xf32>
    %cst_73 = arith.constant dense<0.000000e+00> : vector<1x8xf32>
    %183 = vector.multi_reduction <add>, %182, %cst_73 [2] : vector<1x8x16xf32> to vector<1x8xf32>
    %184 = vector.shape_cast %183 : vector<1x8xf32> to vector<1x8x1xf32>
    %185 = tpu.reciprocal %184 {approx = true} : vector<1x8x1xf32> -> vector<1x8x1xf32>
    %186 = arith.truncf %182 : vector<1x8x16xf32> to vector<1x8x16xbf16>
    "tpu.trace_start"() <{level = 10 : i32, message = "bqk,bkd->bqd"}> : () -> ()
    %cst_74 = arith.constant dense<0.000000e+00> : vector<1x8x8xf32>
    %187 = tpu.matmul %186, %176, %cst_74 {dimension_numbers = #tpu.dot_dimension_numbers<[2], [1], [1], [2], [0, 0, 0, 1, 1, 2], [0], [0]>} : vector<1x8x16xbf16>, vector<1x16x8xbf16>, vector<1x8x8xf32> -> vector<1x8x8xf32>
    "tpu.trace_stop"() : () -> ()
    %188 = vector.broadcast %185 : vector<1x8x1xf32> to vector<1x8x8xf32>
    %189 = arith.mulf %187, %188 : vector<1x8x8xf32>
    %190 = vector.shape_cast %189 : vector<1x8x8xf32> to vector<8x8xf32>
    %191 = arith.truncf %190 : vector<8x8xf32> to vector<8x8xbf16>
    %c0_75 = arith.constant 0 : index
    %c0_76 = arith.constant 0 : index
    %192 = vector.load %arg11[%c0_75, %c0_76] : memref<32x32xf32, #tpu.memory_space<vmem>>, vector<8x32xf32>
    %193 = arith.truncf %192 : vector<8x32xf32> to vector<8x32xbf16>
    %cst_77 = arith.constant dense<0.000000e+00> : vector<8x32xf32>
    %194 = tpu.matmul %191, %193, %cst_77 {dimension_numbers = #tpu.dot_dimension_numbers<[1], [0], [0], [1], [0, 0, 1, 1], [], []>} : vector<8x8xbf16>, vector<8x32xbf16>, vector<8x32xf32> -> vector<8x32xf32>
    %195 = vector.extract_strided_slice %169 {offsets = [0, 0, 8], sizes = [1, 8, 8], strides = [1, 1, 1]} : vector<1x8x32xbf16> to vector<1x8x8xbf16>
    %196 = vector.extract_strided_slice %171 {offsets = [0, 0, 8], sizes = [1, 16, 8], strides = [1, 1, 1]} : vector<1x16x32xbf16> to vector<1x16x8xbf16>
    %197 = vector.extract_strided_slice %173 {offsets = [0, 0, 8], sizes = [1, 16, 8], strides = [1, 1, 1]} : vector<1x16x32xbf16> to vector<1x16x8xbf16>
    "tpu.trace_start"() <{level = 10 : i32, message = "bqd,bkd->bqk"}> : () -> ()
    %cst_78 = arith.constant dense<0.000000e+00> : vector<1x8x16xf32>
    %198 = tpu.matmul %195, %196, %cst_78 {dimension_numbers = #tpu.dot_dimension_numbers<[2], [2], [1], [1], [0, 0, 0, 1, 1, 1], [0], [0]>} : vector<1x8x8xbf16>, vector<1x16x8xbf16>, vector<1x8x16xf32> -> vector<1x8x16xf32>
    "tpu.trace_stop"() : () -> ()
    %cst_79 = arith.constant dense<0xFF800000> : vector<1x8xf32>
    %199 = vector.multi_reduction <maximumf>, %198, %cst_79 [2] : vector<1x8x16xf32> to vector<1x8xf32>
    %200 = vector.shape_cast %199 : vector<1x8xf32> to vector<1x8x1xf32>
    %201 = vector.broadcast %200 : vector<1x8x1xf32> to vector<1x8x16xf32>
    %202 = arith.subf %198, %201 : vector<1x8x16xf32>
    %203 = math.exp %202 : vector<1x8x16xf32>
    %cst_80 = arith.constant dense<0.000000e+00> : vector<1x8xf32>
    %204 = vector.multi_reduction <add>, %203, %cst_80 [2] : vector<1x8x16xf32> to vector<1x8xf32>
    %205 = vector.shape_cast %204 : vector<1x8xf32> to vector<1x8x1xf32>
    %206 = tpu.reciprocal %205 {approx = true} : vector<1x8x1xf32> -> vector<1x8x1xf32>
    %207 = arith.truncf %203 : vector<1x8x16xf32> to vector<1x8x16xbf16>
    "tpu.trace_start"() <{level = 10 : i32, message = "bqk,bkd->bqd"}> : () -> ()
    %cst_81 = arith.constant dense<0.000000e+00> : vector<1x8x8xf32>
    %208 = tpu.matmul %207, %197, %cst_81 {dimension_numbers = #tpu.dot_dimension_numbers<[2], [1], [1], [2], [0, 0, 0, 1, 1, 2], [0], [0]>} : vector<1x8x16xbf16>, vector<1x16x8xbf16>, vector<1x8x8xf32> -> vector<1x8x8xf32>
    "tpu.trace_stop"() : () -> ()
    %209 = vector.broadcast %206 : vector<1x8x1xf32> to vector<1x8x8xf32>
    %210 = arith.mulf %208, %209 : vector<1x8x8xf32>
    %211 = vector.shape_cast %210 : vector<1x8x8xf32> to vector<8x8xf32>
    %212 = arith.truncf %211 : vector<8x8xf32> to vector<8x8xbf16>
    %c8_82 = arith.constant 8 : index
    %c0_83 = arith.constant 0 : index
    %213 = vector.load %arg11[%c8_82, %c0_83] : memref<32x32xf32, #tpu.memory_space<vmem>>, vector<8x32xf32>
    %214 = arith.truncf %213 : vector<8x32xf32> to vector<8x32xbf16>
    %cst_84 = arith.constant dense<0.000000e+00> : vector<8x32xf32>
    %215 = tpu.matmul %212, %214, %cst_84 {dimension_numbers = #tpu.dot_dimension_numbers<[1], [0], [0], [1], [0, 0, 1, 1], [], []>} : vector<8x8xbf16>, vector<8x32xbf16>, vector<8x32xf32> -> vector<8x32xf32>
    %216 = arith.addf %194, %215 : vector<8x32xf32>
    %217 = vector.extract_strided_slice %169 {offsets = [0, 0, 16], sizes = [1, 8, 8], strides = [1, 1, 1]} : vector<1x8x32xbf16> to vector<1x8x8xbf16>
    %218 = vector.extract_strided_slice %171 {offsets = [0, 0, 16], sizes = [1, 16, 8], strides = [1, 1, 1]} : vector<1x16x32xbf16> to vector<1x16x8xbf16>
    %219 = vector.extract_strided_slice %173 {offsets = [0, 0, 16], sizes = [1, 16, 8], strides = [1, 1, 1]} : vector<1x16x32xbf16> to vector<1x16x8xbf16>
    "tpu.trace_start"() <{level = 10 : i32, message = "bqd,bkd->bqk"}> : () -> ()
    %cst_85 = arith.constant dense<0.000000e+00> : vector<1x8x16xf32>
    %220 = tpu.matmul %217, %218, %cst_85 {dimension_numbers = #tpu.dot_dimension_numbers<[2], [2], [1], [1], [0, 0, 0, 1, 1, 1], [0], [0]>} : vector<1x8x8xbf16>, vector<1x16x8xbf16>, vector<1x8x16xf32> -> vector<1x8x16xf32>
    "tpu.trace_stop"() : () -> ()
    %cst_86 = arith.constant dense<0xFF800000> : vector<1x8xf32>
    %221 = vector.multi_reduction <maximumf>, %220, %cst_86 [2] : vector<1x8x16xf32> to vector<1x8xf32>
    %222 = vector.shape_cast %221 : vector<1x8xf32> to vector<1x8x1xf32>
    %223 = vector.broadcast %222 : vector<1x8x1xf32> to vector<1x8x16xf32>
    %224 = arith.subf %220, %223 : vector<1x8x16xf32>
    %225 = math.exp %224 : vector<1x8x16xf32>
    %cst_87 = arith.constant dense<0.000000e+00> : vector<1x8xf32>
    %226 = vector.multi_reduction <add>, %225, %cst_87 [2] : vector<1x8x16xf32> to vector<1x8xf32>
    %227 = vector.shape_cast %226 : vector<1x8xf32> to vector<1x8x1xf32>
    %228 = tpu.reciprocal %227 {approx = true} : vector<1x8x1xf32> -> vector<1x8x1xf32>
    %229 = arith.truncf %225 : vector<1x8x16xf32> to vector<1x8x16xbf16>
    "tpu.trace_start"() <{level = 10 : i32, message = "bqk,bkd->bqd"}> : () -> ()
    %cst_88 = arith.constant dense<0.000000e+00> : vector<1x8x8xf32>
    %230 = tpu.matmul %229, %219, %cst_88 {dimension_numbers = #tpu.dot_dimension_numbers<[2], [1], [1], [2], [0, 0, 0, 1, 1, 2], [0], [0]>} : vector<1x8x16xbf16>, vector<1x16x8xbf16>, vector<1x8x8xf32> -> vector<1x8x8xf32>
    "tpu.trace_stop"() : () -> ()
    %231 = vector.broadcast %228 : vector<1x8x1xf32> to vector<1x8x8xf32>
    %232 = arith.mulf %230, %231 : vector<1x8x8xf32>
    %233 = vector.shape_cast %232 : vector<1x8x8xf32> to vector<8x8xf32>
    %234 = arith.truncf %233 : vector<8x8xf32> to vector<8x8xbf16>
    %c16_89 = arith.constant 16 : index
    %c0_90 = arith.constant 0 : index
    %235 = vector.load %arg11[%c16_89, %c0_90] : memref<32x32xf32, #tpu.memory_space<vmem>>, vector<8x32xf32>
    %236 = arith.truncf %235 : vector<8x32xf32> to vector<8x32xbf16>
    %cst_91 = arith.constant dense<0.000000e+00> : vector<8x32xf32>
    %237 = tpu.matmul %234, %236, %cst_91 {dimension_numbers = #tpu.dot_dimension_numbers<[1], [0], [0], [1], [0, 0, 1, 1], [], []>} : vector<8x8xbf16>, vector<8x32xbf16>, vector<8x32xf32> -> vector<8x32xf32>
    %238 = arith.addf %216, %237 : vector<8x32xf32>
    %239 = vector.extract_strided_slice %169 {offsets = [0, 0, 24], sizes = [1, 8, 8], strides = [1, 1, 1]} : vector<1x8x32xbf16> to vector<1x8x8xbf16>
    %240 = vector.extract_strided_slice %171 {offsets = [0, 0, 24], sizes = [1, 16, 8], strides = [1, 1, 1]} : vector<1x16x32xbf16> to vector<1x16x8xbf16>
    %241 = vector.extract_strided_slice %173 {offsets = [0, 0, 24], sizes = [1, 16, 8], strides = [1, 1, 1]} : vector<1x16x32xbf16> to vector<1x16x8xbf16>
    "tpu.trace_start"() <{level = 10 : i32, message = "bqd,bkd->bqk"}> : () -> ()
    %cst_92 = arith.constant dense<0.000000e+00> : vector<1x8x16xf32>
    %242 = tpu.matmul %239, %240, %cst_92 {dimension_numbers = #tpu.dot_dimension_numbers<[2], [2], [1], [1], [0, 0, 0, 1, 1, 1], [0], [0]>} : vector<1x8x8xbf16>, vector<1x16x8xbf16>, vector<1x8x16xf32> -> vector<1x8x16xf32>
    "tpu.trace_stop"() : () -> ()
    %cst_93 = arith.constant dense<0xFF800000> : vector<1x8xf32>
    %243 = vector.multi_reduction <maximumf>, %242, %cst_93 [2] : vector<1x8x16xf32> to vector<1x8xf32>
    %244 = vector.shape_cast %243 : vector<1x8xf32> to vector<1x8x1xf32>
    %245 = vector.broadcast %244 : vector<1x8x1xf32> to vector<1x8x16xf32>
    %246 = arith.subf %242, %245 : vector<1x8x16xf32>
    %247 = math.exp %246 : vector<1x8x16xf32>
    %cst_94 = arith.constant dense<0.000000e+00> : vector<1x8xf32>
    %248 = vector.multi_reduction <add>, %247, %cst_94 [2] : vector<1x8x16xf32> to vector<1x8xf32>
    %249 = vector.shape_cast %248 : vector<1x8xf32> to vector<1x8x1xf32>
    %250 = tpu.reciprocal %249 {approx = true} : vector<1x8x1xf32> -> vector<1x8x1xf32>
    %251 = arith.truncf %247 : vector<1x8x16xf32> to vector<1x8x16xbf16>
    "tpu.trace_start"() <{level = 10 : i32, message = "bqk,bkd->bqd"}> : () -> ()
    %cst_95 = arith.constant dense<0.000000e+00> : vector<1x8x8xf32>
    %252 = tpu.matmul %251, %241, %cst_95 {dimension_numbers = #tpu.dot_dimension_numbers<[2], [1], [1], [2], [0, 0, 0, 1, 1, 2], [0], [0]>} : vector<1x8x16xbf16>, vector<1x16x8xbf16>, vector<1x8x8xf32> -> vector<1x8x8xf32>
    "tpu.trace_stop"() : () -> ()
    %253 = vector.broadcast %250 : vector<1x8x1xf32> to vector<1x8x8xf32>
    %254 = arith.mulf %252, %253 : vector<1x8x8xf32>
    %255 = vector.shape_cast %254 : vector<1x8x8xf32> to vector<8x8xf32>
    %256 = arith.truncf %255 : vector<8x8xf32> to vector<8x8xbf16>
    %c24_96 = arith.constant 24 : index
    %c0_97 = arith.constant 0 : index
    %257 = vector.load %arg11[%c24_96, %c0_97] : memref<32x32xf32, #tpu.memory_space<vmem>>, vector<8x32xf32>
    %258 = arith.truncf %257 : vector<8x32xf32> to vector<8x32xbf16>
    %cst_98 = arith.constant dense<0.000000e+00> : vector<8x32xf32>
    %259 = tpu.matmul %256, %258, %cst_98 {dimension_numbers = #tpu.dot_dimension_numbers<[1], [0], [0], [1], [0, 0, 1, 1], [], []>} : vector<8x8xbf16>, vector<8x32xbf16>, vector<8x32xf32> -> vector<8x32xf32>
    %260 = arith.addf %238, %259 : vector<8x32xf32>
    %c0_99 = arith.constant 0 : index
    %c0_100 = arith.constant 0 : index
    %261 = vector.load %arg12[%c0_99, %c0_100] : memref<1x32xf32, #tpu.memory_space<vmem>>, vector<1x32xf32>
    %262 = vector.broadcast %261 : vector<1x32xf32> to vector<8x32xf32>
    %263 = arith.addf %260, %262 : vector<8x32xf32>
    %264 = arith.addf %145, %263 : vector<8x32xf32>
    %c1 = arith.constant 1 : index
    %c0_101 = arith.constant 0 : index
    %265 = vector.load %arg17[%c1, %c0_101] : memref<3x32xf32, #tpu.memory_space<vmem>>, vector<1x32xf32>
    %c1_102 = arith.constant 1 : index
    %c0_103 = arith.constant 0 : index
    %266 = vector.load %arg18[%c1_102, %c0_103] : memref<3x32xf32, #tpu.memory_space<vmem>>, vector<1x32xf32>
    %cst_104 = arith.constant dense<0.000000e+00> : vector<8xf32>
    %267 = vector.multi_reduction <add>, %264, %cst_104 [1] : vector<8x32xf32> to vector<8xf32>
    %268 = vector.shape_cast %267 : vector<8xf32> to vector<8x1xf32>
    %cst_105 = arith.constant 3.200000e+01 : f32
    %269 = vector.broadcast %cst_105 : f32 to vector<8x1xf32>
    %270 = arith.divf %268, %269 : vector<8x1xf32>
    %271 = vector.broadcast %270 : vector<8x1xf32> to vector<8x32xf32>
    %272 = arith.subf %264, %271 : vector<8x32xf32>
    %273 = arith.mulf %272, %272 : vector<8x32xf32>
    %cst_106 = arith.constant dense<0.000000e+00> : vector<8xf32>
    %274 = vector.multi_reduction <add>, %273, %cst_106 [1] : vector<8x32xf32> to vector<8xf32>
    %275 = vector.shape_cast %274 : vector<8xf32> to vector<8x1xf32>
    %cst_107 = arith.constant 3.200000e+01 : f32
    %276 = vector.broadcast %cst_107 : f32 to vector<8x1xf32>
    %277 = arith.divf %275, %276 : vector<8x1xf32>
    %278 = vector.broadcast %270 : vector<8x1xf32> to vector<8x32xf32>
    %279 = arith.subf %264, %278 : vector<8x32xf32>
    %cst_108 = arith.constant 9.99999974E-6 : f32
    %280 = vector.broadcast %cst_108 : f32 to vector<8x1xf32>
    %281 = arith.addf %277, %280 : vector<8x1xf32>
    %282 = math.rsqrt %281 : vector<8x1xf32>
    %283 = vector.broadcast %282 : vector<8x1xf32> to vector<8x32xf32>
    %284 = arith.mulf %279, %283 : vector<8x32xf32>
    %285 = vector.broadcast %265 : vector<1x32xf32> to vector<8x32xf32>
    %286 = arith.mulf %284, %285 : vector<8x32xf32>
    %287 = vector.broadcast %266 : vector<1x32xf32> to vector<8x32xf32>
    %288 = arith.addf %286, %287 : vector<8x32xf32>
    %c0_109 = arith.constant 0 : index
    %c0_110 = arith.constant 0 : index
    %289 = vector.load %arg13[%c0_109, %c0_110] : memref<32x64xbf16, #tpu.memory_space<vmem>>, vector<32x64xbf16>
    %290 = arith.truncf %288 : vector<8x32xf32> to vector<8x32xbf16>
    %cst_111 = arith.constant dense<0.000000e+00> : vector<8x64xf32>
    %291 = tpu.matmul %290, %289, %cst_111 {dimension_numbers = #tpu.dot_dimension_numbers<[1], [0], [0], [1], [0, 0, 1, 1], [], []>} : vector<8x32xbf16>, vector<32x64xbf16>, vector<8x64xf32> -> vector<8x64xf32>
    %c0_112 = arith.constant 0 : index
    %c0_113 = arith.constant 0 : index
    %292 = vector.load %arg14[%c0_112, %c0_113] : memref<1x64xf32, #tpu.memory_space<vmem>>, vector<1x64xf32>
    %293 = vector.broadcast %292 : vector<1x64xf32> to vector<8x64xf32>
    %294 = arith.addf %291, %293 : vector<8x64xf32>
    %cst_114 = arith.constant 0.000000e+00 : f32
    %295 = vector.broadcast %cst_114 : f32 to vector<8x64xf32>
    %296 = arith.maximumf %294, %295 : vector<8x64xf32>
    %c0_115 = arith.constant 0 : index
    %c0_116 = arith.constant 0 : index
    %297 = vector.load %arg15[%c0_115, %c0_116] : memref<64x32xbf16, #tpu.memory_space<vmem>>, vector<64x32xbf16>
    %298 = arith.truncf %296 : vector<8x64xf32> to vector<8x64xbf16>
    %cst_117 = arith.constant dense<0.000000e+00> : vector<8x32xf32>
    %299 = tpu.matmul %298, %297, %cst_117 {dimension_numbers = #tpu.dot_dimension_numbers<[1], [0], [0], [1], [0, 0, 1, 1], [], []>} : vector<8x64xbf16>, vector<64x32xbf16>, vector<8x32xf32> -> vector<8x32xf32>
    %c0_118 = arith.constant 0 : index
    %c0_119 = arith.constant 0 : index
    %300 = vector.load %arg16[%c0_118, %c0_119] : memref<1x32xf32, #tpu.memory_space<vmem>>, vector<1x32xf32>
    %301 = vector.broadcast %300 : vector<1x32xf32> to vector<8x32xf32>
    %302 = arith.addf %299, %301 : vector<8x32xf32>
    %303 = arith.addf %288, %302 : vector<8x32xf32>
    %c2 = arith.constant 2 : index
    %c0_120 = arith.constant 0 : index
    %304 = vector.load %arg17[%c2, %c0_120] : memref<3x32xf32, #tpu.memory_space<vmem>>, vector<1x32xf32>
    %c2_121 = arith.constant 2 : index
    %c0_122 = arith.constant 0 : index
    %305 = vector.load %arg18[%c2_121, %c0_122] : memref<3x32xf32, #tpu.memory_space<vmem>>, vector<1x32xf32>
    %cst_123 = arith.constant dense<0.000000e+00> : vector<8xf32>
    %306 = vector.multi_reduction <add>, %303, %cst_123 [1] : vector<8x32xf32> to vector<8xf32>
    %307 = vector.shape_cast %306 : vector<8xf32> to vector<8x1xf32>
    %cst_124 = arith.constant 3.200000e+01 : f32
    %308 = vector.broadcast %cst_124 : f32 to vector<8x1xf32>
    %309 = arith.divf %307, %308 : vector<8x1xf32>
    %310 = vector.broadcast %309 : vector<8x1xf32> to vector<8x32xf32>
    %311 = arith.subf %303, %310 : vector<8x32xf32>
    %312 = arith.mulf %311, %311 : vector<8x32xf32>
    %cst_125 = arith.constant dense<0.000000e+00> : vector<8xf32>
    %313 = vector.multi_reduction <add>, %312, %cst_125 [1] : vector<8x32xf32> to vector<8xf32>
    %314 = vector.shape_cast %313 : vector<8xf32> to vector<8x1xf32>
    %cst_126 = arith.constant 3.200000e+01 : f32
    %315 = vector.broadcast %cst_126 : f32 to vector<8x1xf32>
    %316 = arith.divf %314, %315 : vector<8x1xf32>
    %317 = vector.broadcast %309 : vector<8x1xf32> to vector<8x32xf32>
    %318 = arith.subf %303, %317 : vector<8x32xf32>
    %cst_127 = arith.constant 9.99999974E-6 : f32
    %319 = vector.broadcast %cst_127 : f32 to vector<8x1xf32>
    %320 = arith.addf %316, %319 : vector<8x1xf32>
    %321 = math.rsqrt %320 : vector<8x1xf32>
    %322 = vector.broadcast %321 : vector<8x1xf32> to vector<8x32xf32>
    %323 = arith.mulf %318, %322 : vector<8x32xf32>
    %324 = vector.broadcast %304 : vector<1x32xf32> to vector<8x32xf32>
    %325 = arith.mulf %323, %324 : vector<8x32xf32>
    %326 = vector.broadcast %305 : vector<1x32xf32> to vector<8x32xf32>
    %327 = arith.addf %325, %326 : vector<8x32xf32>
    %328 = vector.shape_cast %327 : vector<8x32xf32> to vector<1x8x32xf32>
    %c0_128 = arith.constant 0 : index
    %c0_129 = arith.constant 0 : index
    %c0_130 = arith.constant 0 : index
    %329 = vector.load %arg19[%c0_128, %c0_129, %c0_130] : memref<1x8x32xf32, #tpu.memory_space<vmem>>, vector<1x8x32xf32>
    tpu.vector_store %arg19[%c0_128, %c0_129, %c0_130], %328 {strides = array<i32>} : memref<1x8x32xf32, #tpu.memory_space<vmem>>, vector<1x8x32xf32>,
    return
  }
  func.func @transform_0(%arg0: i32) -> (i32, i32, i32) {
    %c0_i32 = arith.constant 0 : i32
    %c0_i32_0 = arith.constant 0 : i32
    %c0_i32_1 = arith.constant 0 : i32
    return %arg0, %c0_i32, %c0_i32_0 : i32, i32, i32
  }
  func.func @transform_1(%arg0: i32) -> (i32, i32, i32) {
    %c0_i32 = arith.constant 0 : i32
    %c0_i32_0 = arith.constant 0 : i32
    %c0_i32_1 = arith.constant 0 : i32
    return %arg0, %c0_i32, %c0_i32_0 : i32, i32, i32
  }
  func.func @transform_2(%arg0: i32) -> (i32, i32, i32) {
    %c0_i32 = arith.constant 0 : i32
    %c0_i32_0 = arith.constant 0 : i32
    %c0_i32_1 = arith.constant 0 : i32
    return %arg0, %c0_i32, %c0_i32_0 : i32, i32, i32
  }
  func.func @transform_3(%arg0: i32) -> (i32, i32, i32) {
    %c0_i32 = arith.constant 0 : i32
    %c0_i32_0 = arith.constant 0 : i32
    %c0_i32_1 = arith.constant 0 : i32
    return %arg0, %c0_i32, %c0_i32_0 : i32, i32, i32
  }
  func.func @transform_4(%arg0: i32) -> (i32, i32) {
    %c0_i32 = arith.constant 0 : i32
    %c0_i32_0 = arith.constant 0 : i32
    %c0_i32_1 = arith.constant 0 : i32
    return %c0_i32, %c0_i32_0 : i32, i32
  }
  func.func @transform_5(%arg0: i32) -> (i32, i32) {
    %c0_i32 = arith.constant 0 : i32
    %c0_i32_0 = arith.constant 0 : i32
    %c0_i32_1 = arith.constant 0 : i32
    return %c0_i32, %c0_i32_0 : i32, i32
  }
  func.func @transform_6(%arg0: i32) -> (i32, i32) {
    %c0_i32 = arith.constant 0 : i32
    %c0_i32_0 = arith.constant 0 : i32
    %c0_i32_1 = arith.constant 0 : i32
    return %c0_i32, %c0_i32_0 : i32, i32
  }
  func.func @transform_7(%arg0: i32) -> (i32, i32) {
    %c0_i32 = arith.constant 0 : i32
    %c0_i32_0 = arith.constant 0 : i32
    %c0_i32_1 = arith.constant 0 : i32
    return %c0_i32, %c0_i32_0 : i32, i32
  }
  func.func @transform_8(%arg0: i32) -> (i32, i32) {
    %c0_i32 = arith.constant 0 : i32
    %c0_i32_0 = arith.constant 0 : i32
    %c0_i32_1 = arith.constant 0 : i32
    return %c0_i32, %c0_i32_0 : i32, i32
  }
  func.func @transform_9(%arg0: i32) -> (i32, i32) {
    %c0_i32 = arith.constant 0 : i32
    %c0_i32_0 = arith.constant 0 : i32
    %c0_i32_1 = arith.constant 0 : i32
    return %c0_i32, %c0_i32_0 : i32, i32
  }
  func.func @transform_10(%arg0: i32) -> (i32, i32) {
    %c0_i32 = arith.constant 0 : i32
    %c0_i32_0 = arith.constant 0 : i32
    %c0_i32_1 = arith.constant 0 : i32
    return %c0_i32, %c0_i32_0 : i32, i32
  }
  func.func @transform_11(%arg0: i32) -> (i32, i32) {
    %c0_i32 = arith.constant 0 : i32
    %c0_i32_0 = arith.constant 0 : i32
    %c0_i32_1 = arith.constant 0 : i32
    return %c0_i32, %c0_i32_0 : i32, i32
  }
  func.func @transform_12(%arg0: i32) -> (i32, i32) {
    %c0_i32 = arith.constant 0 : i32
    %c0_i32_0 = arith.constant 0 : i32
    %c0_i32_1 = arith.constant 0 : i32
    return %c0_i32, %c0_i32_0 : i32, i32
  }
  func.func @transform_13(%arg0: i32) -> (i32, i32) {
    %c0_i32 = arith.constant 0 : i32
    %c0_i32_0 = arith.constant 0 : i32
    %c0_i32_1 = arith.constant 0 : i32
    return %c0_i32, %c0_i32_0 : i32, i32
  }
  func.func @transform_14(%arg0: i32) -> (i32, i32) {
    %c0_i32 = arith.constant 0 : i32
    %c0_i32_0 = arith.constant 0 : i32
    %c0_i32_1 = arith.constant 0 : i32
    return %c0_i32, %c0_i32_0 : i32, i32
  }
  func.func @transform_15(%arg0: i32) -> (i32, i32) {
    %c0_i32 = arith.constant 0 : i32
    %c0_i32_0 = arith.constant 0 : i32
    %c0_i32_1 = arith.constant 0 : i32
    return %c0_i32, %c0_i32_0 : i32, i32
  }
  func.func @transform_16(%arg0: i32) -> (i32, i32) {
    %c0_i32 = arith.constant 0 : i32
    %c0_i32_0 = arith.constant 0 : i32
    %c0_i32_1 = arith.constant 0 : i32
    return %c0_i32, %c0_i32_0 : i32, i32
  }
  func.func @transform_17(%arg0: i32) -> (i32, i32) {
    %c0_i32 = arith.constant 0 : i32
    %c0_i32_0 = arith.constant 0 : i32
    %c0_i32_1 = arith.constant 0 : i32
    return %c0_i32, %c0_i32_0 : i32, i32
  }
  func.func @transform_18(%arg0: i32) -> (i32, i32, i32) {
    %c0_i32 = arith.constant 0 : i32
    %c0_i32_0 = arith.constant 0 : i32
    %c0_i32_1 = arith.constant 0 : i32
    return %arg0, %c0_i32, %c0_i32_0 : i32, i32, i32
  }
}

</mosaic_0001>

<llo_original>
// kernel: tpu_custom_call.1
$region0: #{tpu_custom_call.1}
  #allocation0 [shape = 'u32[]', space=smem, size = 0x4, offset = 0x4, fixed_abs, tag = 'smem constant byte address 0x4 - core index']
  #allocation1 [shape = 'u32[144,128]{1,0:T(1,128)}', space=vmem, size = 0x12000, scoped, tag = 'internal scratch']
  %s0 = inlined_call_operand.hbm [shape: f32[2,8,32], index: 0, kind: input, shape index: {}]
  %s1 = inlined_call_operand.hbm [shape: f32[2,16,32], index: 1, kind: input, shape index: {}]
  %s2 = inlined_call_operand.hbm [shape: f32[2,8,32], index: 2, kind: input, shape index: {}]
  %s3 = inlined_call_operand.hbm [shape: f32[2,16,32], index: 3, kind: input, shape index: {}]
  %s4 = inlined_call_operand.hbm [shape: bf16[32,96], index: 4, kind: input, shape index: {}]
  %s5 = inlined_call_operand.hbm [shape: f32[1,96], index: 5, kind: input, shape index: {}]
  %s6 = inlined_call_operand.hbm [shape: f32[32,32], index: 6, kind: input, shape index: {}]
  %s7 = inlined_call_operand.hbm [shape: f32[1,32], index: 7, kind: input, shape index: {}]
  %s8 = inlined_call_operand.hbm [shape: bf16[32,96], index: 8, kind: input, shape index: {}]
  %s9 = inlined_call_operand.hbm [shape: f32[1,96], index: 9, kind: input, shape index: {}]
  %s10 = inlined_call_operand.hbm [shape: f32[32,32], index: 10, kind: input, shape index: {}]
  %s11 = inlined_call_operand.hbm [shape: f32[1,32], index: 11, kind: input, shape index: {}]
  %s12 = inlined_call_operand.hbm [shape: bf16[32,64], index: 12, kind: input, shape index: {}]
  %s13 = inlined_call_operand.hbm [shape: f32[1,64], index: 13, kind: input, shape index: {}]
  %s14 = inlined_call_operand.hbm [shape: bf16[64,32], index: 14, kind: input, shape index: {}]
  %s15 = inlined_call_operand.hbm [shape: f32[1,32], index: 15, kind: input, shape index: {}]
  %s16 = inlined_call_operand.hbm [shape: f32[3,32], index: 16, kind: input, shape index: {}]
  %s17 = inlined_call_operand.hbm [shape: f32[3,32], index: 17, kind: input, shape index: {}]
  %s18 = inlined_call_operand.hbm [shape: f32[2,8,32], index: 18, kind: output, shape index: {}]
  %s19 = sld [smem:[#allocation0]]
  $region177: #{tpu_custom_call.1} parent=0
    _
  %s21 = ssub.s32 1, %s19
  %s22 = scalar_select 0, %s21, %s19
  $region1: #{tpu_custom_call.1} parent=0
    #allocation2 [shape = 'u8[8192]{0}', space=vmem, size = 0x2000, scoped, tag = 'input window, operand 0']
    #allocation3 [shape = 's32[2]{0}', space=sflag, size = 0x8, scoped, tag = 'scoped memory for tpu_custom_call.1']
    #allocation4 [shape = 's32[2]{0}', space=sflag, size = 0x8, scoped, tag = 'scoped memory for tpu_custom_call.1']
    #allocation5 [shape = 'u8[16384]{0}', space=vmem, size = 0x4000, scoped, tag = 'input window, operand 1']
    #allocation6 [shape = 's32[2]{0}', space=sflag, size = 0x8, scoped, tag = 'scoped memory for tpu_custom_call.1']
    #allocation7 [shape = 'u8[8192]{0}', space=vmem, size = 0x2000, scoped, tag = 'input window, operand 2']
    #allocation8 [shape = 'u8[16384]{0}', space=vmem, size = 0x4000, scoped, tag = 'input window, operand 3']
    #allocation9 [shape = 's32[2]{0}', space=sflag, size = 0x8, scoped, tag = 'scoped memory for tpu_custom_call.1']
    #allocation10 [shape = 'u8[8192]{0}', space=vmem, size = 0x2000, scoped, tag = 'input window, operand 4, single buffered']
    #allocation11 [shape = 'u8[512]{0}', space=vmem, size = 0x400, scoped, tag = 'input window, operand 5, single buffered']
    #allocation12 [shape = 's32[1]{0}', space=sflag, size = 0x4, scoped, tag = 'scoped memory for tpu_custom_call.1']
    #allocation13 [shape = 'u8[16384]{0}', space=vmem, size = 0x4000, scoped, tag = 'input window, operand 6, single buffered']
    #allocation14 [shape = 'u8[512]{0}', space=vmem, size = 0x400, scoped, tag = 'input window, operand 7, single buffered']
    #allocation15 [shape = 's32[1]{0}', space=sflag, size = 0x4, scoped, tag = 'scoped memory for tpu_custom_call.1']
    #allocation16 [shape = 'u8[8192]{0}', space=vmem, size = 0x2000, scoped, tag = 'input window, operand 8, single buffered']
    #allocation17 [shape = 'u8[512]{0}', space=vmem, size = 0x400, scoped, tag = 'input window, operand 9, single buffered']
    #allocation18 [shape = 's32[1]{0}', space=sflag, size = 0x4, scoped, tag = 'scoped memory for tpu_custom_call.1']
    #allocation19 [shape = 'u8[16384]{0}', space=vmem, size = 0x4000, scoped, tag = 'input window, operand 10, single buffered']
    #allocation20 [shape = 'u8[512]{0}', space=vmem, size = 0x400, scoped, tag = 'input window, operand 11, single buffered']
    #allocation21 [shape = 's32[1]{0}', space=sflag, size = 0x4, scoped, tag = 'scoped memory for tpu_custom_call.1']
    #allocation22 [shape = 'u8[8192]{0}', space=vmem, size = 0x2000, scoped, tag = 'input window, operand 12, single buffered']
    #allocation23 [shape = 'u8[512]{0}', space=vmem, size = 0x400, scoped, tag = 'input window, operand 13, single buffered']
    #allocation24 [shape = 's32[1]{0}', space=sflag, size = 0x4, scoped, tag = 'scoped memory for tpu_custom_call.1']
    #allocation25 [shape = 'u8[16384]{0}', space=vmem, size = 0x4000, scoped, tag = 'input window, operand 14, single buffered']
    #allocation26 [shape = 'u8[512]{0}', space=vmem, size = 0x400, scoped, tag = 'input window, operand 15, single buffered']
    #allocation27 [shape = 's32[1]{0}', space=sflag, size = 0x4, scoped, tag = 'scoped memory for tpu_custom_call.1']
    #allocation28 [shape = 'u8[2048]{0}', space=vmem, size = 0x800, scoped, tag = 'input window, operand 16, single buffered']
    #allocation29 [shape = 'u8[2048]{0}', space=vmem, size = 0x800, scoped, tag = 'input window, operand 17, single buffered']
    #allocation30 [shape = 's32[1]{0}', space=sflag, size = 0x4, scoped, tag = 'scoped memory for tpu_custom_call.1']
    #allocation31 [shape = 'u8[8192]{0}', space=vmem, size = 0x2000, scoped, tag = 'output window, operand 0']
    %23 = vsyncpa [#allocation3], 0
    %s24 = scalar_lea.sflag [#allocation3], 1
    %25 = vsyncpa %s24, 0
    %26 = vsyncpa [#allocation6], 0
    %s27 = scalar_lea.sflag [#allocation6], 1
    %28 = vsyncpa %s27, 0
    %29 = vsyncpa [#allocation9], 0
    %s30 = scalar_lea.sflag [#allocation9], 1
    %31 = vsyncpa %s30, 0
    %32 = vsyncpa [#allocation12], 0
    %33 = vsyncpa [#allocation15], 0
    %34 = vsyncpa [#allocation18], 0
    %35 = vsyncpa [#allocation21], 0
    %36 = vsyncpa [#allocation24], 0
    %37 = vsyncpa [#allocation27], 0
    %38 = vsyncpa [#allocation30], 0
    %39 = vsyncpa [#allocation4], 0
    %s40 = scalar_lea.sflag [#allocation4], 1
    %41 = vsyncpa %s40, 0
    loop: start=0, step=1, limit=4
    $region2: #{tpu_custom_call.1} parent=1 // loop_pre_header
      _
    $region3: #{tpu_custom_call.1} parent=1 // loop_header
      %s43 = sphi 0, %s47
      %p44 = scmp.ge.s32.totalorder %s43, 4
      %s53 = sphi 0, %s55
      %s56 = sphi 0, %s53
      %s57 = sphi 0, %s56
      %s73 = sphi 0, %s57
      %s79 = sphi 0, %s81
      %s82 = sphi 0, %s79
      %s83 = sphi 0, %s82
      %s99 = sphi 0, %s83
      %s105 = sphi 0, %s107
      %s108 = sphi 0, %s105
      %s109 = sphi 0, %s108
      %s125 = sphi 0, %s109
      %s131 = sphi 0, %s133
      %s134 = sphi 0, %s131
      %s135 = sphi 0, %s134
      %s151 = sphi 0, %s135
      %s155 = sphi 0, %s155
      %s157 = sphi 0, %s155
      %s158 = sphi 0, %s157
      %s172 = sphi 0, %s158
      %s176 = sphi 0, %s176
      %s178 = sphi 0, %s176
      %s179 = sphi 0, %s178
      %s193 = sphi 0, %s179
      %s197 = sphi 0, %s197
      %s199 = sphi 0, %s197
      %s200 = sphi 0, %s199
      %s214 = sphi 0, %s200
      %s218 = sphi 0, %s218
      %s220 = sphi 0, %s218
      %s221 = sphi 0, %s220
      %s235 = sphi 0, %s221
      %s239 = sphi 0, %s239
      %s241 = sphi 0, %s239
      %s242 = sphi 0, %s241
      %s256 = sphi 0, %s242
      %s260 = sphi 0, %s260
      %s262 = sphi 0, %s260
      %s263 = sphi 0, %s262
      %s277 = sphi 0, %s263
      %s281 = sphi 0, %s281
      %s283 = sphi 0, %s281
      %s284 = sphi 0, %s283
      %s298 = sphi 0, %s284
      %s302 = sphi 0, %s302
      %s304 = sphi 0, %s302
      %s305 = sphi 0, %s304
      %s319 = sphi 0, %s305
      %s323 = sphi 0, %s323
      %s325 = sphi 0, %s323
      %s326 = sphi 0, %s325
      %s340 = sphi 0, %s326
      %s344 = sphi 0, %s344
      %s346 = sphi 0, %s344
      %s347 = sphi 0, %s346
      %s361 = sphi 0, %s347
      %s365 = sphi 0, %s365
      %s367 = sphi 0, %s365
      %s368 = sphi 0, %s367
      %s382 = sphi 0, %s368
      %s386 = sphi 0, %s386
      %s388 = sphi 0, %s386
      %s389 = sphi 0, %s388
      %s403 = sphi 0, %s389
      %s407 = sphi 0, %s407
      %s409 = sphi 0, %s407
      %s410 = sphi 0, %s409
      %s424 = sphi 0, %s410
      %s428 = sphi 0, %s428
      %s430 = sphi 0, %s428
      %s431 = sphi 0, %s430
      %s445 = sphi 0, %s431
      %s451 = sphi 0, %s453
      %s454 = sphi 0, %s451
      %s455 = sphi 0, %s454
      %s471 = sphi 0, %s455
    $region4: #{tpu_custom_call.1} parent=1 // loop_header_branch
      %46 = sbr.rel (%p44) target = $region8
    $region5: #{tpu_custom_call.1} parent=1 // loop_body
      %s48 = ssub.s32 %s43, 1
      %s49 = ssub.s32 %s43, 2
      %s50 = sadd.s32 %s43, 1
      %s51 = ssub.s32 %s43, %s50
      %p52 = scmp.eq.s32.totalorder %s51, 0
      %s54 = sadd.s32 %s53, 1
      %s55 = scalar_select %p52, %s53, %s54
      %p58 = pneg %p52
      %p59 = scmp.eq.s32.totalorder %s43, 1
      %p60 = por %p58, %p59
      %p61 = scmp.ne.s32.totalorder %s53, %s56
      %p62 = scmp.eq.s32.totalorder %s43, 0
      %p63 = por %p61, %p62
      %p64 = scmp.ne.s32.totalorder %s53, %s56
      %p65 = scmp.eq.s32.totalorder %s48, 1
      %p66 = por %p64, %p65
      %p67 = scmp.ne.s32.totalorder %s56, %s57
      %p68 = scmp.eq.s32.totalorder %s48, 0
      %p69 = por %p67, %p68
      %p70 = scmp.ne.s32.totalorder %s56, %s57
      %p71 = scmp.eq.s32.totalorder %s49, 1
      %p72 = por %p70, %p71
      %p74 = scmp.ne.s32.totalorder %s57, %s73
      %p75 = scmp.eq.s32.totalorder %s49, 0
      %p76 = por %p74, %p75
      %s77 = ssub.s32 %s43, %s50
      %p78 = scmp.eq.s32.totalorder %s77, 0
      %s80 = sadd.s32 %s79, 1
      %s81 = scalar_select %p78, %s79, %s80
      %p84 = pneg %p78
      %p85 = scmp.eq.s32.totalorder %s43, 1
      %p86 = por %p84, %p85
      %p87 = scmp.ne.s32.totalorder %s79, %s82
      %p88 = scmp.eq.s32.totalorder %s43, 0
      %p89 = por %p87, %p88
      %p90 = scmp.ne.s32.totalorder %s79, %s82
      %p91 = scmp.eq.s32.totalorder %s48, 1
      %p92 = por %p90, %p91
      %p93 = scmp.ne.s32.totalorder %s82, %s83
      %p94 = scmp.eq.s32.totalorder %s48, 0
      %p95 = por %p93, %p94
      %p96 = scmp.ne.s32.totalorder %s82, %s83
      %p97 = scmp.eq.s32.totalorder %s49, 1
      %p98 = por %p96, %p97
      %p100 = scmp.ne.s32.totalorder %s83, %s99
      %p101 = scmp.eq.s32.totalorder %s49, 0
      %p102 = por %p100, %p101
      %s103 = ssub.s32 %s43, %s50
      %p104 = scmp.eq.s32.totalorder %s103, 0
      %s106 = sadd.s32 %s105, 1
      %s107 = scalar_select %p104, %s105, %s106
      %p110 = pneg %p104
      %p111 = scmp.eq.s32.totalorder %s43, 1
      %p112 = por %p110, %p111
      %p113 = scmp.ne.s32.totalorder %s105, %s108
      %p114 = scmp.eq.s32.totalorder %s43, 0
      %p115 = por %p113, %p114
      %p116 = scmp.ne.s32.totalorder %s105, %s108
      %p117 = scmp.eq.s32.totalorder %s48, 1
      %p118 = por %p116, %p117
      %p119 = scmp.ne.s32.totalorder %s108, %s109
      %p120 = scmp.eq.s32.totalorder %s48, 0
      %p121 = por %p119, %p120
      %p122 = scmp.ne.s32.totalorder %s108, %s109
      %p123 = scmp.eq.s32.totalorder %s49, 1
      %p124 = por %p122, %p123
      %p126 = scmp.ne.s32.totalorder %s109, %s125
      %p127 = scmp.eq.s32.totalorder %s49, 0
      %p128 = por %p126, %p127
      %s129 = ssub.s32 %s43, %s50
      %p130 = scmp.eq.s32.totalorder %s129, 0
      %s132 = sadd.s32 %s131, 1
      %s133 = scalar_select %p130, %s131, %s132
      %p136 = pneg %p130
      %p137 = scmp.eq.s32.totalorder %s43, 1
      %p138 = por %p136, %p137
      %p139 = scmp.ne.s32.totalorder %s131, %s134
      %p140 = scmp.eq.s32.totalorder %s43, 0
      %p141 = por %p139, %p140
      %p142 = scmp.ne.s32.totalorder %s131, %s134
      %p143 = scmp.eq.s32.totalorder %s48, 1
      %p144 = por %p142, %p143
      %p145 = scmp.ne.s32.totalorder %s134, %s135
      %p146 = scmp.eq.s32.totalorder %s48, 0
      %p147 = por %p145, %p146
      %p148 = scmp.ne.s32.totalorder %s134, %s135
      %p149 = scmp.eq.s32.totalorder %s49, 1
      %p150 = por %p148, %p149
      %p152 = scmp.ne.s32.totalorder %s135, %s151
      %p153 = scmp.eq.s32.totalorder %s49, 0
      %p154 = por %p152, %p153
      %s156 = sadd.s32 %s155, 1
      %p159 = scmp.eq.s32.totalorder %s43, 1
      %p160 = scmp.ne.s32.totalorder %s155, %s157
      %p161 = scmp.eq.s32.totalorder %s43, 0
      %p162 = por %p160, %p161
      %p163 = scmp.ne.s32.totalorder %s155, %s157
      %p164 = scmp.eq.s32.totalorder %s48, 1
      %p165 = por %p163, %p164
      %p166 = scmp.ne.s32.totalorder %s157, %s158
      %p167 = scmp.eq.s32.totalorder %s48, 0
      %p168 = por %p166, %p167
      %p169 = scmp.ne.s32.totalorder %s157, %s158
      %p170 = scmp.eq.s32.totalorder %s49, 1
      %p171 = por %p169, %p170
      %p173 = scmp.ne.s32.totalorder %s158, %s172
      %p174 = scmp.eq.s32.totalorder %s49, 0
      %p175 = por %p173, %p174
      %s177 = sadd.s32 %s176, 1
      %p180 = scmp.eq.s32.totalorder %s43, 1
      %p181 = scmp.ne.s32.totalorder %s176, %s178
      %p182 = scmp.eq.s32.totalorder %s43, 0
      %p183 = por %p181, %p182
      %p184 = scmp.ne.s32.totalorder %s176, %s178
      %p185 = scmp.eq.s32.totalorder %s48, 1
      %p186 = por %p184, %p185
      %p187 = scmp.ne.s32.totalorder %s178, %s179
      %p188 = scmp.eq.s32.totalorder %s48, 0
      %p189 = por %p187, %p188
      %p190 = scmp.ne.s32.totalorder %s178, %s179
      %p191 = scmp.eq.s32.totalorder %s49, 1
      %p192 = por %p190, %p191
      %p194 = scmp.ne.s32.totalorder %s179, %s193
      %p195 = scmp.eq.s32.totalorder %s49, 0
      %p196 = por %p194, %p195
      %s198 = sadd.s32 %s197, 1
      %p201 = scmp.eq.s32.totalorder %s43, 1
      %p202 = scmp.ne.s32.totalorder %s197, %s199
      %p203 = scmp.eq.s32.totalorder %s43, 0
      %p204 = por %p202, %p203
      %p205 = scmp.ne.s32.totalorder %s197, %s199
      %p206 = scmp.eq.s32.totalorder %s48, 1
      %p207 = por %p205, %p206
      %p208 = scmp.ne.s32.totalorder %s199, %s200
      %p209 = scmp.eq.s32.totalorder %s48, 0
      %p210 = por %p208, %p209
      %p211 = scmp.ne.s32.totalorder %s199, %s200
      %p212 = scmp.eq.s32.totalorder %s49, 1
      %p213 = por %p211, %p212
      %p215 = scmp.ne.s32.totalorder %s200, %s214
      %p216 = scmp.eq.s32.totalorder %s49, 0
      %p217 = por %p215, %p216
      %s219 = sadd.s32 %s218, 1
      %p222 = scmp.eq.s32.totalorder %s43, 1
      %p223 = scmp.ne.s32.totalorder %s218, %s220
      %p224 = scmp.eq.s32.totalorder %s43, 0
      %p225 = por %p223, %p224
      %p226 = scmp.ne.s32.totalorder %s218, %s220
      %p227 = scmp.eq.s32.totalorder %s48, 1
      %p228 = por %p226, %p227
      %p229 = scmp.ne.s32.totalorder %s220, %s221
      %p230 = scmp.eq.s32.totalorder %s48, 0
      %p231 = por %p229, %p230
      %p232 = scmp.ne.s32.totalorder %s220, %s221
      %p233 = scmp.eq.s32.totalorder %s49, 1
      %p234 = por %p232, %p233
      %p236 = scmp.ne.s32.totalorder %s221, %s235
      %p237 = scmp.eq.s32.totalorder %s49, 0
      %p238 = por %p236, %p237
      %s240 = sadd.s32 %s239, 1
      %p243 = scmp.eq.s32.totalorder %s43, 1
      %p244 = scmp.ne.s32.totalorder %s239, %s241
      %p245 = scmp.eq.s32.totalorder %s43, 0
      %p246 = por %p244, %p245
      %p247 = scmp.ne.s32.totalorder %s239, %s241
      %p248 = scmp.eq.s32.totalorder %s48, 1
      %p249 = por %p247, %p248
      %p250 = scmp.ne.s32.totalorder %s241, %s242
      %p251 = scmp.eq.s32.totalorder %s48, 0
      %p252 = por %p250, %p251
      %p253 = scmp.ne.s32.totalorder %s241, %s242
      %p254 = scmp.eq.s32.totalorder %s49, 1
      %p255 = por %p253, %p254
      %p257 = scmp.ne.s32.totalorder %s242, %s256
      %p258 = scmp.eq.s32.totalorder %s49, 0
      %p259 = por %p257, %p258
      %s261 = sadd.s32 %s260, 1
      %p264 = scmp.eq.s32.totalorder %s43, 1
      %p265 = scmp.ne.s32.totalorder %s260, %s262
      %p266 = scmp.eq.s32.totalorder %s43, 0
      %p267 = por %p265, %p266
      %p268 = scmp.ne.s32.totalorder %s260, %s262
      %p269 = scmp.eq.s32.totalorder %s48, 1
      %p270 = por %p268, %p269
      %p271 = scmp.ne.s32.totalorder %s262, %s263
      %p272 = scmp.eq.s32.totalorder %s48, 0
      %p273 = por %p271, %p272
      %p274 = scmp.ne.s32.totalorder %s262, %s263
      %p275 = scmp.eq.s32.totalorder %s49, 1
      %p276 = por %p274, %p275
      %p278 = scmp.ne.s32.totalorder %s263, %s277
      %p279 = scmp.eq.s32.totalorder %s49, 0
      %p280 = por %p278, %p279
      %s282 = sadd.s32 %s281, 1
      %p285 = scmp.eq.s32.totalorder %s43, 1
      %p286 = scmp.ne.s32.totalorder %s281, %s283
      %p287 = scmp.eq.s32.totalorder %s43, 0
      %p288 = por %p286, %p287
      %p289 = scmp.ne.s32.totalorder %s281, %s283
      %p290 = scmp.eq.s32.totalorder %s48, 1
      %p291 = por %p289, %p290
      %p292 = scmp.ne.s32.totalorder %s283, %s284
      %p293 = scmp.eq.s32.totalorder %s48, 0
      %p294 = por %p292, %p293
      %p295 = scmp.ne.s32.totalorder %s283, %s284
      %p296 = scmp.eq.s32.totalorder %s49, 1
      %p297 = por %p295, %p296
      %p299 = scmp.ne.s32.totalorder %s284, %s298
      %p300 = scmp.eq.s32.totalorder %s49, 0
      %p301 = por %p299, %p300
      %s303 = sadd.s32 %s302, 1
      %p306 = scmp.eq.s32.totalorder %s43, 1
      %p307 = scmp.ne.s32.totalorder %s302, %s304
      %p308 = scmp.eq.s32.totalorder %s43, 0
      %p309 = por %p307, %p308
      %p310 = scmp.ne.s32.totalorder %s302, %s304
      %p311 = scmp.eq.s32.totalorder %s48, 1
      %p312 = por %p310, %p311
      %p313 = scmp.ne.s32.totalorder %s304, %s305
      %p314 = scmp.eq.s32.totalorder %s48, 0
      %p315 = por %p313, %p314
      %p316 = scmp.ne.s32.totalorder %s304, %s305
      %p317 = scmp.eq.s32.totalorder %s49, 1
      %p318 = por %p316, %p317
      %p320 = scmp.ne.s32.totalorder %s305, %s319
      %p321 = scmp.eq.s32.totalorder %s49, 0
      %p322 = por %p320, %p321
      %s324 = sadd.s32 %s323, 1
      %p327 = scmp.eq.s32.totalorder %s43, 1
      %p328 = scmp.ne.s32.totalorder %s323, %s325
      %p329 = scmp.eq.s32.totalorder %s43, 0
      %p330 = por %p328, %p329
      %p331 = scmp.ne.s32.totalorder %s323, %s325
      %p332 = scmp.eq.s32.totalorder %s48, 1
      %p333 = por %p331, %p332
      %p334 = scmp.ne.s32.totalorder %s325, %s326
      %p335 = scmp.eq.s32.totalorder %s48, 0
      %p336 = por %p334, %p335
      %p337 = scmp.ne.s32.totalorder %s325, %s326
      %p338 = scmp.eq.s32.totalorder %s49, 1
      %p339 = por %p337, %p338
      %p341 = scmp.ne.s32.totalorder %s326, %s340
      %p342 = scmp.eq.s32.totalorder %s49, 0
      %p343 = por %p341, %p342
      %s345 = sadd.s32 %s344, 1
      %p348 = scmp.eq.s32.totalorder %s43, 1
      %p349 = scmp.ne.s32.totalorder %s344, %s346
      %p350 = scmp.eq.s32.totalorder %s43, 0
      %p351 = por %p349, %p350
      %p352 = scmp.ne.s32.totalorder %s344, %s346
      %p353 = scmp.eq.s32.totalorder %s48, 1
      %p354 = por %p352, %p353
      %p355 = scmp.ne.s32.totalorder %s346, %s347
      %p356 = scmp.eq.s32.totalorder %s48, 0
      %p357 = por %p355, %p356
      %p358 = scmp.ne.s32.totalorder %s346, %s347
      %p359 = scmp.eq.s32.totalorder %s49, 1
      %p360 = por %p358, %p359
      %p362 = scmp.ne.s32.totalorder %s347, %s361
      %p363 = scmp.eq.s32.totalorder %s49, 0
      %p364 = por %p362, %p363
      %s366 = sadd.s32 %s365, 1
      %p369 = scmp.eq.s32.totalorder %s43, 1
      %p370 = scmp.ne.s32.totalorder %s365, %s367
      %p371 = scmp.eq.s32.totalorder %s43, 0
      %p372 = por %p370, %p371
      %p373 = scmp.ne.s32.totalorder %s365, %s367
      %p374 = scmp.eq.s32.totalorder %s48, 1
      %p375 = por %p373, %p374
      %p376 = scmp.ne.s32.totalorder %s367, %s368
      %p377 = scmp.eq.s32.totalorder %s48, 0
      %p378 = por %p376, %p377
      %p379 = scmp.ne.s32.totalorder %s367, %s368
      %p380 = scmp.eq.s32.totalorder %s49, 1
      %p381 = por %p379, %p380
      %p383 = scmp.ne.s32.totalorder %s368, %s382
      %p384 = scmp.eq.s32.totalorder %s49, 0
      %p385 = por %p383, %p384
      %s387 = sadd.s32 %s386, 1
      %p390 = scmp.eq.s32.totalorder %s43, 1
      %p391 = scmp.ne.s32.totalorder %s386, %s388
      %p392 = scmp.eq.s32.totalorder %s43, 0
      %p393 = por %p391, %p392
      %p394 = scmp.ne.s32.totalorder %s386, %s388
      %p395 = scmp.eq.s32.totalorder %s48, 1
      %p396 = por %p394, %p395
      %p397 = scmp.ne.s32.totalorder %s388, %s389
      %p398 = scmp.eq.s32.totalorder %s48, 0
      %p399 = por %p397, %p398
      %p400 = scmp.ne.s32.totalorder %s388, %s389
      %p401 = scmp.eq.s32.totalorder %s49, 1
      %p402 = por %p400, %p401
      %p404 = scmp.ne.s32.totalorder %s389, %s403
      %p405 = scmp.eq.s32.totalorder %s49, 0
      %p406 = por %p404, %p405
      %s408 = sadd.s32 %s407, 1
      %p411 = scmp.eq.s32.totalorder %s43, 1
      %p412 = scmp.ne.s32.totalorder %s407, %s409
      %p413 = scmp.eq.s32.totalorder %s43, 0
      %p414 = por %p412, %p413
      %p415 = scmp.ne.s32.totalorder %s407, %s409
      %p416 = scmp.eq.s32.totalorder %s48, 1
      %p417 = por %p415, %p416
      %p418 = scmp.ne.s32.totalorder %s409, %s410
      %p419 = scmp.eq.s32.totalorder %s48, 0
      %p420 = por %p418, %p419
      %p421 = scmp.ne.s32.totalorder %s409, %s410
      %p422 = scmp.eq.s32.totalorder %s49, 1
      %p423 = por %p421, %p422
      %p425 = scmp.ne.s32.totalorder %s410, %s424
      %p426 = scmp.eq.s32.totalorder %s49, 0
      %p427 = por %p425, %p426
      %s429 = sadd.s32 %s428, 1
      %p432 = scmp.eq.s32.totalorder %s43, 1
      %p433 = scmp.ne.s32.totalorder %s428, %s430
      %p434 = scmp.eq.s32.totalorder %s43, 0
      %p435 = por %p433, %p434
      %p436 = scmp.ne.s32.totalorder %s428, %s430
      %p437 = scmp.eq.s32.totalorder %s48, 1
      %p438 = por %p436, %p437
      %p439 = scmp.ne.s32.totalorder %s430, %s431
      %p440 = scmp.eq.s32.totalorder %s48, 0
      %p441 = por %p439, %p440
      %p442 = scmp.ne.s32.totalorder %s430, %s431
      %p443 = scmp.eq.s32.totalorder %s49, 1
      %p444 = por %p442, %p443
      %p446 = scmp.ne.s32.totalorder %s431, %s445
      %p447 = scmp.eq.s32.totalorder %s49, 0
      %p448 = por %p446, %p447
      %s449 = ssub.s32 %s43, %s50
      %p450 = scmp.eq.s32.totalorder %s449, 0
      %s452 = sadd.s32 %s451, 1
      %s453 = scalar_select %p450, %s451, %s452
      %p456 = pneg %p450
      %p457 = scmp.eq.s32.totalorder %s43, 1
      %p458 = por %p456, %p457
      %p459 = scmp.ne.s32.totalorder %s451, %s454
      %p460 = scmp.eq.s32.totalorder %s43, 0
      %p461 = por %p459, %p460
      %p462 = scmp.ne.s32.totalorder %s451, %s454
      %p463 = scmp.eq.s32.totalorder %s48, 1
      %p464 = por %p462, %p463
      %p465 = scmp.ne.s32.totalorder %s454, %s455
      %p466 = scmp.eq.s32.totalorder %s48, 0
      %p467 = por %p465, %p466
      %p468 = scmp.ne.s32.totalorder %s454, %s455
      %p469 = scmp.eq.s32.totalorder %s49, 1
      %p470 = por %p468, %p469
      %p472 = scmp.ne.s32.totalorder %s455, %s471
      %p473 = scmp.eq.s32.totalorder %s49, 0
      %p474 = por %p472, %p473
      %p475 = scmp.le.s32.totalorder 1, %s43
      %p476 = scmp.lt.s32.totalorder %s43, 3
      %p477 = pnand %p475, %p476
      %p478 = pneg %p477
      // Predicated region
      $region9: #{tpu_custom_call.1} parent=5 // pred_check
        _
      $region10: #{tpu_custom_call.1} parent=5 // pred_check_branch
        %480 = sbr.rel (%p477) target = $region12
      $region11: #{tpu_custom_call.1} parent=5 // pred_region
        %s481 = ssub.s32 %s43, 1
        // Predicated region
        $region13: #{tpu_custom_call.1} parent=11 // pred_check
          %p482 = pneg %p168
        $region14: #{tpu_custom_call.1} parent=11 // pred_check_branch
          %484 = sbr.rel (%p482) target = $region16
        $region15: #{tpu_custom_call.1} parent=11 // pred_region
          %s486 = ssub.s32 256, 256
          %487 = vsyncadd [#allocation9], %s486
          %s488 = sshll.u32 [#allocation10], 4
          %s489 = int_to_ptr.vmem [resolvable:$true] %s488
          %494 = dma.hbm_to_vmem [thread:$0]  %s4, 256, %s489, [#allocation9], 64, 64, 4
        $region16: #{tpu_custom_call.1} parent=11 // pred_fallthru
          _
        // Predicated region
        $region17: #{tpu_custom_call.1} parent=11 // pred_check
          %p495 = pneg %p189
        $region18: #{tpu_custom_call.1} parent=11 // pred_check_branch
          %497 = sbr.rel (%p495) target = $region20
        $region19: #{tpu_custom_call.1} parent=11 // pred_region
          %s499 = ssub.s32 16, 16
          %500 = vsyncadd [#allocation12], %s499
          %s502 = sshll.u32 [#allocation11], 4
          %s503 = int_to_ptr.vmem [resolvable:$true] %s502
          %505 = dma.hbm_to_vmem [thread:$0]  %s5, 16, %s503, [#allocation12]
        $region20: #{tpu_custom_call.1} parent=11 // pred_fallthru
          _
        // Predicated region
        $region21: #{tpu_custom_call.1} parent=11 // pred_check
          %p506 = pneg %p210
        $region22: #{tpu_custom_call.1} parent=11 // pred_check_branch
          %508 = sbr.rel (%p506) target = $region24
        $region23: #{tpu_custom_call.1} parent=11 // pred_region
          %s510 = ssub.s32 512, 512
          %511 = vsyncadd [#allocation12], %s510
          %s512 = sshll.u32 [#allocation13], 4
          %s513 = int_to_ptr.vmem [resolvable:$true] %s512
          %518 = dma.hbm_to_vmem [thread:$0]  %s6, 512, %s513, [#allocation12], 128, 128, 8
        $region24: #{tpu_custom_call.1} parent=11 // pred_fallthru
          _
        // Predicated region
        $region25: #{tpu_custom_call.1} parent=11 // pred_check
          %p519 = pneg %p231
        $region26: #{tpu_custom_call.1} parent=11 // pred_check_branch
          %521 = sbr.rel (%p519) target = $region28
        $region27: #{tpu_custom_call.1} parent=11 // pred_region
          %s523 = ssub.s32 16, 16
          %524 = vsyncadd [#allocation15], %s523
          %s526 = sshll.u32 [#allocation14], 4
          %s527 = int_to_ptr.vmem [resolvable:$true] %s526
          %529 = dma.hbm_to_vmem [thread:$0]  %s7, 16, %s527, [#allocation15]
        $region28: #{tpu_custom_call.1} parent=11 // pred_fallthru
          _
        // Predicated region
        $region29: #{tpu_custom_call.1} parent=11 // pred_check
          %p530 = pneg %p252
        $region30: #{tpu_custom_call.1} parent=11 // pred_check_branch
          %532 = sbr.rel (%p530) target = $region32
        $region31: #{tpu_custom_call.1} parent=11 // pred_region
          %s534 = ssub.s32 256, 256
          %535 = vsyncadd [#allocation15], %s534
          %s536 = sshll.u32 [#allocation16], 4
          %s537 = int_to_ptr.vmem [resolvable:$true] %s536
          %542 = dma.hbm_to_vmem [thread:$0]  %s8, 256, %s537, [#allocation15], 64, 64, 4
        $region32: #{tpu_custom_call.1} parent=11 // pred_fallthru
          _
        // Predicated region
        $region33: #{tpu_custom_call.1} parent=11 // pred_check
          %p543 = pneg %p273
        $region34: #{tpu_custom_call.1} parent=11 // pred_check_branch
          %545 = sbr.rel (%p543) target = $region36
        $region35: #{tpu_custom_call.1} parent=11 // pred_region
          %s547 = ssub.s32 16, 16
          %548 = vsyncadd [#allocation18], %s547
          %s550 = sshll.u32 [#allocation17], 4
          %s551 = int_to_ptr.vmem [resolvable:$true] %s550
          %553 = dma.hbm_to_vmem [thread:$0]  %s9, 16, %s551, [#allocation18]
        $region36: #{tpu_custom_call.1} parent=11 // pred_fallthru
          _
        // Predicated region
        $region37: #{tpu_custom_call.1} parent=11 // pred_check
          %p554 = pneg %p294
        $region38: #{tpu_custom_call.1} parent=11 // pred_check_branch
          %556 = sbr.rel (%p554) target = $region40
        $region39: #{tpu_custom_call.1} parent=11 // pred_region
          %s558 = ssub.s32 512, 512
          %559 = vsyncadd [#allocation18], %s558
          %s560 = sshll.u32 [#allocation19], 4
          %s561 = int_to_ptr.vmem [resolvable:$true] %s560
          %566 = dma.hbm_to_vmem [thread:$0]  %s10, 512, %s561, [#allocation18], 128, 128, 8
        $region40: #{tpu_custom_call.1} parent=11 // pred_fallthru
          _
        // Predicated region
        $region41: #{tpu_custom_call.1} parent=11 // pred_check
          %p567 = pneg %p315
        $region42: #{tpu_custom_call.1} parent=11 // pred_check_branch
          %569 = sbr.rel (%p567) target = $region44
        $region43: #{tpu_custom_call.1} parent=11 // pred_region
          %s571 = ssub.s32 16, 16
          %572 = vsyncadd [#allocation21], %s571
          %s574 = sshll.u32 [#allocation20], 4
          %s575 = int_to_ptr.vmem [resolvable:$true] %s574
          %577 = dma.hbm_to_vmem [thread:$0]  %s11, 16, %s575, [#allocation21]
        $region44: #{tpu_custom_call.1} parent=11 // pred_fallthru
          _
        // Predicated region
        $region45: #{tpu_custom_call.1} parent=11 // pred_check
          %p578 = pneg %p336
        $region46: #{tpu_custom_call.1} parent=11 // pred_check_branch
          %580 = sbr.rel (%p578) target = $region48
        $region47: #{tpu_custom_call.1} parent=11 // pred_region
          %s582 = ssub.s32 256, 256
          %583 = vsyncadd [#allocation21], %s582
          %s584 = sshll.u32 [#allocation22], 4
          %s585 = int_to_ptr.vmem [resolvable:$true] %s584
          %590 = dma.hbm_to_vmem [thread:$0]  %s12, 256, %s585, [#allocation21], 64, 64, 4
        $region48: #{tpu_custom_call.1} parent=11 // pred_fallthru
          _
        // Predicated region
        $region49: #{tpu_custom_call.1} parent=11 // pred_check
          %p591 = pneg %p357
        $region50: #{tpu_custom_call.1} parent=11 // pred_check_branch
          %593 = sbr.rel (%p591) target = $region52
        $region51: #{tpu_custom_call.1} parent=11 // pred_region
          %s595 = ssub.s32 16, 16
          %596 = vsyncadd [#allocation24], %s595
          %s598 = sshll.u32 [#allocation23], 4
          %s599 = int_to_ptr.vmem [resolvable:$true] %s598
          %601 = dma.hbm_to_vmem [thread:$0]  %s13, 16, %s599, [#allocation24]
        $region52: #{tpu_custom_call.1} parent=11 // pred_fallthru
          _
        // Predicated region
        $region53: #{tpu_custom_call.1} parent=11 // pred_check
          %p602 = pneg %p378
        $region54: #{tpu_custom_call.1} parent=11 // pred_check_branch
          %604 = sbr.rel (%p602) target = $region56
        $region55: #{tpu_custom_call.1} parent=11 // pred_region
          %s606 = ssub.s32 512, 512
          %607 = vsyncadd [#allocation24], %s606
          %s608 = sshll.u32 [#allocation25], 4
          %s609 = int_to_ptr.vmem [resolvable:$true] %s608
          %614 = dma.hbm_to_vmem [thread:$0]  %s14, 512, %s609, [#allocation24], 64, 64, 4
        $region56: #{tpu_custom_call.1} parent=11 // pred_fallthru
          _
        // Predicated region
        $region57: #{tpu_custom_call.1} parent=11 // pred_check
          %p615 = pneg %p399
        $region58: #{tpu_custom_call.1} parent=11 // pred_check_branch
          %617 = sbr.rel (%p615) target = $region60
        $region59: #{tpu_custom_call.1} parent=11 // pred_region
          %s619 = ssub.s32 16, 16
          %620 = vsyncadd [#allocation27], %s619
          %s622 = sshll.u32 [#allocation26], 4
          %s623 = int_to_ptr.vmem [resolvable:$true] %s622
          %625 = dma.hbm_to_vmem [thread:$0]  %s15, 16, %s623, [#allocation27]
        $region60: #{tpu_custom_call.1} parent=11 // pred_fallthru
          _
        // Predicated region
        $region61: #{tpu_custom_call.1} parent=11 // pred_check
          %p626 = pneg %p420
        $region62: #{tpu_custom_call.1} parent=11 // pred_check_branch
          %628 = sbr.rel (%p626) target = $region64
        $region63: #{tpu_custom_call.1} parent=11 // pred_region
          %s630 = ssub.s32 64, 64
          %631 = vsyncadd [#allocation27], %s630
          %s633 = sshll.u32 [#allocation28], 4
          %s634 = int_to_ptr.vmem [resolvable:$true] %s633
          %636 = dma.hbm_to_vmem [thread:$0]  %s16, 64, %s634, [#allocation27]
        $region64: #{tpu_custom_call.1} parent=11 // pred_fallthru
          _
        // Predicated region
        $region65: #{tpu_custom_call.1} parent=11 // pred_check
          %p637 = pneg %p441
        $region66: #{tpu_custom_call.1} parent=11 // pred_check_branch
          %639 = sbr.rel (%p637) target = $region68
        $region67: #{tpu_custom_call.1} parent=11 // pred_region
          %s641 = ssub.s32 64, 64
          %642 = vsyncadd [#allocation30], %s641
          %s644 = sshll.u32 [#allocation29], 4
          %s645 = int_to_ptr.vmem [resolvable:$true] %s644
          %647 = dma.hbm_to_vmem [thread:$0]  %s17, 64, %s645, [#allocation30]
        $region68: #{tpu_custom_call.1} parent=11 // pred_fallthru
          _
      $region12: #{tpu_custom_call.1} parent=5 // pred_fallthru
        _
      %p648 = scmp.lt.s32.totalorder %s43, 2
      // Predicated region
      $region69: #{tpu_custom_call.1} parent=5 // pred_check
        %p649 = pneg %p648
      $region70: #{tpu_custom_call.1} parent=5 // pred_check_branch
        %651 = sbr.rel (%p649) target = $region72
      $region71: #{tpu_custom_call.1} parent=5 // pred_region
        // Predicated region
        $region73: #{tpu_custom_call.1} parent=71 // pred_check
          %p652 = pneg %p63
        $region74: #{tpu_custom_call.1} parent=71 // pred_check_branch
          %654 = sbr.rel (%p652) target = $region76
        $region75: #{tpu_custom_call.1} parent=71 // pred_region
          %s655 = sand.u32 %s53, 1
          %s656 = scalar_lea.sflag [#allocation3], %s655
          %s657 = sand.u32 %s53, 1
          %s658 = smul.addr %s657, 8
          %s659 = scalar_lea.vmem [#allocation2], %s658
          %s661 = ssub.s32 128, 128
          %662 = vsyncadd %s656, %s661
          %s663 = smul.addr %s43, 128
          %s664 = scalar_lea.hbm %s0, %s663
          %s666 = sshll.u32 %s659, 4
          %s667 = int_to_ptr.vmem [resolvable:$true] %s666
          %669 = dma.hbm_to_vmem [thread:$0]  %s664, 128, %s667, %s656
        $region76: #{tpu_custom_call.1} parent=71 // pred_fallthru
          _
        // Predicated region
        $region77: #{tpu_custom_call.1} parent=71 // pred_check
          %p670 = pneg %p89
        $region78: #{tpu_custom_call.1} parent=71 // pred_check_branch
          %672 = sbr.rel (%p670) target = $region80
        $region79: #{tpu_custom_call.1} parent=71 // pred_region
          %s673 = sand.u32 %s43, 1
          %s674 = scalar_lea.sflag [#allocation6], %s673
          %s675 = sand.u32 %s79, 1
          %s676 = smul.addr %s675, 16
          %s677 = scalar_lea.vmem [#allocation5], %s676
          %s679 = ssub.s32 256, 256
          %680 = vsyncadd %s674, %s679
          %s681 = smul.addr %s43, 2
          %s682 = smul.addr %s681, 128
          %s683 = scalar_lea.hbm %s1, %s682
          %s684 = sshll.u32 %s677, 4
          %s685 = int_to_ptr.vmem [resolvable:$true] %s684
          %690 = dma.hbm_to_vmem [thread:$0]  %s683, 256, %s685, %s674, 128, 128, 8
        $region80: #{tpu_custom_call.1} parent=71 // pred_fallthru
          _
        // Predicated region
        $region81: #{tpu_custom_call.1} parent=71 // pred_check
          %p691 = pneg %p115
        $region82: #{tpu_custom_call.1} parent=71 // pred_check_branch
          %693 = sbr.rel (%p691) target = $region84
        $region83: #{tpu_custom_call.1} parent=71 // pred_region
          %s694 = sand.u32 %s43, 1
          %s695 = scalar_lea.sflag [#allocation6], %s694
          %s696 = sand.u32 %s105, 1
          %s697 = smul.addr %s696, 8
          %s698 = scalar_lea.vmem [#allocation7], %s697
          %s700 = ssub.s32 128, 128
          %701 = vsyncadd %s695, %s700
          %s702 = smul.addr %s43, 128
          %s703 = scalar_lea.hbm %s2, %s702
          %s705 = sshll.u32 %s698, 4
          %s706 = int_to_ptr.vmem [resolvable:$true] %s705
          %708 = dma.hbm_to_vmem [thread:$0]  %s703, 128, %s706, %s695
        $region84: #{tpu_custom_call.1} parent=71 // pred_fallthru
          _
        // Predicated region
        $region85: #{tpu_custom_call.1} parent=71 // pred_check
          %p709 = pneg %p141
        $region86: #{tpu_custom_call.1} parent=71 // pred_check_branch
          %711 = sbr.rel (%p709) target = $region88
        $region87: #{tpu_custom_call.1} parent=71 // pred_region
          %s712 = sand.u32 %s43, 1
          %s713 = scalar_lea.sflag [#allocation9], %s712
          %s714 = sand.u32 %s131, 1
          %s715 = smul.addr %s714, 16
          %s716 = scalar_lea.vmem [#allocation8], %s715
          %s718 = ssub.s32 256, 256
          %719 = vsyncadd %s713, %s718
          %s720 = smul.addr %s43, 2
          %s721 = smul.addr %s720, 128
          %s722 = scalar_lea.hbm %s3, %s721
          %s723 = sshll.u32 %s716, 4
          %s724 = int_to_ptr.vmem [resolvable:$true] %s723
          %729 = dma.hbm_to_vmem [thread:$0]  %s722, 256, %s724, %s713, 128, 128, 8
        $region88: #{tpu_custom_call.1} parent=71 // pred_fallthru
          _
      $region72: #{tpu_custom_call.1} parent=5 // pred_fallthru
        _
      %p730 = scmp.le.s32.totalorder 1, %s43
      %p731 = scmp.lt.s32.totalorder %s43, 3
      %p732 = pnand %p730, %p731
      %p733 = pneg %p732
      // Predicated region
      $region89: #{tpu_custom_call.1} parent=5 // pred_check
        _
      $region90: #{tpu_custom_call.1} parent=5 // pred_check_branch
        %735 = sbr.rel (%p732) target = $region92
      $region91: #{tpu_custom_call.1} parent=5 // pred_region
        %s736 = ssub.s32 %s43, 1
        %s737 = sand.u32 %s56, 1
        %s738 = scalar_lea.sflag [#allocation3], %s737
        %s739 = sand.u32 %s56, 1
        %s740 = smul.addr %s739, 8
        %s741 = scalar_lea.vmem [#allocation2], %s740
        // Predicated region
        $region93: #{tpu_custom_call.1} parent=91 // pred_check
          %p742 = pneg %p69
        $region94: #{tpu_custom_call.1} parent=91 // pred_check_branch
          %744 = sbr.rel (%p742) target = $region96
        $region95: #{tpu_custom_call.1} parent=91 // pred_region
          %745 = dma.done %s738, 128
        $region96: #{tpu_custom_call.1} parent=91 // pred_fallthru
          _
        %s746 = sand.u32 %s48, 1
        %s747 = scalar_lea.sflag [#allocation6], %s746
        %s748 = sand.u32 %s82, 1
        %s749 = smul.addr %s748, 16
        %s750 = scalar_lea.vmem [#allocation5], %s749
        // Predicated region
        $region97: #{tpu_custom_call.1} parent=91 // pred_check
          %p751 = pneg %p95
        $region98: #{tpu_custom_call.1} parent=91 // pred_check_branch
          %753 = sbr.rel (%p751) target = $region100
        $region99: #{tpu_custom_call.1} parent=91 // pred_region
          %754 = dma.done %s747, 256
        $region100: #{tpu_custom_call.1} parent=91 // pred_fallthru
          _
        %s755 = sand.u32 %s48, 1
        %s756 = scalar_lea.sflag [#allocation6], %s755
        %s757 = sand.u32 %s108, 1
        %s758 = smul.addr %s757, 8
        %s759 = scalar_lea.vmem [#allocation7], %s758
        // Predicated region
        $region101: #{tpu_custom_call.1} parent=91 // pred_check
          %p760 = pneg %p121
        $region102: #{tpu_custom_call.1} parent=91 // pred_check_branch
          %762 = sbr.rel (%p760) target = $region104
        $region103: #{tpu_custom_call.1} parent=91 // pred_region
          %763 = dma.done %s756, 128
        $region104: #{tpu_custom_call.1} parent=91 // pred_fallthru
          _
        %s764 = sand.u32 %s48, 1
        %s765 = scalar_lea.sflag [#allocation9], %s764
        %s766 = sand.u32 %s134, 1
        %s767 = smul.addr %s766, 16
        %s768 = scalar_lea.vmem [#allocation8], %s767
        // Predicated region
        $region105: #{tpu_custom_call.1} parent=91 // pred_check
          %p769 = pneg %p147
        $region106: #{tpu_custom_call.1} parent=91 // pred_check_branch
          %771 = sbr.rel (%p769) target = $region108
        $region107: #{tpu_custom_call.1} parent=91 // pred_region
          %772 = dma.done %s765, 256
        $region108: #{tpu_custom_call.1} parent=91 // pred_fallthru
          _
        // Predicated region
        $region109: #{tpu_custom_call.1} parent=91 // pred_check
          %p773 = pneg %p168
        $region110: #{tpu_custom_call.1} parent=91 // pred_check_branch
          %775 = sbr.rel (%p773) target = $region112
        $region111: #{tpu_custom_call.1} parent=91 // pred_region
          %776 = dma.done [#allocation9], 256
        $region112: #{tpu_custom_call.1} parent=91 // pred_fallthru
          _
        // Predicated region
        $region113: #{tpu_custom_call.1} parent=91 // pred_check
          %p777 = pneg %p189
        $region114: #{tpu_custom_call.1} parent=91 // pred_check_branch
          %779 = sbr.rel (%p777) target = $region116
        $region115: #{tpu_custom_call.1} parent=91 // pred_region
          %780 = dma.done [#allocation12], 16
        $region116: #{tpu_custom_call.1} parent=91 // pred_fallthru
          _
        // Predicated region
        $region117: #{tpu_custom_call.1} parent=91 // pred_check
          %p781 = pneg %p210
        $region118: #{tpu_custom_call.1} parent=91 // pred_check_branch
          %783 = sbr.rel (%p781) target = $region120
        $region119: #{tpu_custom_call.1} parent=91 // pred_region
          %784 = dma.done [#allocation12], 512
        $region120: #{tpu_custom_call.1} parent=91 // pred_fallthru
          _
        // Predicated region
        $region121: #{tpu_custom_call.1} parent=91 // pred_check
          %p785 = pneg %p231
        $region122: #{tpu_custom_call.1} parent=91 // pred_check_branch
          %787 = sbr.rel (%p785) target = $region124
        $region123: #{tpu_custom_call.1} parent=91 // pred_region
          %788 = dma.done [#allocation15], 16
        $region124: #{tpu_custom_call.1} parent=91 // pred_fallthru
          _
        // Predicated region
        $region125: #{tpu_custom_call.1} parent=91 // pred_check
          %p789 = pneg %p252
        $region126: #{tpu_custom_call.1} parent=91 // pred_check_branch
          %791 = sbr.rel (%p789) target = $region128
        $region127: #{tpu_custom_call.1} parent=91 // pred_region
          %792 = dma.done [#allocation15], 256
        $region128: #{tpu_custom_call.1} parent=91 // pred_fallthru
          _
        // Predicated region
        $region129: #{tpu_custom_call.1} parent=91 // pred_check
          %p793 = pneg %p273
        $region130: #{tpu_custom_call.1} parent=91 // pred_check_branch
          %795 = sbr.rel (%p793) target = $region132
        $region131: #{tpu_custom_call.1} parent=91 // pred_region
          %796 = dma.done [#allocation18], 16
        $region132: #{tpu_custom_call.1} parent=91 // pred_fallthru
          _
        // Predicated region
        $region133: #{tpu_custom_call.1} parent=91 // pred_check
          %p797 = pneg %p294
        $region134: #{tpu_custom_call.1} parent=91 // pred_check_branch
          %799 = sbr.rel (%p797) target = $region136
        $region135: #{tpu_custom_call.1} parent=91 // pred_region
          %800 = dma.done [#allocation18], 512
        $region136: #{tpu_custom_call.1} parent=91 // pred_fallthru
          _
        // Predicated region
        $region137: #{tpu_custom_call.1} parent=91 // pred_check
          %p801 = pneg %p315
        $region138: #{tpu_custom_call.1} parent=91 // pred_check_branch
          %803 = sbr.rel (%p801) target = $region140
        $region139: #{tpu_custom_call.1} parent=91 // pred_region
          %804 = dma.done [#allocation21], 16
        $region140: #{tpu_custom_call.1} parent=91 // pred_fallthru
          _
        // Predicated region
        $region141: #{tpu_custom_call.1} parent=91 // pred_check
          %p805 = pneg %p336
        $region142: #{tpu_custom_call.1} parent=91 // pred_check_branch
          %807 = sbr.rel (%p805) target = $region144
        $region143: #{tpu_custom_call.1} parent=91 // pred_region
          %808 = dma.done [#allocation21], 256
        $region144: #{tpu_custom_call.1} parent=91 // pred_fallthru
          _
        // Predicated region
        $region145: #{tpu_custom_call.1} parent=91 // pred_check
          %p809 = pneg %p357
        $region146: #{tpu_custom_call.1} parent=91 // pred_check_branch
          %811 = sbr.rel (%p809) target = $region148
        $region147: #{tpu_custom_call.1} parent=91 // pred_region
          %812 = dma.done [#allocation24], 16
        $region148: #{tpu_custom_call.1} parent=91 // pred_fallthru
          _
        // Predicated region
        $region149: #{tpu_custom_call.1} parent=91 // pred_check
          %p813 = pneg %p378
        $region150: #{tpu_custom_call.1} parent=91 // pred_check_branch
          %815 = sbr.rel (%p813) target = $region152
        $region151: #{tpu_custom_call.1} parent=91 // pred_region
          %816 = dma.done [#allocation24], 512
        $region152: #{tpu_custom_call.1} parent=91 // pred_fallthru
          _
        // Predicated region
        $region153: #{tpu_custom_call.1} parent=91 // pred_check
          %p817 = pneg %p399
        $region154: #{tpu_custom_call.1} parent=91 // pred_check_branch
          %819 = sbr.rel (%p817) target = $region156
        $region155: #{tpu_custom_call.1} parent=91 // pred_region
          %820 = dma.done [#allocation27], 16
        $region156: #{tpu_custom_call.1} parent=91 // pred_fallthru
          _
        // Predicated region
        $region157: #{tpu_custom_call.1} parent=91 // pred_check
          %p821 = pneg %p420
        $region158: #{tpu_custom_call.1} parent=91 // pred_check_branch
          %823 = sbr.rel (%p821) target = $region160
        $region159: #{tpu_custom_call.1} parent=91 // pred_region
          %824 = dma.done [#allocation27], 64
        $region160: #{tpu_custom_call.1} parent=91 // pred_fallthru
          _
        // Predicated region
        $region161: #{tpu_custom_call.1} parent=91 // pred_check
          %p825 = pneg %p441
        $region162: #{tpu_custom_call.1} parent=91 // pred_check_branch
          %827 = sbr.rel (%p825) target = $region164
        $region163: #{tpu_custom_call.1} parent=91 // pred_region
          %828 = dma.done [#allocation30], 64
        $region164: #{tpu_custom_call.1} parent=91 // pred_fallthru
          _
        %s829 = sand.u32 %s56, 1
        %s830 = scalar_lea.sflag [#allocation3], %s829
        %s831 = sand.u32 %s56, 1
        %s832 = smul.addr %s831, 8
        %s833 = scalar_lea.vmem [#allocation2], %s832
        %p834 = pneg %p69
        %p835 = pneg %p66
        %s836 = sand.u32 %s48, 1
        %s837 = scalar_lea.sflag [#allocation6], %s836
        %s838 = sand.u32 %s82, 1
        %s839 = smul.addr %s838, 16
        %s840 = scalar_lea.vmem [#allocation5], %s839
        %p841 = pneg %p95
        %p842 = pneg %p92
        %s843 = sand.u32 %s48, 1
        %s844 = scalar_lea.sflag [#allocation6], %s843
        %s845 = sand.u32 %s108, 1
        %s846 = smul.addr %s845, 8
        %s847 = scalar_lea.vmem [#allocation7], %s846
        %p848 = pneg %p121
        %p849 = pneg %p118
        %s850 = sand.u32 %s48, 1
        %s851 = scalar_lea.sflag [#allocation9], %s850
        %s852 = sand.u32 %s134, 1
        %s853 = smul.addr %s852, 16
        %s854 = scalar_lea.vmem [#allocation8], %s853
        %p855 = pneg %p147
        %p856 = pneg %p144
        %p857 = pneg %p168
        %p858 = pneg %p165
        %p859 = pneg %p189
        %p860 = pneg %p186
        %p861 = pneg %p210
        %p862 = pneg %p207
        %p863 = pneg %p231
        %p864 = pneg %p228
        %p865 = pneg %p252
        %p866 = pneg %p249
        %p867 = pneg %p273
        %p868 = pneg %p270
        %p869 = pneg %p294
        %p870 = pneg %p291
        %p871 = pneg %p315
        %p872 = pneg %p312
        %p873 = pneg %p336
        %p874 = pneg %p333
        %p875 = pneg %p357
        %p876 = pneg %p354
        %p877 = pneg %p378
        %p878 = pneg %p375
        %p879 = pneg %p399
        %p880 = pneg %p396
        %p881 = pneg %p420
        %p882 = pneg %p417
        %p883 = pneg %p441
        %p884 = pneg %p438
        %p885 = pneg %p467
        %p886 = pneg %p464
        %s887 = sand.u32 %s454, 1
        %s888 = scalar_lea.sflag [#allocation4], %s887
        %s889 = sand.u32 %s454, 1
        %s890 = smul.addr %s889, 8
        %s891 = scalar_lea.vmem [#allocation31], %s890
        %v893 = vld [vmem:[%s741] sm:$0xff]
        %v894 = vld [vmem:[%s759] sm:$0xff]
        %v895 = vld [vmem:[%s750] sm:$0xff]
        %v896 = vld [vmem:[%s750 + $0x8] sm:$0xff]
        %v897 = vld [vmem:[%s768] sm:$0xff]
        %v898 = vld [vmem:[%s768 + $0x8] sm:$0xff]
        %v899 = vadd.f32 %v893, %v894
        %v900 = vld [vmem:[#allocation10] sm:$0xf]
        %v901 = vld [vmem:[#allocation10 + $0x4] sm:$0xf]
        %v902 = vld [vmem:[#allocation10 + $0x8] sm:$0xf]
        %v903 = vld [vmem:[#allocation10 + $0xc] sm:$0xf]
        %v904 = vpack.c.bf16 %v899, %v899
        %v905 = vld [vmem:[#allocation11] sm:$0x1]
        %v907 = vlaneseq
        %v908 = vshrl.u32 %v907, 7
        %v909 = vsub.s32 0, %v908
        %v910 = vrot.slane %v905, %v909
        %v916 = vunpack.c.l.b16 %v900
        %v917 = vunpack.c.l.b16 %v901
        %v918 = vunpack.c.l.b16 %v902
        %v919 = vunpack.c.l.b16 %v903
        %v920 = vpack.c.b16 %v917, %v916
        %v921 = vpack.c.b16 %v919, %v918
        %vm924 = vcmask 261120
        %v926 = vsel %vm924, %v904, 0
        %928 = vmatprep.subr.bf16.mxu0 0
        %929 = vmatpush1.bf16.msra.mxu0 %v920
        %930 = vmatprep.subr.bf16.mxu0 0
        %931 = vmatpush1.bf16.msra.mxu0 %v921
        %932 = vmatprep.subr.bf16.mxu0 0
        %933 = vmatpush1.bf16.msra.mxu0 0
        %934 = vmatprep.subr.bf16.mxu0 0
        %935 = vmatpush1.bf16.msra.mxu0 0
        %936 = vmatprep.subr.bf16.mxu0 0
        %937 = vmatpush1.bf16.msra.mxu0 0
        %938 = vmatprep.subr.bf16.mxu0 0
        %939 = vmatpush1.bf16.msra.mxu0 0
        %940 = vmatprep.subr.bf16.mxu0 0
        %941 = vmatpush1.bf16.msra.mxu0 0
        %942 = vmatprep.subr.bf16.mxu0 0
        %943 = vmatpush1.bf16.msra.mxu0 0
        %944 = vmatprep.subr.bf16.mxu0 0
        %945 = vmatpush1.bf16.msra.mxu0 0
        %946 = vmatprep.subr.bf16.mxu0 0
        %947 = vmatpush1.bf16.msra.mxu0 0
        %948 = vmatprep.subr.bf16.mxu0 0
        %949 = vmatpush1.bf16.msra.mxu0 0
        %950 = vmatprep.subr.bf16.mxu0 0
        %951 = vmatpush1.bf16.msra.mxu0 0
        %952 = vmatprep.subr.bf16.mxu0 0
        %953 = vmatpush1.bf16.msra.mxu0 0
        %954 = vmatprep.subr.bf16.mxu0 0
        %955 = vmatpush1.bf16.msra.mxu0 0
        %956 = vmatprep.subr.bf16.mxu0 0
        %957 = vmatpush1.bf16.msra.mxu0 0
        %958 = vmatprep.subr.bf16.mxu0 0
        %959 = vmatpush1.bf16.msra.mxu0 0
        %960 = vmatprep.mubr.bf16.mxu0 0
        %961 = vmatmul.mubr.bf16.gmra.mrb[0].mxu0 %v926
        %v962 = vpop.f32.mrb[0].mxu0
        %v963 = vadd.f32 %v910, %v962
        %v964 = vpop.f32.mrb[0].mxu0
        %v965 = vpop.f32.mrb[0].mxu0
        %v966 = vpop.f32.mrb[0].mxu0
        %967 = vdwg.mxu0
        %v968 = vpack.c.bf16 %v893, %v893
        %969 = vrot.lane.b32.xlu0 %v920, 64
        %v970 = vpop.permute.xlu0 %969
        %971 = vrot.lane.b32.xlu0 %v921, 64
        %v972 = vpop.permute.xlu0 %971
        %975 = vrot.lane.b32.xlu0 %v910, 64
        %v976 = vpop.permute.xlu0 %975
        %v979 = vsel %vm924, %v968, 0
        %981 = vmatprep.subr.bf16.mxu0 0
        %982 = vmatpush1.bf16.msra.mxu0 %v970
        %983 = vmatprep.subr.bf16.mxu0 0
        %984 = vmatpush1.bf16.msra.mxu0 %v972
        %985 = vmatprep.subr.bf16.mxu0 0
        %986 = vmatpush1.bf16.msra.mxu0 0
        %987 = vmatprep.subr.bf16.mxu0 0
        %988 = vmatpush1.bf16.msra.mxu0 0
        %989 = vmatprep.subr.bf16.mxu0 0
        %990 = vmatpush1.bf16.msra.mxu0 0
        %991 = vmatprep.subr.bf16.mxu0 0
        %992 = vmatpush1.bf16.msra.mxu0 0
        %993 = vmatprep.subr.bf16.mxu0 0
        %994 = vmatpush1.bf16.msra.mxu0 0
        %995 = vmatprep.subr.bf16.mxu0 0
        %996 = vmatpush1.bf16.msra.mxu0 0
        %997 = vmatprep.subr.bf16.mxu0 0
        %998 = vmatpush1.bf16.msra.mxu0 0
        %999 = vmatprep.subr.bf16.mxu0 0
        %1000 = vmatpush1.bf16.msra.mxu0 0
        %1001 = vmatprep.subr.bf16.mxu0 0
        %1002 = vmatpush1.bf16.msra.mxu0 0
        %1003 = vmatprep.subr.bf16.mxu0 0
        %1004 = vmatpush1.bf16.msra.mxu0 0
        %1005 = vmatprep.subr.bf16.mxu0 0
        %1006 = vmatpush1.bf16.msra.mxu0 0
        %1007 = vmatprep.subr.bf16.mxu0 0
        %1008 = vmatpush1.bf16.msra.mxu0 0
        %1009 = vmatprep.subr.bf16.mxu0 0
        %1010 = vmatpush1.bf16.msra.mxu0 0
        %1011 = vmatprep.subr.bf16.mxu0 0
        %1012 = vmatpush1.bf16.msra.mxu0 0
        %1013 = vmatprep.mubr.bf16.mxu0 0
        %1014 = vmatmul.mubr.bf16.gmra.mrb[0].mxu0 %v979
        %v1015 = vpop.f32.mrb[0].mxu0
        %v1016 = vadd.f32 %v976, %v1015
        %v1017 = vpop.f32.mrb[0].mxu0
        %v1018 = vpop.f32.mrb[0].mxu0
        %v1019 = vpop.f32.mrb[0].mxu0
        %1020 = vdwg.mxu0
        %v1021 = vmul.f32 %v963, 0.35355338
        %v1022 = vpack.c.bf16 %v1021, %v1021
        %v1023 = vpack.c.bf16 %v963, %v963
        %v1024 = vpack.c.bf16 %v1016, %v1016
        %1026 = vrot.lane.b32.xlu0 %v1023, 96
        %v1027 = vpop.permute.xlu0 %1026
        %vm1028 = vcmask 64512
        %v1030 = vsel %vm1028, %v1022, 0
        %v1033 = vsel %vm1028, %v1027, 0
        %1035 = vmatprep.subr.bf16.mxu0 0
        %1036 = vmatpush1.bf16.xpose.msra.mxu0 %v1033
        %1037 = vmatprep.subr.bf16.mxu0 0
        %1038 = vmatpush1.bf16.xpose.msra.mxu0 0
        %1039 = vmatprep.subr.bf16.mxu0 0
        %1040 = vmatpush1.bf16.xpose.msra.mxu0 0
        %1041 = vmatprep.subr.bf16.mxu0 0
        %1042 = vmatpush1.bf16.xpose.msra.mxu0 0
        %1043 = vmatprep.subr.bf16.mxu0 0
        %1044 = vmatpush1.bf16.xpose.msra.mxu0 0
        %1045 = vmatprep.subr.bf16.mxu0 0
        %1046 = vmatpush1.bf16.xpose.msra.mxu0 0
        %1047 = vmatprep.subr.bf16.mxu0 0
        %1048 = vmatpush1.bf16.xpose.msra.mxu0 0
        %1049 = vmatprep.subr.bf16.mxu0 0
        %1050 = vmatpush1.bf16.xpose.msra.mxu0 0
        %1051 = vmatprep.subr.bf16.mxu0 0
        %1052 = vmatpush1.bf16.xpose.msra.mxu0 0
        %1053 = vmatprep.subr.bf16.mxu0 0
        %1054 = vmatpush1.bf16.xpose.msra.mxu0 0
        %1055 = vmatprep.subr.bf16.mxu0 0
        %1056 = vmatpush1.bf16.xpose.msra.mxu0 0
        %1057 = vmatprep.subr.bf16.mxu0 0
        %1058 = vmatpush1.bf16.xpose.msra.mxu0 0
        %1059 = vmatprep.subr.bf16.mxu0 0
        %1060 = vmatpush1.bf16.xpose.msra.mxu0 0
        %1061 = vmatprep.subr.bf16.mxu0 0
        %1062 = vmatpush1.bf16.xpose.msra.mxu0 0
        %1063 = vmatprep.subr.bf16.mxu0 0
        %1064 = vmatpush1.bf16.xpose.msra.mxu0 0
        %1065 = vmatprep.subr.bf16.mxu0 0
        %1066 = vmatpush1.bf16.xpose.msra.mxu0 0
        %1067 = vmatprep.mubr.bf16.mxu0 0
        %1068 = vmatmul.mubr.bf16.gmra.mrb[0].mxu0 %v1030
        %v1069 = vpop.f32.mrb[0].mxu0
        %v1070 = vadd.f32 0.0, %v1069
        %v1071 = vpop.f32.mrb[0].mxu0
        %v1072 = vpop.f32.mrb[0].mxu0
        %v1073 = vpop.f32.mrb[0].mxu0
        %1074 = vdwg.mxu0
        %v1075 = vsel %vm1028, %v1070, -inf
        %1076 = vmax.xlane.f32.xlu0 %v1075
        %v1077 = vpop.xlane.xlu0 %1076
        %v1078 = vsub.f32 %v1070, %v1077
        %v1079 = vmul.f32 %v1078, 1.442695
        %v1080 = vpow.pop %v1079
        %v1081 = vsel %vm1028, %v1080, 0.0
        %1082 = vadd.xlane.f32.xlu0 %v1081
        %v1083 = vpop.xlane.xlu0 %1082
        %v1084 = vrcp.pop %v1083
        %v1085 = vpack.c.bf16 %v1080, %v1080
        %v1087 = vsel %vm1028, %v1085, 0
        %vm1089 = vcmask 1043456
        %v1091 = vsel %vm1089, %v1024, 0
        %1093 = vmatprep.subr.bf16.mxu0 0
        %1094 = vmatpush1.bf16.msra.mxu0 %v1091
        %1095 = vmatprep.subr.bf16.mxu0 0
        %1096 = vmatpush1.bf16.msra.mxu0 0
        %1097 = vmatprep.subr.bf16.mxu0 0
        %1098 = vmatpush1.bf16.msra.mxu0 0
        %1099 = vmatprep.subr.bf16.mxu0 0
        %1100 = vmatpush1.bf16.msra.mxu0 0
        %1101 = vmatprep.subr.bf16.mxu0 0
        %1102 = vmatpush1.bf16.msra.mxu0 0
        %1103 = vmatprep.subr.bf16.mxu0 0
        %1104 = vmatpush1.bf16.msra.mxu0 0
        %1105 = vmatprep.subr.bf16.mxu0 0
        %1106 = vmatpush1.bf16.msra.mxu0 0
        %1107 = vmatprep.subr.bf16.mxu0 0
        %1108 = vmatpush1.bf16.msra.mxu0 0
        %1109 = vmatprep.subr.bf16.mxu0 0
        %1110 = vmatpush1.bf16.msra.mxu0 0
        %1111 = vmatprep.subr.bf16.mxu0 0
        %1112 = vmatpush1.bf16.msra.mxu0 0
        %1113 = vmatprep.subr.bf16.mxu0 0
        %1114 = vmatpush1.bf16.msra.mxu0 0
        %1115 = vmatprep.subr.bf16.mxu0 0
        %1116 = vmatpush1.bf16.msra.mxu0 0
        %1117 = vmatprep.subr.bf16.mxu0 0
        %1118 = vmatpush1.bf16.msra.mxu0 0
        %1119 = vmatprep.subr.bf16.mxu0 0
        %1120 = vmatpush1.bf16.msra.mxu0 0
        %1121 = vmatprep.subr.bf16.mxu0 0
        %1122 = vmatpush1.bf16.msra.mxu0 0
        %1123 = vmatprep.subr.bf16.mxu0 0
        %1124 = vmatpush1.bf16.msra.mxu0 0
        %1125 = vmatprep.mubr.bf16.mxu0 0
        %1126 = vmatmul.mubr.bf16.gmra.mrb[0].mxu0 %v1087
        %v1127 = vpop.f32.mrb[0].mxu0
        %v1128 = vadd.f32 0.0, %v1127
        %v1129 = vpop.f32.mrb[0].mxu0
        %v1130 = vpop.f32.mrb[0].mxu0
        %v1131 = vpop.f32.mrb[0].mxu0
        %1132 = vdwg.mxu0
        %v1133 = vmul.f32 %v1128, %v1084
        %v1134 = vpack.c.bf16 %v1133, %v1133
        %v1135 = vld [vmem:[#allocation13] sm:$0xff]
        %v1136 = vpack.c.bf16 %v1135, %v1135
        %1138 = vrot.lane.b32.xlu0 %v1022, 120
        %v1139 = vpop.permute.xlu0 %1138
        %1140 = vrot.lane.b32.xlu0 %v1023, 88
        %v1141 = vpop.permute.xlu0 %1140
        %v1143 = vsel %vm1028, %v1139, 0
        %v1146 = vsel %vm1028, %v1141, 0
        %1148 = vmatprep.subr.bf16.mxu0 0
        %1149 = vmatpush1.bf16.xpose.msra.mxu0 %v1146
        %1150 = vmatprep.subr.bf16.mxu0 0
        %1151 = vmatpush1.bf16.xpose.msra.mxu0 0
        %1152 = vmatprep.subr.bf16.mxu0 0
        %1153 = vmatpush1.bf16.xpose.msra.mxu0 0
        %1154 = vmatprep.subr.bf16.mxu0 0
        %1155 = vmatpush1.bf16.xpose.msra.mxu0 0
        %1156 = vmatprep.subr.bf16.mxu0 0
        %1157 = vmatpush1.bf16.xpose.msra.mxu0 0
        %1158 = vmatprep.subr.bf16.mxu0 0
        %1159 = vmatpush1.bf16.xpose.msra.mxu0 0
        %1160 = vmatprep.subr.bf16.mxu0 0
        %1161 = vmatpush1.bf16.xpose.msra.mxu0 0
        %1162 = vmatprep.subr.bf16.mxu0 0
        %1163 = vmatpush1.bf16.xpose.msra.mxu0 0
        %1164 = vmatprep.subr.bf16.mxu0 0
        %1165 = vmatpush1.bf16.xpose.msra.mxu0 0
        %1166 = vmatprep.subr.bf16.mxu0 0
        %1167 = vmatpush1.bf16.xpose.msra.mxu0 0
        %1168 = vmatprep.subr.bf16.mxu0 0
        %1169 = vmatpush1.bf16.xpose.msra.mxu0 0
        %1170 = vmatprep.subr.bf16.mxu0 0
        %1171 = vmatpush1.bf16.xpose.msra.mxu0 0
        %1172 = vmatprep.subr.bf16.mxu0 0
        %1173 = vmatpush1.bf16.xpose.msra.mxu0 0
        %1174 = vmatprep.subr.bf16.mxu0 0
        %1175 = vmatpush1.bf16.xpose.msra.mxu0 0
        %1176 = vmatprep.subr.bf16.mxu0 0
        %1177 = vmatpush1.bf16.xpose.msra.mxu0 0
        %1178 = vmatprep.subr.bf16.mxu0 0
        %1179 = vmatpush1.bf16.xpose.msra.mxu0 0
        %1180 = vmatprep.mubr.bf16.mxu0 0
        %1181 = vmatmul.mubr.bf16.gmra.mrb[0].mxu0 %v1143
        %v1182 = vpop.f32.mrb[0].mxu0
        %v1183 = vadd.f32 0.0, %v1182
        %v1184 = vpop.f32.mrb[0].mxu0
        %v1185 = vpop.f32.mrb[0].mxu0
        %v1186 = vpop.f32.mrb[0].mxu0
        %1187 = vdwg.mxu0
        %v1188 = vsel %vm1028, %v1183, -inf
        %1189 = vmax.xlane.f32.xlu0 %v1188
        %v1190 = vpop.xlane.xlu0 %1189
        %v1191 = vsub.f32 %v1183, %v1190
        %v1192 = vmul.f32 %v1191, 1.442695
        %v1193 = vpow.pop %v1192
        %v1194 = vsel %vm1028, %v1193, 0.0
        %1195 = vadd.xlane.f32.xlu0 %v1194
        %v1196 = vpop.xlane.xlu0 %1195
        %v1197 = vrcp.pop %v1196
        %v1198 = vpack.c.bf16 %v1193, %v1193
        %1200 = vrot.lane.b32.xlu0 %v1024, 120
        %v1201 = vpop.permute.xlu0 %1200
        %v1203 = vsel %vm1028, %v1198, 0
        %v1206 = vsel %vm1089, %v1201, 0
        %1208 = vmatprep.subr.bf16.mxu0 0
        %1209 = vmatpush1.bf16.msra.mxu0 %v1206
        %1210 = vmatprep.subr.bf16.mxu0 0
        %1211 = vmatpush1.bf16.msra.mxu0 0
        %1212 = vmatprep.subr.bf16.mxu0 0
        %1213 = vmatpush1.bf16.msra.mxu0 0
        %1214 = vmatprep.subr.bf16.mxu0 0
        %1215 = vmatpush1.bf16.msra.mxu0 0
        %1216 = vmatprep.subr.bf16.mxu0 0
        %1217 = vmatpush1.bf16.msra.mxu0 0
        %1218 = vmatprep.subr.bf16.mxu0 0
        %1219 = vmatpush1.bf16.msra.mxu0 0
        %1220 = vmatprep.subr.bf16.mxu0 0
        %1221 = vmatpush1.bf16.msra.mxu0 0
        %1222 = vmatprep.subr.bf16.mxu0 0
        %1223 = vmatpush1.bf16.msra.mxu0 0
        %1224 = vmatprep.subr.bf16.mxu0 0
        %1225 = vmatpush1.bf16.msra.mxu0 0
        %1226 = vmatprep.subr.bf16.mxu0 0
        %1227 = vmatpush1.bf16.msra.mxu0 0
        %1228 = vmatprep.subr.bf16.mxu0 0
        %1229 = vmatpush1.bf16.msra.mxu0 0
        %1230 = vmatprep.subr.bf16.mxu0 0
        %1231 = vmatpush1.bf16.msra.mxu0 0
        %1232 = vmatprep.subr.bf16.mxu0 0
        %1233 = vmatpush1.bf16.msra.mxu0 0
        %1234 = vmatprep.subr.bf16.mxu0 0
        %1235 = vmatpush1.bf16.msra.mxu0 0
        %1236 = vmatprep.subr.bf16.mxu0 0
        %1237 = vmatpush1.bf16.msra.mxu0 0
        %1238 = vmatprep.subr.bf16.mxu0 0
        %1239 = vmatpush1.bf16.msra.mxu0 0
        %1240 = vmatprep.mubr.bf16.mxu0 0
        %1241 = vmatmul.mubr.bf16.gmra.mrb[0].mxu0 %v1203
        %v1242 = vpop.f32.mrb[0].mxu0
        %v1243 = vadd.f32 0.0, %v1242
        %v1244 = vpop.f32.mrb[0].mxu0
        %v1245 = vpop.f32.mrb[0].mxu0
        %v1246 = vpop.f32.mrb[0].mxu0
        %1247 = vdwg.mxu0
        %v1248 = vmul.f32 %v1243, %v1197
        %v1249 = vpack.c.bf16 %v1248, %v1248
        %v1250 = vld [vmem:[#allocation13 + $0x8] sm:$0xff]
        %v1251 = vpack.c.bf16 %v1250, %v1250
        %v1253 = vsel %vm1028, %v1249, 0
        %v1256 = vsel %vm1089, %v1251, 0
        %1258 = vmatprep.subr.bf16.mxu0 0
        %1259 = vmatpush1.bf16.msra.mxu0 %v1256
        %1260 = vmatprep.subr.bf16.mxu0 0
        %1261 = vmatpush1.bf16.msra.mxu0 0
        %1262 = vmatprep.subr.bf16.mxu0 0
        %1263 = vmatpush1.bf16.msra.mxu0 0
        %1264 = vmatprep.subr.bf16.mxu0 0
        %1265 = vmatpush1.bf16.msra.mxu0 0
        %1266 = vmatprep.subr.bf16.mxu0 0
        %1267 = vmatpush1.bf16.msra.mxu0 0
        %1268 = vmatprep.subr.bf16.mxu0 0
        %1269 = vmatpush1.bf16.msra.mxu0 0
        %1270 = vmatprep.subr.bf16.mxu0 0
        %1271 = vmatpush1.bf16.msra.mxu0 0
        %1272 = vmatprep.subr.bf16.mxu0 0
        %1273 = vmatpush1.bf16.msra.mxu0 0
        %1274 = vmatprep.subr.bf16.mxu0 0
        %1275 = vmatpush1.bf16.msra.mxu0 0
        %1276 = vmatprep.subr.bf16.mxu0 0
        %1277 = vmatpush1.bf16.msra.mxu0 0
        %1278 = vmatprep.subr.bf16.mxu0 0
        %1279 = vmatpush1.bf16.msra.mxu0 0
        %1280 = vmatprep.subr.bf16.mxu0 0
        %1281 = vmatpush1.bf16.msra.mxu0 0
        %1282 = vmatprep.subr.bf16.mxu0 0
        %1283 = vmatpush1.bf16.msra.mxu0 0
        %1284 = vmatprep.subr.bf16.mxu0 0
        %1285 = vmatpush1.bf16.msra.mxu0 0
        %1286 = vmatprep.subr.bf16.mxu0 0
        %1287 = vmatpush1.bf16.msra.mxu0 0
        %1288 = vmatprep.subr.bf16.mxu0 0
        %1289 = vmatpush1.bf16.msra.mxu0 0
        %1290 = vmatprep.mubr.bf16.mxu0 0
        %1291 = vmatmul.mubr.bf16.gmra.mrb[0].mxu0 %v1253
        %v1292 = vpop.f32.mrb[0].mxu0
        %v1293 = vadd.f32 0.0, %v1292
        %v1294 = vpop.f32.mrb[0].mxu0
        %v1295 = vpop.f32.mrb[0].mxu0
        %v1296 = vpop.f32.mrb[0].mxu0
        %1297 = vdwg.mxu0
        %v1299 = vsel %vm1028, %v1134, 0
        %v1302 = vsel %vm1089, %v1136, 0
        %1304 = vmatprep.subr.bf16.mxu0 0
        %1305 = vmatpush1.bf16.msra.mxu0 %v1302
        %1306 = vmatprep.subr.bf16.mxu0 0
        %1307 = vmatpush1.bf16.msra.mxu0 0
        %1308 = vmatprep.subr.bf16.mxu0 0
        %1309 = vmatpush1.bf16.msra.mxu0 0
        %1310 = vmatprep.subr.bf16.mxu0 0
        %1311 = vmatpush1.bf16.msra.mxu0 0
        %1312 = vmatprep.subr.bf16.mxu0 0
        %1313 = vmatpush1.bf16.msra.mxu0 0
        %1314 = vmatprep.subr.bf16.mxu0 0
        %1315 = vmatpush1.bf16.msra.mxu0 0
        %1316 = vmatprep.subr.bf16.mxu0 0
        %1317 = vmatpush1.bf16.msra.mxu0 0
        %1318 = vmatprep.subr.bf16.mxu0 0
        %1319 = vmatpush1.bf16.msra.mxu0 0
        %1320 = vmatprep.subr.bf16.mxu0 0
        %1321 = vmatpush1.bf16.msra.mxu0 0
        %1322 = vmatprep.subr.bf16.mxu0 0
        %1323 = vmatpush1.bf16.msra.mxu0 0
        %1324 = vmatprep.subr.bf16.mxu0 0
        %1325 = vmatpush1.bf16.msra.mxu0 0
        %1326 = vmatprep.subr.bf16.mxu0 0
        %1327 = vmatpush1.bf16.msra.mxu0 0
        %1328 = vmatprep.subr.bf16.mxu0 0
        %1329 = vmatpush1.bf16.msra.mxu0 0
        %1330 = vmatprep.subr.bf16.mxu0 0
        %1331 = vmatpush1.bf16.msra.mxu0 0
        %1332 = vmatprep.subr.bf16.mxu0 0
        %1333 = vmatpush1.bf16.msra.mxu0 0
        %1334 = vmatprep.subr.bf16.mxu0 0
        %1335 = vmatpush1.bf16.msra.mxu0 0
        %1336 = vmatprep.mubr.bf16.mxu0 0
        %1337 = vmatmul.mubr.bf16.gmra.mrb[0].mxu0 %v1299
        %v1338 = vpop.f32.mrb[0].mxu0
        %v1339 = vadd.f32 %v1293, %v1338
        %v1340 = vpop.f32.mrb[0].mxu0
        %v1341 = vpop.f32.mrb[0].mxu0
        %v1342 = vpop.f32.mrb[0].mxu0
        %1343 = vdwg.mxu0
        %1344 = vrot.lane.b32.xlu0 %v1022, 112
        %v1345 = vpop.permute.xlu0 %1344
        %1346 = vrot.lane.b32.xlu0 %v1023, 80
        %v1347 = vpop.permute.xlu0 %1346
        %v1349 = vsel %vm1028, %v1345, 0
        %v1352 = vsel %vm1028, %v1347, 0
        %1354 = vmatprep.subr.bf16.mxu0 0
        %1355 = vmatpush1.bf16.xpose.msra.mxu0 %v1352
        %1356 = vmatprep.subr.bf16.mxu0 0
        %1357 = vmatpush1.bf16.xpose.msra.mxu0 0
        %1358 = vmatprep.subr.bf16.mxu0 0
        %1359 = vmatpush1.bf16.xpose.msra.mxu0 0
        %1360 = vmatprep.subr.bf16.mxu0 0
        %1361 = vmatpush1.bf16.xpose.msra.mxu0 0
        %1362 = vmatprep.subr.bf16.mxu0 0
        %1363 = vmatpush1.bf16.xpose.msra.mxu0 0
        %1364 = vmatprep.subr.bf16.mxu0 0
        %1365 = vmatpush1.bf16.xpose.msra.mxu0 0
        %1366 = vmatprep.subr.bf16.mxu0 0
        %1367 = vmatpush1.bf16.xpose.msra.mxu0 0
        %1368 = vmatprep.subr.bf16.mxu0 0
        %1369 = vmatpush1.bf16.xpose.msra.mxu0 0
        %1370 = vmatprep.subr.bf16.mxu0 0
        %1371 = vmatpush1.bf16.xpose.msra.mxu0 0
        %1372 = vmatprep.subr.bf16.mxu0 0
        %1373 = vmatpush1.bf16.xpose.msra.mxu0 0
        %1374 = vmatprep.subr.bf16.mxu0 0
        %1375 = vmatpush1.bf16.xpose.msra.mxu0 0
        %1376 = vmatprep.subr.bf16.mxu0 0
        %1377 = vmatpush1.bf16.xpose.msra.mxu0 0
        %1378 = vmatprep.subr.bf16.mxu0 0
        %1379 = vmatpush1.bf16.xpose.msra.mxu0 0
        %1380 = vmatprep.subr.bf16.mxu0 0
        %1381 = vmatpush1.bf16.xpose.msra.mxu0 0
        %1382 = vmatprep.subr.bf16.mxu0 0
        %1383 = vmatpush1.bf16.xpose.msra.mxu0 0
        %1384 = vmatprep.subr.bf16.mxu0 0
        %1385 = vmatpush1.bf16.xpose.msra.mxu0 0
        %1386 = vmatprep.mubr.bf16.mxu0 0
        %1387 = vmatmul.mubr.bf16.gmra.mrb[0].mxu0 %v1349
        %v1388 = vpop.f32.mrb[0].mxu0
        %v1389 = vadd.f32 0.0, %v1388
        %v1390 = vpop.f32.mrb[0].mxu0
        %v1391 = vpop.f32.mrb[0].mxu0
        %v1392 = vpop.f32.mrb[0].mxu0
        %1393 = vdwg.mxu0
        %v1394 = vsel %vm1028, %v1389, -inf
        %1395 = vmax.xlane.f32.xlu0 %v1394
        %v1396 = vpop.xlane.xlu0 %1395
        %v1397 = vsub.f32 %v1389, %v1396
        %v1398 = vmul.f32 %v1397, 1.442695
        %v1399 = vpow.pop %v1398
        %v1400 = vsel %vm1028, %v1399, 0.0
        %1401 = vadd.xlane.f32.xlu0 %v1400
        %v1402 = vpop.xlane.xlu0 %1401
        %v1403 = vrcp.pop %v1402
        %v1404 = vpack.c.bf16 %v1399, %v1399
        %1405 = vrot.lane.b32.xlu0 %v1024, 112
        %v1406 = vpop.permute.xlu0 %1405
        %v1408 = vsel %vm1028, %v1404, 0
        %v1411 = vsel %vm1089, %v1406, 0
        %1413 = vmatprep.subr.bf16.mxu0 0
        %1414 = vmatpush1.bf16.msra.mxu0 %v1411
        %1415 = vmatprep.subr.bf16.mxu0 0
        %1416 = vmatpush1.bf16.msra.mxu0 0
        %1417 = vmatprep.subr.bf16.mxu0 0
        %1418 = vmatpush1.bf16.msra.mxu0 0
        %1419 = vmatprep.subr.bf16.mxu0 0
        %1420 = vmatpush1.bf16.msra.mxu0 0
        %1421 = vmatprep.subr.bf16.mxu0 0
        %1422 = vmatpush1.bf16.msra.mxu0 0
        %1423 = vmatprep.subr.bf16.mxu0 0
        %1424 = vmatpush1.bf16.msra.mxu0 0
        %1425 = vmatprep.subr.bf16.mxu0 0
        %1426 = vmatpush1.bf16.msra.mxu0 0
        %1427 = vmatprep.subr.bf16.mxu0 0
        %1428 = vmatpush1.bf16.msra.mxu0 0
        %1429 = vmatprep.subr.bf16.mxu0 0
        %1430 = vmatpush1.bf16.msra.mxu0 0
        %1431 = vmatprep.subr.bf16.mxu0 0
        %1432 = vmatpush1.bf16.msra.mxu0 0
        %1433 = vmatprep.subr.bf16.mxu0 0
        %1434 = vmatpush1.bf16.msra.mxu0 0
        %1435 = vmatprep.subr.bf16.mxu0 0
        %1436 = vmatpush1.bf16.msra.mxu0 0
        %1437 = vmatprep.subr.bf16.mxu0 0
        %1438 = vmatpush1.bf16.msra.mxu0 0
        %1439 = vmatprep.subr.bf16.mxu0 0
        %1440 = vmatpush1.bf16.msra.mxu0 0
        %1441 = vmatprep.subr.bf16.mxu0 0
        %1442 = vmatpush1.bf16.msra.mxu0 0
        %1443 = vmatprep.subr.bf16.mxu0 0
        %1444 = vmatpush1.bf16.msra.mxu0 0
        %1445 = vmatprep.mubr.bf16.mxu0 0
        %1446 = vmatmul.mubr.bf16.gmra.mrb[0].mxu0 %v1408
        %v1447 = vpop.f32.mrb[0].mxu0
        %v1448 = vadd.f32 0.0, %v1447
        %v1449 = vpop.f32.mrb[0].mxu0
        %v1450 = vpop.f32.mrb[0].mxu0
        %v1451 = vpop.f32.mrb[0].mxu0
        %1452 = vdwg.mxu0
        %v1453 = vmul.f32 %v1448, %v1403
        %v1454 = vpack.c.bf16 %v1453, %v1453
        %v1455 = vld [vmem:[#allocation13 + $0x10] sm:$0xff]
        %v1456 = vpack.c.bf16 %v1455, %v1455
        %v1458 = vsel %vm1028, %v1454, 0
        %v1461 = vsel %vm1089, %v1456, 0
        %1463 = vmatprep.subr.bf16.mxu0 0
        %1464 = vmatpush1.bf16.msra.mxu0 %v1461
        %1465 = vmatprep.subr.bf16.mxu0 0
        %1466 = vmatpush1.bf16.msra.mxu0 0
        %1467 = vmatprep.subr.bf16.mxu0 0
        %1468 = vmatpush1.bf16.msra.mxu0 0
        %1469 = vmatprep.subr.bf16.mxu0 0
        %1470 = vmatpush1.bf16.msra.mxu0 0
        %1471 = vmatprep.subr.bf16.mxu0 0
        %1472 = vmatpush1.bf16.msra.mxu0 0
        %1473 = vmatprep.subr.bf16.mxu0 0
        %1474 = vmatpush1.bf16.msra.mxu0 0
        %1475 = vmatprep.subr.bf16.mxu0 0
        %1476 = vmatpush1.bf16.msra.mxu0 0
        %1477 = vmatprep.subr.bf16.mxu0 0
        %1478 = vmatpush1.bf16.msra.mxu0 0
        %1479 = vmatprep.subr.bf16.mxu0 0
        %1480 = vmatpush1.bf16.msra.mxu0 0
        %1481 = vmatprep.subr.bf16.mxu0 0
        %1482 = vmatpush1.bf16.msra.mxu0 0
        %1483 = vmatprep.subr.bf16.mxu0 0
        %1484 = vmatpush1.bf16.msra.mxu0 0
        %1485 = vmatprep.subr.bf16.mxu0 0
        %1486 = vmatpush1.bf16.msra.mxu0 0
        %1487 = vmatprep.subr.bf16.mxu0 0
        %1488 = vmatpush1.bf16.msra.mxu0 0
        %1489 = vmatprep.subr.bf16.mxu0 0
        %1490 = vmatpush1.bf16.msra.mxu0 0
        %1491 = vmatprep.subr.bf16.mxu0 0
        %1492 = vmatpush1.bf16.msra.mxu0 0
        %1493 = vmatprep.subr.bf16.mxu0 0
        %1494 = vmatpush1.bf16.msra.mxu0 0
        %1495 = vmatprep.mubr.bf16.mxu0 0
        %1496 = vmatmul.mubr.bf16.gmra.mrb[0].mxu0 %v1458
        %v1497 = vpop.f32.mrb[0].mxu0
        %v1498 = vadd.f32 0.0, %v1497
        %v1499 = vpop.f32.mrb[0].mxu0
        %v1500 = vpop.f32.mrb[0].mxu0
        %v1501 = vpop.f32.mrb[0].mxu0
        %1502 = vdwg.mxu0
        %v1503 = vadd.f32 %v1339, %v1498
        %1504 = vrot.lane.b32.xlu0 %v1022, 104
        %v1505 = vpop.permute.xlu0 %1504
        %1506 = vrot.lane.b32.xlu0 %v1023, 72
        %v1507 = vpop.permute.xlu0 %1506
        %v1509 = vsel %vm1028, %v1505, 0
        %v1512 = vsel %vm1028, %v1507, 0
        %1514 = vmatprep.subr.bf16.mxu0 0
        %1515 = vmatpush1.bf16.xpose.msra.mxu0 %v1512
        %1516 = vmatprep.subr.bf16.mxu0 0
        %1517 = vmatpush1.bf16.xpose.msra.mxu0 0
        %1518 = vmatprep.subr.bf16.mxu0 0
        %1519 = vmatpush1.bf16.xpose.msra.mxu0 0
        %1520 = vmatprep.subr.bf16.mxu0 0
        %1521 = vmatpush1.bf16.xpose.msra.mxu0 0
        %1522 = vmatprep.subr.bf16.mxu0 0
        %1523 = vmatpush1.bf16.xpose.msra.mxu0 0
        %1524 = vmatprep.subr.bf16.mxu0 0
        %1525 = vmatpush1.bf16.xpose.msra.mxu0 0
        %1526 = vmatprep.subr.bf16.mxu0 0
        %1527 = vmatpush1.bf16.xpose.msra.mxu0 0
        %1528 = vmatprep.subr.bf16.mxu0 0
        %1529 = vmatpush1.bf16.xpose.msra.mxu0 0
        %1530 = vmatprep.subr.bf16.mxu0 0
        %1531 = vmatpush1.bf16.xpose.msra.mxu0 0
        %1532 = vmatprep.subr.bf16.mxu0 0
        %1533 = vmatpush1.bf16.xpose.msra.mxu0 0
        %1534 = vmatprep.subr.bf16.mxu0 0
        %1535 = vmatpush1.bf16.xpose.msra.mxu0 0
        %1536 = vmatprep.subr.bf16.mxu0 0
        %1537 = vmatpush1.bf16.xpose.msra.mxu0 0
        %1538 = vmatprep.subr.bf16.mxu0 0
        %1539 = vmatpush1.bf16.xpose.msra.mxu0 0
        %1540 = vmatprep.subr.bf16.mxu0 0
        %1541 = vmatpush1.bf16.xpose.msra.mxu0 0
        %1542 = vmatprep.subr.bf16.mxu0 0
        %1543 = vmatpush1.bf16.xpose.msra.mxu0 0
        %1544 = vmatprep.subr.bf16.mxu0 0
        %1545 = vmatpush1.bf16.xpose.msra.mxu0 0
        %1546 = vmatprep.mubr.bf16.mxu0 0
        %1547 = vmatmul.mubr.bf16.gmra.mrb[0].mxu0 %v1509
        %v1548 = vpop.f32.mrb[0].mxu0
        %v1549 = vadd.f32 0.0, %v1548
        %v1550 = vpop.f32.mrb[0].mxu0
        %v1551 = vpop.f32.mrb[0].mxu0
        %v1552 = vpop.f32.mrb[0].mxu0
        %1553 = vdwg.mxu0
        %v1554 = vsel %vm1028, %v1549, -inf
        %1555 = vmax.xlane.f32.xlu0 %v1554
        %v1556 = vpop.xlane.xlu0 %1555
        %v1557 = vsub.f32 %v1549, %v1556
        %v1558 = vmul.f32 %v1557, 1.442695
        %v1559 = vpow.pop %v1558
        %v1560 = vsel %vm1028, %v1559, 0.0
        %1561 = vadd.xlane.f32.xlu0 %v1560
        %v1562 = vpop.xlane.xlu0 %1561
        %v1563 = vrcp.pop %v1562
        %v1564 = vpack.c.bf16 %v1559, %v1559
        %1565 = vrot.lane.b32.xlu0 %v1024, 104
        %v1566 = vpop.permute.xlu0 %1565
        %v1568 = vsel %vm1028, %v1564, 0
        %v1571 = vsel %vm1089, %v1566, 0
        %1573 = vmatprep.subr.bf16.mxu0 0
        %1574 = vmatpush1.bf16.msra.mxu0 %v1571
        %1575 = vmatprep.subr.bf16.mxu0 0
        %1576 = vmatpush1.bf16.msra.mxu0 0
        %1577 = vmatprep.subr.bf16.mxu0 0
        %1578 = vmatpush1.bf16.msra.mxu0 0
        %1579 = vmatprep.subr.bf16.mxu0 0
        %1580 = vmatpush1.bf16.msra.mxu0 0
        %1581 = vmatprep.subr.bf16.mxu0 0
        %1582 = vmatpush1.bf16.msra.mxu0 0
        %1583 = vmatprep.subr.bf16.mxu0 0
        %1584 = vmatpush1.bf16.msra.mxu0 0
        %1585 = vmatprep.subr.bf16.mxu0 0
        %1586 = vmatpush1.bf16.msra.mxu0 0
        %1587 = vmatprep.subr.bf16.mxu0 0
        %1588 = vmatpush1.bf16.msra.mxu0 0
        %1589 = vmatprep.subr.bf16.mxu0 0
        %1590 = vmatpush1.bf16.msra.mxu0 0
        %1591 = vmatprep.subr.bf16.mxu0 0
        %1592 = vmatpush1.bf16.msra.mxu0 0
        %1593 = vmatprep.subr.bf16.mxu0 0
        %1594 = vmatpush1.bf16.msra.mxu0 0
        %1595 = vmatprep.subr.bf16.mxu0 0
        %1596 = vmatpush1.bf16.msra.mxu0 0
        %1597 = vmatprep.subr.bf16.mxu0 0
        %1598 = vmatpush1.bf16.msra.mxu0 0
        %1599 = vmatprep.subr.bf16.mxu0 0
        %1600 = vmatpush1.bf16.msra.mxu0 0
        %1601 = vmatprep.subr.bf16.mxu0 0
        %1602 = vmatpush1.bf16.msra.mxu0 0
        %1603 = vmatprep.subr.bf16.mxu0 0
        %1604 = vmatpush1.bf16.msra.mxu0 0
        %1605 = vmatprep.mubr.bf16.mxu0 0
        %1606 = vmatmul.mubr.bf16.gmra.mrb[0].mxu0 %v1568
        %v1607 = vpop.f32.mrb[0].mxu0
        %v1608 = vadd.f32 0.0, %v1607
        %v1609 = vpop.f32.mrb[0].mxu0
        %v1610 = vpop.f32.mrb[0].mxu0
        %v1611 = vpop.f32.mrb[0].mxu0
        %1612 = vdwg.mxu0
        %v1613 = vmul.f32 %v1608, %v1563
        %v1614 = vpack.c.bf16 %v1613, %v1613
        %v1615 = vld [vmem:[#allocation13 + $0x18] sm:$0xff]
        %v1616 = vpack.c.bf16 %v1615, %v1615
        %v1618 = vsel %vm1028, %v1614, 0
        %v1621 = vsel %vm1089, %v1616, 0
        %1623 = vmatprep.subr.bf16.mxu0 0
        %1624 = vmatpush1.bf16.msra.mxu0 %v1621
        %1625 = vmatprep.subr.bf16.mxu0 0
        %1626 = vmatpush1.bf16.msra.mxu0 0
        %1627 = vmatprep.subr.bf16.mxu0 0
        %1628 = vmatpush1.bf16.msra.mxu0 0
        %1629 = vmatprep.subr.bf16.mxu0 0
        %1630 = vmatpush1.bf16.msra.mxu0 0
        %1631 = vmatprep.subr.bf16.mxu0 0
        %1632 = vmatpush1.bf16.msra.mxu0 0
        %1633 = vmatprep.subr.bf16.mxu0 0
        %1634 = vmatpush1.bf16.msra.mxu0 0
        %1635 = vmatprep.subr.bf16.mxu0 0
        %1636 = vmatpush1.bf16.msra.mxu0 0
        %1637 = vmatprep.subr.bf16.mxu0 0
        %1638 = vmatpush1.bf16.msra.mxu0 0
        %1639 = vmatprep.subr.bf16.mxu0 0
        %1640 = vmatpush1.bf16.msra.mxu0 0
        %1641 = vmatprep.subr.bf16.mxu0 0
        %1642 = vmatpush1.bf16.msra.mxu0 0
        %1643 = vmatprep.subr.bf16.mxu0 0
        %1644 = vmatpush1.bf16.msra.mxu0 0
        %1645 = vmatprep.subr.bf16.mxu0 0
        %1646 = vmatpush1.bf16.msra.mxu0 0
        %1647 = vmatprep.subr.bf16.mxu0 0
        %1648 = vmatpush1.bf16.msra.mxu0 0
        %1649 = vmatprep.subr.bf16.mxu0 0
        %1650 = vmatpush1.bf16.msra.mxu0 0
        %1651 = vmatprep.subr.bf16.mxu0 0
        %1652 = vmatpush1.bf16.msra.mxu0 0
        %1653 = vmatprep.subr.bf16.mxu0 0
        %1654 = vmatpush1.bf16.msra.mxu0 0
        %1655 = vmatprep.mubr.bf16.mxu0 0
        %1656 = vmatmul.mubr.bf16.gmra.mrb[0].mxu0 %v1618
        %v1657 = vpop.f32.mrb[0].mxu0
        %v1658 = vadd.f32 0.0, %v1657
        %v1659 = vpop.f32.mrb[0].mxu0
        %v1660 = vpop.f32.mrb[0].mxu0
        %v1661 = vpop.f32.mrb[0].mxu0
        %1662 = vdwg.mxu0
        %v1663 = vadd.f32 %v1503, %v1658
        %v1664 = vld [vmem:[#allocation14] sm:$0x1]
        %v1666 = vlaneseq
        %v1667 = vshrl.u32 %v1666, 7
        %v1668 = vsub.s32 0, %v1667
        %v1669 = vrot.slane %v1664, %v1668
        %v1671 = vadd.f32 %v1663, %v1669
        %v1672 = vadd.f32 %v893, %v1671
        %v1673 = vld [vmem:[#allocation28] sm:$0x1]
        %v1674 = vld [vmem:[#allocation29] sm:$0x1]
        %v1675 = vsel %vm924, %v1672, 0.0
        %1676 = vadd.xlane.f32.xlu0 %v1675
        %v1677 = vpop.xlane.xlu0 %1676
        %v1678 = vrcp.pop 32.0
        %v1679 = vmul.f32 %v1677, %v1678
        %v1680 = vsub.f32 %v1672, %v1679
        %v1681 = vmul.f32 %v1680, %v1680
        %v1682 = vsel %vm924, %v1681, 0.0
        %1683 = vadd.xlane.f32.xlu0 %v1682
        %v1684 = vpop.xlane.xlu0 %1683
        %v1685 = vmul.f32 %v1684, %v1678
        %v1686 = vadd.f32 %v1685, 1e-05
        %v1687 = vrsqrt.pop %v1686
        %v1688 = vmul.f32 %v1680, %v1687
        %v1689 = vlaneseq
        %v1690 = vshrl.u32 %v1689, 7
        %v1691 = vsub.s32 0, %v1690
        %v1692 = vrot.slane %v1673, %v1691
        %v1693 = vmul.f32 %v1688, %v1692
        %v1694 = vlaneseq
        %v1695 = vshrl.u32 %v1694, 7
        %v1696 = vsub.s32 0, %v1695
        %v1697 = vrot.slane %v1674, %v1696
        %v1698 = vadd.f32 %v1693, %v1697
        %v1699 = vadd.f32 %v1698, %v894
        %v1700 = vld [vmem:[#allocation16] sm:$0xf]
        %v1701 = vld [vmem:[#allocation16 + $0x4] sm:$0xf]
        %v1702 = vld [vmem:[#allocation16 + $0x8] sm:$0xf]
        %v1703 = vld [vmem:[#allocation16 + $0xc] sm:$0xf]
        %v1704 = vpack.c.bf16 %v1699, %v1699
        %v1705 = vld [vmem:[#allocation17] sm:$0x1]
        %v1707 = vlaneseq
        %v1708 = vshrl.u32 %v1707, 7
        %v1709 = vsub.s32 0, %v1708
        %v1710 = vrot.slane %v1705, %v1709
        %v1716 = vunpack.c.l.b16 %v1700
        %v1717 = vunpack.c.l.b16 %v1701
        %v1718 = vunpack.c.l.b16 %v1702
        %v1719 = vunpack.c.l.b16 %v1703
        %v1720 = vpack.c.b16 %v1717, %v1716
        %v1721 = vpack.c.b16 %v1719, %v1718
        %v1725 = vsel %vm924, %v1704, 0
        %1727 = vmatprep.subr.bf16.mxu0 0
        %1728 = vmatpush1.bf16.msra.mxu0 %v1720
        %1729 = vmatprep.subr.bf16.mxu0 0
        %1730 = vmatpush1.bf16.msra.mxu0 %v1721
        %1731 = vmatprep.subr.bf16.mxu0 0
        %1732 = vmatpush1.bf16.msra.mxu0 0
        %1733 = vmatprep.subr.bf16.mxu0 0
        %1734 = vmatpush1.bf16.msra.mxu0 0
        %1735 = vmatprep.subr.bf16.mxu0 0
        %1736 = vmatpush1.bf16.msra.mxu0 0
        %1737 = vmatprep.subr.bf16.mxu0 0
        %1738 = vmatpush1.bf16.msra.mxu0 0
        %1739 = vmatprep.subr.bf16.mxu0 0
        %1740 = vmatpush1.bf16.msra.mxu0 0
        %1741 = vmatprep.subr.bf16.mxu0 0
        %1742 = vmatpush1.bf16.msra.mxu0 0
        %1743 = vmatprep.subr.bf16.mxu0 0
        %1744 = vmatpush1.bf16.msra.mxu0 0
        %1745 = vmatprep.subr.bf16.mxu0 0
        %1746 = vmatpush1.bf16.msra.mxu0 0
        %1747 = vmatprep.subr.bf16.mxu0 0
        %1748 = vmatpush1.bf16.msra.mxu0 0
        %1749 = vmatprep.subr.bf16.mxu0 0
        %1750 = vmatpush1.bf16.msra.mxu0 0
        %1751 = vmatprep.subr.bf16.mxu0 0
        %1752 = vmatpush1.bf16.msra.mxu0 0
        %1753 = vmatprep.subr.bf16.mxu0 0
        %1754 = vmatpush1.bf16.msra.mxu0 0
        %1755 = vmatprep.subr.bf16.mxu0 0
        %1756 = vmatpush1.bf16.msra.mxu0 0
        %1757 = vmatprep.subr.bf16.mxu0 0
        %1758 = vmatpush1.bf16.msra.mxu0 0
        %1759 = vmatprep.mubr.bf16.mxu0 0
        %1760 = vmatmul.mubr.bf16.gmra.mrb[0].mxu0 %v1725
        %v1761 = vpop.f32.mrb[0].mxu0
        %v1762 = vadd.f32 %v1710, %v1761
        %v1763 = vpop.f32.mrb[0].mxu0
        %v1764 = vpop.f32.mrb[0].mxu0
        %v1765 = vpop.f32.mrb[0].mxu0
        %1766 = vdwg.mxu0
        %v1767 = vadd.f32 %v895, %v897
        %v1768 = vadd.f32 %v896, %v898
        %v1769 = vpack.c.bf16 %v1768, %v1767
        %1770 = vrot.lane.b32.xlu0 %v1720, 96
        %v1771 = vpop.permute.xlu0 %1770
        %1772 = vrot.lane.b32.xlu0 %v1721, 96
        %v1773 = vpop.permute.xlu0 %1772
        %1776 = vrot.lane.b32.xlu0 %v1710, 96
        %v1777 = vpop.permute.xlu0 %1776
        %v1780 = vsel %vm924, %v1769, 0
        %1782 = vmatprep.subr.bf16.mxu0 0
        %1783 = vmatpush1.bf16.msra.mxu0 %v1771
        %1784 = vmatprep.subr.bf16.mxu0 0
        %1785 = vmatpush1.bf16.msra.mxu0 %v1773
        %1786 = vmatprep.subr.bf16.mxu0 0
        %1787 = vmatpush1.bf16.msra.mxu0 0
        %1788 = vmatprep.subr.bf16.mxu0 0
        %1789 = vmatpush1.bf16.msra.mxu0 0
        %1790 = vmatprep.subr.bf16.mxu0 0
        %1791 = vmatpush1.bf16.msra.mxu0 0
        %1792 = vmatprep.subr.bf16.mxu0 0
        %1793 = vmatpush1.bf16.msra.mxu0 0
        %1794 = vmatprep.subr.bf16.mxu0 0
        %1795 = vmatpush1.bf16.msra.mxu0 0
        %1796 = vmatprep.subr.bf16.mxu0 0
        %1797 = vmatpush1.bf16.msra.mxu0 0
        %1798 = vmatprep.subr.bf16.mxu0 0
        %1799 = vmatpush1.bf16.msra.mxu0 0
        %1800 = vmatprep.subr.bf16.mxu0 0
        %1801 = vmatpush1.bf16.msra.mxu0 0
        %1802 = vmatprep.subr.bf16.mxu0 0
        %1803 = vmatpush1.bf16.msra.mxu0 0
        %1804 = vmatprep.subr.bf16.mxu0 0
        %1805 = vmatpush1.bf16.msra.mxu0 0
        %1806 = vmatprep.subr.bf16.mxu0 0
        %1807 = vmatpush1.bf16.msra.mxu0 0
        %1808 = vmatprep.subr.bf16.mxu0 0
        %1809 = vmatpush1.bf16.msra.mxu0 0
        %1810 = vmatprep.subr.bf16.mxu0 0
        %1811 = vmatpush1.bf16.msra.mxu0 0
        %1812 = vmatprep.subr.bf16.mxu0 0
        %1813 = vmatpush1.bf16.msra.mxu0 0
        %1814 = vmatprep.mubr.bf16.mxu0 0
        %1815 = vmatmul.mubr.bf16.gmra.mrb[0].mxu0 %v1780
        %v1816 = vpop.f32.mrb[0].mxu0
        %v1817 = vadd.f32 %v1777, %v1816
        %v1818 = vpop.f32.mrb[0].mxu0
        %v1819 = vpop.f32.mrb[0].mxu0
        %v1820 = vadd.f32 %v1777, %v1819
        %v1821 = vpop.f32.mrb[0].mxu0
        %1822 = vdwg.mxu0
        %v1823 = vpack.c.bf16 %v896, %v895
        %1824 = vrot.lane.b32.xlu0 %v1720, 64
        %v1825 = vpop.permute.xlu0 %1824
        %1826 = vrot.lane.b32.xlu0 %v1721, 64
        %v1827 = vpop.permute.xlu0 %1826
        %1830 = vrot.lane.b32.xlu0 %v1710, 64
        %v1831 = vpop.permute.xlu0 %1830
        %v1834 = vsel %vm924, %v1823, 0
        %1836 = vmatprep.subr.bf16.mxu0 0
        %1837 = vmatpush1.bf16.msra.mxu0 %v1825
        %1838 = vmatprep.subr.bf16.mxu0 0
        %1839 = vmatpush1.bf16.msra.mxu0 %v1827
        %1840 = vmatprep.subr.bf16.mxu0 0
        %1841 = vmatpush1.bf16.msra.mxu0 0
        %1842 = vmatprep.subr.bf16.mxu0 0
        %1843 = vmatpush1.bf16.msra.mxu0 0
        %1844 = vmatprep.subr.bf16.mxu0 0
        %1845 = vmatpush1.bf16.msra.mxu0 0
        %1846 = vmatprep.subr.bf16.mxu0 0
        %1847 = vmatpush1.bf16.msra.mxu0 0
        %1848 = vmatprep.subr.bf16.mxu0 0
        %1849 = vmatpush1.bf16.msra.mxu0 0
        %1850 = vmatprep.subr.bf16.mxu0 0
        %1851 = vmatpush1.bf16.msra.mxu0 0
        %1852 = vmatprep.subr.bf16.mxu0 0
        %1853 = vmatpush1.bf16.msra.mxu0 0
        %1854 = vmatprep.subr.bf16.mxu0 0
        %1855 = vmatpush1.bf16.msra.mxu0 0
        %1856 = vmatprep.subr.bf16.mxu0 0
        %1857 = vmatpush1.bf16.msra.mxu0 0
        %1858 = vmatprep.subr.bf16.mxu0 0
        %1859 = vmatpush1.bf16.msra.mxu0 0
        %1860 = vmatprep.subr.bf16.mxu0 0
        %1861 = vmatpush1.bf16.msra.mxu0 0
        %1862 = vmatprep.subr.bf16.mxu0 0
        %1863 = vmatpush1.bf16.msra.mxu0 0
        %1864 = vmatprep.subr.bf16.mxu0 0
        %1865 = vmatpush1.bf16.msra.mxu0 0
        %1866 = vmatprep.subr.bf16.mxu0 0
        %1867 = vmatpush1.bf16.msra.mxu0 0
        %1868 = vmatprep.mubr.bf16.mxu0 0
        %1869 = vmatmul.mubr.bf16.gmra.mrb[0].mxu0 %v1834
        %v1870 = vpop.f32.mrb[0].mxu0
        %v1871 = vadd.f32 %v1831, %v1870
        %v1872 = vpop.f32.mrb[0].mxu0
        %v1873 = vpop.f32.mrb[0].mxu0
        %v1874 = vadd.f32 %v1831, %v1873
        %v1875 = vpop.f32.mrb[0].mxu0
        %1876 = vdwg.mxu0
        %v1877 = vmul.f32 %v1762, 0.35355338
        %v1878 = vpack.c.bf16 %v1877, %v1877
        %v1879 = vpack.c.bf16 %v1820, %v1817
        %v1880 = vpack.c.bf16 %v1874, %v1871
        %v1882 = vsel %vm1028, %v1878, 0
        %v1885 = vsel %vm1028, %v1879, 0
        %1887 = vmatprep.subr.bf16.mxu0 0
        %1888 = vmatpush1.bf16.xpose.msra.mxu0 %v1885
        %1889 = vmatprep.subr.bf16.mxu0 0
        %1890 = vmatpush1.bf16.xpose.msra.mxu0 0
        %1891 = vmatprep.subr.bf16.mxu0 0
        %1892 = vmatpush1.bf16.xpose.msra.mxu0 0
        %1893 = vmatprep.subr.bf16.mxu0 0
        %1894 = vmatpush1.bf16.xpose.msra.mxu0 0
        %1895 = vmatprep.subr.bf16.mxu0 0
        %1896 = vmatpush1.bf16.xpose.msra.mxu0 0
        %1897 = vmatprep.subr.bf16.mxu0 0
        %1898 = vmatpush1.bf16.xpose.msra.mxu0 0
        %1899 = vmatprep.subr.bf16.mxu0 0
        %1900 = vmatpush1.bf16.xpose.msra.mxu0 0
        %1901 = vmatprep.subr.bf16.mxu0 0
        %1902 = vmatpush1.bf16.xpose.msra.mxu0 0
        %1903 = vmatprep.subr.bf16.mxu0 0
        %1904 = vmatpush1.bf16.xpose.msra.mxu0 0
        %1905 = vmatprep.subr.bf16.mxu0 0
        %1906 = vmatpush1.bf16.xpose.msra.mxu0 0
        %1907 = vmatprep.subr.bf16.mxu0 0
        %1908 = vmatpush1.bf16.xpose.msra.mxu0 0
        %1909 = vmatprep.subr.bf16.mxu0 0
        %1910 = vmatpush1.bf16.xpose.msra.mxu0 0
        %1911 = vmatprep.subr.bf16.mxu0 0
        %1912 = vmatpush1.bf16.xpose.msra.mxu0 0
        %1913 = vmatprep.subr.bf16.mxu0 0
        %1914 = vmatpush1.bf16.xpose.msra.mxu0 0
        %1915 = vmatprep.subr.bf16.mxu0 0
        %1916 = vmatpush1.bf16.xpose.msra.mxu0 0
        %1917 = vmatprep.subr.bf16.mxu0 0
        %1918 = vmatpush1.bf16.xpose.msra.mxu0 0
        %1919 = vmatprep.mubr.bf16.mxu0 0
        %1920 = vmatmul.mubr.bf16.gmra.mrb[0].mxu0 %v1882
        %v1921 = vpop.f32.mrb[0].mxu0
        %v1922 = vadd.f32 0.0, %v1921
        %v1923 = vpop.f32.mrb[0].mxu0
        %v1924 = vpop.f32.mrb[0].mxu0
        %v1925 = vpop.f32.mrb[0].mxu0
        %1926 = vdwg.mxu0
        %vm1927 = vcmask 130048
        %v1928 = vsel %vm1927, %v1922, -inf
        %1929 = vmax.xlane.f32.xlu0 %v1928
        %v1930 = vpop.xlane.xlu0 %1929
        %v1931 = vsub.f32 %v1922, %v1930
        %v1932 = vmul.f32 %v1931, 1.442695
        %v1933 = vpow.pop %v1932
        %v1934 = vsel %vm1927, %v1933, 0.0
        %1935 = vadd.xlane.f32.xlu0 %v1934
        %v1936 = vpop.xlane.xlu0 %1935
        %v1937 = vrcp.pop %v1936
        %v1938 = vpack.c.bf16 %v1933, %v1933
        %v1940 = vsel %vm1927, %v1938, 0
        %1942 = vmatprep.subr.bf16.mxu0 0
        %1943 = vmatpush1.bf16.msra.mxu0 %v1880
        %1944 = vmatprep.subr.bf16.mxu0 0
        %1945 = vmatpush1.bf16.msra.mxu0 0
        %1946 = vmatprep.subr.bf16.mxu0 0
        %1947 = vmatpush1.bf16.msra.mxu0 0
        %1948 = vmatprep.subr.bf16.mxu0 0
        %1949 = vmatpush1.bf16.msra.mxu0 0
        %1950 = vmatprep.subr.bf16.mxu0 0
        %1951 = vmatpush1.bf16.msra.mxu0 0
        %1952 = vmatprep.subr.bf16.mxu0 0
        %1953 = vmatpush1.bf16.msra.mxu0 0
        %1954 = vmatprep.subr.bf16.mxu0 0
        %1955 = vmatpush1.bf16.msra.mxu0 0
        %1956 = vmatprep.subr.bf16.mxu0 0
        %1957 = vmatpush1.bf16.msra.mxu0 0
        %1958 = vmatprep.subr.bf16.mxu0 0
        %1959 = vmatpush1.bf16.msra.mxu0 0
        %1960 = vmatprep.subr.bf16.mxu0 0
        %1961 = vmatpush1.bf16.msra.mxu0 0
        %1962 = vmatprep.subr.bf16.mxu0 0
        %1963 = vmatpush1.bf16.msra.mxu0 0
        %1964 = vmatprep.subr.bf16.mxu0 0
        %1965 = vmatpush1.bf16.msra.mxu0 0
        %1966 = vmatprep.subr.bf16.mxu0 0
        %1967 = vmatpush1.bf16.msra.mxu0 0
        %1968 = vmatprep.subr.bf16.mxu0 0
        %1969 = vmatpush1.bf16.msra.mxu0 0
        %1970 = vmatprep.subr.bf16.mxu0 0
        %1971 = vmatpush1.bf16.msra.mxu0 0
        %1972 = vmatprep.subr.bf16.mxu0 0
        %1973 = vmatpush1.bf16.msra.mxu0 0
        %1974 = vmatprep.mubr.bf16.mxu0 0
        %1975 = vmatmul.mubr.bf16.gmra.mrb[0].mxu0 %v1940
        %v1976 = vpop.f32.mrb[0].mxu0
        %v1977 = vadd.f32 0.0, %v1976
        %v1978 = vpop.f32.mrb[0].mxu0
        %v1979 = vpop.f32.mrb[0].mxu0
        %v1980 = vpop.f32.mrb[0].mxu0
        %1981 = vdwg.mxu0
        %v1982 = vmul.f32 %v1977, %v1937
        %v1983 = vpack.c.bf16 %v1982, %v1982
        %v1984 = vld [vmem:[#allocation19] sm:$0xff]
        %v1985 = vpack.c.bf16 %v1984, %v1984
        %1987 = vrot.lane.b32.xlu0 %v1878, 120
        %v1988 = vpop.permute.xlu0 %1987
        %1990 = vrot.lane.b32.xlu0 %v1879, 120
        %v1991 = vpop.permute.xlu0 %1990
        %v1993 = vsel %vm1028, %v1988, 0
        %v1996 = vsel %vm1028, %v1991, 0
        %1998 = vmatprep.subr.bf16.mxu0 0
        %1999 = vmatpush1.bf16.xpose.msra.mxu0 %v1996
        %2000 = vmatprep.subr.bf16.mxu0 0
        %2001 = vmatpush1.bf16.xpose.msra.mxu0 0
        %2002 = vmatprep.subr.bf16.mxu0 0
        %2003 = vmatpush1.bf16.xpose.msra.mxu0 0
        %2004 = vmatprep.subr.bf16.mxu0 0
        %2005 = vmatpush1.bf16.xpose.msra.mxu0 0
        %2006 = vmatprep.subr.bf16.mxu0 0
        %2007 = vmatpush1.bf16.xpose.msra.mxu0 0
        %2008 = vmatprep.subr.bf16.mxu0 0
        %2009 = vmatpush1.bf16.xpose.msra.mxu0 0
        %2010 = vmatprep.subr.bf16.mxu0 0
        %2011 = vmatpush1.bf16.xpose.msra.mxu0 0
        %2012 = vmatprep.subr.bf16.mxu0 0
        %2013 = vmatpush1.bf16.xpose.msra.mxu0 0
        %2014 = vmatprep.subr.bf16.mxu0 0
        %2015 = vmatpush1.bf16.xpose.msra.mxu0 0
        %2016 = vmatprep.subr.bf16.mxu0 0
        %2017 = vmatpush1.bf16.xpose.msra.mxu0 0
        %2018 = vmatprep.subr.bf16.mxu0 0
        %2019 = vmatpush1.bf16.xpose.msra.mxu0 0
        %2020 = vmatprep.subr.bf16.mxu0 0
        %2021 = vmatpush1.bf16.xpose.msra.mxu0 0
        %2022 = vmatprep.subr.bf16.mxu0 0
        %2023 = vmatpush1.bf16.xpose.msra.mxu0 0
        %2024 = vmatprep.subr.bf16.mxu0 0
        %2025 = vmatpush1.bf16.xpose.msra.mxu0 0
        %2026 = vmatprep.subr.bf16.mxu0 0
        %2027 = vmatpush1.bf16.xpose.msra.mxu0 0
        %2028 = vmatprep.subr.bf16.mxu0 0
        %2029 = vmatpush1.bf16.xpose.msra.mxu0 0
        %2030 = vmatprep.mubr.bf16.mxu0 0
        %2031 = vmatmul.mubr.bf16.gmra.mrb[0].mxu0 %v1993
        %v2032 = vpop.f32.mrb[0].mxu0
        %v2033 = vadd.f32 0.0, %v2032
        %v2034 = vpop.f32.mrb[0].mxu0
        %v2035 = vpop.f32.mrb[0].mxu0
        %v2036 = vpop.f32.mrb[0].mxu0
        %2037 = vdwg.mxu0
        %v2038 = vsel %vm1927, %v2033, -inf
        %2039 = vmax.xlane.f32.xlu0 %v2038
        %v2040 = vpop.xlane.xlu0 %2039
        %v2041 = vsub.f32 %v2033, %v2040
        %v2042 = vmul.f32 %v2041, 1.442695
        %v2043 = vpow.pop %v2042
        %v2044 = vsel %vm1927, %v2043, 0.0
        %2045 = vadd.xlane.f32.xlu0 %v2044
        %v2046 = vpop.xlane.xlu0 %2045
        %v2047 = vrcp.pop %v2046
        %v2048 = vpack.c.bf16 %v2043, %v2043
        %2050 = vrot.lane.b32.xlu0 %v1880, 120
        %v2051 = vpop.permute.xlu0 %2050
        %v2054 = vsel %vm1927, %v2048, 0
        %2056 = vmatprep.subr.bf16.mxu0 0
        %2057 = vmatpush1.bf16.msra.mxu0 %v2051
        %2058 = vmatprep.subr.bf16.mxu0 0
        %2059 = vmatpush1.bf16.msra.mxu0 0
        %2060 = vmatprep.subr.bf16.mxu0 0
        %2061 = vmatpush1.bf16.msra.mxu0 0
        %2062 = vmatprep.subr.bf16.mxu0 0
        %2063 = vmatpush1.bf16.msra.mxu0 0
        %2064 = vmatprep.subr.bf16.mxu0 0
        %2065 = vmatpush1.bf16.msra.mxu0 0
        %2066 = vmatprep.subr.bf16.mxu0 0
        %2067 = vmatpush1.bf16.msra.mxu0 0
        %2068 = vmatprep.subr.bf16.mxu0 0
        %2069 = vmatpush1.bf16.msra.mxu0 0
        %2070 = vmatprep.subr.bf16.mxu0 0
        %2071 = vmatpush1.bf16.msra.mxu0 0
        %2072 = vmatprep.subr.bf16.mxu0 0
        %2073 = vmatpush1.bf16.msra.mxu0 0
        %2074 = vmatprep.subr.bf16.mxu0 0
        %2075 = vmatpush1.bf16.msra.mxu0 0
        %2076 = vmatprep.subr.bf16.mxu0 0
        %2077 = vmatpush1.bf16.msra.mxu0 0
        %2078 = vmatprep.subr.bf16.mxu0 0
        %2079 = vmatpush1.bf16.msra.mxu0 0
        %2080 = vmatprep.subr.bf16.mxu0 0
        %2081 = vmatpush1.bf16.msra.mxu0 0
        %2082 = vmatprep.subr.bf16.mxu0 0
        %2083 = vmatpush1.bf16.msra.mxu0 0
        %2084 = vmatprep.subr.bf16.mxu0 0
        %2085 = vmatpush1.bf16.msra.mxu0 0
        %2086 = vmatprep.subr.bf16.mxu0 0
        %2087 = vmatpush1.bf16.msra.mxu0 0
        %2088 = vmatprep.mubr.bf16.mxu0 0
        %2089 = vmatmul.mubr.bf16.gmra.mrb[0].mxu0 %v2054
        %v2090 = vpop.f32.mrb[0].mxu0
        %v2091 = vadd.f32 0.0, %v2090
        %v2092 = vpop.f32.mrb[0].mxu0
        %v2093 = vpop.f32.mrb[0].mxu0
        %v2094 = vpop.f32.mrb[0].mxu0
        %2095 = vdwg.mxu0
        %v2096 = vmul.f32 %v2091, %v2047
        %v2097 = vpack.c.bf16 %v2096, %v2096
        %v2098 = vld [vmem:[#allocation19 + $0x8] sm:$0xff]
        %v2099 = vpack.c.bf16 %v2098, %v2098
        %v2101 = vsel %vm1028, %v2097, 0
        %v2104 = vsel %vm1089, %v2099, 0
        %2106 = vmatprep.subr.bf16.mxu0 0
        %2107 = vmatpush1.bf16.msra.mxu0 %v2104
        %2108 = vmatprep.subr.bf16.mxu0 0
        %2109 = vmatpush1.bf16.msra.mxu0 0
        %2110 = vmatprep.subr.bf16.mxu0 0
        %2111 = vmatpush1.bf16.msra.mxu0 0
        %2112 = vmatprep.subr.bf16.mxu0 0
        %2113 = vmatpush1.bf16.msra.mxu0 0
        %2114 = vmatprep.subr.bf16.mxu0 0
        %2115 = vmatpush1.bf16.msra.mxu0 0
        %2116 = vmatprep.subr.bf16.mxu0 0
        %2117 = vmatpush1.bf16.msra.mxu0 0
        %2118 = vmatprep.subr.bf16.mxu0 0
        %2119 = vmatpush1.bf16.msra.mxu0 0
        %2120 = vmatprep.subr.bf16.mxu0 0
        %2121 = vmatpush1.bf16.msra.mxu0 0
        %2122 = vmatprep.subr.bf16.mxu0 0
        %2123 = vmatpush1.bf16.msra.mxu0 0
        %2124 = vmatprep.subr.bf16.mxu0 0
        %2125 = vmatpush1.bf16.msra.mxu0 0
        %2126 = vmatprep.subr.bf16.mxu0 0
        %2127 = vmatpush1.bf16.msra.mxu0 0
        %2128 = vmatprep.subr.bf16.mxu0 0
        %2129 = vmatpush1.bf16.msra.mxu0 0
        %2130 = vmatprep.subr.bf16.mxu0 0
        %2131 = vmatpush1.bf16.msra.mxu0 0
        %2132 = vmatprep.subr.bf16.mxu0 0
        %2133 = vmatpush1.bf16.msra.mxu0 0
        %2134 = vmatprep.subr.bf16.mxu0 0
        %2135 = vmatpush1.bf16.msra.mxu0 0
        %2136 = vmatprep.subr.bf16.mxu0 0
        %2137 = vmatpush1.bf16.msra.mxu0 0
        %2138 = vmatprep.mubr.bf16.mxu0 0
        %2139 = vmatmul.mubr.bf16.gmra.mrb[0].mxu0 %v2101
        %v2140 = vpop.f32.mrb[0].mxu0
        %v2141 = vadd.f32 0.0, %v2140
        %v2142 = vpop.f32.mrb[0].mxu0
        %v2143 = vpop.f32.mrb[0].mxu0
        %v2144 = vpop.f32.mrb[0].mxu0
        %2145 = vdwg.mxu0
        %v2147 = vsel %vm1028, %v1983, 0
        %v2150 = vsel %vm1089, %v1985, 0
        %2152 = vmatprep.subr.bf16.mxu0 0
        %2153 = vmatpush1.bf16.msra.mxu0 %v2150
        %2154 = vmatprep.subr.bf16.mxu0 0
        %2155 = vmatpush1.bf16.msra.mxu0 0
        %2156 = vmatprep.subr.bf16.mxu0 0
        %2157 = vmatpush1.bf16.msra.mxu0 0
        %2158 = vmatprep.subr.bf16.mxu0 0
        %2159 = vmatpush1.bf16.msra.mxu0 0
        %2160 = vmatprep.subr.bf16.mxu0 0
        %2161 = vmatpush1.bf16.msra.mxu0 0
        %2162 = vmatprep.subr.bf16.mxu0 0
        %2163 = vmatpush1.bf16.msra.mxu0 0
        %2164 = vmatprep.subr.bf16.mxu0 0
        %2165 = vmatpush1.bf16.msra.mxu0 0
        %2166 = vmatprep.subr.bf16.mxu0 0
        %2167 = vmatpush1.bf16.msra.mxu0 0
        %2168 = vmatprep.subr.bf16.mxu0 0
        %2169 = vmatpush1.bf16.msra.mxu0 0
        %2170 = vmatprep.subr.bf16.mxu0 0
        %2171 = vmatpush1.bf16.msra.mxu0 0
        %2172 = vmatprep.subr.bf16.mxu0 0
        %2173 = vmatpush1.bf16.msra.mxu0 0
        %2174 = vmatprep.subr.bf16.mxu0 0
        %2175 = vmatpush1.bf16.msra.mxu0 0
        %2176 = vmatprep.subr.bf16.mxu0 0
        %2177 = vmatpush1.bf16.msra.mxu0 0
        %2178 = vmatprep.subr.bf16.mxu0 0
        %2179 = vmatpush1.bf16.msra.mxu0 0
        %2180 = vmatprep.subr.bf16.mxu0 0
        %2181 = vmatpush1.bf16.msra.mxu0 0
        %2182 = vmatprep.subr.bf16.mxu0 0
        %2183 = vmatpush1.bf16.msra.mxu0 0
        %2184 = vmatprep.mubr.bf16.mxu0 0
        %2185 = vmatmul.mubr.bf16.gmra.mrb[0].mxu0 %v2147
        %v2186 = vpop.f32.mrb[0].mxu0
        %v2187 = vadd.f32 %v2141, %v2186
        %v2188 = vpop.f32.mrb[0].mxu0
        %v2189 = vpop.f32.mrb[0].mxu0
        %v2190 = vpop.f32.mrb[0].mxu0
        %2191 = vdwg.mxu0
        %2192 = vrot.lane.b32.xlu0 %v1878, 112
        %v2193 = vpop.permute.xlu0 %2192
        %2194 = vrot.lane.b32.xlu0 %v1879, 112
        %v2195 = vpop.permute.xlu0 %2194
        %v2197 = vsel %vm1028, %v2193, 0
        %v2200 = vsel %vm1028, %v2195, 0
        %2202 = vmatprep.subr.bf16.mxu0 0
        %2203 = vmatpush1.bf16.xpose.msra.mxu0 %v2200
        %2204 = vmatprep.subr.bf16.mxu0 0
        %2205 = vmatpush1.bf16.xpose.msra.mxu0 0
        %2206 = vmatprep.subr.bf16.mxu0 0
        %2207 = vmatpush1.bf16.xpose.msra.mxu0 0
        %2208 = vmatprep.subr.bf16.mxu0 0
        %2209 = vmatpush1.bf16.xpose.msra.mxu0 0
        %2210 = vmatprep.subr.bf16.mxu0 0
        %2211 = vmatpush1.bf16.xpose.msra.mxu0 0
        %2212 = vmatprep.subr.bf16.mxu0 0
        %2213 = vmatpush1.bf16.xpose.msra.mxu0 0
        %2214 = vmatprep.subr.bf16.mxu0 0
        %2215 = vmatpush1.bf16.xpose.msra.mxu0 0
        %2216 = vmatprep.subr.bf16.mxu0 0
        %2217 = vmatpush1.bf16.xpose.msra.mxu0 0
        %2218 = vmatprep.subr.bf16.mxu0 0
        %2219 = vmatpush1.bf16.xpose.msra.mxu0 0
        %2220 = vmatprep.subr.bf16.mxu0 0
        %2221 = vmatpush1.bf16.xpose.msra.mxu0 0
        %2222 = vmatprep.subr.bf16.mxu0 0
        %2223 = vmatpush1.bf16.xpose.msra.mxu0 0
        %2224 = vmatprep.subr.bf16.mxu0 0
        %2225 = vmatpush1.bf16.xpose.msra.mxu0 0
        %2226 = vmatprep.subr.bf16.mxu0 0
        %2227 = vmatpush1.bf16.xpose.msra.mxu0 0
        %2228 = vmatprep.subr.bf16.mxu0 0
        %2229 = vmatpush1.bf16.xpose.msra.mxu0 0
        %2230 = vmatprep.subr.bf16.mxu0 0
        %2231 = vmatpush1.bf16.xpose.msra.mxu0 0
        %2232 = vmatprep.subr.bf16.mxu0 0
        %2233 = vmatpush1.bf16.xpose.msra.mxu0 0
        %2234 = vmatprep.mubr.bf16.mxu0 0
        %2235 = vmatmul.mubr.bf16.gmra.mrb[0].mxu0 %v2197
        %v2236 = vpop.f32.mrb[0].mxu0
        %v2237 = vadd.f32 0.0, %v2236
        %v2238 = vpop.f32.mrb[0].mxu0
        %v2239 = vpop.f32.mrb[0].mxu0
        %v2240 = vpop.f32.mrb[0].mxu0
        %2241 = vdwg.mxu0
        %v2242 = vsel %vm1927, %v2237, -inf
        %2243 = vmax.xlane.f32.xlu0 %v2242
        %v2244 = vpop.xlane.xlu0 %2243
        %v2245 = vsub.f32 %v2237, %v2244
        %v2246 = vmul.f32 %v2245, 1.442695
        %v2247 = vpow.pop %v2246
        %v2248 = vsel %vm1927, %v2247, 0.0
        %2249 = vadd.xlane.f32.xlu0 %v2248
        %v2250 = vpop.xlane.xlu0 %2249
        %v2251 = vrcp.pop %v2250
        %v2252 = vpack.c.bf16 %v2247, %v2247
        %2253 = vrot.lane.b32.xlu0 %v1880, 112
        %v2254 = vpop.permute.xlu0 %2253
        %v2257 = vsel %vm1927, %v2252, 0
        %2259 = vmatprep.subr.bf16.mxu0 0
        %2260 = vmatpush1.bf16.msra.mxu0 %v2254
        %2261 = vmatprep.subr.bf16.mxu0 0
        %2262 = vmatpush1.bf16.msra.mxu0 0
        %2263 = vmatprep.subr.bf16.mxu0 0
        %2264 = vmatpush1.bf16.msra.mxu0 0
        %2265 = vmatprep.subr.bf16.mxu0 0
        %2266 = vmatpush1.bf16.msra.mxu0 0
        %2267 = vmatprep.subr.bf16.mxu0 0
        %2268 = vmatpush1.bf16.msra.mxu0 0
        %2269 = vmatprep.subr.bf16.mxu0 0
        %2270 = vmatpush1.bf16.msra.mxu0 0
        %2271 = vmatprep.subr.bf16.mxu0 0
        %2272 = vmatpush1.bf16.msra.mxu0 0
        %2273 = vmatprep.subr.bf16.mxu0 0
        %2274 = vmatpush1.bf16.msra.mxu0 0
        %2275 = vmatprep.subr.bf16.mxu0 0
        %2276 = vmatpush1.bf16.msra.mxu0 0
        %2277 = vmatprep.subr.bf16.mxu0 0
        %2278 = vmatpush1.bf16.msra.mxu0 0
        %2279 = vmatprep.subr.bf16.mxu0 0
        %2280 = vmatpush1.bf16.msra.mxu0 0
        %2281 = vmatprep.subr.bf16.mxu0 0
        %2282 = vmatpush1.bf16.msra.mxu0 0
        %2283 = vmatprep.subr.bf16.mxu0 0
        %2284 = vmatpush1.bf16.msra.mxu0 0
        %2285 = vmatprep.subr.bf16.mxu0 0
        %2286 = vmatpush1.bf16.msra.mxu0 0
        %2287 = vmatprep.subr.bf16.mxu0 0
        %2288 = vmatpush1.bf16.msra.mxu0 0
        %2289 = vmatprep.subr.bf16.mxu0 0
        %2290 = vmatpush1.bf16.msra.mxu0 0
        %2291 = vmatprep.mubr.bf16.mxu0 0
        %2292 = vmatmul.mubr.bf16.gmra.mrb[0].mxu0 %v2257
        %v2293 = vpop.f32.mrb[0].mxu0
        %v2294 = vadd.f32 0.0, %v2293
        %v2295 = vpop.f32.mrb[0].mxu0
        %v2296 = vpop.f32.mrb[0].mxu0
        %v2297 = vpop.f32.mrb[0].mxu0
        %2298 = vdwg.mxu0
        %v2299 = vmul.f32 %v2294, %v2251
        %v2300 = vpack.c.bf16 %v2299, %v2299
        %v2301 = vld [vmem:[#allocation19 + $0x10] sm:$0xff]
        %v2302 = vpack.c.bf16 %v2301, %v2301
        %v2304 = vsel %vm1028, %v2300, 0
        %v2307 = vsel %vm1089, %v2302, 0
        %2309 = vmatprep.subr.bf16.mxu0 0
        %2310 = vmatpush1.bf16.msra.mxu0 %v2307
        %2311 = vmatprep.subr.bf16.mxu0 0
        %2312 = vmatpush1.bf16.msra.mxu0 0
        %2313 = vmatprep.subr.bf16.mxu0 0
        %2314 = vmatpush1.bf16.msra.mxu0 0
        %2315 = vmatprep.subr.bf16.mxu0 0
        %2316 = vmatpush1.bf16.msra.mxu0 0
        %2317 = vmatprep.subr.bf16.mxu0 0
        %2318 = vmatpush1.bf16.msra.mxu0 0
        %2319 = vmatprep.subr.bf16.mxu0 0
        %2320 = vmatpush1.bf16.msra.mxu0 0
        %2321 = vmatprep.subr.bf16.mxu0 0
        %2322 = vmatpush1.bf16.msra.mxu0 0
        %2323 = vmatprep.subr.bf16.mxu0 0
        %2324 = vmatpush1.bf16.msra.mxu0 0
        %2325 = vmatprep.subr.bf16.mxu0 0
        %2326 = vmatpush1.bf16.msra.mxu0 0
        %2327 = vmatprep.subr.bf16.mxu0 0
        %2328 = vmatpush1.bf16.msra.mxu0 0
        %2329 = vmatprep.subr.bf16.mxu0 0
        %2330 = vmatpush1.bf16.msra.mxu0 0
        %2331 = vmatprep.subr.bf16.mxu0 0
        %2332 = vmatpush1.bf16.msra.mxu0 0
        %2333 = vmatprep.subr.bf16.mxu0 0
        %2334 = vmatpush1.bf16.msra.mxu0 0
        %2335 = vmatprep.subr.bf16.mxu0 0
        %2336 = vmatpush1.bf16.msra.mxu0 0
        %2337 = vmatprep.subr.bf16.mxu0 0
        %2338 = vmatpush1.bf16.msra.mxu0 0
        %2339 = vmatprep.subr.bf16.mxu0 0
        %2340 = vmatpush1.bf16.msra.mxu0 0
        %2341 = vmatprep.mubr.bf16.mxu0 0
        %2342 = vmatmul.mubr.bf16.gmra.mrb[0].mxu0 %v2304
        %v2343 = vpop.f32.mrb[0].mxu0
        %v2344 = vadd.f32 0.0, %v2343
        %v2345 = vpop.f32.mrb[0].mxu0
        %v2346 = vpop.f32.mrb[0].mxu0
        %v2347 = vpop.f32.mrb[0].mxu0
        %2348 = vdwg.mxu0
        %v2349 = vadd.f32 %v2187, %v2344
        %2350 = vrot.lane.b32.xlu0 %v1878, 104
        %v2351 = vpop.permute.xlu0 %2350
        %2352 = vrot.lane.b32.xlu0 %v1879, 104
        %v2353 = vpop.permute.xlu0 %2352
        %v2355 = vsel %vm1028, %v2351, 0
        %v2358 = vsel %vm1028, %v2353, 0
        %2360 = vmatprep.subr.bf16.mxu0 0
        %2361 = vmatpush1.bf16.xpose.msra.mxu0 %v2358
        %2362 = vmatprep.subr.bf16.mxu0 0
        %2363 = vmatpush1.bf16.xpose.msra.mxu0 0
        %2364 = vmatprep.subr.bf16.mxu0 0
        %2365 = vmatpush1.bf16.xpose.msra.mxu0 0
        %2366 = vmatprep.subr.bf16.mxu0 0
        %2367 = vmatpush1.bf16.xpose.msra.mxu0 0
        %2368 = vmatprep.subr.bf16.mxu0 0
        %2369 = vmatpush1.bf16.xpose.msra.mxu0 0
        %2370 = vmatprep.subr.bf16.mxu0 0
        %2371 = vmatpush1.bf16.xpose.msra.mxu0 0
        %2372 = vmatprep.subr.bf16.mxu0 0
        %2373 = vmatpush1.bf16.xpose.msra.mxu0 0
        %2374 = vmatprep.subr.bf16.mxu0 0
        %2375 = vmatpush1.bf16.xpose.msra.mxu0 0
        %2376 = vmatprep.subr.bf16.mxu0 0
        %2377 = vmatpush1.bf16.xpose.msra.mxu0 0
        %2378 = vmatprep.subr.bf16.mxu0 0
        %2379 = vmatpush1.bf16.xpose.msra.mxu0 0
        %2380 = vmatprep.subr.bf16.mxu0 0
        %2381 = vmatpush1.bf16.xpose.msra.mxu0 0
        %2382 = vmatprep.subr.bf16.mxu0 0
        %2383 = vmatpush1.bf16.xpose.msra.mxu0 0
        %2384 = vmatprep.subr.bf16.mxu0 0
        %2385 = vmatpush1.bf16.xpose.msra.mxu0 0
        %2386 = vmatprep.subr.bf16.mxu0 0
        %2387 = vmatpush1.bf16.xpose.msra.mxu0 0
        %2388 = vmatprep.subr.bf16.mxu0 0
        %2389 = vmatpush1.bf16.xpose.msra.mxu0 0
        %2390 = vmatprep.subr.bf16.mxu0 0
        %2391 = vmatpush1.bf16.xpose.msra.mxu0 0
        %2392 = vmatprep.mubr.bf16.mxu0 0
        %2393 = vmatmul.mubr.bf16.gmra.mrb[0].mxu0 %v2355
        %v2394 = vpop.f32.mrb[0].mxu0
        %v2395 = vadd.f32 0.0, %v2394
        %v2396 = vpop.f32.mrb[0].mxu0
        %v2397 = vpop.f32.mrb[0].mxu0
        %v2398 = vpop.f32.mrb[0].mxu0
        %2399 = vdwg.mxu0
        %v2400 = vsel %vm1927, %v2395, -inf
        %2401 = vmax.xlane.f32.xlu0 %v2400
        %v2402 = vpop.xlane.xlu0 %2401
        %v2403 = vsub.f32 %v2395, %v2402
        %v2404 = vmul.f32 %v2403, 1.442695
        %v2405 = vpow.pop %v2404
        %v2406 = vsel %vm1927, %v2405, 0.0
        %2407 = vadd.xlane.f32.xlu0 %v2406
        %v2408 = vpop.xlane.xlu0 %2407
        %v2409 = vrcp.pop %v2408
        %v2410 = vpack.c.bf16 %v2405, %v2405
        %2411 = vrot.lane.b32.xlu0 %v1880, 104
        %v2412 = vpop.permute.xlu0 %2411
        %v2415 = vsel %vm1927, %v2410, 0
        %2417 = vmatprep.subr.bf16.mxu0 0
        %2418 = vmatpush1.bf16.msra.mxu0 %v2412
        %2419 = vmatprep.subr.bf16.mxu0 0
        %2420 = vmatpush1.bf16.msra.mxu0 0
        %2421 = vmatprep.subr.bf16.mxu0 0
        %2422 = vmatpush1.bf16.msra.mxu0 0
        %2423 = vmatprep.subr.bf16.mxu0 0
        %2424 = vmatpush1.bf16.msra.mxu0 0
        %2425 = vmatprep.subr.bf16.mxu0 0
        %2426 = vmatpush1.bf16.msra.mxu0 0
        %2427 = vmatprep.subr.bf16.mxu0 0
        %2428 = vmatpush1.bf16.msra.mxu0 0
        %2429 = vmatprep.subr.bf16.mxu0 0
        %2430 = vmatpush1.bf16.msra.mxu0 0
        %2431 = vmatprep.subr.bf16.mxu0 0
        %2432 = vmatpush1.bf16.msra.mxu0 0
        %2433 = vmatprep.subr.bf16.mxu0 0
        %2434 = vmatpush1.bf16.msra.mxu0 0
        %2435 = vmatprep.subr.bf16.mxu0 0
        %2436 = vmatpush1.bf16.msra.mxu0 0
        %2437 = vmatprep.subr.bf16.mxu0 0
        %2438 = vmatpush1.bf16.msra.mxu0 0
        %2439 = vmatprep.subr.bf16.mxu0 0
        %2440 = vmatpush1.bf16.msra.mxu0 0
        %2441 = vmatprep.subr.bf16.mxu0 0
        %2442 = vmatpush1.bf16.msra.mxu0 0
        %2443 = vmatprep.subr.bf16.mxu0 0
        %2444 = vmatpush1.bf16.msra.mxu0 0
        %2445 = vmatprep.subr.bf16.mxu0 0
        %2446 = vmatpush1.bf16.msra.mxu0 0
        %2447 = vmatprep.subr.bf16.mxu0 0
        %2448 = vmatpush1.bf16.msra.mxu0 0
        %2449 = vmatprep.mubr.bf16.mxu0 0
        %2450 = vmatmul.mubr.bf16.gmra.mrb[0].mxu0 %v2415
        %v2451 = vpop.f32.mrb[0].mxu0
        %v2452 = vadd.f32 0.0, %v2451
        %v2453 = vpop.f32.mrb[0].mxu0
        %v2454 = vpop.f32.mrb[0].mxu0
        %v2455 = vpop.f32.mrb[0].mxu0
        %2456 = vdwg.mxu0
        %v2457 = vmul.f32 %v2452, %v2409
        %v2458 = vpack.c.bf16 %v2457, %v2457
        %v2459 = vld [vmem:[#allocation19 + $0x18] sm:$0xff]
        %v2460 = vpack.c.bf16 %v2459, %v2459
        %v2462 = vsel %vm1028, %v2458, 0
        %v2465 = vsel %vm1089, %v2460, 0
        %2467 = vmatprep.subr.bf16.mxu0 0
        %2468 = vmatpush1.bf16.msra.mxu0 %v2465
        %2469 = vmatprep.subr.bf16.mxu0 0
        %2470 = vmatpush1.bf16.msra.mxu0 0
        %2471 = vmatprep.subr.bf16.mxu0 0
        %2472 = vmatpush1.bf16.msra.mxu0 0
        %2473 = vmatprep.subr.bf16.mxu0 0
        %2474 = vmatpush1.bf16.msra.mxu0 0
        %2475 = vmatprep.subr.bf16.mxu0 0
        %2476 = vmatpush1.bf16.msra.mxu0 0
        %2477 = vmatprep.subr.bf16.mxu0 0
        %2478 = vmatpush1.bf16.msra.mxu0 0
        %2479 = vmatprep.subr.bf16.mxu0 0
        %2480 = vmatpush1.bf16.msra.mxu0 0
        %2481 = vmatprep.subr.bf16.mxu0 0
        %2482 = vmatpush1.bf16.msra.mxu0 0
        %2483 = vmatprep.subr.bf16.mxu0 0
        %2484 = vmatpush1.bf16.msra.mxu0 0
        %2485 = vmatprep.subr.bf16.mxu0 0
        %2486 = vmatpush1.bf16.msra.mxu0 0
        %2487 = vmatprep.subr.bf16.mxu0 0
        %2488 = vmatpush1.bf16.msra.mxu0 0
        %2489 = vmatprep.subr.bf16.mxu0 0
        %2490 = vmatpush1.bf16.msra.mxu0 0
        %2491 = vmatprep.subr.bf16.mxu0 0
        %2492 = vmatpush1.bf16.msra.mxu0 0
        %2493 = vmatprep.subr.bf16.mxu0 0
        %2494 = vmatpush1.bf16.msra.mxu0 0
        %2495 = vmatprep.subr.bf16.mxu0 0
        %2496 = vmatpush1.bf16.msra.mxu0 0
        %2497 = vmatprep.subr.bf16.mxu0 0
        %2498 = vmatpush1.bf16.msra.mxu0 0
        %2499 = vmatprep.mubr.bf16.mxu0 0
        %2500 = vmatmul.mubr.bf16.gmra.mrb[0].mxu0 %v2462
        %v2501 = vpop.f32.mrb[0].mxu0
        %v2502 = vadd.f32 0.0, %v2501
        %v2503 = vpop.f32.mrb[0].mxu0
        %v2504 = vpop.f32.mrb[0].mxu0
        %v2505 = vpop.f32.mrb[0].mxu0
        %2506 = vdwg.mxu0
        %v2507 = vadd.f32 %v2349, %v2502
        %v2508 = vld [vmem:[#allocation20] sm:$0x1]
        %v2510 = vlaneseq
        %v2511 = vshrl.u32 %v2510, 7
        %v2512 = vsub.s32 0, %v2511
        %v2513 = vrot.slane %v2508, %v2512
        %v2515 = vadd.f32 %v2507, %v2513
        %v2516 = vadd.f32 %v1698, %v2515
        %v2517 = vld [vmem:[#allocation28 + $0x1] sm:$0x1]
        %v2518 = vld [vmem:[#allocation29 + $0x1] sm:$0x1]
        %v2519 = vsel %vm924, %v2516, 0.0
        %2520 = vadd.xlane.f32.xlu0 %v2519
        %v2521 = vpop.xlane.xlu0 %2520
        %v2522 = vmul.f32 %v2521, %v1678
        %v2523 = vsub.f32 %v2516, %v2522
        %v2524 = vmul.f32 %v2523, %v2523
        %v2525 = vsel %vm924, %v2524, 0.0
        %2526 = vadd.xlane.f32.xlu0 %v2525
        %v2527 = vpop.xlane.xlu0 %2526
        %v2528 = vmul.f32 %v2527, %v1678
        %v2529 = vadd.f32 %v2528, 1e-05
        %v2530 = vrsqrt.pop %v2529
        %v2531 = vmul.f32 %v2523, %v2530
        %v2532 = vlaneseq
        %v2533 = vshrl.u32 %v2532, 7
        %v2534 = vsub.s32 0, %v2533
        %v2535 = vrot.slane %v2517, %v2534
        %v2536 = vmul.f32 %v2531, %v2535
        %v2537 = vlaneseq
        %v2538 = vshrl.u32 %v2537, 7
        %v2539 = vsub.s32 0, %v2538
        %v2540 = vrot.slane %v2518, %v2539
        %v2541 = vadd.f32 %v2536, %v2540
        %v2542 = vld [vmem:[#allocation22] sm:$0xf]
        %v2543 = vld [vmem:[#allocation22 + $0x4] sm:$0xf]
        %v2544 = vld [vmem:[#allocation22 + $0x8] sm:$0xf]
        %v2545 = vld [vmem:[#allocation22 + $0xc] sm:$0xf]
        %v2546 = vpack.c.bf16 %v2541, %v2541
        %v2547 = vld [vmem:[#allocation23] sm:$0x1]
        %v2549 = vlaneseq
        %v2550 = vshrl.u32 %v2549, 7
        %v2551 = vsub.s32 0, %v2550
        %v2552 = vrot.slane %v2547, %v2551
        %v2558 = vunpack.c.l.b16 %v2542
        %v2559 = vunpack.c.l.b16 %v2543
        %v2560 = vunpack.c.l.b16 %v2544
        %v2561 = vunpack.c.l.b16 %v2545
        %v2562 = vpack.c.b16 %v2559, %v2558
        %v2563 = vpack.c.b16 %v2561, %v2560
        %v2567 = vsel %vm924, %v2546, 0
        %2569 = vmatprep.subr.bf16.mxu0 0
        %2570 = vmatpush1.bf16.msra.mxu0 %v2562
        %2571 = vmatprep.subr.bf16.mxu0 0
        %2572 = vmatpush1.bf16.msra.mxu0 %v2563
        %2573 = vmatprep.subr.bf16.mxu0 0
        %2574 = vmatpush1.bf16.msra.mxu0 0
        %2575 = vmatprep.subr.bf16.mxu0 0
        %2576 = vmatpush1.bf16.msra.mxu0 0
        %2577 = vmatprep.subr.bf16.mxu0 0
        %2578 = vmatpush1.bf16.msra.mxu0 0
        %2579 = vmatprep.subr.bf16.mxu0 0
        %2580 = vmatpush1.bf16.msra.mxu0 0
        %2581 = vmatprep.subr.bf16.mxu0 0
        %2582 = vmatpush1.bf16.msra.mxu0 0
        %2583 = vmatprep.subr.bf16.mxu0 0
        %2584 = vmatpush1.bf16.msra.mxu0 0
        %2585 = vmatprep.subr.bf16.mxu0 0
        %2586 = vmatpush1.bf16.msra.mxu0 0
        %2587 = vmatprep.subr.bf16.mxu0 0
        %2588 = vmatpush1.bf16.msra.mxu0 0
        %2589 = vmatprep.subr.bf16.mxu0 0
        %2590 = vmatpush1.bf16.msra.mxu0 0
        %2591 = vmatprep.subr.bf16.mxu0 0
        %2592 = vmatpush1.bf16.msra.mxu0 0
        %2593 = vmatprep.subr.bf16.mxu0 0
        %2594 = vmatpush1.bf16.msra.mxu0 0
        %2595 = vmatprep.subr.bf16.mxu0 0
        %2596 = vmatpush1.bf16.msra.mxu0 0
        %2597 = vmatprep.subr.bf16.mxu0 0
        %2598 = vmatpush1.bf16.msra.mxu0 0
        %2599 = vmatprep.subr.bf16.mxu0 0
        %2600 = vmatpush1.bf16.msra.mxu0 0
        %2601 = vmatprep.mubr.bf16.mxu0 0
        %2602 = vmatmul.mubr.bf16.gmra.mrb[0].mxu0 %v2567
        %v2603 = vpop.f32.mrb[0].mxu0
        %v2604 = vadd.f32 %v2552, %v2603
        %v2605 = vpop.f32.mrb[0].mxu0
        %v2606 = vpop.f32.mrb[0].mxu0
        %v2607 = vpop.f32.mrb[0].mxu0
        %2608 = vdwg.mxu0
        %v2609 = vmax.f32 %v2604, 0.0
        %v2610 = vld [vmem:[#allocation25] sm:$0xf]
        %v2611 = vld [vmem:[#allocation25 + $0x4] sm:$0xf]
        %v2612 = vld [vmem:[#allocation25 + $0x8] sm:$0xf]
        %v2613 = vld [vmem:[#allocation25 + $0xc] sm:$0xf]
        %v2614 = vld [vmem:[#allocation25 + $0x10] sm:$0xf]
        %v2615 = vld [vmem:[#allocation25 + $0x14] sm:$0xf]
        %v2616 = vld [vmem:[#allocation25 + $0x18] sm:$0xf]
        %v2617 = vld [vmem:[#allocation25 + $0x1c] sm:$0xf]
        %v2618 = vpack.c.bf16 %v2609, %v2609
        %v2619 = vld [vmem:[#allocation26] sm:$0x1]
        %v2621 = vlaneseq
        %v2622 = vshrl.u32 %v2621, 7
        %v2623 = vsub.s32 0, %v2622
        %v2624 = vrot.slane %v2619, %v2623
        %v2634 = vunpack.c.l.b16 %v2610
        %v2635 = vunpack.c.l.b16 %v2611
        %v2636 = vunpack.c.l.b16 %v2612
        %v2637 = vunpack.c.l.b16 %v2613
        %v2638 = vunpack.c.l.b16 %v2614
        %v2639 = vunpack.c.l.b16 %v2615
        %v2640 = vunpack.c.l.b16 %v2616
        %v2641 = vunpack.c.l.b16 %v2617
        %v2642 = vpack.c.b16 %v2635, %v2634
        %v2643 = vpack.c.b16 %v2637, %v2636
        %v2644 = vpack.c.b16 %v2639, %v2638
        %v2645 = vpack.c.b16 %v2641, %v2640
        %vm2650 = vcmask 523264
        %v2652 = vsel %vm2650, %v2618, 0
        %2654 = vmatprep.subr.bf16.mxu0 0
        %2655 = vmatpush1.bf16.msra.mxu0 %v2642
        %2656 = vmatprep.subr.bf16.mxu0 0
        %2657 = vmatpush1.bf16.msra.mxu0 %v2643
        %2658 = vmatprep.subr.bf16.mxu0 0
        %2659 = vmatpush1.bf16.msra.mxu0 %v2644
        %2660 = vmatprep.subr.bf16.mxu0 0
        %2661 = vmatpush1.bf16.msra.mxu0 %v2645
        %2662 = vmatprep.subr.bf16.mxu0 0
        %2663 = vmatpush1.bf16.msra.mxu0 0
        %2664 = vmatprep.subr.bf16.mxu0 0
        %2665 = vmatpush1.bf16.msra.mxu0 0
        %2666 = vmatprep.subr.bf16.mxu0 0
        %2667 = vmatpush1.bf16.msra.mxu0 0
        %2668 = vmatprep.subr.bf16.mxu0 0
        %2669 = vmatpush1.bf16.msra.mxu0 0
        %2670 = vmatprep.subr.bf16.mxu0 0
        %2671 = vmatpush1.bf16.msra.mxu0 0
        %2672 = vmatprep.subr.bf16.mxu0 0
        %2673 = vmatpush1.bf16.msra.mxu0 0
        %2674 = vmatprep.subr.bf16.mxu0 0
        %2675 = vmatpush1.bf16.msra.mxu0 0
        %2676 = vmatprep.subr.bf16.mxu0 0
        %2677 = vmatpush1.bf16.msra.mxu0 0
        %2678 = vmatprep.subr.bf16.mxu0 0
        %2679 = vmatpush1.bf16.msra.mxu0 0
        %2680 = vmatprep.subr.bf16.mxu0 0
        %2681 = vmatpush1.bf16.msra.mxu0 0
        %2682 = vmatprep.subr.bf16.mxu0 0
        %2683 = vmatpush1.bf16.msra.mxu0 0
        %2684 = vmatprep.subr.bf16.mxu0 0
        %2685 = vmatpush1.bf16.msra.mxu0 0
        %2686 = vmatprep.mubr.bf16.mxu0 0
        %2687 = vmatmul.mubr.bf16.gmra.mrb[0].mxu0 %v2652
        %v2688 = vpop.f32.mrb[0].mxu0
        %v2689 = vadd.f32 %v2624, %v2688
        %v2690 = vpop.f32.mrb[0].mxu0
        %v2691 = vpop.f32.mrb[0].mxu0
        %v2692 = vpop.f32.mrb[0].mxu0
        %2693 = vdwg.mxu0
        %v2694 = vadd.f32 %v2541, %v2689
        %v2695 = vld [vmem:[#allocation28 + $0x2] sm:$0x1]
        %v2696 = vld [vmem:[#allocation29 + $0x2] sm:$0x1]
        %v2697 = vsel %vm924, %v2694, 0.0
        %2698 = vadd.xlane.f32.xlu0 %v2697
        %v2699 = vpop.xlane.xlu0 %2698
        %v2700 = vmul.f32 %v2699, %v1678
        %v2701 = vsub.f32 %v2694, %v2700
        %v2702 = vmul.f32 %v2701, %v2701
        %v2703 = vsel %vm924, %v2702, 0.0
        %2704 = vadd.xlane.f32.xlu0 %v2703
        %v2705 = vpop.xlane.xlu0 %2704
        %v2706 = vmul.f32 %v2705, %v1678
        %v2707 = vadd.f32 %v2706, 1e-05
        %v2708 = vrsqrt.pop %v2707
        %v2709 = vmul.f32 %v2701, %v2708
        %v2710 = vlaneseq
        %v2711 = vshrl.u32 %v2710, 7
        %v2712 = vsub.s32 0, %v2711
        %v2713 = vrot.slane %v2695, %v2712
        %v2714 = vmul.f32 %v2709, %v2713
        %v2715 = vlaneseq
        %v2716 = vshrl.u32 %v2715, 7
        %v2717 = vsub.s32 0, %v2716
        %v2718 = vrot.slane %v2696, %v2717
        %v2719 = vadd.f32 %v2714, %v2718
        %2720 = vst.msk [vmem:[%s891] sm:$0xff] %vm924, %v2719
        %s2721 = sand.u32 %s454, 1
        %s2722 = scalar_lea.sflag [#allocation4], %s2721
        %s2723 = sand.u32 %s454, 1
        %s2724 = smul.addr %s2723, 8
        %s2725 = scalar_lea.vmem [#allocation31], %s2724
        // Predicated region
        $region165: #{tpu_custom_call.1} parent=91 // pred_check
          %p2726 = pneg %p464
        $region166: #{tpu_custom_call.1} parent=91 // pred_check_branch
          %2728 = sbr.rel (%p2726) target = $region168
        $region167: #{tpu_custom_call.1} parent=91 // pred_region
          %s2730 = ssub.s32 128, 128
          %2731 = vsyncadd %s2722, %s2730
          %s2732 = smul.addr %s48, 128
          %s2733 = scalar_lea.hbm %s18, %s2732
          %s2735 = sshll.u32 %s2725, 4
          %s2736 = int_to_ptr.vmem [resolvable:$true] %s2735
          %2738 = dma.vmem_to_hbm [thread:$0]  %s2736, 128, %s2733, %s2722
        $region168: #{tpu_custom_call.1} parent=91 // pred_fallthru
          _
      $region92: #{tpu_custom_call.1} parent=5 // pred_fallthru
        _
      %p2739 = scmp.le.s32.totalorder 2, %s43
      // Predicated region
      $region169: #{tpu_custom_call.1} parent=5 // pred_check
        %p2740 = pneg %p2739
      $region170: #{tpu_custom_call.1} parent=5 // pred_check_branch
        %2742 = sbr.rel (%p2740) target = $region172
      $region171: #{tpu_custom_call.1} parent=5 // pred_region
        %s2743 = ssub.s32 %s43, 2
        // Predicated region
        $region173: #{tpu_custom_call.1} parent=171 // pred_check
          %p2744 = pneg %p470
        $region174: #{tpu_custom_call.1} parent=171 // pred_check_branch
          %2746 = sbr.rel (%p2744) target = $region176
        $region175: #{tpu_custom_call.1} parent=171 // pred_region
          %s2747 = sand.u32 %s455, 1
          %s2748 = scalar_lea.sflag [#allocation4], %s2747
          %s2749 = sand.u32 %s455, 1
          %s2750 = smul.addr %s2749, 8
          %s2751 = scalar_lea.vmem [#allocation31], %s2750
          %2752 = dma.done %s2748, 128
        $region176: #{tpu_custom_call.1} parent=171 // pred_fallthru
          _
      $region172: #{tpu_custom_call.1} parent=5 // pred_fallthru
        _
    $region6: #{tpu_custom_call.1} parent=1 // loop_footer
      %s47 = sadd.s32 1, %s43
    $region7: #{tpu_custom_call.1} parent=1 // loop_footer_branch
      %42 = sbr.rel target = $region3
    $region8: #{tpu_custom_call.1} parent=1 // loop_exit
      _
    %2753 = vsyncpa [#allocation3], 1
    %s2754 = scalar_lea.sflag [#allocation3], 1
    %2755 = vsyncpa %s2754, 1
    %2756 = vsyncpa [#allocation6], 1
    %s2757 = scalar_lea.sflag [#allocation6], 1
    %2758 = vsyncpa %s2757, 1
    %2759 = vsyncpa [#allocation9], 1
    %s2760 = scalar_lea.sflag [#allocation9], 1
    %2761 = vsyncpa %s2760, 1
    %2762 = vsyncpa [#allocation12], 1
    %2763 = vsyncpa [#allocation15], 1
    %2764 = vsyncpa [#allocation18], 1
    %2765 = vsyncpa [#allocation21], 1
    %2766 = vsyncpa [#allocation24], 1
    %2767 = vsyncpa [#allocation27], 1
    %2768 = vsyncpa [#allocation30], 1
    %2769 = vsyncpa [#allocation4], 1
    %s2770 = scalar_lea.sflag [#allocation4], 1
    %2771 = vsyncpa %s2770, 1

// kernel: tpu_custom_call.1
$region0: #{tpu_custom_call.1}
  #allocation0 [shape = 'u32[]', space=smem, size = 0x4, offset = 0x4, fixed_abs, tag = 'smem constant byte address 0x4 - core index']
  #allocation1 [shape = 'u32[144,128]{1,0:T(1,128)}', space=vmem, size = 0x12000, scoped, tag = 'internal scratch']
  %s0 = inlined_call_operand.hbm [shape: f32[2,8,32], index: 0, kind: input, shape index: {}]
  %s1 = inlined_call_operand.hbm [shape: f32[2,16,32], index: 1, kind: input, shape index: {}]
  %s2 = inlined_call_operand.hbm [shape: f32[2,8,32], index: 2, kind: input, shape index: {}]
  %s3 = inlined_call_operand.hbm [shape: f32[2,16,32], index: 3, kind: input, shape index: {}]
  %s4 = inlined_call_operand.hbm [shape: bf16[32,96], index: 4, kind: input, shape index: {}]
  %s5 = inlined_call_operand.hbm [shape: f32[1,96], index: 5, kind: input, shape index: {}]
  %s6 = inlined_call_operand.hbm [shape: f32[32,32], index: 6, kind: input, shape index: {}]
  %s7 = inlined_call_operand.hbm [shape: f32[1,32], index: 7, kind: input, shape index: {}]
  %s8 = inlined_call_operand.hbm [shape: bf16[32,96], index: 8, kind: input, shape index: {}]
  %s9 = inlined_call_operand.hbm [shape: f32[1,96], index: 9, kind: input, shape index: {}]
  %s10 = inlined_call_operand.hbm [shape: f32[32,32], index: 10, kind: input, shape index: {}]
  %s11 = inlined_call_operand.hbm [shape: f32[1,32], index: 11, kind: input, shape index: {}]
  %s12 = inlined_call_operand.hbm [shape: bf16[32,64], index: 12, kind: input, shape index: {}]
  %s13 = inlined_call_operand.hbm [shape: f32[1,64], index: 13, kind: input, shape index: {}]
  %s14 = inlined_call_operand.hbm [shape: bf16[64,32], index: 14, kind: input, shape index: {}]
  %s15 = inlined_call_operand.hbm [shape: f32[1,32], index: 15, kind: input, shape index: {}]
  %s16 = inlined_call_operand.hbm [shape: f32[3,32], index: 16, kind: input, shape index: {}]
  %s17 = inlined_call_operand.hbm [shape: f32[3,32], index: 17, kind: input, shape index: {}]
  %s18 = inlined_call_operand.hbm [shape: f32[2,8,32], index: 18, kind: output, shape index: {}]
  %s19 = sld [smem:[#allocation0]]
  $region177: #{tpu_custom_call.1} parent=0
    _
  %s21 = ssub.s32 1, %s19
  %s22 = scalar_select 0, %s21, %s19
  $region1: #{tpu_custom_call.1} parent=0
    #allocation2 [shape = 'u8[8192]{0}', space=vmem, size = 0x2000, scoped, tag = 'input window, operand 0']
    #allocation3 [shape = 's32[2]{0}', space=sflag, size = 0x8, scoped, tag = 'scoped memory for tpu_custom_call.1']
    #allocation4 [shape = 's32[2]{0}', space=sflag, size = 0x8, scoped, tag = 'scoped memory for tpu_custom_call.1']
    #allocation5 [shape = 'u8[16384]{0}', space=vmem, size = 0x4000, scoped, tag = 'input window, operand 1']
    #allocation6 [shape = 's32[2]{0}', space=sflag, size = 0x8, scoped, tag = 'scoped memory for tpu_custom_call.1']
    #allocation7 [shape = 'u8[8192]{0}', space=vmem, size = 0x2000, scoped, tag = 'input window, operand 2']
    #allocation8 [shape = 'u8[16384]{0}', space=vmem, size = 0x4000, scoped, tag = 'input window, operand 3']
    #allocation9 [shape = 's32[2]{0}', space=sflag, size = 0x8, scoped, tag = 'scoped memory for tpu_custom_call.1']
    #allocation10 [shape = 'u8[8192]{0}', space=vmem, size = 0x2000, scoped, tag = 'input window, operand 4, single buffered']
    #allocation11 [shape = 'u8[512]{0}', space=vmem, size = 0x400, scoped, tag = 'input window, operand 5, single buffered']
    #allocation12 [shape = 's32[1]{0}', space=sflag, size = 0x4, scoped, tag = 'scoped memory for tpu_custom_call.1']
    #allocation13 [shape = 'u8[16384]{0}', space=vmem, size = 0x4000, scoped, tag = 'input window, operand 6, single buffered']
    #allocation14 [shape = 'u8[512]{0}', space=vmem, size = 0x400, scoped, tag = 'input window, operand 7, single buffered']
    #allocation15 [shape = 's32[1]{0}', space=sflag, size = 0x4, scoped, tag = 'scoped memory for tpu_custom_call.1']
    #allocation16 [shape = 'u8[8192]{0}', space=vmem, size = 0x2000, scoped, tag = 'input window, operand 8, single buffered']
    #allocation17 [shape = 'u8[512]{0}', space=vmem, size = 0x400, scoped, tag = 'input window, operand 9, single buffered']
    #allocation18 [shape = 's32[1]{0}', space=sflag, size = 0x4, scoped, tag = 'scoped memory for tpu_custom_call.1']
    #allocation19 [shape = 'u8[16384]{0}', space=vmem, size = 0x4000, scoped, tag = 'input window, operand 10, single buffered']
    #allocation20 [shape = 'u8[512]{0}', space=vmem, size = 0x400, scoped, tag = 'input window, operand 11, single buffered']
    #allocation21 [shape = 's32[1]{0}', space=sflag, size = 0x4, scoped, tag = 'scoped memory for tpu_custom_call.1']
    #allocation22 [shape = 'u8[8192]{0}', space=vmem, size = 0x2000, scoped, tag = 'input window, operand 12, single buffered']
    #allocation23 [shape = 'u8[512]{0}', space=vmem, size = 0x400, scoped, tag = 'input window, operand 13, single buffered']
    #allocation24 [shape = 's32[1]{0}', space=sflag, size = 0x4, scoped, tag = 'scoped memory for tpu_custom_call.1']
    #allocation25 [shape = 'u8[16384]{0}', space=vmem, size = 0x4000, scoped, tag = 'input window, operand 14, single buffered']
    #allocation26 [shape = 'u8[512]{0}', space=vmem, size = 0x400, scoped, tag = 'input window, operand 15, single buffered']
    #allocation27 [shape = 's32[1]{0}', space=sflag, size = 0x4, scoped, tag = 'scoped memory for tpu_custom_call.1']
    #allocation28 [shape = 'u8[2048]{0}', space=vmem, size = 0x800, scoped, tag = 'input window, operand 16, single buffered']
    #allocation29 [shape = 'u8[2048]{0}', space=vmem, size = 0x800, scoped, tag = 'input window, operand 17, single buffered']
    #allocation30 [shape = 's32[1]{0}', space=sflag, size = 0x4, scoped, tag = 'scoped memory for tpu_custom_call.1']
    #allocation31 [shape = 'u8[8192]{0}', space=vmem, size = 0x2000, scoped, tag = 'output window, operand 0']
    %23 = vsyncpa [#allocation3], 0
    %s24 = scalar_lea.sflag [#allocation3], 1
    %25 = vsyncpa %s24, 0
    %26 = vsyncpa [#allocation6], 0
    %s27 = scalar_lea.sflag [#allocation6], 1
    %28 = vsyncpa %s27, 0
    %29 = vsyncpa [#allocation9], 0
    %s30 = scalar_lea.sflag [#allocation9], 1
    %31 = vsyncpa %s30, 0
    %32 = vsyncpa [#allocation12], 0
    %33 = vsyncpa [#allocation15], 0
    %34 = vsyncpa [#allocation18], 0
    %35 = vsyncpa [#allocation21], 0
    %36 = vsyncpa [#allocation24], 0
    %37 = vsyncpa [#allocation27], 0
    %38 = vsyncpa [#allocation30], 0
    %39 = vsyncpa [#allocation4], 0
    %s40 = scalar_lea.sflag [#allocation4], 1
    %41 = vsyncpa %s40, 0
    loop: start=0, step=1, limit=4
    $region2: #{tpu_custom_call.1} parent=1 // loop_pre_header
      _
    $region3: #{tpu_custom_call.1} parent=1 // loop_header
      %s43 = sphi 0, %s47
      %p44 = scmp.ge.s32.totalorder %s43, 4
      %s53 = sphi 0, %s55
      %s56 = sphi 0, %s53
      %s57 = sphi 0, %s56
      %s73 = sphi 0, %s57
      %s79 = sphi 0, %s81
      %s82 = sphi 0, %s79
      %s83 = sphi 0, %s82
      %s99 = sphi 0, %s83
      %s105 = sphi 0, %s107
      %s108 = sphi 0, %s105
      %s109 = sphi 0, %s108
      %s125 = sphi 0, %s109
      %s131 = sphi 0, %s133
      %s134 = sphi 0, %s131
      %s135 = sphi 0, %s134
      %s151 = sphi 0, %s135
      %s155 = sphi 0, %s155
      %s157 = sphi 0, %s155
      %s158 = sphi 0, %s157
      %s172 = sphi 0, %s158
      %s176 = sphi 0, %s176
      %s178 = sphi 0, %s176
      %s179 = sphi 0, %s178
      %s193 = sphi 0, %s179
      %s197 = sphi 0, %s197
      %s199 = sphi 0, %s197
      %s200 = sphi 0, %s199
      %s214 = sphi 0, %s200
      %s218 = sphi 0, %s218
      %s220 = sphi 0, %s218
      %s221 = sphi 0, %s220
      %s235 = sphi 0, %s221
      %s239 = sphi 0, %s239
      %s241 = sphi 0, %s239
      %s242 = sphi 0, %s241
      %s256 = sphi 0, %s242
      %s260 = sphi 0, %s260
      %s262 = sphi 0, %s260
      %s263 = sphi 0, %s262
      %s277 = sphi 0, %s263
      %s281 = sphi 0, %s281
      %s283 = sphi 0, %s281
      %s284 = sphi 0, %s283
      %s298 = sphi 0, %s284
      %s302 = sphi 0, %s302
      %s304 = sphi 0, %s302
      %s305 = sphi 0, %s304
      %s319 = sphi 0, %s305
      %s323 = sphi 0, %s323
      %s325 = sphi 0, %s323
      %s326 = sphi 0, %s325
      %s340 = sphi 0, %s326
      %s344 = sphi 0, %s344
      %s346 = sphi 0, %s344
      %s347 = sphi 0, %s346
      %s361 = sphi 0, %s347
      %s365 = sphi 0, %s365
      %s367 = sphi 0, %s365
      %s368 = sphi 0, %s367
      %s382 = sphi 0, %s368
      %s386 = sphi 0, %s386
      %s388 = sphi 0, %s386
      %s389 = sphi 0, %s388
      %s403 = sphi 0, %s389
      %s407 = sphi 0, %s407
      %s409 = sphi 0, %s407
      %s410 = sphi 0, %s409
      %s424 = sphi 0, %s410
      %s428 = sphi 0, %s428
      %s430 = sphi 0, %s428
      %s431 = sphi 0, %s430
      %s445 = sphi 0, %s431
      %s451 = sphi 0, %s453
      %s454 = sphi 0, %s451
      %s455 = sphi 0, %s454
      %s471 = sphi 0, %s455
    $region4: #{tpu_custom_call.1} parent=1 // loop_header_branch
      %46 = sbr.rel (%p44) target = $region8
    $region5: #{tpu_custom_call.1} parent=1 // loop_body
      %s48 = ssub.s32 %s43, 1
      %s49 = ssub.s32 %s43, 2
      %s50 = sadd.s32 %s43, 1
      %s51 = ssub.s32 %s43, %s50
      %p52 = scmp.eq.s32.totalorder %s51, 0
      %s54 = sadd.s32 %s53, 1
      %s55 = scalar_select %p52, %s53, %s54
      %p58 = pneg %p52
      %p59 = scmp.eq.s32.totalorder %s43, 1
      %p60 = por %p58, %p59
      %p61 = scmp.ne.s32.totalorder %s53, %s56
      %p62 = scmp.eq.s32.totalorder %s43, 0
      %p63 = por %p61, %p62
      %p64 = scmp.ne.s32.totalorder %s53, %s56
      %p65 = scmp.eq.s32.totalorder %s48, 1
      %p66 = por %p64, %p65
      %p67 = scmp.ne.s32.totalorder %s56, %s57
      %p68 = scmp.eq.s32.totalorder %s48, 0
      %p69 = por %p67, %p68
      %p70 = scmp.ne.s32.totalorder %s56, %s57
      %p71 = scmp.eq.s32.totalorder %s49, 1
      %p72 = por %p70, %p71
      %p74 = scmp.ne.s32.totalorder %s57, %s73
      %p75 = scmp.eq.s32.totalorder %s49, 0
      %p76 = por %p74, %p75
      %s77 = ssub.s32 %s43, %s50
      %p78 = scmp.eq.s32.totalorder %s77, 0
      %s80 = sadd.s32 %s79, 1
      %s81 = scalar_select %p78, %s79, %s80
      %p84 = pneg %p78
      %p85 = scmp.eq.s32.totalorder %s43, 1
      %p86 = por %p84, %p85
      %p87 = scmp.ne.s32.totalorder %s79, %s82
      %p88 = scmp.eq.s32.totalorder %s43, 0
      %p89 = por %p87, %p88
      %p90 = scmp.ne.s32.totalorder %s79, %s82
      %p91 = scmp.eq.s32.totalorder %s48, 1
      %p92 = por %p90, %p91
      %p93 = scmp.ne.s32.totalorder %s82, %s83
      %p94 = scmp.eq.s32.totalorder %s48, 0
      %p95 = por %p93, %p94
      %p96 = scmp.ne.s32.totalorder %s82, %s83
      %p97 = scmp.eq.s32.totalorder %s49, 1
      %p98 = por %p96, %p97
      %p100 = scmp.ne.s32.totalorder %s83, %s99
      %p101 = scmp.eq.s32.totalorder %s49, 0
      %p102 = por %p100, %p101
      %s103 = ssub.s32 %s43, %s50
      %p104 = scmp.eq.s32.totalorder %s103, 0
      %s106 = sadd.s32 %s105, 1
      %s107 = scalar_select %p104, %s105, %s106
      %p110 = pneg %p104
      %p111 = scmp.eq.s32.totalorder %s43, 1
      %p112 = por %p110, %p111
      %p113 = scmp.ne.s32.totalorder %s105, %s108
      %p114 = scmp.eq.s32.totalorder %s43, 0
      %p115 = por %p113, %p114
      %p116 = scmp.ne.s32.totalorder %s105, %s108
      %p117 = scmp.eq.s32.totalorder %s48, 1
      %p118 = por %p116, %p117
      %p119 = scmp.ne.s32.totalorder %s108, %s109
      %p120 = scmp.eq.s32.totalorder %s48, 0
      %p121 = por %p119, %p120
      %p122 = scmp.ne.s32.totalorder %s108, %s109
      %p123 = scmp.eq.s32.totalorder %s49, 1
      %p124 = por %p122, %p123
      %p126 = scmp.ne.s32.totalorder %s109, %s125
      %p127 = scmp.eq.s32.totalorder %s49, 0
      %p128 = por %p126, %p127
      %s129 = ssub.s32 %s43, %s50
      %p130 = scmp.eq.s32.totalorder %s129, 0
      %s132 = sadd.s32 %s131, 1
      %s133 = scalar_select %p130, %s131, %s132
      %p136 = pneg %p130
      %p137 = scmp.eq.s32.totalorder %s43, 1
      %p138 = por %p136, %p137
      %p139 = scmp.ne.s32.totalorder %s131, %s134
      %p140 = scmp.eq.s32.totalorder %s43, 0
      %p141 = por %p139, %p140
      %p142 = scmp.ne.s32.totalorder %s131, %s134
      %p143 = scmp.eq.s32.totalorder %s48, 1
      %p144 = por %p142, %p143
      %p145 = scmp.ne.s32.totalorder %s134, %s135
      %p146 = scmp.eq.s32.totalorder %s48, 0
      %p147 = por %p145, %p146
      %p148 = scmp.ne.s32.totalorder %s134, %s135
      %p149 = scmp.eq.s32.totalorder %s49, 1
      %p150 = por %p148, %p149
      %p152 = scmp.ne.s32.totalorder %s135, %s151
      %p153 = scmp.eq.s32.totalorder %s49, 0
      %p154 = por %p152, %p153
      %s156 = sadd.s32 %s155, 1
      %p159 = scmp.eq.s32.totalorder %s43, 1
      %p160 = scmp.ne.s32.totalorder %s155, %s157
      %p161 = scmp.eq.s32.totalorder %s43, 0
      %p162 = por %p160, %p161
      %p163 = scmp.ne.s32.totalorder %s155, %s157
      %p164 = scmp.eq.s32.totalorder %s48, 1
      %p165 = por %p163, %p164
      %p166 = scmp.ne.s32.totalorder %s157, %s158
      %p167 = scmp.eq.s32.totalorder %s48, 0
      %p168 = por %p166, %p167
      %p169 = scmp.ne.s32.totalorder %s157, %s158
      %p170 = scmp.eq.s32.totalorder %s49, 1
      %p171 = por %p169, %p170
      %p173 = scmp.ne.s32.totalorder %s158, %s172
      %p174 = scmp.eq.s32.totalorder %s49, 0
      %p175 = por %p173, %p174
      %s177 = sadd.s32 %s176, 1
      %p180 = scmp.eq.s32.totalorder %s43, 1
      %p181 = scmp.ne.s32.totalorder %s176, %s178
      %p182 = scmp.eq.s32.totalorder %s43, 0
      %p183 = por %p181, %p182
      %p184 = scmp.ne.s32.totalorder %s176, %s178
      %p185 = scmp.eq.s32.totalorder %s48, 1
      %p186 = por %p184, %p185
      %p187 = scmp.ne.s32.totalorder %s178, %s179
      %p188 = scmp.eq.s32.totalorder %s48, 0
      %p189 = por %p187, %p188
      %p190 = scmp.ne.s32.totalorder %s178, %s179
      %p191 = scmp.eq.s32.totalorder %s49, 1
      %p192 = por %p190, %p191
      %p194 = scmp.ne.s32.totalorder %s179, %s193
      %p195 = scmp.eq.s32.totalorder %s49, 0
      %p196 = por %p194, %p195
      %s198 = sadd.s32 %s197, 1
      %p201 = scmp.eq.s32.totalorder %s43, 1
      %p202 = scmp.ne.s32.totalorder %s197, %s199
      %p203 = scmp.eq.s32.totalorder %s43, 0
      %p204 = por %p202, %p203
      %p205 = scmp.ne.s32.totalorder %s197, %s199
      %p206 = scmp.eq.s32.totalorder %s48, 1
      %p207 = por %p205, %p206
      %p208 = scmp.ne.s32.totalorder %s199, %s200
      %p209 = scmp.eq.s32.totalorder %s48, 0
      %p210 = por %p208, %p209
      %p211 = scmp.ne.s32.totalorder %s199, %s200
      %p212 = scmp.eq.s32.totalorder %s49, 1
      %p213 = por %p211, %p212
      %p215 = scmp.ne.s32.totalorder %s200, %s214
      %p216 = scmp.eq.s32.totalorder %s49, 0
      %p217 = por %p215, %p216
      %s219 = sadd.s32 %s218, 1
      %p222 = scmp.eq.s32.totalorder %s43, 1
      %p223 = scmp.ne.s32.totalorder %s218, %s220
      %p224 = scmp.eq.s32.totalorder %s43, 0
      %p225 = por %p223, %p224
      %p226 = scmp.ne.s32.totalorder %s218, %s220
      %p227 = scmp.eq.s32.totalorder %s48, 1
      %p228 = por %p226, %p227
      %p229 = scmp.ne.s32.totalorder %s220, %s221
      %p230 = scmp.eq.s32.totalorder %s48, 0
      %p231 = por %p229, %p230
      %p232 = scmp.ne.s32.totalorder %s220, %s221
      %p233 = scmp.eq.s32.totalorder %s49, 1
      %p234 = por %p232, %p233
      %p236 = scmp.ne.s32.totalorder %s221, %s235
      %p237 = scmp.eq.s32.totalorder %s49, 0
      %p238 = por %p236, %p237
      %s240 = sadd.s32 %s239, 1
      %p243 = scmp.eq.s32.totalorder %s43, 1
      %p244 = scmp.ne.s32.totalorder %s239, %s241
      %p245 = scmp.eq.s32.totalorder %s43, 0
      %p246 = por %p244, %p245
      %p247 = scmp.ne.s32.totalorder %s239, %s241
      %p248 = scmp.eq.s32.totalorder %s48, 1
      %p249 = por %p247, %p248
      %p250 = scmp.ne.s32.totalorder %s241, %s242
      %p251 = scmp.eq.s32.totalorder %s48, 0
      %p252 = por %p250, %p251
      %p253 = scmp.ne.s32.totalorder %s241, %s242
      %p254 = scmp.eq.s32.totalorder %s49, 1
      %p255 = por %p253, %p254
      %p257 = scmp.ne.s32.totalorder %s242, %s256
      %p258 = scmp.eq.s32.totalorder %s49, 0
      %p259 = por %p257, %p258
      %s261 = sadd.s32 %s260, 1
      %p264 = scmp.eq.s32.totalorder %s43, 1
      %p265 = scmp.ne.s32.totalorder %s260, %s262
      %p266 = scmp.eq.s32.totalorder %s43, 0
      %p267 = por %p265, %p266
      %p268 = scmp.ne.s32.totalorder %s260, %s262
      %p269 = scmp.eq.s32.totalorder %s48, 1
      %p270 = por %p268, %p269
      %p271 = scmp.ne.s32.totalorder %s262, %s263
      %p272 = scmp.eq.s32.totalorder %s48, 0
      %p273 = por %p271, %p272
      %p274 = scmp.ne.s32.totalorder %s262, %s263
      %p275 = scmp.eq.s32.totalorder %s49, 1
      %p276 = por %p274, %p275
      %p278 = scmp.ne.s32.totalorder %s263, %s277
      %p279 = scmp.eq.s32.totalorder %s49, 0
      %p280 = por %p278, %p279
      %s282 = sadd.s32 %s281, 1
      %p285 = scmp.eq.s32.totalorder %s43, 1
      %p286 = scmp.ne.s32.totalorder %s281, %s283
      %p287 = scmp.eq.s32.totalorder %s43, 0
      %p288 = por %p286, %p287
      %p289 = scmp.ne.s32.totalorder %s281, %s283
      %p290 = scmp.eq.s32.totalorder %s48, 1
      %p291 = por %p289, %p290
      %p292 = scmp.ne.s32.totalorder %s283, %s284
      %p293 = scmp.eq.s32.totalorder %s48, 0
      %p294 = por %p292, %p293
      %p295 = scmp.ne.s32.totalorder %s283, %s284
      %p296 = scmp.eq.s32.totalorder %s49, 1
      %p297 = por %p295, %p296
      %p299 = scmp.ne.s32.totalorder %s284, %s298
      %p300 = scmp.eq.s32.totalorder %s49, 0
      %p301 = por %p299, %p300
      %s303 = sadd.s32 %s302, 1
      %p306 = scmp.eq.s32.totalorder %s43, 1
      %p307 = scmp.ne.s32.totalorder %s302, %s304
      %p308 = scmp.eq.s32.totalorder %s43, 0
      %p309 = por %p307, %p308
      %p310 = scmp.ne.s32.totalorder %s302, %s304
      %p311 = scmp.eq.s32.totalorder %s48, 1
      %p312 = por %p310, %p311
      %p313 = scmp.ne.s32.totalorder %s304, %s305
      %p314 = scmp.eq.s32.totalorder %s48, 0
      %p315 = por %p313, %p314
      %p316 = scmp.ne.s32.totalorder %s304, %s305
      %p317 = scmp.eq.s32.totalorder %s49, 1
      %p318 = por %p316, %p317
      %p320 = scmp.ne.s32.totalorder %s305, %s319
      %p321 = scmp.eq.s32.totalorder %s49, 0
      %p322 = por %p320, %p321
      %s324 = sadd.s32 %s323, 1
      %p327 = scmp.eq.s32.totalorder %s43, 1
      %p328 = scmp.ne.s32.totalorder %s323, %s325
      %p329 = scmp.eq.s32.totalorder %s43, 0
      %p330 = por %p328, %p329
      %p331 = scmp.ne.s32.totalorder %s323, %s325
      %p332 = scmp.eq.s32.totalorder %s48, 1
      %p333 = por %p331, %p332
      %p334 = scmp.ne.s32.totalorder %s325, %s326
      %p335 = scmp.eq.s32.totalorder %s48, 0
      %p336 = por %p334, %p335
      %p337 = scmp.ne.s32.totalorder %s325, %s326
      %p338 = scmp.eq.s32.totalorder %s49, 1
      %p339 = por %p337, %p338
      %p341 = scmp.ne.s32.totalorder %s326, %s340
      %p342 = scmp.eq.s32.totalorder %s49, 0
      %p343 = por %p341, %p342
      %s345 = sadd.s32 %s344, 1
      %p348 = scmp.eq.s32.totalorder %s43, 1
      %p349 = scmp.ne.s32.totalorder %s344, %s346
      %p350 = scmp.eq.s32.totalorder %s43, 0
      %p351 = por %p349, %p350
      %p352 = scmp.ne.s32.totalorder %s344, %s346
      %p353 = scmp.eq.s32.totalorder %s48, 1
      %p354 = por %p352, %p353
      %p355 = scmp.ne.s32.totalorder %s346, %s347
      %p356 = scmp.eq.s32.totalorder %s48, 0
      %p357 = por %p355, %p356
      %p358 = scmp.ne.s32.totalorder %s346, %s347
      %p359 = scmp.eq.s32.totalorder %s49, 1
      %p360 = por %p358, %p359
      %p362 = scmp.ne.s32.totalorder %s347, %s361
      %p363 = scmp.eq.s32.totalorder %s49, 0
      %p364 = por %p362, %p363
      %s366 = sadd.s32 %s365, 1
      %p369 = scmp.eq.s32.totalorder %s43, 1
      %p370 = scmp.ne.s32.totalorder %s365, %s367
      %p371 = scmp.eq.s32.totalorder %s43, 0
      %p372 = por %p370, %p371
      %p373 = scmp.ne.s32.totalorder %s365, %s367
      %p374 = scmp.eq.s32.totalorder %s48, 1
      %p375 = por %p373, %p374
      %p376 = scmp.ne.s32.totalorder %s367, %s368
      %p377 = scmp.eq.s32.totalorder %s48, 0
      %p378 = por %p376, %p377
      %p379 = scmp.ne.s32.totalorder %s367, %s368
      %p380 = scmp.eq.s32.totalorder %s49, 1
      %p381 = por %p379, %p380
      %p383 = scmp.ne.s32.totalorder %s368, %s382
      %p384 = scmp.eq.s32.totalorder %s49, 0
      %p385 = por %p383, %p384
      %s387 = sadd.s32 %s386, 1
      %p390 = scmp.eq.s32.totalorder %s43, 1
      %p391 = scmp.ne.s32.totalorder %s386, %s388
      %p392 = scmp.eq.s32.totalorder %s43, 0
      %p393 = por %p391, %p392
      %p394 = scmp.ne.s32.totalorder %s386, %s388
      %p395 = scmp.eq.s32.totalorder %s48, 1
      %p396 = por %p394, %p395
      %p397 = scmp.ne.s32.totalorder %s388, %s389
      %p398 = scmp.eq.s32.totalorder %s48, 0
      %p399 = por %p397, %p398
      %p400 = scmp.ne.s32.totalorder %s388, %s389
      %p401 = scmp.eq.s32.totalorder %s49, 1
      %p402 = por %p400, %p401
      %p404 = scmp.ne.s32.totalorder %s389, %s403
      %p405 = scmp.eq.s32.totalorder %s49, 0
      %p406 = por %p404, %p405
      %s408 = sadd.s32 %s407, 1
      %p411 = scmp.eq.s32.totalorder %s43, 1
      %p412 = scmp.ne.s32.totalorder %s407, %s409
      %p413 = scmp.eq.s32.totalorder %s43, 0
      %p414 = por %p412, %p413
      %p415 = scmp.ne.s32.totalorder %s407, %s409
      %p416 = scmp.eq.s32.totalorder %s48, 1
      %p417 = por %p415, %p416
      %p418 = scmp.ne.s32.totalorder %s409, %s410
      %p419 = scmp.eq.s32.totalorder %s48, 0
      %p420 = por %p418, %p419
      %p421 = scmp.ne.s32.totalorder %s409, %s410
      %p422 = scmp.eq.s32.totalorder %s49, 1
      %p423 = por %p421, %p422
      %p425 = scmp.ne.s32.totalorder %s410, %s424
      %p426 = scmp.eq.s32.totalorder %s49, 0
      %p427 = por %p425, %p426
      %s429 = sadd.s32 %s428, 1
      %p432 = scmp.eq.s32.totalorder %s43, 1
      %p433 = scmp.ne.s32.totalorder %s428, %s430
      %p434 = scmp.eq.s32.totalorder %s43, 0
      %p435 = por %p433, %p434
      %p436 = scmp.ne.s32.totalorder %s428, %s430
      %p437 = scmp.eq.s32.totalorder %s48, 1
      %p438 = por %p436, %p437
      %p439 = scmp.ne.s32.totalorder %s430, %s431
      %p440 = scmp.eq.s32.totalorder %s48, 0
      %p441 = por %p439, %p440
      %p442 = scmp.ne.s32.totalorder %s430, %s431
      %p443 = scmp.eq.s32.totalorder %s49, 1
      %p444 = por %p442, %p443
      %p446 = scmp.ne.s32.totalorder %s431, %s445
      %p447 = scmp.eq.s32.totalorder %s49, 0
      %p448 = por %p446, %p447
      %s449 = ssub.s32 %s43, %s50
      %p450 = scmp.eq.s32.totalorder %s449, 0
      %s452 = sadd.s32 %s451, 1
      %s453 = scalar_select %p450, %s451, %s452
      %p456 = pneg %p450
      %p457 = scmp.eq.s32.totalorder %s43, 1
      %p458 = por %p456, %p457
      %p459 = scmp.ne.s32.totalorder %s451, %s454
      %p460 = scmp.eq.s32.totalorder %s43, 0
      %p461 = por %p459, %p460
      %p462 = scmp.ne.s32.totalorder %s451, %s454
      %p463 = scmp.eq.s32.totalorder %s48, 1
      %p464 = por %p462, %p463
      %p465 = scmp.ne.s32.totalorder %s454, %s455
      %p466 = scmp.eq.s32.totalorder %s48, 0
      %p467 = por %p465, %p466
      %p468 = scmp.ne.s32.totalorder %s454, %s455
      %p469 = scmp.eq.s32.totalorder %s49, 1
      %p470 = por %p468, %p469
      %p472 = scmp.ne.s32.totalorder %s455, %s471
      %p473 = scmp.eq.s32.totalorder %s49, 0
      %p474 = por %p472, %p473
      %p475 = scmp.le.s32.totalorder 1, %s43
      %p476 = scmp.lt.s32.totalorder %s43, 3
      %p477 = pnand %p475, %p476
      %p478 = pneg %p477
      // Predicated region
      $region9: #{tpu_custom_call.1} parent=5 // pred_check
        _
      $region10: #{tpu_custom_call.1} parent=5 // pred_check_branch
        %480 = sbr.rel (%p477) target = $region12
      $region11: #{tpu_custom_call.1} parent=5 // pred_region
        %s481 = ssub.s32 %s43, 1
        // Predicated region
        $region13: #{tpu_custom_call.1} parent=11 // pred_check
          %p482 = pneg %p168
        $region14: #{tpu_custom_call.1} parent=11 // pred_check_branch
          %484 = sbr.rel (%p482) target = $region16
        $region15: #{tpu_custom_call.1} parent=11 // pred_region
          %s486 = ssub.s32 256, 256
          %487 = vsyncadd [#allocation9], %s486
          %s488 = sshll.u32 [#allocation10], 4
          %s489 = int_to_ptr.vmem [resolvable:$true] %s488
          %494 = dma.hbm_to_vmem [thread:$0]  %s4, 256, %s489, [#allocation9], 64, 64, 4
        $region16: #{tpu_custom_call.1} parent=11 // pred_fallthru
          _
        // Predicated region
        $region17: #{tpu_custom_call.1} parent=11 // pred_check
          %p495 = pneg %p189
        $region18: #{tpu_custom_call.1} parent=11 // pred_check_branch
          %497 = sbr.rel (%p495) target = $region20
        $region19: #{tpu_custom_call.1} parent=11 // pred_region
          %s499 = ssub.s32 16, 16
          %500 = vsyncadd [#allocation12], %s499
          %s502 = sshll.u32 [#allocation11], 4
          %s503 = int_to_ptr.vmem [resolvable:$true] %s502
          %505 = dma.hbm_to_vmem [thread:$0]  %s5, 16, %s503, [#allocation12]
        $region20: #{tpu_custom_call.1} parent=11 // pred_fallthru
          _
        // Predicated region
        $region21: #{tpu_custom_call.1} parent=11 // pred_check
          %p506 = pneg %p210
        $region22: #{tpu_custom_call.1} parent=11 // pred_check_branch
          %508 = sbr.rel (%p506) target = $region24
        $region23: #{tpu_custom_call.1} parent=11 // pred_region
          %s510 = ssub.s32 512, 512
          %511 = vsyncadd [#allocation12], %s510
          %s512 = sshll.u32 [#allocation13], 4
          %s513 = int_to_ptr.vmem [resolvable:$true] %s512
          %518 = dma.hbm_to_vmem [thread:$0]  %s6, 512, %s513, [#allocation12], 128, 128, 8
        $region24: #{tpu_custom_call.1} parent=11 // pred_fallthru
          _
        // Predicated region
        $region25: #{tpu_custom_call.1} parent=11 // pred_check
          %p519 = pneg %p231
        $region26: #{tpu_custom_call.1} parent=11 // pred_check_branch
          %521 = sbr.rel (%p519) target = $region28
        $region27: #{tpu_custom_call.1} parent=11 // pred_region
          %s523 = ssub.s32 16, 16
          %524 = vsyncadd [#allocation15], %s523
          %s526 = sshll.u32 [#allocation14], 4
          %s527 = int_to_ptr.vmem [resolvable:$true] %s526
          %529 = dma.hbm_to_vmem [thread:$0]  %s7, 16, %s527, [#allocation15]
        $region28: #{tpu_custom_call.1} parent=11 // pred_fallthru
          _
        // Predicated region
        $region29: #{tpu_custom_call.1} parent=11 // pred_check
          %p530 = pneg %p252
        $region30: #{tpu_custom_call.1} parent=11 // pred_check_branch
          %532 = sbr.rel (%p530) target = $region32
        $region31: #{tpu_custom_call.1} parent=11 // pred_region
          %s534 = ssub.s32 256, 256
          %535 = vsyncadd [#allocation15], %s534
          %s536 = sshll.u32 [#allocation16], 4
          %s537 = int_to_ptr.vmem [resolvable:$true] %s536
          %542 = dma.hbm_to_vmem [thread:$0]  %s8, 256, %s537, [#allocation15], 64, 64, 4
        $region32: #{tpu_custom_call.1} parent=11 // pred_fallthru
          _
        // Predicated region
        $region33: #{tpu_custom_call.1} parent=11 // pred_check
          %p543 = pneg %p273
        $region34: #{tpu_custom_call.1} parent=11 // pred_check_branch
          %545 = sbr.rel (%p543) target = $region36
        $region35: #{tpu_custom_call.1} parent=11 // pred_region
          %s547 = ssub.s32 16, 16
          %548 = vsyncadd [#allocation18], %s547
          %s550 = sshll.u32 [#allocation17], 4
          %s551 = int_to_ptr.vmem [resolvable:$true] %s550
          %553 = dma.hbm_to_vmem [thread:$0]  %s9, 16, %s551, [#allocation18]
        $region36: #{tpu_custom_call.1} parent=11 // pred_fallthru
          _
        // Predicated region
        $region37: #{tpu_custom_call.1} parent=11 // pred_check
          %p554 = pneg %p294
        $region38: #{tpu_custom_call.1} parent=11 // pred_check_branch
          %556 = sbr.rel (%p554) target = $region40
        $region39: #{tpu_custom_call.1} parent=11 // pred_region
          %s558 = ssub.s32 512, 512
          %559 = vsyncadd [#allocation18], %s558
          %s560 = sshll.u32 [#allocation19], 4
          %s561 = int_to_ptr.vmem [resolvable:$true] %s560
          %566 = dma.hbm_to_vmem [thread:$0]  %s10, 512, %s561, [#allocation18], 128, 128, 8
        $region40: #{tpu_custom_call.1} parent=11 // pred_fallthru
          _
        // Predicated region
        $region41: #{tpu_custom_call.1} parent=11 // pred_check
          %p567 = pneg %p315
        $region42: #{tpu_custom_call.1} parent=11 // pred_check_branch
          %569 = sbr.rel (%p567) target = $region44
        $region43: #{tpu_custom_call.1} parent=11 // pred_region
          %s571 = ssub.s32 16, 16
          %572 = vsyncadd [#allocation21], %s571
          %s574 = sshll.u32 [#allocation20], 4
          %s575 = int_to_ptr.vmem [resolvable:$true] %s574
          %577 = dma.hbm_to_vmem [thread:$0]  %s11, 16, %s575, [#allocation21]
        $region44: #{tpu_custom_call.1} parent=11 // pred_fallthru
          _
        // Predicated region
        $region45: #{tpu_custom_call.1} parent=11 // pred_check
          %p578 = pneg %p336
        $region46: #{tpu_custom_call.1} parent=11 // pred_check_branch
          %580 = sbr.rel (%p578) target = $region48
        $region47: #{tpu_custom_call.1} parent=11 // pred_region
          %s582 = ssub.s32 256, 256
          %583 = vsyncadd [#allocation21], %s582
          %s584 = sshll.u32 [#allocation22], 4
          %s585 = int_to_ptr.vmem [resolvable:$true] %s584
          %590 = dma.hbm_to_vmem [thread:$0]  %s12, 256, %s585, [#allocation21], 64, 64, 4
        $region48: #{tpu_custom_call.1} parent=11 // pred_fallthru
          _
        // Predicated region
        $region49: #{tpu_custom_call.1} parent=11 // pred_check
          %p591 = pneg %p357
        $region50: #{tpu_custom_call.1} parent=11 // pred_check_branch
          %593 = sbr.rel (%p591) target = $region52
        $region51: #{tpu_custom_call.1} parent=11 // pred_region
          %s595 = ssub.s32 16, 16
          %596 = vsyncadd [#allocation24], %s595
          %s598 = sshll.u32 [#allocation23], 4
          %s599 = int_to_ptr.vmem [resolvable:$true] %s598
          %601 = dma.hbm_to_vmem [thread:$0]  %s13, 16, %s599, [#allocation24]
        $region52: #{tpu_custom_call.1} parent=11 // pred_fallthru
          _
        // Predicated region
        $region53: #{tpu_custom_call.1} parent=11 // pred_check
          %p602 = pneg %p378
        $region54: #{tpu_custom_call.1} parent=11 // pred_check_branch
          %604 = sbr.rel (%p602) target = $region56
        $region55: #{tpu_custom_call.1} parent=11 // pred_region
          %s606 = ssub.s32 512, 512
          %607 = vsyncadd [#allocation24], %s606
          %s608 = sshll.u32 [#allocation25], 4
          %s609 = int_to_ptr.vmem [resolvable:$true] %s608
          %614 = dma.hbm_to_vmem [thread:$0]  %s14, 512, %s609, [#allocation24], 64, 64, 4
        $region56: #{tpu_custom_call.1} parent=11 // pred_fallthru
          _
        // Predicated region
        $region57: #{tpu_custom_call.1} parent=11 // pred_check
          %p615 = pneg %p399
        $region58: #{tpu_custom_call.1} parent=11 // pred_check_branch
          %617 = sbr.rel (%p615) target = $region60
        $region59: #{tpu_custom_call.1} parent=11 // pred_region
          %s619 = ssub.s32 16, 16
          %620 = vsyncadd [#allocation27], %s619
          %s622 = sshll.u32 [#allocation26], 4
          %s623 = int_to_ptr.vmem [resolvable:$true] %s622
          %625 = dma.hbm_to_vmem [thread:$0]  %s15, 16, %s623, [#allocation27]
        $region60: #{tpu_custom_call.1} parent=11 // pred_fallthru
          _
        // Predicated region
        $region61: #{tpu_custom_call.1} parent=11 // pred_check
          %p626 = pneg %p420
        $region62: #{tpu_custom_call.1} parent=11 // pred_check_branch
          %628 = sbr.rel (%p626) target = $region64
        $region63: #{tpu_custom_call.1} parent=11 // pred_region
          %s630 = ssub.s32 64, 64
          %631 = vsyncadd [#allocation27], %s630
          %s633 = sshll.u32 [#allocation28], 4
          %s634 = int_to_ptr.vmem [resolvable:$true] %s633
          %636 = dma.hbm_to_vmem [thread:$0]  %s16, 64, %s634, [#allocation27]
        $region64: #{tpu_custom_call.1} parent=11 // pred_fallthru
          _
        // Predicated region
        $region65: #{tpu_custom_call.1} parent=11 // pred_check
          %p637 = pneg %p441
        $region66: #{tpu_custom_call.1} parent=11 // pred_check_branch
          %639 = sbr.rel (%p637) target = $region68
        $region67: #{tpu_custom_call.1} parent=11 // pred_region
          %s641 = ssub.s32 64, 64
          %642 = vsyncadd [#allocation30], %s641
          %s644 = sshll.u32 [#allocation29], 4
          %s645 = int_to_ptr.vmem [resolvable:$true] %s644
          %647 = dma.hbm_to_vmem [thread:$0]  %s17, 64, %s645, [#allocation30]
        $region68: #{tpu_custom_call.1} parent=11 // pred_fallthru
          _
      $region12: #{tpu_custom_call.1} parent=5 // pred_fallthru
        _
      %p648 = scmp.lt.s32.totalorder %s43, 2
      // Predicated region
      $region69: #{tpu_custom_call.1} parent=5 // pred_check
        %p649 = pneg %p648
      $region70: #{tpu_custom_call.1} parent=5 // pred_check_branch
        %651 = sbr.rel (%p649) target = $region72
      $region71: #{tpu_custom_call.1} parent=5 // pred_region
        // Predicated region
        $region73: #{tpu_custom_call.1} parent=71 // pred_check
          %p652 = pneg %p63
        $region74: #{tpu_custom_call.1} parent=71 // pred_check_branch
          %654 = sbr.rel (%p652) target = $region76
        $region75: #{tpu_custom_call.1} parent=71 // pred_region
          %s655 = sand.u32 %s53, 1
          %s656 = scalar_lea.sflag [#allocation3], %s655
          %s657 = sand.u32 %s53, 1
          %s658 = smul.addr %s657, 8
          %s659 = scalar_lea.vmem [#allocation2], %s658
          %s661 = ssub.s32 128, 128
          %662 = vsyncadd %s656, %s661
          %s663 = smul.addr %s43, 128
          %s664 = scalar_lea.hbm %s0, %s663
          %s666 = sshll.u32 %s659, 4
          %s667 = int_to_ptr.vmem [resolvable:$true] %s666
          %669 = dma.hbm_to_vmem [thread:$0]  %s664, 128, %s667, %s656
        $region76: #{tpu_custom_call.1} parent=71 // pred_fallthru
          _
        // Predicated region
        $region77: #{tpu_custom_call.1} parent=71 // pred_check
          %p670 = pneg %p89
        $region78: #{tpu_custom_call.1} parent=71 // pred_check_branch
          %672 = sbr.rel (%p670) target = $region80
        $region79: #{tpu_custom_call.1} parent=71 // pred_region
          %s673 = sand.u32 %s43, 1
          %s674 = scalar_lea.sflag [#allocation6], %s673
          %s675 = sand.u32 %s79, 1
          %s676 = smul.addr %s675, 16
          %s677 = scalar_lea.vmem [#allocation5], %s676
          %s679 = ssub.s32 256, 256
          %680 = vsyncadd %s674, %s679
          %s681 = smul.addr %s43, 2
          %s682 = smul.addr %s681, 128
          %s683 = scalar_lea.hbm %s1, %s682
          %s684 = sshll.u32 %s677, 4
          %s685 = int_to_ptr.vmem [resolvable:$true] %s684
          %690 = dma.hbm_to_vmem [thread:$0]  %s683, 256, %s685, %s674, 128, 128, 8
        $region80: #{tpu_custom_call.1} parent=71 // pred_fallthru
          _
        // Predicated region
        $region81: #{tpu_custom_call.1} parent=71 // pred_check
          %p691 = pneg %p115
        $region82: #{tpu_custom_call.1} parent=71 // pred_check_branch
          %693 = sbr.rel (%p691) target = $region84
        $region83: #{tpu_custom_call.1} parent=71 // pred_region
          %s694 = sand.u32 %s43, 1
          %s695 = scalar_lea.sflag [#allocation6], %s694
          %s696 = sand.u32 %s105, 1
          %s697 = smul.addr %s696, 8
          %s698 = scalar_lea.vmem [#allocation7], %s697
          %s700 = ssub.s32 128, 128
          %701 = vsyncadd %s695, %s700
          %s702 = smul.addr %s43, 128
          %s703 = scalar_lea.hbm %s2, %s702
          %s705 = sshll.u32 %s698, 4
          %s706 = int_to_ptr.vmem [resolvable:$true] %s705
          %708 = dma.hbm_to_vmem [thread:$0]  %s703, 128, %s706, %s695
        $region84: #{tpu_custom_call.1} parent=71 // pred_fallthru
          _
        // Predicated region
        $region85: #{tpu_custom_call.1} parent=71 // pred_check
          %p709 = pneg %p141
        $region86: #{tpu_custom_call.1} parent=71 // pred_check_branch
          %711 = sbr.rel (%p709) target = $region88
        $region87: #{tpu_custom_call.1} parent=71 // pred_region
          %s712 = sand.u32 %s43, 1
          %s713 = scalar_lea.sflag [#allocation9], %s712
          %s714 = sand.u32 %s131, 1
          %s715 = smul.addr %s714, 16
          %s716 = scalar_lea.vmem [#allocation8], %s715
          %s718 = ssub.s32 256, 256
          %719 = vsyncadd %s713, %s718
          %s720 = smul.addr %s43, 2
          %s721 = smul.addr %s720, 128
          %s722 = scalar_lea.hbm %s3, %s721
          %s723 = sshll.u32 %s716, 4
          %s724 = int_to_ptr.vmem [resolvable:$true] %s723
          %729 = dma.hbm_to_vmem [thread:$0]  %s722, 256, %s724, %s713, 128, 128, 8
        $region88: #{tpu_custom_call.1} parent=71 // pred_fallthru
          _
      $region72: #{tpu_custom_call.1} parent=5 // pred_fallthru
        _
      %p730 = scmp.le.s32.totalorder 1, %s43
      %p731 = scmp.lt.s32.totalorder %s43, 3
      %p732 = pnand %p730, %p731
      %p733 = pneg %p732
      // Predicated region
      $region89: #{tpu_custom_call.1} parent=5 // pred_check
        _
      $region90: #{tpu_custom_call.1} parent=5 // pred_check_branch
        %735 = sbr.rel (%p732) target = $region92
      $region91: #{tpu_custom_call.1} parent=5 // pred_region
        %s736 = ssub.s32 %s43, 1
        %s737 = sand.u32 %s56, 1
        %s738 = scalar_lea.sflag [#allocation3], %s737
        %s739 = sand.u32 %s56, 1
        %s740 = smul.addr %s739, 8
        %s741 = scalar_lea.vmem [#allocation2], %s740
        // Predicated region
        $region93: #{tpu_custom_call.1} parent=91 // pred_check
          %p742 = pneg %p69
        $region94: #{tpu_custom_call.1} parent=91 // pred_check_branch
          %744 = sbr.rel (%p742) target = $region96
        $region95: #{tpu_custom_call.1} parent=91 // pred_region
          %745 = dma.done %s738, 128
        $region96: #{tpu_custom_call.1} parent=91 // pred_fallthru
          _
        %s746 = sand.u32 %s48, 1
        %s747 = scalar_lea.sflag [#allocation6], %s746
        %s748 = sand.u32 %s82, 1
        %s749 = smul.addr %s748, 16
        %s750 = scalar_lea.vmem [#allocation5], %s749
        // Predicated region
        $region97: #{tpu_custom_call.1} parent=91 // pred_check
          %p751 = pneg %p95
        $region98: #{tpu_custom_call.1} parent=91 // pred_check_branch
          %753 = sbr.rel (%p751) target = $region100
        $region99: #{tpu_custom_call.1} parent=91 // pred_region
          %754 = dma.done %s747, 256
        $region100: #{tpu_custom_call.1} parent=91 // pred_fallthru
          _
        %s755 = sand.u32 %s48, 1
        %s756 = scalar_lea.sflag [#allocation6], %s755
        %s757 = sand.u32 %s108, 1
        %s758 = smul.addr %s757, 8
        %s759 = scalar_lea.vmem [#allocation7], %s758
        // Predicated region
        $region101: #{tpu_custom_call.1} parent=91 // pred_check
          %p760 = pneg %p121
        $region102: #{tpu_custom_call.1} parent=91 // pred_check_branch
          %762 = sbr.rel (%p760) target = $region104
        $region103: #{tpu_custom_call.1} parent=91 // pred_region
          %763 = dma.done %s756, 128
        $region104: #{tpu_custom_call.1} parent=91 // pred_fallthru
          _
        %s764 = sand.u32 %s48, 1
        %s765 = scalar_lea.sflag [#allocation9], %s764
        %s766 = sand.u32 %s134, 1
        %s767 = smul.addr %s766, 16
        %s768 = scalar_lea.vmem [#allocation8], %s767
        // Predicated region
        $region105: #{tpu_custom_call.1} parent=91 // pred_check
          %p769 = pneg %p147
        $region106: #{tpu_custom_call.1} parent=91 // pred_check_branch
          %771 = sbr.rel (%p769) target = $region108
        $region107: #{tpu_custom_call.1} parent=91 // pred_region
          %772 = dma.done %s765, 256
        $region108: #{tpu_custom_call.1} parent=91 // pred_fallthru
          _
        // Predicated region
        $region109: #{tpu_custom_call.1} parent=91 // pred_check
          %p773 = pneg %p168
        $region110: #{tpu_custom_call.1} parent=91 // pred_check_branch
          %775 = sbr.rel (%p773) target = $region112
        $region111: #{tpu_custom_call.1} parent=91 // pred_region
          %776 = dma.done [#allocation9], 256
        $region112: #{tpu_custom_call.1} parent=91 // pred_fallthru
          _
        // Predicated region
        $region113: #{tpu_custom_call.1} parent=91 // pred_check
          %p777 = pneg %p189
        $region114: #{tpu_custom_call.1} parent=91 // pred_check_branch
          %779 = sbr.rel (%p777) target = $region116
        $region115: #{tpu_custom_call.1} parent=91 // pred_region
          %780 = dma.done [#allocation12], 16
        $region116: #{tpu_custom_call.1} parent=91 // pred_fallthru
          _
        // Predicated region
        $region117: #{tpu_custom_call.1} parent=91 // pred_check
          %p781 = pneg %p210
        $region118: #{tpu_custom_call.1} parent=91 // pred_check_branch
          %783 = sbr.rel (%p781) target = $region120
        $region119: #{tpu_custom_call.1} parent=91 // pred_region
          %784 = dma.done [#allocation12], 512
        $region120: #{tpu_custom_call.1} parent=91 // pred_fallthru
          _
        // Predicated region
        $region121: #{tpu_custom_call.1} parent=91 // pred_check
          %p785 = pneg %p231
        $region122: #{tpu_custom_call.1} parent=91 // pred_check_branch
          %787 = sbr.rel (%p785) target = $region124
        $region123: #{tpu_custom_call.1} parent=91 // pred_region
          %788 = dma.done [#allocation15], 16
        $region124: #{tpu_custom_call.1} parent=91 // pred_fallthru
          _
        // Predicated region
        $region125: #{tpu_custom_call.1} parent=91 // pred_check
          %p789 = pneg %p252
        $region126: #{tpu_custom_call.1} parent=91 // pred_check_branch
          %791 = sbr.rel (%p789) target = $region128
        $region127: #{tpu_custom_call.1} parent=91 // pred_region
          %792 = dma.done [#allocation15], 256
        $region128: #{tpu_custom_call.1} parent=91 // pred_fallthru
          _
        // Predicated region
        $region129: #{tpu_custom_call.1} parent=91 // pred_check
          %p793 = pneg %p273
        $region130: #{tpu_custom_call.1} parent=91 // pred_check_branch
          %795 = sbr.rel (%p793) target = $region132
        $region131: #{tpu_custom_call.1} parent=91 // pred_region
          %796 = dma.done [#allocation18], 16
        $region132: #{tpu_custom_call.1} parent=91 // pred_fallthru
          _
        // Predicated region
        $region133: #{tpu_custom_call.1} parent=91 // pred_check
          %p797 = pneg %p294
        $region134: #{tpu_custom_call.1} parent=91 // pred_check_branch
          %799 = sbr.rel (%p797) target = $region136
        $region135: #{tpu_custom_call.1} parent=91 // pred_region
          %800 = dma.done [#allocation18], 512
        $region136: #{tpu_custom_call.1} parent=91 // pred_fallthru
          _
        // Predicated region
        $region137: #{tpu_custom_call.1} parent=91 // pred_check
          %p801 = pneg %p315
        $region138: #{tpu_custom_call.1} parent=91 // pred_check_branch
          %803 = sbr.rel (%p801) target = $region140
        $region139: #{tpu_custom_call.1} parent=91 // pred_region
          %804 = dma.done [#allocation21], 16
        $region140: #{tpu_custom_call.1} parent=91 // pred_fallthru
          _
        // Predicated region
        $region141: #{tpu_custom_call.1} parent=91 // pred_check
          %p805 = pneg %p336
        $region142: #{tpu_custom_call.1} parent=91 // pred_check_branch
          %807 = sbr.rel (%p805) target = $region144
        $region143: #{tpu_custom_call.1} parent=91 // pred_region
          %808 = dma.done [#allocation21], 256
        $region144: #{tpu_custom_call.1} parent=91 // pred_fallthru
          _
        // Predicated region
        $region145: #{tpu_custom_call.1} parent=91 // pred_check
          %p809 = pneg %p357
        $region146: #{tpu_custom_call.1} parent=91 // pred_check_branch
          %811 = sbr.rel (%p809) target = $region148
        $region147: #{tpu_custom_call.1} parent=91 // pred_region
          %812 = dma.done [#allocation24], 16
        $region148: #{tpu_custom_call.1} parent=91 // pred_fallthru
          _
        // Predicated region
        $region149: #{tpu_custom_call.1} parent=91 // pred_check
          %p813 = pneg %p378
        $region150: #{tpu_custom_call.1} parent=91 // pred_check_branch
          %815 = sbr.rel (%p813) target = $region152
        $region151: #{tpu_custom_call.1} parent=91 // pred_region
          %816 = dma.done [#allocation24], 512
        $region152: #{tpu_custom_call.1} parent=91 // pred_fallthru
          _
        // Predicated region
        $region153: #{tpu_custom_call.1} parent=91 // pred_check
          %p817 = pneg %p399
        $region154: #{tpu_custom_call.1} parent=91 // pred_check_branch
          %819 = sbr.rel (%p817) target = $region156
        $region155: #{tpu_custom_call.1} parent=91 // pred_region
          %820 = dma.done [#allocation27], 16
        $region156: #{tpu_custom_call.1} parent=91 // pred_fallthru
          _
        // Predicated region
        $region157: #{tpu_custom_call.1} parent=91 // pred_check
          %p821 = pneg %p420
        $region158: #{tpu_custom_call.1} parent=91 // pred_check_branch
          %823 = sbr.rel (%p821) target = $region160
        $region159: #{tpu_custom_call.1} parent=91 // pred_region
          %824 = dma.done [#allocation27], 64
        $region160: #{tpu_custom_call.1} parent=91 // pred_fallthru
          _
        // Predicated region
        $region161: #{tpu_custom_call.1} parent=91 // pred_check
          %p825 = pneg %p441
        $region162: #{tpu_custom_call.1} parent=91 // pred_check_branch
          %827 = sbr.rel (%p825) target = $region164
        $region163: #{tpu_custom_call.1} parent=91 // pred_region
          %828 = dma.done [#allocation30], 64
        $region164: #{tpu_custom_call.1} parent=91 // pred_fallthru
          _
        %s829 = sand.u32 %s56, 1
        %s830 = scalar_lea.sflag [#allocation3], %s829
        %s831 = sand.u32 %s56, 1
        %s832 = smul.addr %s831, 8
        %s833 = scalar_lea.vmem [#allocation2], %s832
        %p834 = pneg %p69
        %p835 = pneg %p66
        %s836 = sand.u32 %s48, 1
        %s837 = scalar_lea.sflag [#allocation6], %s836
        %s838 = sand.u32 %s82, 1
        %s839 = smul.addr %s838, 16
        %s840 = scalar_lea.vmem [#allocation5], %s839
        %p841 = pneg %p95
        %p842 = pneg %p92
        %s843 = sand.u32 %s48, 1
        %s844 = scalar_lea.sflag [#allocation6], %s843
        %s845 = sand.u32 %s108, 1
        %s846 = smul.addr %s845, 8
        %s847 = scalar_lea.vmem [#allocation7], %s846
        %p848 = pneg %p121
        %p849 = pneg %p118
        %s850 = sand.u32 %s48, 1
        %s851 = scalar_lea.sflag [#allocation9], %s850
        %s852 = sand.u32 %s134, 1
        %s853 = smul.addr %s852, 16
        %s854 = scalar_lea.vmem [#allocation8], %s853
        %p855 = pneg %p147
        %p856 = pneg %p144
        %p857 = pneg %p168
        %p858 = pneg %p165
        %p859 = pneg %p189
        %p860 = pneg %p186
        %p861 = pneg %p210
        %p862 = pneg %p207
        %p863 = pneg %p231
        %p864 = pneg %p228
        %p865 = pneg %p252
        %p866 = pneg %p249
        %p867 = pneg %p273
        %p868 = pneg %p270
        %p869 = pneg %p294
        %p870 = pneg %p291
        %p871 = pneg %p315
        %p872 = pneg %p312
        %p873 = pneg %p336
        %p874 = pneg %p333
        %p875 = pneg %p357
        %p876 = pneg %p354
        %p877 = pneg %p378
        %p878 = pneg %p375
        %p879 = pneg %p399
        %p880 = pneg %p396
        %p881 = pneg %p420
        %p882 = pneg %p417
        %p883 = pneg %p441
        %p884 = pneg %p438
        %p885 = pneg %p467
        %p886 = pneg %p464
        %s887 = sand.u32 %s454, 1
        %s888 = scalar_lea.sflag [#allocation4], %s887
        %s889 = sand.u32 %s454, 1
        %s890 = smul.addr %s889, 8
        %s891 = scalar_lea.vmem [#allocation31], %s890
        %v893 = vld [vmem:[%s741] sm:$0xff]
        %v894 = vld [vmem:[%s759] sm:$0xff]
        %v895 = vld [vmem:[%s750] sm:$0xff]
        %v896 = vld [vmem:[%s750 + $0x8] sm:$0xff]
        %v897 = vld [vmem:[%s768] sm:$0xff]
        %v898 = vld [vmem:[%s768 + $0x8] sm:$0xff]
        %v899 = vadd.f32 %v893, %v894
        %v900 = vld [vmem:[#allocation10] sm:$0xf]
        %v901 = vld [vmem:[#allocation10 + $0x4] sm:$0xf]
        %v902 = vld [vmem:[#allocation10 + $0x8] sm:$0xf]
        %v903 = vld [vmem:[#allocation10 + $0xc] sm:$0xf]
        %v904 = vpack.c.bf16 %v899, %v899
        %v905 = vld [vmem:[#allocation11] sm:$0x1]
        %v907 = vlaneseq
        %v908 = vshrl.u32 %v907, 7
        %v909 = vsub.s32 0, %v908
        %v910 = vrot.slane %v905, %v909
        %v916 = vunpack.c.l.b16 %v900
        %v917 = vunpack.c.l.b16 %v901
        %v918 = vunpack.c.l.b16 %v902
        %v919 = vunpack.c.l.b16 %v903
        %v920 = vpack.c.b16 %v917, %v916
        %v921 = vpack.c.b16 %v919, %v918
        %vm924 = vcmask 261120
        %v926 = vsel %vm924, %v904, 0
        %928 = vmatprep.subr.bf16.mxu0 0
        %929 = vmatpush1.bf16.msra.mxu0 %v920
        %930 = vmatprep.subr.bf16.mxu0 0
        %931 = vmatpush1.bf16.msra.mxu0 %v921
        %932 = vmatprep.subr.bf16.mxu0 0
        %933 = vmatpush1.bf16.msra.mxu0 0
        %934 = vmatprep.subr.bf16.mxu0 0
        %935 = vmatpush1.bf16.msra.mxu0 0
        %936 = vmatprep.subr.bf16.mxu0 0
        %937 = vmatpush1.bf16.msra.mxu0 0
        %938 = vmatprep.subr.bf16.mxu0 0
        %939 = vmatpush1.bf16.msra.mxu0 0
        %940 = vmatprep.subr.bf16.mxu0 0
        %941 = vmatpush1.bf16.msra.mxu0 0
        %942 = vmatprep.subr.bf16.mxu0 0
        %943 = vmatpush1.bf16.msra.mxu0 0
        %944 = vmatprep.subr.bf16.mxu0 0
        %945 = vmatpush1.bf16.msra.mxu0 0
        %946 = vmatprep.subr.bf16.mxu0 0
        %947 = vmatpush1.bf16.msra.mxu0 0
        %948 = vmatprep.subr.bf16.mxu0 0
        %949 = vmatpush1.bf16.msra.mxu0 0
        %950 = vmatprep.subr.bf16.mxu0 0
        %951 = vmatpush1.bf16.msra.mxu0 0
        %952 = vmatprep.subr.bf16.mxu0 0
        %953 = vmatpush1.bf16.msra.mxu0 0
        %954 = vmatprep.subr.bf16.mxu0 0
        %955 = vmatpush1.bf16.msra.mxu0 0
        %956 = vmatprep.subr.bf16.mxu0 0
        %957 = vmatpush1.bf16.msra.mxu0 0
        %958 = vmatprep.subr.bf16.mxu0 0
        %959 = vmatpush1.bf16.msra.mxu0 0
        %960 = vmatprep.mubr.bf16.mxu0 0
        %961 = vmatmul.mubr.bf16.gmra.mrb[0].mxu0 %v926
        %v962 = vpop.f32.mrb[0].mxu0
        %v963 = vadd.f32 %v910, %v962
        %v964 = vpop.f32.mrb[0].mxu0
        %v965 = vpop.f32.mrb[0].mxu0
        %v966 = vpop.f32.mrb[0].mxu0
        %967 = vdwg.mxu0
        %v968 = vpack.c.bf16 %v893, %v893
        %969 = vrot.lane.b32.xlu0 %v920, 64
        %v970 = vpop.permute.xlu0 %969
        %971 = vrot.lane.b32.xlu0 %v921, 64
        %v972 = vpop.permute.xlu0 %971
        %975 = vrot.lane.b32.xlu0 %v910, 64
        %v976 = vpop.permute.xlu0 %975
        %v979 = vsel %vm924, %v968, 0
        %981 = vmatprep.subr.bf16.mxu0 0
        %982 = vmatpush1.bf16.msra.mxu0 %v970
        %983 = vmatprep.subr.bf16.mxu0 0
        %984 = vmatpush1.bf16.msra.mxu0 %v972
        %985 = vmatprep.subr.bf16.mxu0 0
        %986 = vmatpush1.bf16.msra.mxu0 0
        %987 = vmatprep.subr.bf16.mxu0 0
        %988 = vmatpush1.bf16.msra.mxu0 0
        %989 = vmatprep.subr.bf16.mxu0 0
        %990 = vmatpush1.bf16.msra.mxu0 0
        %991 = vmatprep.subr.bf16.mxu0 0
        %992 = vmatpush1.bf16.msra.mxu0 0
        %993 = vmatprep.subr.bf16.mxu0 0
        %994 = vmatpush1.bf16.msra.mxu0 0
        %995 = vmatprep.subr.bf16.mxu0 0
        %996 = vmatpush1.bf16.msra.mxu0 0
        %997 = vmatprep.subr.bf16.mxu0 0
        %998 = vmatpush1.bf16.msra.mxu0 0
        %999 = vmatprep.subr.bf16.mxu0 0
        %1000 = vmatpush1.bf16.msra.mxu0 0
        %1001 = vmatprep.subr.bf16.mxu0 0
        %1002 = vmatpush1.bf16.msra.mxu0 0
        %1003 = vmatprep.subr.bf16.mxu0 0
        %1004 = vmatpush1.bf16.msra.mxu0 0
        %1005 = vmatprep.subr.bf16.mxu0 0
        %1006 = vmatpush1.bf16.msra.mxu0 0
        %1007 = vmatprep.subr.bf16.mxu0 0
        %1008 = vmatpush1.bf16.msra.mxu0 0
        %1009 = vmatprep.subr.bf16.mxu0 0
        %1010 = vmatpush1.bf16.msra.mxu0 0
        %1011 = vmatprep.subr.bf16.mxu0 0
        %1012 = vmatpush1.bf16.msra.mxu0 0
        %1013 = vmatprep.mubr.bf16.mxu0 0
        %1014 = vmatmul.mubr.bf16.gmra.mrb[0].mxu0 %v979
        %v1015 = vpop.f32.mrb[0].mxu0
        %v1016 = vadd.f32 %v976, %v1015
        %v1017 = vpop.f32.mrb[0].mxu0
        %v1018 = vpop.f32.mrb[0].mxu0
        %v1019 = vpop.f32.mrb[0].mxu0
        %1020 = vdwg.mxu0
        %v1021 = vmul.f32 %v963, 0.35355338
        %v1022 = vpack.c.bf16 %v1021, %v1021
        %v1023 = vpack.c.bf16 %v963, %v963
        %v1024 = vpack.c.bf16 %v1016, %v1016
        %1026 = vrot.lane.b32.xlu0 %v1023, 96
        %v1027 = vpop.permute.xlu0 %1026
        %vm1028 = vcmask 64512
        %v1030 = vsel %vm1028, %v1022, 0
        %v1033 = vsel %vm1028, %v1027, 0
        %1035 = vmatprep.subr.bf16.mxu0 0
        %1036 = vmatpush1.bf16.xpose.msra.mxu0 %v1033
        %1037 = vmatprep.subr.bf16.mxu0 0
        %1038 = vmatpush1.bf16.xpose.msra.mxu0 0
        %1039 = vmatprep.subr.bf16.mxu0 0
        %1040 = vmatpush1.bf16.xpose.msra.mxu0 0
        %1041 = vmatprep.subr.bf16.mxu0 0
        %1042 = vmatpush1.bf16.xpose.msra.mxu0 0
        %1043 = vmatprep.subr.bf16.mxu0 0
        %1044 = vmatpush1.bf16.xpose.msra.mxu0 0
        %1045 = vmatprep.subr.bf16.mxu0 0
        %1046 = vmatpush1.bf16.xpose.msra.mxu0 0
        %1047 = vmatprep.subr.bf16.mxu0 0
        %1048 = vmatpush1.bf16.xpose.msra.mxu0 0
        %1049 = vmatprep.subr.bf16.mxu0 0
        %1050 = vmatpush1.bf16.xpose.msra.mxu0 0
        %1051 = vmatprep.subr.bf16.mxu0 0
        %1052 = vmatpush1.bf16.xpose.msra.mxu0 0
        %1053 = vmatprep.subr.bf16.mxu0 0
        %1054 = vmatpush1.bf16.xpose.msra.mxu0 0
        %1055 = vmatprep.subr.bf16.mxu0 0
        %1056 = vmatpush1.bf16.xpose.msra.mxu0 0
        %1057 = vmatprep.subr.bf16.mxu0 0
        %1058 = vmatpush1.bf16.xpose.msra.mxu0 0
        %1059 = vmatprep.subr.bf16.mxu0 0
        %1060 = vmatpush1.bf16.xpose.msra.mxu0 0
        %1061 = vmatprep.subr.bf16.mxu0 0
        %1062 = vmatpush1.bf16.xpose.msra.mxu0 0
        %1063 = vmatprep.subr.bf16.mxu0 0
        %1064 = vmatpush1.bf16.xpose.msra.mxu0 0
        %1065 = vmatprep.subr.bf16.mxu0 0
        %1066 = vmatpush1.bf16.xpose.msra.mxu0 0
        %1067 = vmatprep.mubr.bf16.mxu0 0
        %1068 = vmatmul.mubr.bf16.gmra.mrb[0].mxu0 %v1030
        %v1069 = vpop.f32.mrb[0].mxu0
        %v1070 = vadd.f32 0.0, %v1069
        %v1071 = vpop.f32.mrb[0].mxu0
        %v1072 = vpop.f32.mrb[0].mxu0
        %v1073 = vpop.f32.mrb[0].mxu0
        %1074 = vdwg.mxu0
        %v1075 = vsel %vm1028, %v1070, -inf
        %1076 = vmax.xlane.f32.xlu0 %v1075
        %v1077 = vpop.xlane.xlu0 %1076
        %v1078 = vsub.f32 %v1070, %v1077
        %v1079 = vmul.f32 %v1078, 1.442695
        %v1080 = vpow.pop %v1079
        %v1081 = vsel %vm1028, %v1080, 0.0
        %1082 = vadd.xlane.f32.xlu0 %v1081
        %v1083 = vpop.xlane.xlu0 %1082
        %v1084 = vrcp.pop %v1083
        %v1085 = vpack.c.bf16 %v1080, %v1080
        %v1087 = vsel %vm1028, %v1085, 0
        %vm1089 = vcmask 1043456
        %v1091 = vsel %vm1089, %v1024, 0
        %1093 = vmatprep.subr.bf16.mxu0 0
        %1094 = vmatpush1.bf16.msra.mxu0 %v1091
        %1095 = vmatprep.subr.bf16.mxu0 0
        %1096 = vmatpush1.bf16.msra.mxu0 0
        %1097 = vmatprep.subr.bf16.mxu0 0
        %1098 = vmatpush1.bf16.msra.mxu0 0
        %1099 = vmatprep.subr.bf16.mxu0 0
        %1100 = vmatpush1.bf16.msra.mxu0 0
        %1101 = vmatprep.subr.bf16.mxu0 0
        %1102 = vmatpush1.bf16.msra.mxu0 0
        %1103 = vmatprep.subr.bf16.mxu0 0
        %1104 = vmatpush1.bf16.msra.mxu0 0
        %1105 = vmatprep.subr.bf16.mxu0 0
        %1106 = vmatpush1.bf16.msra.mxu0 0
        %1107 = vmatprep.subr.bf16.mxu0 0
        %1108 = vmatpush1.bf16.msra.mxu0 0
        %1109 = vmatprep.subr.bf16.mxu0 0
        %1110 = vmatpush1.bf16.msra.mxu0 0
        %1111 = vmatprep.subr.bf16.mxu0 0
        %1112 = vmatpush1.bf16.msra.mxu0 0
        %1113 = vmatprep.subr.bf16.mxu0 0
        %1114 = vmatpush1.bf16.msra.mxu0 0
        %1115 = vmatprep.subr.bf16.mxu0 0
        %1116 = vmatpush1.bf16.msra.mxu0 0
        %1117 = vmatprep.subr.bf16.mxu0 0
        %1118 = vmatpush1.bf16.msra.mxu0 0
        %1119 = vmatprep.subr.bf16.mxu0 0
        %1120 = vmatpush1.bf16.msra.mxu0 0
        %1121 = vmatprep.subr.bf16.mxu0 0
        %1122 = vmatpush1.bf16.msra.mxu0 0
        %1123 = vmatprep.subr.bf16.mxu0 0
        %1124 = vmatpush1.bf16.msra.mxu0 0
        %1125 = vmatprep.mubr.bf16.mxu0 0
        %1126 = vmatmul.mubr.bf16.gmra.mrb[0].mxu0 %v1087
        %v1127 = vpop.f32.mrb[0].mxu0
        %v1128 = vadd.f32 0.0, %v1127
        %v1129 = vpop.f32.mrb[0].mxu0
        %v1130 = vpop.f32.mrb[0].mxu0
        %v1131 = vpop.f32.mrb[0].mxu0
        %1132 = vdwg.mxu0
        %v1133 = vmul.f32 %v1128, %v1084
        %v1134 = vpack.c.bf16 %v1133, %v1133
        %v1135 = vld [vmem:[#allocation13] sm:$0xff]
        %v1136 = vpack.c.bf16 %v1135, %v1135
        %1138 = vrot.lane.b32.xlu0 %v1022, 120
        %v1139 = vpop.permute.xlu0 %1138
        %1140 = vrot.lane.b32.xlu0 %v1023, 88
        %v1141 = vpop.permute.xlu0 %1140
        %v1143 = vsel %vm1028, %v1139, 0
        %v1146 = vsel %vm1028, %v1141, 0
        %1148 = vmatprep.subr.bf16.mxu0 0
        %1149 = vmatpush1.bf16.xpose.msra.mxu0 %v1146
        %1150 = vmatprep.subr.bf16.mxu0 0
        %1151 = vmatpush1.bf16.xpose.msra.mxu0 0
        %1152 = vmatprep.subr.bf16.mxu0 0
        %1153 = vmatpush1.bf16.xpose.msra.mxu0 0
        %1154 = vmatprep.subr.bf16.mxu0 0
        %1155 = vmatpush1.bf16.xpose.msra.mxu0 0
        %1156 = vmatprep.subr.bf16.mxu0 0
        %1157 = vmatpush1.bf16.xpose.msra.mxu0 0
        %1158 = vmatprep.subr.bf16.mxu0 0
        %1159 = vmatpush1.bf16.xpose.msra.mxu0 0
        %1160 = vmatprep.subr.bf16.mxu0 0
        %1161 = vmatpush1.bf16.xpose.msra.mxu0 0
        %1162 = vmatprep.subr.bf16.mxu0 0
        %1163 = vmatpush1.bf16.xpose.msra.mxu0 0
        %1164 = vmatprep.subr.bf16.mxu0 0
        %1165 = vmatpush1.bf16.xpose.msra.mxu0 0
        %1166 = vmatprep.subr.bf16.mxu0 0
        %1167 = vmatpush1.bf16.xpose.msra.mxu0 0
        %1168 = vmatprep.subr.bf16.mxu0 0
        %1169 = vmatpush1.bf16.xpose.msra.mxu0 0
        %1170 = vmatprep.subr.bf16.mxu0 0
        %1171 = vmatpush1.bf16.xpose.msra.mxu0 0
        %1172 = vmatprep.subr.bf16.mxu0 0
        %1173 = vmatpush1.bf16.xpose.msra.mxu0 0
        %1174 = vmatprep.subr.bf16.mxu0 0
        %1175 = vmatpush1.bf16.xpose.msra.mxu0 0
        %1176 = vmatprep.subr.bf16.mxu0 0
        %1177 = vmatpush1.bf16.xpose.msra.mxu0 0
        %1178 = vmatprep.subr.bf16.mxu0 0
        %1179 = vmatpush1.bf16.xpose.msra.mxu0 0
        %1180 = vmatprep.mubr.bf16.mxu0 0
        %1181 = vmatmul.mubr.bf16.gmra.mrb[0].mxu0 %v1143
        %v1182 = vpop.f32.mrb[0].mxu0
        %v1183 = vadd.f32 0.0, %v1182
        %v1184 = vpop.f32.mrb[0].mxu0
        %v1185 = vpop.f32.mrb[0].mxu0
        %v1186 = vpop.f32.mrb[0].mxu0
        %1187 = vdwg.mxu0
        %v1188 = vsel %vm1028, %v1183, -inf
        %1189 = vmax.xlane.f32.xlu0 %v1188
        %v1190 = vpop.xlane.xlu0 %1189
        %v1191 = vsub.f32 %v1183, %v1190
        %v1192 = vmul.f32 %v1191, 1.442695
        %v1193 = vpow.pop %v1192
        %v1194 = vsel %vm1028, %v1193, 0.0
        %1195 = vadd.xlane.f32.xlu0 %v1194
        %v1196 = vpop.xlane.xlu0 %1195
        %v1197 = vrcp.pop %v1196
        %v1198 = vpack.c.bf16 %v1193, %v1193
        %1200 = vrot.lane.b32.xlu0 %v1024, 120
        %v1201 = vpop.permute.xlu0 %1200
        %v1203 = vsel %vm1028, %v1198, 0
        %v1206 = vsel %vm1089, %v1201, 0
        %1208 = vmatprep.subr.bf16.mxu0 0
        %1209 = vmatpush1.bf16.msra.mxu0 %v1206
        %1210 = vmatprep.subr.bf16.mxu0 0
        %1211 = vmatpush1.bf16.msra.mxu0 0
        %1212 = vmatprep.subr.bf16.mxu0 0
        %1213 = vmatpush1.bf16.msra.mxu0 0
        %1214 = vmatprep.subr.bf16.mxu0 0
        %1215 = vmatpush1.bf16.msra.mxu0 0
        %1216 = vmatprep.subr.bf16.mxu0 0
        %1217 = vmatpush1.bf16.msra.mxu0 0
        %1218 = vmatprep.subr.bf16.mxu0 0
        %1219 = vmatpush1.bf16.msra.mxu0 0
        %1220 = vmatprep.subr.bf16.mxu0 0
        %1221 = vmatpush1.bf16.msra.mxu0 0
        %1222 = vmatprep.subr.bf16.mxu0 0
        %1223 = vmatpush1.bf16.msra.mxu0 0
        %1224 = vmatprep.subr.bf16.mxu0 0
        %1225 = vmatpush1.bf16.msra.mxu0 0
        %1226 = vmatprep.subr.bf16.mxu0 0
        %1227 = vmatpush1.bf16.msra.mxu0 0
        %1228 = vmatprep.subr.bf16.mxu0 0
        %1229 = vmatpush1.bf16.msra.mxu0 0
        %1230 = vmatprep.subr.bf16.mxu0 0
        %1231 = vmatpush1.bf16.msra.mxu0 0
        %1232 = vmatprep.subr.bf16.mxu0 0
        %1233 = vmatpush1.bf16.msra.mxu0 0
        %1234 = vmatprep.subr.bf16.mxu0 0
        %1235 = vmatpush1.bf16.msra.mxu0 0
        %1236 = vmatprep.subr.bf16.mxu0 0
        %1237 = vmatpush1.bf16.msra.mxu0 0
        %1238 = vmatprep.subr.bf16.mxu0 0
        %1239 = vmatpush1.bf16.msra.mxu0 0
        %1240 = vmatprep.mubr.bf16.mxu0 0
        %1241 = vmatmul.mubr.bf16.gmra.mrb[0].mxu0 %v1203
        %v1242 = vpop.f32.mrb[0].mxu0
        %v1243 = vadd.f32 0.0, %v1242
        %v1244 = vpop.f32.mrb[0].mxu0
        %v1245 = vpop.f32.mrb[0].mxu0
        %v1246 = vpop.f32.mrb[0].mxu0
        %1247 = vdwg.mxu0
        %v1248 = vmul.f32 %v1243, %v1197
        %v1249 = vpack.c.bf16 %v1248, %v1248
        %v1250 = vld [vmem:[#allocation13 + $0x8] sm:$0xff]
        %v1251 = vpack.c.bf16 %v1250, %v1250
        %v1253 = vsel %vm1028, %v1249, 0
        %v1256 = vsel %vm1089, %v1251, 0
        %1258 = vmatprep.subr.bf16.mxu0 0
        %1259 = vmatpush1.bf16.msra.mxu0 %v1256
        %1260 = vmatprep.subr.bf16.mxu0 0
        %1261 = vmatpush1.bf16.msra.mxu0 0
        %1262 = vmatprep.subr.bf16.mxu0 0
        %1263 = vmatpush1.bf16.msra.mxu0 0
        %1264 = vmatprep.subr.bf16.mxu0 0
        %1265 = vmatpush1.bf16.msra.mxu0 0
        %1266 = vmatprep.subr.bf16.mxu0 0
        %1267 = vmatpush1.bf16.msra.mxu0 0
        %1268 = vmatprep.subr.bf16.mxu0 0
        %1269 = vmatpush1.bf16.msra.mxu0 0
        %1270 = vmatprep.subr.bf16.mxu0 0
        %1271 = vmatpush1.bf16.msra.mxu0 0
        %1272 = vmatprep.subr.bf16.mxu0 0
        %1273 = vmatpush1.bf16.msra.mxu0 0
        %1274 = vmatprep.subr.bf16.mxu0 0
        %1275 = vmatpush1.bf16.msra.mxu0 0
        %1276 = vmatprep.subr.bf16.mxu0 0
        %1277 = vmatpush1.bf16.msra.mxu0 0
        %1278 = vmatprep.subr.bf16.mxu0 0
        %1279 = vmatpush1.bf16.msra.mxu0 0
        %1280 = vmatprep.subr.bf16.mxu0 0
        %1281 = vmatpush1.bf16.msra.mxu0 0
        %1282 = vmatprep.subr.bf16.mxu0 0
        %1283 = vmatpush1.bf16.msra.mxu0 0
        %1284 = vmatprep.subr.bf16.mxu0 0
        %1285 = vmatpush1.bf16.msra.mxu0 0
        %1286 = vmatprep.subr.bf16.mxu0 0
        %1287 = vmatpush1.bf16.msra.mxu0 0
        %1288 = vmatprep.subr.bf16.mxu0 0
        %1289 = vmatpush1.bf16.msra.mxu0 0
        %1290 = vmatprep.mubr.bf16.mxu0 0
        %1291 = vmatmul.mubr.bf16.gmra.mrb[0].mxu0 %v1253
        %v1292 = vpop.f32.mrb[0].mxu0
        %v1293 = vadd.f32 0.0, %v1292
        %v1294 = vpop.f32.mrb[0].mxu0
        %v1295 = vpop.f32.mrb[0].mxu0
        %v1296 = vpop.f32.mrb[0].mxu0
        %1297 = vdwg.mxu0
        %v1299 = vsel %vm1028, %v1134, 0
        %v1302 = vsel %vm1089, %v1136, 0
        %1304 = vmatprep.subr.bf16.mxu0 0
        %1305 = vmatpush1.bf16.msra.mxu0 %v1302
        %1306 = vmatprep.subr.bf16.mxu0 0
        %1307 = vmatpush1.bf16.msra.mxu0 0
        %1308 = vmatprep.subr.bf16.mxu0 0
        %1309 = vmatpush1.bf16.msra.mxu0 0
        %1310 = vmatprep.subr.bf16.mxu0 0
        %1311 = vmatpush1.bf16.msra.mxu0 0
        %1312 = vmatprep.subr.bf16.mxu0 0
        %1313 = vmatpush1.bf16.msra.mxu0 0
        %1314 = vmatprep.subr.bf16.mxu0 0
        %1315 = vmatpush1.bf16.msra.mxu0 0
        %1316 = vmatprep.subr.bf16.mxu0 0
        %1317 = vmatpush1.bf16.msra.mxu0 0
        %1318 = vmatprep.subr.bf16.mxu0 0
        %1319 = vmatpush1.bf16.msra.mxu0 0
        %1320 = vmatprep.subr.bf16.mxu0 0
        %1321 = vmatpush1.bf16.msra.mxu0 0
        %1322 = vmatprep.subr.bf16.mxu0 0
        %1323 = vmatpush1.bf16.msra.mxu0 0
        %1324 = vmatprep.subr.bf16.mxu0 0
        %1325 = vmatpush1.bf16.msra.mxu0 0
        %1326 = vmatprep.subr.bf16.mxu0 0
        %1327 = vmatpush1.bf16.msra.mxu0 0
        %1328 = vmatprep.subr.bf16.mxu0 0
        %1329 = vmatpush1.bf16.msra.mxu0 0
        %1330 = vmatprep.subr.bf16.mxu0 0
        %1331 = vmatpush1.bf16.msra.mxu0 0
        %1332 = vmatprep.subr.bf16.mxu0 0
        %1333 = vmatpush1.bf16.msra.mxu0 0
        %1334 = vmatprep.subr.bf16.mxu0 0
        %1335 = vmatpush1.bf16.msra.mxu0 0
        %1336 = vmatprep.mubr.bf16.mxu0 0
        %1337 = vmatmul.mubr.bf16.gmra.mrb[0].mxu0 %v1299
        %v1338 = vpop.f32.mrb[0].mxu0
        %v1339 = vadd.f32 %v1293, %v1338
        %v1340 = vpop.f32.mrb[0].mxu0
        %v1341 = vpop.f32.mrb[0].mxu0
        %v1342 = vpop.f32.mrb[0].mxu0
        %1343 = vdwg.mxu0
        %1344 = vrot.lane.b32.xlu0 %v1022, 112
        %v1345 = vpop.permute.xlu0 %1344
        %1346 = vrot.lane.b32.xlu0 %v1023, 80
        %v1347 = vpop.permute.xlu0 %1346
        %v1349 = vsel %vm1028, %v1345, 0
        %v1352 = vsel %vm1028, %v1347, 0
        %1354 = vmatprep.subr.bf16.mxu0 0
        %1355 = vmatpush1.bf16.xpose.msra.mxu0 %v1352
        %1356 = vmatprep.subr.bf16.mxu0 0
        %1357 = vmatpush1.bf16.xpose.msra.mxu0 0
        %1358 = vmatprep.subr.bf16.mxu0 0
        %1359 = vmatpush1.bf16.xpose.msra.mxu0 0
        %1360 = vmatprep.subr.bf16.mxu0 0
        %1361 = vmatpush1.bf16.xpose.msra.mxu0 0
        %1362 = vmatprep.subr.bf16.mxu0 0
        %1363 = vmatpush1.bf16.xpose.msra.mxu0 0
        %1364 = vmatprep.subr.bf16.mxu0 0
        %1365 = vmatpush1.bf16.xpose.msra.mxu0 0
        %1366 = vmatprep.subr.bf16.mxu0 0
        %1367 = vmatpush1.bf16.xpose.msra.mxu0 0
        %1368 = vmatprep.subr.bf16.mxu0 0
        %1369 = vmatpush1.bf16.xpose.msra.mxu0 0
        %1370 = vmatprep.subr.bf16.mxu0 0
        %1371 = vmatpush1.bf16.xpose.msra.mxu0 0
        %1372 = vmatprep.subr.bf16.mxu0 0
        %1373 = vmatpush1.bf16.xpose.msra.mxu0 0
        %1374 = vmatprep.subr.bf16.mxu0 0
        %1375 = vmatpush1.bf16.xpose.msra.mxu0 0
        %1376 = vmatprep.subr.bf16.mxu0 0
        %1377 = vmatpush1.bf16.xpose.msra.mxu0 0
        %1378 = vmatprep.subr.bf16.mxu0 0
        %1379 = vmatpush1.bf16.xpose.msra.mxu0 0
        %1380 = vmatprep.subr.bf16.mxu0 0
        %1381 = vmatpush1.bf16.xpose.msra.mxu0 0
        %1382 = vmatprep.subr.bf16.mxu0 0
        %1383 = vmatpush1.bf16.xpose.msra.mxu0 0
        %1384 = vmatprep.subr.bf16.mxu0 0
        %1385 = vmatpush1.bf16.xpose.msra.mxu0 0
        %1386 = vmatprep.mubr.bf16.mxu0 0
        %1387 = vmatmul.mubr.bf16.gmra.mrb[0].mxu0 %v1349
        %v1388 = vpop.f32.mrb[0].mxu0
        %v1389 = vadd.f32 0.0, %v1388
        %v1390 = vpop.f32.mrb[0].mxu0
        %v1391 = vpop.f32.mrb[0].mxu0
        %v1392 = vpop.f32.mrb[0].mxu0
        %1393 = vdwg.mxu0
        %v1394 = vsel %vm1028, %v1389, -inf
        %1395 = vmax.xlane.f32.xlu0 %v1394
        %v1396 = vpop.xlane.xlu0 %1395
        %v1397 = vsub.f32 %v1389, %v1396
        %v1398 = vmul.f32 %v1397, 1.442695
        %v1399 = vpow.pop %v1398
        %v1400 = vsel %vm1028, %v1399, 0.0
        %1401 = vadd.xlane.f32.xlu0 %v1400
        %v1402 = vpop.xlane.xlu0 %1401
        %v1403 = vrcp.pop %v1402
        %v1404 = vpack.c.bf16 %v1399, %v1399
        %1405 = vrot.lane.b32.xlu0 %v1024, 112
        %v1406 = vpop.permute.xlu0 %1405
        %v1408 = vsel %vm1028, %v1404, 0
        %v1411 = vsel %vm1089, %v1406, 0
        %1413 = vmatprep.subr.bf16.mxu0 0
        %1414 = vmatpush1.bf16.msra.mxu0 %v1411
        %1415 = vmatprep.subr.bf16.mxu0 0
        %1416 = vmatpush1.bf16.msra.mxu0 0
        %1417 = vmatprep.subr.bf16.mxu0 0
        %1418 = vmatpush1.bf16.msra.mxu0 0
        %1419 = vmatprep.subr.bf16.mxu0 0
        %1420 = vmatpush1.bf16.msra.mxu0 0
        %1421 = vmatprep.subr.bf16.mxu0 0
        %1422 = vmatpush1.bf16.msra.mxu0 0
        %1423 = vmatprep.subr.bf16.mxu0 0
        %1424 = vmatpush1.bf16.msra.mxu0 0
        %1425 = vmatprep.subr.bf16.mxu0 0
        %1426 = vmatpush1.bf16.msra.mxu0 0
        %1427 = vmatprep.subr.bf16.mxu0 0
        %1428 = vmatpush1.bf16.msra.mxu0 0
        %1429 = vmatprep.subr.bf16.mxu0 0
        %1430 = vmatpush1.bf16.msra.mxu0 0
        %1431 = vmatprep.subr.bf16.mxu0 0
        %1432 = vmatpush1.bf16.msra.mxu0 0
        %1433 = vmatprep.subr.bf16.mxu0 0
        %1434 = vmatpush1.bf16.msra.mxu0 0
        %1435 = vmatprep.subr.bf16.mxu0 0
        %1436 = vmatpush1.bf16.msra.mxu0 0
        %1437 = vmatprep.subr.bf16.mxu0 0
        %1438 = vmatpush1.bf16.msra.mxu0 0
        %1439 = vmatprep.subr.bf16.mxu0 0
        %1440 = vmatpush1.bf16.msra.mxu0 0
        %1441 = vmatprep.subr.bf16.mxu0 0
        %1442 = vmatpush1.bf16.msra.mxu0 0
        %1443 = vmatprep.subr.bf16.mxu0 0
        %1444 = vmatpush1.bf16.msra.mxu0 0
        %1445 = vmatprep.mubr.bf16.mxu0 0
        %1446 = vmatmul.mubr.bf16.gmra.mrb[0].mxu0 %v1408
        %v1447 = vpop.f32.mrb[0].mxu0
        %v1448 = vadd.f32 0.0, %v1447
        %v1449 = vpop.f32.mrb[0].mxu0
        %v1450 = vpop.f32.mrb[0].mxu0
        %v1451 = vpop.f32.mrb[0].mxu0
        %1452 = vdwg.mxu0
        %v1453 = vmul.f32 %v1448, %v1403
        %v1454 = vpack.c.bf16 %v1453, %v1453
        %v1455 = vld [vmem:[#allocation13 + $0x10] sm:$0xff]
        %v1456 = vpack.c.bf16 %v1455, %v1455
        %v1458 = vsel %vm1028, %v1454, 0
        %v1461 = vsel %vm1089, %v1456, 0
        %1463 = vmatprep.subr.bf16.mxu0 0
        %1464 = vmatpush1.bf16.msra.mxu0 %v1461
        %1465 = vmatprep.subr.bf16.mxu0 0
        %1466 = vmatpush1.bf16.msra.mxu0 0
        %1467 = vmatprep.subr.bf16.mxu0 0
        %1468 = vmatpush1.bf16.msra.mxu0 0
        %1469 = vmatprep.subr.bf16.mxu0 0
        %1470 = vmatpush1.bf16.msra.mxu0 0
        %1471 = vmatprep.subr.bf16.mxu0 0
        %1472 = vmatpush1.bf16.msra.mxu0 0
        %1473 = vmatprep.subr.bf16.mxu0 0
        %1474 = vmatpush1.bf16.msra.mxu0 0
        %1475 = vmatprep.subr.bf16.mxu0 0
        %1476 = vmatpush1.bf16.msra.mxu0 0
        %1477 = vmatprep.subr.bf16.mxu0 0
        %1478 = vmatpush1.bf16.msra.mxu0 0
        %1479 = vmatprep.subr.bf16.mxu0 0
        %1480 = vmatpush1.bf16.msra.mxu0 0
        %1481 = vmatprep.subr.bf16.mxu0 0
        %1482 = vmatpush1.bf16.msra.mxu0 0
        %1483 = vmatprep.subr.bf16.mxu0 0
        %1484 = vmatpush1.bf16.msra.mxu0 0
        %1485 = vmatprep.subr.bf16.mxu0 0
        %1486 = vmatpush1.bf16.msra.mxu0 0
        %1487 = vmatprep.subr.bf16.mxu0 0
        %1488 = vmatpush1.bf16.msra.mxu0 0
        %1489 = vmatprep.subr.bf16.mxu0 0
        %1490 = vmatpush1.bf16.msra.mxu0 0
        %1491 = vmatprep.subr.bf16.mxu0 0
        %1492 = vmatpush1.bf16.msra.mxu0 0
        %1493 = vmatprep.subr.bf16.mxu0 0
        %1494 = vmatpush1.bf16.msra.mxu0 0
        %1495 = vmatprep.mubr.bf16.mxu0 0
        %1496 = vmatmul.mubr.bf16.gmra.mrb[0].mxu0 %v1458
        %v1497 = vpop.f32.mrb[0].mxu0
        %v1498 = vadd.f32 0.0, %v1497
        %v1499 = vpop.f32.mrb[0].mxu0
        %v1500 = vpop.f32.mrb[0].mxu0
        %v1501 = vpop.f32.mrb[0].mxu0
        %1502 = vdwg.mxu0
        %v1503 = vadd.f32 %v1339, %v1498
        %1504 = vrot.lane.b32.xlu0 %v1022, 104
        %v1505 = vpop.permute.xlu0 %1504
        %1506 = vrot.lane.b32.xlu0 %v1023, 72
        %v1507 = vpop.permute.xlu0 %1506
        %v1509 = vsel %vm1028, %v1505, 0
        %v1512 = vsel %vm1028, %v1507, 0
        %1514 = vmatprep.subr.bf16.mxu0 0
        %1515 = vmatpush1.bf16.xpose.msra.mxu0 %v1512
        %1516 = vmatprep.subr.bf16.mxu0 0
        %1517 = vmatpush1.bf16.xpose.msra.mxu0 0
        %1518 = vmatprep.subr.bf16.mxu0 0
        %1519 = vmatpush1.bf16.xpose.msra.mxu0 0
        %1520 = vmatprep.subr.bf16.mxu0 0
        %1521 = vmatpush1.bf16.xpose.msra.mxu0 0
        %1522 = vmatprep.subr.bf16.mxu0 0
        %1523 = vmatpush1.bf16.xpose.msra.mxu0 0
        %1524 = vmatprep.subr.bf16.mxu0 0
        %1525 = vmatpush1.bf16.xpose.msra.mxu0 0
        %1526 = vmatprep.subr.bf16.mxu0 0
        %1527 = vmatpush1.bf16.xpose.msra.mxu0 0
        %1528 = vmatprep.subr.bf16.mxu0 0
        %1529 = vmatpush1.bf16.xpose.msra.mxu0 0
        %1530 = vmatprep.subr.bf16.mxu0 0
        %1531 = vmatpush1.bf16.xpose.msra.mxu0 0
        %1532 = vmatprep.subr.bf16.mxu0 0
        %1533 = vmatpush1.bf16.xpose.msra.mxu0 0
        %1534 = vmatprep.subr.bf16.mxu0 0
        %1535 = vmatpush1.bf16.xpose.msra.mxu0 0
        %1536 = vmatprep.subr.bf16.mxu0 0
        %1537 = vmatpush1.bf16.xpose.msra.mxu0 0
        %1538 = vmatprep.subr.bf16.mxu0 0
        %1539 = vmatpush1.bf16.xpose.msra.mxu0 0
        %1540 = vmatprep.subr.bf16.mxu0 0
        %1541 = vmatpush1.bf16.xpose.msra.mxu0 0
        %1542 = vmatprep.subr.bf16.mxu0 0
        %1543 = vmatpush1.bf16.xpose.msra.mxu0 0
        %1544 = vmatprep.subr.bf16.mxu0 0
        %1545 = vmatpush1.bf16.xpose.msra.mxu0 0
        %1546 = vmatprep.mubr.bf16.mxu0 0
        %1547 = vmatmul.mubr.bf16.gmra.mrb[0].mxu0 %v1509
        %v1548 = vpop.f32.mrb[0].mxu0
        %v1549 = vadd.f32 0.0, %v1548
        %v1550 = vpop.f32.mrb[0].mxu0
        %v1551 = vpop.f32.mrb[0].mxu0
        %v1552 = vpop.f32.mrb[0].mxu0
        %1553 = vdwg.mxu0
        %v1554 = vsel %vm1028, %v1549, -inf
        %1555 = vmax.xlane.f32.xlu0 %v1554
        %v1556 = vpop.xlane.xlu0 %1555
        %v1557 = vsub.f32 %v1549, %v1556
        %v1558 = vmul.f32 %v1557, 1.442695
        %v1559 = vpow.pop %v1558
        %v1560 = vsel %vm1028, %v1559, 0.0
        %1561 = vadd.xlane.f32.xlu0 %v1560
        %v1562 = vpop.xlane.xlu0 %1561
        %v1563 = vrcp.pop %v1562
        %v1564 = vpack.c.bf16 %v1559, %v1559
        %1565 = vrot.lane.b32.xlu0 %v1024, 104
        %v1566 = vpop.permute.xlu0 %1565
        %v1568 = vsel %vm1028, %v1564, 0
        %v1571 = vsel %vm1089, %v1566, 0
        %1573 = vmatprep.subr.bf16.mxu0 0
        %1574 = vmatpush1.bf16.msra.mxu0 %v1571
        %1575 = vmatprep.subr.bf16.mxu0 0
        %1576 = vmatpush1.bf16.msra.mxu0 0
        %1577 = vmatprep.subr.bf16.mxu0 0
        %1578 = vmatpush1.bf16.msra.mxu0 0
        %1579 = vmatprep.subr.bf16.mxu0 0
        %1580 = vmatpush1.bf16.msra.mxu0 0
        %1581 = vmatprep.subr.bf16.mxu0 0
        %1582 = vmatpush1.bf16.msra.mxu0 0
        %1583 = vmatprep.subr.bf16.mxu0 0
        %1584 = vmatpush1.bf16.msra.mxu0 0
        %1585 = vmatprep.subr.bf16.mxu0 0
        %1586 = vmatpush1.bf16.msra.mxu0 0
        %1587 = vmatprep.subr.bf16.mxu0 0
        %1588 = vmatpush1.bf16.msra.mxu0 0
        %1589 = vmatprep.subr.bf16.mxu0 0
        %1590 = vmatpush1.bf16.msra.mxu0 0
        %1591 = vmatprep.subr.bf16.mxu0 0
        %1592 = vmatpush1.bf16.msra.mxu0 0
        %1593 = vmatprep.subr.bf16.mxu0 0
        %1594 = vmatpush1.bf16.msra.mxu0 0
        %1595 = vmatprep.subr.bf16.mxu0 0
        %1596 = vmatpush1.bf16.msra.mxu0 0
        %1597 = vmatprep.subr.bf16.mxu0 0
        %1598 = vmatpush1.bf16.msra.mxu0 0
        %1599 = vmatprep.subr.bf16.mxu0 0
        %1600 = vmatpush1.bf16.msra.mxu0 0
        %1601 = vmatprep.subr.bf16.mxu0 0
        %1602 = vmatpush1.bf16.msra.mxu0 0
        %1603 = vmatprep.subr.bf16.mxu0 0
        %1604 = vmatpush1.bf16.msra.mxu0 0
        %1605 = vmatprep.mubr.bf16.mxu0 0
        %1606 = vmatmul.mubr.bf16.gmra.mrb[0].mxu0 %v1568
        %v1607 = vpop.f32.mrb[0].mxu0
        %v1608 = vadd.f32 0.0, %v1607
        %v1609 = vpop.f32.mrb[0].mxu0
        %v1610 = vpop.f32.mrb[0].mxu0
        %v1611 = vpop.f32.mrb[0].mxu0
        %1612 = vdwg.mxu0
        %v1613 = vmul.f32 %v1608, %v1563
        %v1614 = vpack.c.bf16 %v1613, %v1613
        %v1615 = vld [vmem:[#allocation13 + $0x18] sm:$0xff]
        %v1616 = vpack.c.bf16 %v1615, %v1615
        %v1618 = vsel %vm1028, %v1614, 0
        %v1621 = vsel %vm1089, %v1616, 0
        %1623 = vmatprep.subr.bf16.mxu0 0
        %1624 = vmatpush1.bf16.msra.mxu0 %v1621
        %1625 = vmatprep.subr.bf16.mxu0 0
        %1626 = vmatpush1.bf16.msra.mxu0 0
        %1627 = vmatprep.subr.bf16.mxu0 0
        %1628 = vmatpush1.bf16.msra.mxu0 0
        %1629 = vmatprep.subr.bf16.mxu0 0
        %1630 = vmatpush1.bf16.msra.mxu0 0
        %1631 = vmatprep.subr.bf16.mxu0 0
        %1632 = vmatpush1.bf16.msra.mxu0 0
        %1633 = vmatprep.subr.bf16.mxu0 0
        %1634 = vmatpush1.bf16.msra.mxu0 0
        %1635 = vmatprep.subr.bf16.mxu0 0
        %1636 = vmatpush1.bf16.msra.mxu0 0
        %1637 = vmatprep.subr.bf16.mxu0 0
        %1638 = vmatpush1.bf16.msra.mxu0 0
        %1639 = vmatprep.subr.bf16.mxu0 0
        %1640 = vmatpush1.bf16.msra.mxu0 0
        %1641 = vmatprep.subr.bf16.mxu0 0
        %1642 = vmatpush1.bf16.msra.mxu0 0
        %1643 = vmatprep.subr.bf16.mxu0 0
        %1644 = vmatpush1.bf16.msra.mxu0 0
        %1645 = vmatprep.subr.bf16.mxu0 0
        %1646 = vmatpush1.bf16.msra.mxu0 0
        %1647 = vmatprep.subr.bf16.mxu0 0
        %1648 = vmatpush1.bf16.msra.mxu0 0
        %1649 = vmatprep.subr.bf16.mxu0 0
        %1650 = vmatpush1.bf16.msra.mxu0 0
        %1651 = vmatprep.subr.bf16.mxu0 0
        %1652 = vmatpush1.bf16.msra.mxu0 0
        %1653 = vmatprep.subr.bf16.mxu0 0
        %1654 = vmatpush1.bf16.msra.mxu0 0
        %1655 = vmatprep.mubr.bf16.mxu0 0
        %1656 = vmatmul.mubr.bf16.gmra.mrb[0].mxu0 %v1618
        %v1657 = vpop.f32.mrb[0].mxu0
        %v1658 = vadd.f32 0.0, %v1657
        %v1659 = vpop.f32.mrb[0].mxu0
        %v1660 = vpop.f32.mrb[0].mxu0
        %v1661 = vpop.f32.mrb[0].mxu0
        %1662 = vdwg.mxu0
        %v1663 = vadd.f32 %v1503, %v1658
        %v1664 = vld [vmem:[#allocation14] sm:$0x1]
        %v1666 = vlaneseq
        %v1667 = vshrl.u32 %v1666, 7
        %v1668 = vsub.s32 0, %v1667
        %v1669 = vrot.slane %v1664, %v1668
        %v1671 = vadd.f32 %v1663, %v1669
        %v1672 = vadd.f32 %v893, %v1671
        %v1673 = vld [vmem:[#allocation28] sm:$0x1]
        %v1674 = vld [vmem:[#allocation29] sm:$0x1]
        %v1675 = vsel %vm924, %v1672, 0.0
        %1676 = vadd.xlane.f32.xlu0 %v1675
        %v1677 = vpop.xlane.xlu0 %1676
        %v1678 = vrcp.pop 32.0
        %v1679 = vmul.f32 %v1677, %v1678
        %v1680 = vsub.f32 %v1672, %v1679
        %v1681 = vmul.f32 %v1680, %v1680
        %v1682 = vsel %vm924, %v1681, 0.0
        %1683 = vadd.xlane.f32.xlu0 %v1682
        %v1684 = vpop.xlane.xlu0 %1683
        %v1685 = vmul.f32 %v1684, %v1678
        %v1686 = vadd.f32 %v1685, 1e-05
        %v1687 = vrsqrt.pop %v1686
        %v1688 = vmul.f32 %v1680, %v1687
        %v1689 = vlaneseq
        %v1690 = vshrl.u32 %v1689, 7
        %v1691 = vsub.s32 0, %v1690
        %v1692 = vrot.slane %v1673, %v1691
        %v1693 = vmul.f32 %v1688, %v1692
        %v1694 = vlaneseq
        %v1695 = vshrl.u32 %v1694, 7
        %v1696 = vsub.s32 0, %v1695
        %v1697 = vrot.slane %v1674, %v1696
        %v1698 = vadd.f32 %v1693, %v1697
        %v1699 = vadd.f32 %v1698, %v894
        %v1700 = vld [vmem:[#allocation16] sm:$0xf]
        %v1701 = vld [vmem:[#allocation16 + $0x4] sm:$0xf]
        %v1702 = vld [vmem:[#allocation16 + $0x8] sm:$0xf]
        %v1703 = vld [vmem:[#allocation16 + $0xc] sm:$0xf]
        %v1704 = vpack.c.bf16 %v1699, %v1699
        %v1705 = vld [vmem:[#allocation17] sm:$0x1]
        %v1707 = vlaneseq
        %v1708 = vshrl.u32 %v1707, 7
        %v1709 = vsub.s32 0, %v1708
        %v1710 = vrot.slane %v1705, %v1709
        %v1716 = vunpack.c.l.b16 %v1700
        %v1717 = vunpack.c.l.b16 %v1701
        %v1718 = vunpack.c.l.b16 %v1702
        %v1719 = vunpack.c.l.b16 %v1703
        %v1720 = vpack.c.b16 %v1717, %v1716
        %v1721 = vpack.c.b16 %v1719, %v1718
        %v1725 = vsel %vm924, %v1704, 0
        %1727 = vmatprep.subr.bf16.mxu0 0
        %1728 = vmatpush1.bf16.msra.mxu0 %v1720
        %1729 = vmatprep.subr.bf16.mxu0 0
        %1730 = vmatpush1.bf16.msra.mxu0 %v1721
        %1731 = vmatprep.subr.bf16.mxu0 0
        %1732 = vmatpush1.bf16.msra.mxu0 0
        %1733 = vmatprep.subr.bf16.mxu0 0
        %1734 = vmatpush1.bf16.msra.mxu0 0
        %1735 = vmatprep.subr.bf16.mxu0 0
        %1736 = vmatpush1.bf16.msra.mxu0 0
        %1737 = vmatprep.subr.bf16.mxu0 0
        %1738 = vmatpush1.bf16.msra.mxu0 0
        %1739 = vmatprep.subr.bf16.mxu0 0
        %1740 = vmatpush1.bf16.msra.mxu0 0
        %1741 = vmatprep.subr.bf16.mxu0 0
        %1742 = vmatpush1.bf16.msra.mxu0 0
        %1743 = vmatprep.subr.bf16.mxu0 0
        %1744 = vmatpush1.bf16.msra.mxu0 0
        %1745 = vmatprep.subr.bf16.mxu0 0
        %1746 = vmatpush1.bf16.msra.mxu0 0
        %1747 = vmatprep.subr.bf16.mxu0 0
        %1748 = vmatpush1.bf16.msra.mxu0 0
        %1749 = vmatprep.subr.bf16.mxu0 0
        %1750 = vmatpush1.bf16.msra.mxu0 0
        %1751 = vmatprep.subr.bf16.mxu0 0
        %1752 = vmatpush1.bf16.msra.mxu0 0
        %1753 = vmatprep.subr.bf16.mxu0 0
        %1754 = vmatpush1.bf16.msra.mxu0 0
        %1755 = vmatprep.subr.bf16.mxu0 0
        %1756 = vmatpush1.bf16.msra.mxu0 0
        %1757 = vmatprep.subr.bf16.mxu0 0
        %1758 = vmatpush1.bf16.msra.mxu0 0
        %1759 = vmatprep.mubr.bf16.mxu0 0
        %1760 = vmatmul.mubr.bf16.gmra.mrb[0].mxu0 %v1725
        %v1761 = vpop.f32.mrb[0].mxu0
        %v1762 = vadd.f32 %v1710, %v1761
        %v1763 = vpop.f32.mrb[0].mxu0
        %v1764 = vpop.f32.mrb[0].mxu0
        %v1765 = vpop.f32.mrb[0].mxu0
        %1766 = vdwg.mxu0
        %v1767 = vadd.f32 %v895, %v897
        %v1768 = vadd.f32 %v896, %v898
        %v1769 = vpack.c.bf16 %v1768, %v1767
        %1770 = vrot.lane.b32.xlu0 %v1720, 96
        %v1771 = vpop.permute.xlu0 %1770
        %1772 = vrot.lane.b32.xlu0 %v1721, 96
        %v1773 = vpop.permute.xlu0 %1772
        %1776 = vrot.lane.b32.xlu0 %v1710, 96
        %v1777 = vpop.permute.xlu0 %1776
        %v1780 = vsel %vm924, %v1769, 0
        %1782 = vmatprep.subr.bf16.mxu0 0
        %1783 = vmatpush1.bf16.msra.mxu0 %v1771
        %1784 = vmatprep.subr.bf16.mxu0 0
        %1785 = vmatpush1.bf16.msra.mxu0 %v1773
        %1786 = vmatprep.subr.bf16.mxu0 0
        %1787 = vmatpush1.bf16.msra.mxu0 0
        %1788 = vmatprep.subr.bf16.mxu0 0
        %1789 = vmatpush1.bf16.msra.mxu0 0
        %1790 = vmatprep.subr.bf16.mxu0 0
        %1791 = vmatpush1.bf16.msra.mxu0 0
        %1792 = vmatprep.subr.bf16.mxu0 0
        %1793 = vmatpush1.bf16.msra.mxu0 0
        %1794 = vmatprep.subr.bf16.mxu0 0
        %1795 = vmatpush1.bf16.msra.mxu0 0
        %1796 = vmatprep.subr.bf16.mxu0 0
        %1797 = vmatpush1.bf16.msra.mxu0 0
        %1798 = vmatprep.subr.bf16.mxu0 0
        %1799 = vmatpush1.bf16.msra.mxu0 0
        %1800 = vmatprep.subr.bf16.mxu0 0
        %1801 = vmatpush1.bf16.msra.mxu0 0
        %1802 = vmatprep.subr.bf16.mxu0 0
        %1803 = vmatpush1.bf16.msra.mxu0 0
        %1804 = vmatprep.subr.bf16.mxu0 0
        %1805 = vmatpush1.bf16.msra.mxu0 0
        %1806 = vmatprep.subr.bf16.mxu0 0
        %1807 = vmatpush1.bf16.msra.mxu0 0
        %1808 = vmatprep.subr.bf16.mxu0 0
        %1809 = vmatpush1.bf16.msra.mxu0 0
        %1810 = vmatprep.subr.bf16.mxu0 0
        %1811 = vmatpush1.bf16.msra.mxu0 0
        %1812 = vmatprep.subr.bf16.mxu0 0
        %1813 = vmatpush1.bf16.msra.mxu0 0
        %1814 = vmatprep.mubr.bf16.mxu0 0
        %1815 = vmatmul.mubr.bf16.gmra.mrb[0].mxu0 %v1780
        %v1816 = vpop.f32.mrb[0].mxu0
        %v1817 = vadd.f32 %v1777, %v1816
        %v1818 = vpop.f32.mrb[0].mxu0
        %v1819 = vpop.f32.mrb[0].mxu0
        %v1820 = vadd.f32 %v1777, %v1819
        %v1821 = vpop.f32.mrb[0].mxu0
        %1822 = vdwg.mxu0
        %v1823 = vpack.c.bf16 %v896, %v895
        %1824 = vrot.lane.b32.xlu0 %v1720, 64
        %v1825 = vpop.permute.xlu0 %1824
        %1826 = vrot.lane.b32.xlu0 %v1721, 64
        %v1827 = vpop.permute.xlu0 %1826
        %1830 = vrot.lane.b32.xlu0 %v1710, 64
        %v1831 = vpop.permute.xlu0 %1830
        %v1834 = vsel %vm924, %v1823, 0
        %1836 = vmatprep.subr.bf16.mxu0 0
        %1837 = vmatpush1.bf16.msra.mxu0 %v1825
        %1838 = vmatprep.subr.bf16.mxu0 0
        %1839 = vmatpush1.bf16.msra.mxu0 %v1827
        %1840 = vmatprep.subr.bf16.mxu0 0
        %1841 = vmatpush1.bf16.msra.mxu0 0
        %1842 = vmatprep.subr.bf16.mxu0 0
        %1843 = vmatpush1.bf16.msra.mxu0 0
        %1844 = vmatprep.subr.bf16.mxu0 0
        %1845 = vmatpush1.bf16.msra.mxu0 0
        %1846 = vmatprep.subr.bf16.mxu0 0
        %1847 = vmatpush1.bf16.msra.mxu0 0
        %1848 = vmatprep.subr.bf16.mxu0 0
        %1849 = vmatpush1.bf16.msra.mxu0 0
        %1850 = vmatprep.subr.bf16.mxu0 0
        %1851 = vmatpush1.bf16.msra.mxu0 0
        %1852 = vmatprep.subr.bf16.mxu0 0
        %1853 = vmatpush1.bf16.msra.mxu0 0
        %1854 = vmatprep.subr.bf16.mxu0 0
        %1855 = vmatpush1.bf16.msra.mxu0 0
        %1856 = vmatprep.subr.bf16.mxu0 0
        %1857 = vmatpush1.bf16.msra.mxu0 0
        %1858 = vmatprep.subr.bf16.mxu0 0
        %1859 = vmatpush1.bf16.msra.mxu0 0
        %1860 = vmatprep.subr.bf16.mxu0 0
        %1861 = vmatpush1.bf16.msra.mxu0 0
        %1862 = vmatprep.subr.bf16.mxu0 0
        %1863 = vmatpush1.bf16.msra.mxu0 0
        %1864 = vmatprep.subr.bf16.mxu0 0
        %1865 = vmatpush1.bf16.msra.mxu0 0
        %1866 = vmatprep.subr.bf16.mxu0 0
        %1867 = vmatpush1.bf16.msra.mxu0 0
        %1868 = vmatprep.mubr.bf16.mxu0 0
        %1869 = vmatmul.mubr.bf16.gmra.mrb[0].mxu0 %v1834
        %v1870 = vpop.f32.mrb[0].mxu0
        %v1871 = vadd.f32 %v1831, %v1870
        %v1872 = vpop.f32.mrb[0].mxu0
        %v1873 = vpop.f32.mrb[0].mxu0
        %v1874 = vadd.f32 %v1831, %v1873
        %v1875 = vpop.f32.mrb[0].mxu0
        %1876 = vdwg.mxu0
        %v1877 = vmul.f32 %v1762, 0.35355338
        %v1878 = vpack.c.bf16 %v1877, %v1877
        %v1879 = vpack.c.bf16 %v1820, %v1817
        %v1880 = vpack.c.bf16 %v1874, %v1871
        %v1882 = vsel %vm1028, %v1878, 0
        %v1885 = vsel %vm1028, %v1879, 0
        %1887 = vmatprep.subr.bf16.mxu0 0
        %1888 = vmatpush1.bf16.xpose.msra.mxu0 %v1885
        %1889 = vmatprep.subr.bf16.mxu0 0
        %1890 = vmatpush1.bf16.xpose.msra.mxu0 0
        %1891 = vmatprep.subr.bf16.mxu0 0
        %1892 = vmatpush1.bf16.xpose.msra.mxu0 0
        %1893 = vmatprep.subr.bf16.mxu0 0
        %1894 = vmatpush1.bf16.xpose.msra.mxu0 0
        %1895 = vmatprep.subr.bf16.mxu0 0
        %1896 = vmatpush1.bf16.xpose.msra.mxu0 0
        %1897 = vmatprep.subr.bf16.mxu0 0
        %1898 = vmatpush1.bf16.xpose.msra.mxu0 0
        %1899 = vmatprep.subr.bf16.mxu0 0
        %1900 = vmatpush1.bf16.xpose.msra.mxu0 0
        %1901 = vmatprep.subr.bf16.mxu0 0
        %1902 = vmatpush1.bf16.xpose.msra.mxu0 0
        %1903 = vmatprep.subr.bf16.mxu0 0
        %1904 = vmatpush1.bf16.xpose.msra.mxu0 0
        %1905 = vmatprep.subr.bf16.mxu0 0
        %1906 = vmatpush1.bf16.xpose.msra.mxu0 0
        %1907 = vmatprep.subr.bf16.mxu0 0
        %1908 = vmatpush1.bf16.xpose.msra.mxu0 0
        %1909 = vmatprep.subr.bf16.mxu0 0
        %1910 = vmatpush1.bf16.xpose.msra.mxu0 0
        %1911 = vmatprep.subr.bf16.mxu0 0
        %1912 = vmatpush1.bf16.xpose.msra.mxu0 0
        %1913 = vmatprep.subr.bf16.mxu0 0
        %1914 = vmatpush1.bf16.xpose.msra.mxu0 0
        %1915 = vmatprep.subr.bf16.mxu0 0
        %1916 = vmatpush1.bf16.xpose.msra.mxu0 0
        %1917 = vmatprep.subr.bf16.mxu0 0
        %1918 = vmatpush1.bf16.xpose.msra.mxu0 0
        %1919 = vmatprep.mubr.bf16.mxu0 0
        %1920 = vmatmul.mubr.bf16.gmra.mrb[0].mxu0 %v1882
        %v1921 = vpop.f32.mrb[0].mxu0
        %v1922 = vadd.f32 0.0, %v1921
        %v1923 = vpop.f32.mrb[0].mxu0
        %v1924 = vpop.f32.mrb[0].mxu0
        %v1925 = vpop.f32.mrb[0].mxu0
        %1926 = vdwg.mxu0
        %vm1927 = vcmask 130048
        %v1928 = vsel %vm1927, %v1922, -inf
        %1929 = vmax.xlane.f32.xlu0 %v1928
        %v1930 = vpop.xlane.xlu0 %1929
        %v1931 = vsub.f32 %v1922, %v1930
        %v1932 = vmul.f32 %v1931, 1.442695
        %v1933 = vpow.pop %v1932
        %v1934 = vsel %vm1927, %v1933, 0.0
        %1935 = vadd.xlane.f32.xlu0 %v1934
        %v1936 = vpop.xlane.xlu0 %1935
        %v1937 = vrcp.pop %v1936
        %v1938 = vpack.c.bf16 %v1933, %v1933
        %v1940 = vsel %vm1927, %v1938, 0
        %1942 = vmatprep.subr.bf16.mxu0 0
        %1943 = vmatpush1.bf16.msra.mxu0 %v1880
        %1944 = vmatprep.subr.bf16.mxu0 0
        %1945 = vmatpush1.bf16.msra.mxu0 0
        %1946 = vmatprep.subr.bf16.mxu0 0
        %1947 = vmatpush1.bf16.msra.mxu0 0
        %1948 = vmatprep.subr.bf16.mxu0 0
        %1949 = vmatpush1.bf16.msra.mxu0 0
        %1950 = vmatprep.subr.bf16.mxu0 0
        %1951 = vmatpush1.bf16.msra.mxu0 0
        %1952 = vmatprep.subr.bf16.mxu0 0
        %1953 = vmatpush1.bf16.msra.mxu0 0
        %1954 = vmatprep.subr.bf16.mxu0 0
        %1955 = vmatpush1.bf16.msra.mxu0 0
        %1956 = vmatprep.subr.bf16.mxu0 0
        %1957 = vmatpush1.bf16.msra.mxu0 0
        %1958 = vmatprep.subr.bf16.mxu0 0
        %1959 = vmatpush1.bf16.msra.mxu0 0
        %1960 = vmatprep.subr.bf16.mxu0 0
        %1961 = vmatpush1.bf16.msra.mxu0 0
        %1962 = vmatprep.subr.bf16.mxu0 0
        %1963 = vmatpush1.bf16.msra.mxu0 0
        %1964 = vmatprep.subr.bf16.mxu0 0
        %1965 = vmatpush1.bf16.msra.mxu0 0
        %1966 = vmatprep.subr.bf16.mxu0 0
        %1967 = vmatpush1.bf16.msra.mxu0 0
        %1968 = vmatprep.subr.bf16.mxu0 0
        %1969 = vmatpush1.bf16.msra.mxu0 0
        %1970 = vmatprep.subr.bf16.mxu0 0
        %1971 = vmatpush1.bf16.msra.mxu0 0
        %1972 = vmatprep.subr.bf16.mxu0 0
        %1973 = vmatpush1.bf16.msra.mxu0 0
        %1974 = vmatprep.mubr.bf16.mxu0 0
        %1975 = vmatmul.mubr.bf16.gmra.mrb[0].mxu0 %v1940
        %v1976 = vpop.f32.mrb[0].mxu0
        %v1977 = vadd.f32 0.0, %v1976
        %v1978 = vpop.f32.mrb[0].mxu0
        %v1979 = vpop.f32.mrb[0].mxu0
        %v1980 = vpop.f32.mrb[0].mxu0
        %1981 = vdwg.mxu0
        %v1982 = vmul.f32 %v1977, %v1937
        %v1983 = vpack.c.bf16 %v1982, %v1982
        %v1984 = vld [vmem:[#allocation19] sm:$0xff]
        %v1985 = vpack.c.bf16 %v1984, %v1984
        %1987 = vrot.lane.b32.xlu0 %v1878, 120
        %v1988 = vpop.permute.xlu0 %1987
        %1990 = vrot.lane.b32.xlu0 %v1879, 120
        %v1991 = vpop.permute.xlu0 %1990
        %v1993 = vsel %vm1028, %v1988, 0
        %v1996 = vsel %vm1028, %v1991, 0
        %1998 = vmatprep.subr.bf16.mxu0 0
        %1999 = vmatpush1.bf16.xpose.msra.mxu0 %v1996
        %2000 = vmatprep.subr.bf16.mxu0 0
        %2001 = vmatpush1.bf16.xpose.msra.mxu0 0
        %2002 = vmatprep.subr.bf16.mxu0 0
        %2003 = vmatpush1.bf16.xpose.msra.mxu0 0
        %2004 = vmatprep.subr.bf16.mxu0 0
        %2005 = vmatpush1.bf16.xpose.msra.mxu0 0
        %2006 = vmatprep.subr.bf16.mxu0 0
        %2007 = vmatpush1.bf16.xpose.msra.mxu0 0
        %2008 = vmatprep.subr.bf16.mxu0 0
        %2009 = vmatpush1.bf16.xpose.msra.mxu0 0
        %2010 = vmatprep.subr.bf16.mxu0 0
        %2011 = vmatpush1.bf16.xpose.msra.mxu0 0
        %2012 = vmatprep.subr.bf16.mxu0 0
        %2013 = vmatpush1.bf16.xpose.msra.mxu0 0
        %2014 = vmatprep.subr.bf16.mxu0 0
        %2015 = vmatpush1.bf16.xpose.msra.mxu0 0
        %2016 = vmatprep.subr.bf16.mxu0 0
        %2017 = vmatpush1.bf16.xpose.msra.mxu0 0
        %2018 = vmatprep.subr.bf16.mxu0 0
        %2019 = vmatpush1.bf16.xpose.msra.mxu0 0
        %2020 = vmatprep.subr.bf16.mxu0 0
        %2021 = vmatpush1.bf16.xpose.msra.mxu0 0
        %2022 = vmatprep.subr.bf16.mxu0 0
        %2023 = vmatpush1.bf16.xpose.msra.mxu0 0
        %2024 = vmatprep.subr.bf16.mxu0 0
        %2025 = vmatpush1.bf16.xpose.msra.mxu0 0
        %2026 = vmatprep.subr.bf16.mxu0 0
        %2027 = vmatpush1.bf16.xpose.msra.mxu0 0
        %2028 = vmatprep.subr.bf16.mxu0 0
        %2029 = vmatpush1.bf16.xpose.msra.mxu0 0
        %2030 = vmatprep.mubr.bf16.mxu0 0
        %2031 = vmatmul.mubr.bf16.gmra.mrb[0].mxu0 %v1993
        %v2032 = vpop.f32.mrb[0].mxu0
        %v2033 = vadd.f32 0.0, %v2032
        %v2034 = vpop.f32.mrb[0].mxu0
        %v2035 = vpop.f32.mrb[0].mxu0
        %v2036 = vpop.f32.mrb[0].mxu0
        %2037 = vdwg.mxu0
        %v2038 = vsel %vm1927, %v2033, -inf
        %2039 = vmax.xlane.f32.xlu0 %v2038
        %v2040 = vpop.xlane.xlu0 %2039
        %v2041 = vsub.f32 %v2033, %v2040
        %v2042 = vmul.f32 %v2041, 1.442695
        %v2043 = vpow.pop %v2042
        %v2044 = vsel %vm1927, %v2043, 0.0
        %2045 = vadd.xlane.f32.xlu0 %v2044
        %v2046 = vpop.xlane.xlu0 %2045
        %v2047 = vrcp.pop %v2046
        %v2048 = vpack.c.bf16 %v2043, %v2043
        %2050 = vrot.lane.b32.xlu0 %v1880, 120
        %v2051 = vpop.permute.xlu0 %2050
        %v2054 = vsel %vm1927, %v2048, 0
        %2056 = vmatprep.subr.bf16.mxu0 0
        %2057 = vmatpush1.bf16.msra.mxu0 %v2051
        %2058 = vmatprep.subr.bf16.mxu0 0
        %2059 = vmatpush1.bf16.msra.mxu0 0
        %2060 = vmatprep.subr.bf16.mxu0 0
        %2061 = vmatpush1.bf16.msra.mxu0 0
        %2062 = vmatprep.subr.bf16.mxu0 0
        %2063 = vmatpush1.bf16.msra.mxu0 0
        %2064 = vmatprep.subr.bf16.mxu0 0
        %2065 = vmatpush1.bf16.msra.mxu0 0
        %2066 = vmatprep.subr.bf16.mxu0 0
        %2067 = vmatpush1.bf16.msra.mxu0 0
        %2068 = vmatprep.subr.bf16.mxu0 0
        %2069 = vmatpush1.bf16.msra.mxu0 0
        %2070 = vmatprep.subr.bf16.mxu0 0
        %2071 = vmatpush1.bf16.msra.mxu0 0
        %2072 = vmatprep.subr.bf16.mxu0 0
        %2073 = vmatpush1.bf16.msra.mxu0 0
        %2074 = vmatprep.subr.bf16.mxu0 0
        %2075 = vmatpush1.bf16.msra.mxu0 0
        %2076 = vmatprep.subr.bf16.mxu0 0
        %2077 = vmatpush1.bf16.msra.mxu0 0
        %2078 = vmatprep.subr.bf16.mxu0 0
        %2079 = vmatpush1.bf16.msra.mxu0 0
        %2080 = vmatprep.subr.bf16.mxu0 0
        %2081 = vmatpush1.bf16.msra.mxu0 0
        %2082 = vmatprep.subr.bf16.mxu0 0
        %2083 = vmatpush1.bf16.msra.mxu0 0
        %2084 = vmatprep.subr.bf16.mxu0 0
        %2085 = vmatpush1.bf16.msra.mxu0 0
        %2086 = vmatprep.subr.bf16.mxu0 0
        %2087 = vmatpush1.bf16.msra.mxu0 0
        %2088 = vmatprep.mubr.bf16.mxu0 0
        %2089 = vmatmul.mubr.bf16.gmra.mrb[0].mxu0 %v2054
        %v2090 = vpop.f32.mrb[0].mxu0
        %v2091 = vadd.f32 0.0, %v2090
        %v2092 = vpop.f32.mrb[0].mxu0
        %v2093 = vpop.f32.mrb[0].mxu0
        %v2094 = vpop.f32.mrb[0].mxu0
        %2095 = vdwg.mxu0
        %v2096 = vmul.f32 %v2091, %v2047
        %v2097 = vpack.c.bf16 %v2096, %v2096
        %v2098 = vld [vmem:[#allocation19 + $0x8] sm:$0xff]
        %v2099 = vpack.c.bf16 %v2098, %v2098
        %v2101 = vsel %vm1028, %v2097, 0
        %v2104 = vsel %vm1089, %v2099, 0
        %2106 = vmatprep.subr.bf16.mxu0 0
        %2107 = vmatpush1.bf16.msra.mxu0 %v2104
        %2108 = vmatprep.subr.bf16.mxu0 0
        %2109 = vmatpush1.bf16.msra.mxu0 0
        %2110 = vmatprep.subr.bf16.mxu0 0
        %2111 = vmatpush1.bf16.msra.mxu0 0
        %2112 = vmatprep.subr.bf16.mxu0 0
        %2113 = vmatpush1.bf16.msra.mxu0 0
        %2114 = vmatprep.subr.bf16.mxu0 0
        %2115 = vmatpush1.bf16.msra.mxu0 0
        %2116 = vmatprep.subr.bf16.mxu0 0
        %2117 = vmatpush1.bf16.msra.mxu0 0
        %2118 = vmatprep.subr.bf16.mxu0 0
        %2119 = vmatpush1.bf16.msra.mxu0 0
        %2120 = vmatprep.subr.bf16.mxu0 0
        %2121 = vmatpush1.bf16.msra.mxu0 0
        %2122 = vmatprep.subr.bf16.mxu0 0
        %2123 = vmatpush1.bf16.msra.mxu0 0
        %2124 = vmatprep.subr.bf16.mxu0 0
        %2125 = vmatpush1.bf16.msra.mxu0 0
        %2126 = vmatprep.subr.bf16.mxu0 0
        %2127 = vmatpush1.bf16.msra.mxu0 0
        %2128 = vmatprep.subr.bf16.mxu0 0
        %2129 = vmatpush1.bf16.msra.mxu0 0
        %2130 = vmatprep.subr.bf16.mxu0 0
        %2131 = vmatpush1.bf16.msra.mxu0 0
        %2132 = vmatprep.subr.bf16.mxu0 0
        %2133 = vmatpush1.bf16.msra.mxu0 0
        %2134 = vmatprep.subr.bf16.mxu0 0
        %2135 = vmatpush1.bf16.msra.mxu0 0
        %2136 = vmatprep.subr.bf16.mxu0 0
        %2137 = vmatpush1.bf16.msra.mxu0 0
        %2138 = vmatprep.mubr.bf16.mxu0 0
        %2139 = vmatmul.mubr.bf16.gmra.mrb[0].mxu0 %v2101
        %v2140 = vpop.f32.mrb[0].mxu0
        %v2141 = vadd.f32 0.0, %v2140
        %v2142 = vpop.f32.mrb[0].mxu0
        %v2143 = vpop.f32.mrb[0].mxu0
        %v2144 = vpop.f32.mrb[0].mxu0
        %2145 = vdwg.mxu0
        %v2147 = vsel %vm1028, %v1983, 0
        %v2150 = vsel %vm1089, %v1985, 0
        %2152 = vmatprep.subr.bf16.mxu0 0
        %2153 = vmatpush1.bf16.msra.mxu0 %v2150
        %2154 = vmatprep.subr.bf16.mxu0 0
        %2155 = vmatpush1.bf16.msra.mxu0 0
        %2156 = vmatprep.subr.bf16.mxu0 0
        %2157 = vmatpush1.bf16.msra.mxu0 0
        %2158 = vmatprep.subr.bf16.mxu0 0
        %2159 = vmatpush1.bf16.msra.mxu0 0
        %2160 = vmatprep.subr.bf16.mxu0 0
        %2161 = vmatpush1.bf16.msra.mxu0 0
        %2162 = vmatprep.subr.bf16.mxu0 0
        %2163 = vmatpush1.bf16.msra.mxu0 0
        %2164 = vmatprep.subr.bf16.mxu0 0
        %2165 = vmatpush1.bf16.msra.mxu0 0
        %2166 = vmatprep.subr.bf16.mxu0 0
        %2167 = vmatpush1.bf16.msra.mxu0 0
        %2168 = vmatprep.subr.bf16.mxu0 0
        %2169 = vmatpush1.bf16.msra.mxu0 0
        %2170 = vmatprep.subr.bf16.mxu0 0
        %2171 = vmatpush1.bf16.msra.mxu0 0
        %2172 = vmatprep.subr.bf16.mxu0 0
        %2173 = vmatpush1.bf16.msra.mxu0 0
        %2174 = vmatprep.subr.bf16.mxu0 0
        %2175 = vmatpush1.bf16.msra.mxu0 0
        %2176 = vmatprep.subr.bf16.mxu0 0
        %2177 = vmatpush1.bf16.msra.mxu0 0
        %2178 = vmatprep.subr.bf16.mxu0 0
        %2179 = vmatpush1.bf16.msra.mxu0 0
        %2180 = vmatprep.subr.bf16.mxu0 0
        %2181 = vmatpush1.bf16.msra.mxu0 0
        %2182 = vmatprep.subr.bf16.mxu0 0
        %2183 = vmatpush1.bf16.msra.mxu0 0
        %2184 = vmatprep.mubr.bf16.mxu0 0
        %2185 = vmatmul.mubr.bf16.gmra.mrb[0].mxu0 %v2147
        %v2186 = vpop.f32.mrb[0].mxu0
        %v2187 = vadd.f32 %v2141, %v2186
        %v2188 = vpop.f32.mrb[0].mxu0
        %v2189 = vpop.f32.mrb[0].mxu0
        %v2190 = vpop.f32.mrb[0].mxu0
        %2191 = vdwg.mxu0
        %2192 = vrot.lane.b32.xlu0 %v1878, 112
        %v2193 = vpop.permute.xlu0 %2192
        %2194 = vrot.lane.b32.xlu0 %v1879, 112
        %v2195 = vpop.permute.xlu0 %2194
        %v2197 = vsel %vm1028, %v2193, 0
        %v2200 = vsel %vm1028, %v2195, 0
        %2202 = vmatprep.subr.bf16.mxu0 0
        %2203 = vmatpush1.bf16.xpose.msra.mxu0 %v2200
        %2204 = vmatprep.subr.bf16.mxu0 0
        %2205 = vmatpush1.bf16.xpose.msra.mxu0 0
        %2206 = vmatprep.subr.bf16.mxu0 0
        %2207 = vmatpush1.bf16.xpose.msra.mxu0 0
        %2208 = vmatprep.subr.bf16.mxu0 0
        %2209 = vmatpush1.bf16.xpose.msra.mxu0 0
        %2210 = vmatprep.subr.bf16.mxu0 0
        %2211 = vmatpush1.bf16.xpose.msra.mxu0 0
        %2212 = vmatprep.subr.bf16.mxu0 0
        %2213 = vmatpush1.bf16.xpose.msra.mxu0 0
        %2214 = vmatprep.subr.bf16.mxu0 0
        %2215 = vmatpush1.bf16.xpose.msra.mxu0 0
        %2216 = vmatprep.subr.bf16.mxu0 0
        %2217 = vmatpush1.bf16.xpose.msra.mxu0 0
        %2218 = vmatprep.subr.bf16.mxu0 0
        %2219 = vmatpush1.bf16.xpose.msra.mxu0 0
        %2220 = vmatprep.subr.bf16.mxu0 0
        %2221 = vmatpush1.bf16.xpose.msra.mxu0 0
        %2222 = vmatprep.subr.bf16.mxu0 0
        %2223 = vmatpush1.bf16.xpose.msra.mxu0 0
        %2224 = vmatprep.subr.bf16.mxu0 0
        %2225 = vmatpush1.bf16.xpose.msra.mxu0 0
        %2226 = vmatprep.subr.bf16.mxu0 0
        %2227 = vmatpush1.bf16.xpose.msra.mxu0 0
        %2228 = vmatprep.subr.bf16.mxu0 0
        %2229 = vmatpush1.bf16.xpose.msra.mxu0 0
        %2230 = vmatprep.subr.bf16.mxu0 0
        %2231 = vmatpush1.bf16.xpose.msra.mxu0 0
        %2232 = vmatprep.subr.bf16.mxu0 0
        %2233 = vmatpush1.bf16.xpose.msra.mxu0 0
        %2234 = vmatprep.mubr.bf16.mxu0 0
        %2235 = vmatmul.mubr.bf16.gmra.mrb[0].mxu0 %v2197
        %v2236 = vpop.f32.mrb[0].mxu0
        %v2237 = vadd.f32 0.0, %v2236
        %v2238 = vpop.f32.mrb[0].mxu0
        %v2239 = vpop.f32.mrb[0].mxu0
        %v2240 = vpop.f32.mrb[0].mxu0
        %2241 = vdwg.mxu0
        %v2242 = vsel %vm1927, %v2237, -inf
        %2243 = vmax.xlane.f32.xlu0 %v2242
        %v2244 = vpop.xlane.xlu0 %2243
        %v2245 = vsub.f32 %v2237, %v2244
        %v2246 = vmul.f32 %v2245, 1.442695
        %v2247 = vpow.pop %v2246
        %v2248 = vsel %vm1927, %v2247, 0.0
        %2249 = vadd.xlane.f32.xlu0 %v2248
        %v2250 = vpop.xlane.xlu0 %2249
        %v2251 = vrcp.pop %v2250
        %v2252 = vpack.c.bf16 %v2247, %v2247
        %2253 = vrot.lane.b32.xlu0 %v1880, 112
        %v2254 = vpop.permute.xlu0 %2253
        %v2257 = vsel %vm1927, %v2252, 0
        %2259 = vmatprep.subr.bf16.mxu0 0
        %2260 = vmatpush1.bf16.msra.mxu0 %v2254
        %2261 = vmatprep.subr.bf16.mxu0 0
        %2262 = vmatpush1.bf16.msra.mxu0 0
        %2263 = vmatprep.subr.bf16.mxu0 0
        %2264 = vmatpush1.bf16.msra.mxu0 0
        %2265 = vmatprep.subr.bf16.mxu0 0
        %2266 = vmatpush1.bf16.msra.mxu0 0
        %2267 = vmatprep.subr.bf16.mxu0 0
        %2268 = vmatpush1.bf16.msra.mxu0 0
        %2269 = vmatprep.subr.bf16.mxu0 0
        %2270 = vmatpush1.bf16.msra.mxu0 0
        %2271 = vmatprep.subr.bf16.mxu0 0
        %2272 = vmatpush1.bf16.msra.mxu0 0
        %2273 = vmatprep.subr.bf16.mxu0 0
        %2274 = vmatpush1.bf16.msra.mxu0 0
        %2275 = vmatprep.subr.bf16.mxu0 0
        %2276 = vmatpush1.bf16.msra.mxu0 0
        %2277 = vmatprep.subr.bf16.mxu0 0
        %2278 = vmatpush1.bf16.msra.mxu0 0
        %2279 = vmatprep.subr.bf16.mxu0 0
        %2280 = vmatpush1.bf16.msra.mxu0 0
        %2281 = vmatprep.subr.bf16.mxu0 0
        %2282 = vmatpush1.bf16.msra.mxu0 0
        %2283 = vmatprep.subr.bf16.mxu0 0
        %2284 = vmatpush1.bf16.msra.mxu0 0
        %2285 = vmatprep.subr.bf16.mxu0 0
        %2286 = vmatpush1.bf16.msra.mxu0 0
        %2287 = vmatprep.subr.bf16.mxu0 0
        %2288 = vmatpush1.bf16.msra.mxu0 0
        %2289 = vmatprep.subr.bf16.mxu0 0
        %2290 = vmatpush1.bf16.msra.mxu0 0
        %2291 = vmatprep.mubr.bf16.mxu0 0
        %2292 = vmatmul.mubr.bf16.gmra.mrb[0].mxu0 %v2257
        %v2293 = vpop.f32.mrb[0].mxu0
        %v2294 = vadd.f32 0.0, %v2293
        %v2295 = vpop.f32.mrb[0].mxu0
        %v2296 = vpop.f32.mrb[0].mxu0
        %v2297 = vpop.f32.mrb[0].mxu0
        %2298 = vdwg.mxu0
        %v2299 = vmul.f32 %v2294, %v2251
        %v2300 = vpack.c.bf16 %v2299, %v2299
        %v2301 = vld [vmem:[#allocation19 + $0x10] sm:$0xff]
        %v2302 = vpack.c.bf16 %v2301, %v2301
        %v2304 = vsel %vm1028, %v2300, 0
        %v2307 = vsel %vm1089, %v2302, 0
        %2309 = vmatprep.subr.bf16.mxu0 0
        %2310 = vmatpush1.bf16.msra.mxu0 %v2307
        %2311 = vmatprep.subr.bf16.mxu0 0
        %2312 = vmatpush1.bf16.msra.mxu0 0
        %2313 = vmatprep.subr.bf16.mxu0 0
        %2314 = vmatpush1.bf16.msra.mxu0 0
        %2315 = vmatprep.subr.bf16.mxu0 0
        %2316 = vmatpush1.bf16.msra.mxu0 0
        %2317 = vmatprep.subr.bf16.mxu0 0
        %2318 = vmatpush1.bf16.msra.mxu0 0
        %2319 = vmatprep.subr.bf16.mxu0 0
        %2320 = vmatpush1.bf16.msra.mxu0 0
        %2321 = vmatprep.subr.bf16.mxu0 0
        %2322 = vmatpush1.bf16.msra.mxu0 0
        %2323 = vmatprep.subr.bf16.mxu0 0
        %2324 = vmatpush1.bf16.msra.mxu0 0
        %2325 = vmatprep.subr.bf16.mxu0 0
        %2326 = vmatpush1.bf16.msra.mxu0 0
        %2327 = vmatprep.subr.bf16.mxu0 0
        %2328 = vmatpush1.bf16.msra.mxu0 0
        %2329 = vmatprep.subr.bf16.mxu0 0
        %2330 = vmatpush1.bf16.msra.mxu0 0
        %2331 = vmatprep.subr.bf16.mxu0 0
        %2332 = vmatpush1.bf16.msra.mxu0 0
        %2333 = vmatprep.subr.bf16.mxu0 0
        %2334 = vmatpush1.bf16.msra.mxu0 0
        %2335 = vmatprep.subr.bf16.mxu0 0
        %2336 = vmatpush1.bf16.msra.mxu0 0
        %2337 = vmatprep.subr.bf16.mxu0 0
        %2338 = vmatpush1.bf16.msra.mxu0 0
        %2339 = vmatprep.subr.bf16.mxu0 0
        %2340 = vmatpush1.bf16.msra.mxu0 0
        %2341 = vmatprep.mubr.bf16.mxu0 0
        %2342 = vmatmul.mubr.bf16.gmra.mrb[0].mxu0 %v2304
        %v2343 = vpop.f32.mrb[0].mxu0
        %v2344 = vadd.f32 0.0, %v2343
        %v2345 = vpop.f32.mrb[0].mxu0
        %v2346 = vpop.f32.mrb[0].mxu0
        %v2347 = vpop.f32.mrb[0].mxu0
        %2348 = vdwg.mxu0
        %v2349 = vadd.f32 %v2187, %v2344
        %2350 = vrot.lane.b32.xlu0 %v1878, 104
        %v2351 = vpop.permute.xlu0 %2350
        %2352 = vrot.lane.b32.xlu0 %v1879, 104
        %v2353 = vpop.permute.xlu0 %2352
        %v2355 = vsel %vm1028, %v2351, 0
        %v2358 = vsel %vm1028, %v2353, 0
        %2360 = vmatprep.subr.bf16.mxu0 0
        %2361 = vmatpush1.bf16.xpose.msra.mxu0 %v2358
        %2362 = vmatprep.subr.bf16.mxu0 0
        %2363 = vmatpush1.bf16.xpose.msra.mxu0 0
        %2364 = vmatprep.subr.bf16.mxu0 0
        %2365 = vmatpush1.bf16.xpose.msra.mxu0 0
        %2366 = vmatprep.subr.bf16.mxu0 0
        %2367 = vmatpush1.bf16.xpose.msra.mxu0 0
        %2368 = vmatprep.subr.bf16.mxu0 0
        %2369 = vmatpush1.bf16.xpose.msra.mxu0 0
        %2370 = vmatprep.subr.bf16.mxu0 0
        %2371 = vmatpush1.bf16.xpose.msra.mxu0 0
        %2372 = vmatprep.subr.bf16.mxu0 0
        %2373 = vmatpush1.bf16.xpose.msra.mxu0 0
        %2374 = vmatprep.subr.bf16.mxu0 0
        %2375 = vmatpush1.bf16.xpose.msra.mxu0 0
        %2376 = vmatprep.subr.bf16.mxu0 0
        %2377 = vmatpush1.bf16.xpose.msra.mxu0 0
        %2378 = vmatprep.subr.bf16.mxu0 0
        %2379 = vmatpush1.bf16.xpose.msra.mxu0 0
        %2380 = vmatprep.subr.bf16.mxu0 0
        %2381 = vmatpush1.bf16.xpose.msra.mxu0 0
        %2382 = vmatprep.subr.bf16.mxu0 0
        %2383 = vmatpush1.bf16.xpose.msra.mxu0 0
        %2384 = vmatprep.subr.bf16.mxu0 0
        %2385 = vmatpush1.bf16.xpose.msra.mxu0 0
        %2386 = vmatprep.subr.bf16.mxu0 0
        %2387 = vmatpush1.bf16.xpose.msra.mxu0 0
        %2388 = vmatprep.subr.bf16.mxu0 0
        %2389 = vmatpush1.bf16.xpose.msra.mxu0 0
        %2390 = vmatprep.subr.bf16.mxu0 0
        %2391 = vmatpush1.bf16.xpose.msra.mxu0 0
        %2392 = vmatprep.mubr.bf16.mxu0 0
        %2393 = vmatmul.mubr.bf16.gmra.mrb[0].mxu0 %v2355
        %v2394 = vpop.f32.mrb[0].mxu0
        %v2395 = vadd.f32 0.0, %v2394
        %v2396 = vpop.f32.mrb[0].mxu0
        %v2397 = vpop.f32.mrb[0].mxu0
        %v2398 = vpop.f32.mrb[0].mxu0
        %2399 = vdwg.mxu0
        %v2400 = vsel %vm1927, %v2395, -inf
        %2401 = vmax.xlane.f32.xlu0 %v2400
        %v2402 = vpop.xlane.xlu0 %2401
        %v2403 = vsub.f32 %v2395, %v2402
        %v2404 = vmul.f32 %v2403, 1.442695
        %v2405 = vpow.pop %v2404
        %v2406 = vsel %vm1927, %v2405, 0.0
        %2407 = vadd.xlane.f32.xlu0 %v2406
        %v2408 = vpop.xlane.xlu0 %2407
        %v2409 = vrcp.pop %v2408
        %v2410 = vpack.c.bf16 %v2405, %v2405
        %2411 = vrot.lane.b32.xlu0 %v1880, 104
        %v2412 = vpop.permute.xlu0 %2411
        %v2415 = vsel %vm1927, %v2410, 0
        %2417 = vmatprep.subr.bf16.mxu0 0
        %2418 = vmatpush1.bf16.msra.mxu0 %v2412
        %2419 = vmatprep.subr.bf16.mxu0 0
        %2420 = vmatpush1.bf16.msra.mxu0 0
        %2421 = vmatprep.subr.bf16.mxu0 0
        %2422 = vmatpush1.bf16.msra.mxu0 0
        %2423 = vmatprep.subr.bf16.mxu0 0
        %2424 = vmatpush1.bf16.msra.mxu0 0
        %2425 = vmatprep.subr.bf16.mxu0 0
        %2426 = vmatpush1.bf16.msra.mxu0 0
        %2427 = vmatprep.subr.bf16.mxu0 0
        %2428 = vmatpush1.bf16.msra.mxu0 0
        %2429 = vmatprep.subr.bf16.mxu0 0
        %2430 = vmatpush1.bf16.msra.mxu0 0
        %2431 = vmatprep.subr.bf16.mxu0 0
        %2432 = vmatpush1.bf16.msra.mxu0 0
        %2433 = vmatprep.subr.bf16.mxu0 0
        %2434 = vmatpush1.bf16.msra.mxu0 0
        %2435 = vmatprep.subr.bf16.mxu0 0
        %2436 = vmatpush1.bf16.msra.mxu0 0
        %2437 = vmatprep.subr.bf16.mxu0 0
        %2438 = vmatpush1.bf16.msra.mxu0 0
        %2439 = vmatprep.subr.bf16.mxu0 0
        %2440 = vmatpush1.bf16.msra.mxu0 0
        %2441 = vmatprep.subr.bf16.mxu0 0
        %2442 = vmatpush1.bf16.msra.mxu0 0
        %2443 = vmatprep.subr.bf16.mxu0 0
        %2444 = vmatpush1.bf16.msra.mxu0 0
        %2445 = vmatprep.subr.bf16.mxu0 0
        %2446 = vmatpush1.bf16.msra.mxu0 0
        %2447 = vmatprep.subr.bf16.mxu0 0
        %2448 = vmatpush1.bf16.msra.mxu0 0
        %2449 = vmatprep.mubr.bf16.mxu0 0
        %2450 = vmatmul.mubr.bf16.gmra.mrb[0].mxu0 %v2415
        %v2451 = vpop.f32.mrb[0].mxu0
        %v2452 = vadd.f32 0.0, %v2451
        %v2453 = vpop.f32.mrb[0].mxu0
        %v2454 = vpop.f32.mrb[0].mxu0
        %v2455 = vpop.f32.mrb[0].mxu0
        %2456 = vdwg.mxu0
        %v2457 = vmul.f32 %v2452, %v2409
        %v2458 = vpack.c.bf16 %v2457, %v2457
        %v2459 = vld [vmem:[#allocation19 + $0x18] sm:$0xff]
        %v2460 = vpack.c.bf16 %v2459, %v2459
        %v2462 = vsel %vm1028, %v2458, 0
        %v2465 = vsel %vm1089, %v2460, 0
        %2467 = vmatprep.subr.bf16.mxu0 0
        %2468 = vmatpush1.bf16.msra.mxu0 %v2465
        %2469 = vmatprep.subr.bf16.mxu0 0
        %2470 = vmatpush1.bf16.msra.mxu0 0
        %2471 = vmatprep.subr.bf16.mxu0 0
        %2472 = vmatpush1.bf16.msra.mxu0 0
        %2473 = vmatprep.subr.bf16.mxu0 0
        %2474 = vmatpush1.bf16.msra.mxu0 0
        %2475 = vmatprep.subr.bf16.mxu0 0
        %2476 = vmatpush1.bf16.msra.mxu0 0
        %2477 = vmatprep.subr.bf16.mxu0 0
        %2478 = vmatpush1.bf16.msra.mxu0 0
        %2479 = vmatprep.subr.bf16.mxu0 0
        %2480 = vmatpush1.bf16.msra.mxu0 0
        %2481 = vmatprep.subr.bf16.mxu0 0
        %2482 = vmatpush1.bf16.msra.mxu0 0
        %2483 = vmatprep.subr.bf16.mxu0 0
        %2484 = vmatpush1.bf16.msra.mxu0 0
        %2485 = vmatprep.subr.bf16.mxu0 0
        %2486 = vmatpush1.bf16.msra.mxu0 0
        %2487 = vmatprep.subr.bf16.mxu0 0
        %2488 = vmatpush1.bf16.msra.mxu0 0
        %2489 = vmatprep.subr.bf16.mxu0 0
        %2490 = vmatpush1.bf16.msra.mxu0 0
        %2491 = vmatprep.subr.bf16.mxu0 0
        %2492 = vmatpush1.bf16.msra.mxu0 0
        %2493 = vmatprep.subr.bf16.mxu0 0
        %2494 = vmatpush1.bf16.msra.mxu0 0
        %2495 = vmatprep.subr.bf16.mxu0 0
        %2496 = vmatpush1.bf16.msra.mxu0 0
        %2497 = vmatprep.subr.bf16.mxu0 0
        %2498 = vmatpush1.bf16.msra.mxu0 0
        %2499 = vmatprep.mubr.bf16.mxu0 0
        %2500 = vmatmul.mubr.bf16.gmra.mrb[0].mxu0 %v2462
        %v2501 = vpop.f32.mrb[0].mxu0
        %v2502 = vadd.f32 0.0, %v2501
        %v2503 = vpop.f32.mrb[0].mxu0
        %v2504 = vpop.f32.mrb[0].mxu0
        %v2505 = vpop.f32.mrb[0].mxu0
        %2506 = vdwg.mxu0
        %v2507 = vadd.f32 %v2349, %v2502
        %v2508 = vld [vmem:[#allocation20] sm:$0x1]
        %v2510 = vlaneseq
        %v2511 = vshrl.u32 %v2510, 7
        %v2512 = vsub.s32 0, %v2511
        %v2513 = vrot.slane %v2508, %v2512
        %v2515 = vadd.f32 %v2507, %v2513
        %v2516 = vadd.f32 %v1698, %v2515
        %v2517 = vld [vmem:[#allocation28 + $0x1] sm:$0x1]
        %v2518 = vld [vmem:[#allocation29 + $0x1] sm:$0x1]
        %v2519 = vsel %vm924, %v2516, 0.0
        %2520 = vadd.xlane.f32.xlu0 %v2519
        %v2521 = vpop.xlane.xlu0 %2520
        %v2522 = vmul.f32 %v2521, %v1678
        %v2523 = vsub.f32 %v2516, %v2522
        %v2524 = vmul.f32 %v2523, %v2523
        %v2525 = vsel %vm924, %v2524, 0.0
        %2526 = vadd.xlane.f32.xlu0 %v2525
        %v2527 = vpop.xlane.xlu0 %2526
        %v2528 = vmul.f32 %v2527, %v1678
        %v2529 = vadd.f32 %v2528, 1e-05
        %v2530 = vrsqrt.pop %v2529
        %v2531 = vmul.f32 %v2523, %v2530
        %v2532 = vlaneseq
        %v2533 = vshrl.u32 %v2532, 7
        %v2534 = vsub.s32 0, %v2533
        %v2535 = vrot.slane %v2517, %v2534
        %v2536 = vmul.f32 %v2531, %v2535
        %v2537 = vlaneseq
        %v2538 = vshrl.u32 %v2537, 7
        %v2539 = vsub.s32 0, %v2538
        %v2540 = vrot.slane %v2518, %v2539
        %v2541 = vadd.f32 %v2536, %v2540
        %v2542 = vld [vmem:[#allocation22] sm:$0xf]
        %v2543 = vld [vmem:[#allocation22 + $0x4] sm:$0xf]
        %v2544 = vld [vmem:[#allocation22 + $0x8] sm:$0xf]
        %v2545 = vld [vmem:[#allocation22 + $0xc] sm:$0xf]
        %v2546 = vpack.c.bf16 %v2541, %v2541
        %v2547 = vld [vmem:[#allocation23] sm:$0x1]
        %v2549 = vlaneseq
        %v2550 = vshrl.u32 %v2549, 7
        %v2551 = vsub.s32 0, %v2550
        %v2552 = vrot.slane %v2547, %v2551
        %v2558 = vunpack.c.l.b16 %v2542
        %v2559 = vunpack.c.l.b16 %v2543
        %v2560 = vunpack.c.l.b16 %v2544
        %v2561 = vunpack.c.l.b16 %v2545
        %v2562 = vpack.c.b16 %v2559, %v2558
        %v2563 = vpack.c.b16 %v2561, %v2560
        %v2567 = vsel %vm924, %v2546, 0
        %2569 = vmatprep.subr.bf16.mxu0 0
        %2570 = vmatpush1.bf16.msra.mxu0 %v2562
        %2571 = vmatprep.subr.bf16.mxu0 0
        %2572 = vmatpush1.bf16.msra.mxu0 %v2563
        %2573 = vmatprep.subr.bf16.mxu0 0
        %2574 = vmatpush1.bf16.msra.mxu0 0
        %2575 = vmatprep.subr.bf16.mxu0 0
        %2576 = vmatpush1.bf16.msra.mxu0 0
        %2577 = vmatprep.subr.bf16.mxu0 0
        %2578 = vmatpush1.bf16.msra.mxu0 0
        %2579 = vmatprep.subr.bf16.mxu0 0
        %2580 = vmatpush1.bf16.msra.mxu0 0
        %2581 = vmatprep.subr.bf16.mxu0 0
        %2582 = vmatpush1.bf16.msra.mxu0 0
        %2583 = vmatprep.subr.bf16.mxu0 0
        %2584 = vmatpush1.bf16.msra.mxu0 0
        %2585 = vmatprep.subr.bf16.mxu0 0
        %2586 = vmatpush1.bf16.msra.mxu0 0
        %2587 = vmatprep.subr.bf16.mxu0 0
        %2588 = vmatpush1.bf16.msra.mxu0 0
        %2589 = vmatprep.subr.bf16.mxu0 0
        %2590 = vmatpush1.bf16.msra.mxu0 0
        %2591 = vmatprep.subr.bf16.mxu0 0
        %2592 = vmatpush1.bf16.msra.mxu0 0
        %2593 = vmatprep.subr.bf16.mxu0 0
        %2594 = vmatpush1.bf16.msra.mxu0 0
        %2595 = vmatprep.subr.bf16.mxu0 0
        %2596 = vmatpush1.bf16.msra.mxu0 0
        %2597 = vmatprep.subr.bf16.mxu0 0
        %2598 = vmatpush1.bf16.msra.mxu0 0
        %2599 = vmatprep.subr.bf16.mxu0 0
        %2600 = vmatpush1.bf16.msra.mxu0 0
        %2601 = vmatprep.mubr.bf16.mxu0 0
        %2602 = vmatmul.mubr.bf16.gmra.mrb[0].mxu0 %v2567
        %v2603 = vpop.f32.mrb[0].mxu0
        %v2604 = vadd.f32 %v2552, %v2603
        %v2605 = vpop.f32.mrb[0].mxu0
        %v2606 = vpop.f32.mrb[0].mxu0
        %v2607 = vpop.f32.mrb[0].mxu0
        %2608 = vdwg.mxu0
        %v2609 = vmax.f32 %v2604, 0.0
        %v2610 = vld [vmem:[#allocation25] sm:$0xf]
        %v2611 = vld [vmem:[#allocation25 + $0x4] sm:$0xf]
        %v2612 = vld [vmem:[#allocation25 + $0x8] sm:$0xf]
        %v2613 = vld [vmem:[#allocation25 + $0xc] sm:$0xf]
        %v2614 = vld [vmem:[#allocation25 + $0x10] sm:$0xf]
        %v2615 = vld [vmem:[#allocation25 + $0x14] sm:$0xf]
        %v2616 = vld [vmem:[#allocation25 + $0x18] sm:$0xf]
        %v2617 = vld [vmem:[#allocation25 + $0x1c] sm:$0xf]
        %v2618 = vpack.c.bf16 %v2609, %v2609
        %v2619 = vld [vmem:[#allocation26] sm:$0x1]
        %v2621 = vlaneseq
        %v2622 = vshrl.u32 %v2621, 7
        %v2623 = vsub.s32 0, %v2622
        %v2624 = vrot.slane %v2619, %v2623
        %v2634 = vunpack.c.l.b16 %v2610
        %v2635 = vunpack.c.l.b16 %v2611
        %v2636 = vunpack.c.l.b16 %v2612
        %v2637 = vunpack.c.l.b16 %v2613
        %v2638 = vunpack.c.l.b16 %v2614
        %v2639 = vunpack.c.l.b16 %v2615
        %v2640 = vunpack.c.l.b16 %v2616
        %v2641 = vunpack.c.l.b16 %v2617
        %v2642 = vpack.c.b16 %v2635, %v2634
        %v2643 = vpack.c.b16 %v2637, %v2636
        %v2644 = vpack.c.b16 %v2639, %v2638
        %v2645 = vpack.c.b16 %v2641, %v2640
        %vm2650 = vcmask 523264
        %v2652 = vsel %vm2650, %v2618, 0
        %2654 = vmatprep.subr.bf16.mxu0 0
        %2655 = vmatpush1.bf16.msra.mxu0 %v2642
        %2656 = vmatprep.subr.bf16.mxu0 0
        %2657 = vmatpush1.bf16.msra.mxu0 %v2643
        %2658 = vmatprep.subr.bf16.mxu0 0
        %2659 = vmatpush1.bf16.msra.mxu0 %v2644
        %2660 = vmatprep.subr.bf16.mxu0 0
        %2661 = vmatpush1.bf16.msra.mxu0 %v2645
        %2662 = vmatprep.subr.bf16.mxu0 0
        %2663 = vmatpush1.bf16.msra.mxu0 0
        %2664 = vmatprep.subr.bf16.mxu0 0
        %2665 = vmatpush1.bf16.msra.mxu0 0
        %2666 = vmatprep.subr.bf16.mxu0 0
        %2667 = vmatpush1.bf16.msra.mxu0 0
        %2668 = vmatprep.subr.bf16.mxu0 0
        %2669 = vmatpush1.bf16.msra.mxu0 0
        %2670 = vmatprep.subr.bf16.mxu0 0
        %2671 = vmatpush1.bf16.msra.mxu0 0
        %2672 = vmatprep.subr.bf16.mxu0 0
        %2673 = vmatpush1.bf16.msra.mxu0 0
        %2674 = vmatprep.subr.bf16.mxu0 0
        %2675 = vmatpush1.bf16.msra.mxu0 0
        %2676 = vmatprep.subr.bf16.mxu0 0
        %2677 = vmatpush1.bf16.msra.mxu0 0
        %2678 = vmatprep.subr.bf16.mxu0 0
        %2679 = vmatpush1.bf16.msra.mxu0 0
        %2680 = vmatprep.subr.bf16.mxu0 0
        %2681 = vmatpush1.bf16.msra.mxu0 0
        %2682 = vmatprep.subr.bf16.mxu0 0
        %2683 = vmatpush1.bf16.msra.mxu0 0
        %2684 = vmatprep.subr.bf16.mxu0 0
        %2685 = vmatpush1.bf16.msra.mxu0 0
        %2686 = vmatprep.mubr.bf16.mxu0 0
        %2687 = vmatmul.mubr.bf16.gmra.mrb[0].mxu0 %v2652
        %v2688 = vpop.f32.mrb[0].mxu0
        %v2689 = vadd.f32 %v2624, %v2688
        %v2690 = vpop.f32.mrb[0].mxu0
        %v2691 = vpop.f32.mrb[0].mxu0
        %v2692 = vpop.f32.mrb[0].mxu0
        %2693 = vdwg.mxu0
        %v2694 = vadd.f32 %v2541, %v2689
        %v2695 = vld [vmem:[#allocation28 + $0x2] sm:$0x1]
        %v2696 = vld [vmem:[#allocation29 + $0x2] sm:$0x1]
        %v2697 = vsel %vm924, %v2694, 0.0
        %2698 = vadd.xlane.f32.xlu0 %v2697
        %v2699 = vpop.xlane.xlu0 %2698
        %v2700 = vmul.f32 %v2699, %v1678
        %v2701 = vsub.f32 %v2694, %v2700
        %v2702 = vmul.f32 %v2701, %v2701
        %v2703 = vsel %vm924, %v2702, 0.0
        %2704 = vadd.xlane.f32.xlu0 %v2703
        %v2705 = vpop.xlane.xlu0 %2704
        %v2706 = vmul.f32 %v2705, %v1678
        %v2707 = vadd.f32 %v2706, 1e-05
        %v2708 = vrsqrt.pop %v2707
        %v2709 = vmul.f32 %v2701, %v2708
        %v2710 = vlaneseq
        %v2711 = vshrl.u32 %v2710, 7
        %v2712 = vsub.s32 0, %v2711
        %v2713 = vrot.slane %v2695, %v2712
        %v2714 = vmul.f32 %v2709, %v2713
        %v2715 = vlaneseq
        %v2716 = vshrl.u32 %v2715, 7
        %v2717 = vsub.s32 0, %v2716
        %v2718 = vrot.slane %v2696, %v2717
        %v2719 = vadd.f32 %v2714, %v2718
        %2720 = vst.msk [vmem:[%s891] sm:$0xff] %vm924, %v2719
        %s2721 = sand.u32 %s454, 1
        %s2722 = scalar_lea.sflag [#allocation4], %s2721
        %s2723 = sand.u32 %s454, 1
        %s2724 = smul.addr %s2723, 8
        %s2725 = scalar_lea.vmem [#allocation31], %s2724
        // Predicated region
        $region165: #{tpu_custom_call.1} parent=91 // pred_check
          %p2726 = pneg %p464
        $region166: #{tpu_custom_call.1} parent=91 // pred_check_branch
          %2728 = sbr.rel (%p2726) target = $region168
        $region167: #{tpu_custom_call.1} parent=91 // pred_region
          %s2730 = ssub.s32 128, 128
          %2731 = vsyncadd %s2722, %s2730
          %s2732 = smul.addr %s48, 128
          %s2733 = scalar_lea.hbm %s18, %s2732
          %s2735 = sshll.u32 %s2725, 4
          %s2736 = int_to_ptr.vmem [resolvable:$true] %s2735
          %2738 = dma.vmem_to_hbm [thread:$0]  %s2736, 128, %s2733, %s2722
        $region168: #{tpu_custom_call.1} parent=91 // pred_fallthru
          _
      $region92: #{tpu_custom_call.1} parent=5 // pred_fallthru
        _
      %p2739 = scmp.le.s32.totalorder 2, %s43
      // Predicated region
      $region169: #{tpu_custom_call.1} parent=5 // pred_check
        %p2740 = pneg %p2739
      $region170: #{tpu_custom_call.1} parent=5 // pred_check_branch
        %2742 = sbr.rel (%p2740) target = $region172
      $region171: #{tpu_custom_call.1} parent=5 // pred_region
        %s2743 = ssub.s32 %s43, 2
        // Predicated region
        $region173: #{tpu_custom_call.1} parent=171 // pred_check
          %p2744 = pneg %p470
        $region174: #{tpu_custom_call.1} parent=171 // pred_check_branch
          %2746 = sbr.rel (%p2744) target = $region176
        $region175: #{tpu_custom_call.1} parent=171 // pred_region
          %s2747 = sand.u32 %s455, 1
          %s2748 = scalar_lea.sflag [#allocation4], %s2747
          %s2749 = sand.u32 %s455, 1
          %s2750 = smul.addr %s2749, 8
          %s2751 = scalar_lea.vmem [#allocation31], %s2750
          %2752 = dma.done %s2748, 128
        $region176: #{tpu_custom_call.1} parent=171 // pred_fallthru
          _
      $region172: #{tpu_custom_call.1} parent=5 // pred_fallthru
        _
    $region6: #{tpu_custom_call.1} parent=1 // loop_footer
      %s47 = sadd.s32 1, %s43
    $region7: #{tpu_custom_call.1} parent=1 // loop_footer_branch
      %42 = sbr.rel target = $region3
    $region8: #{tpu_custom_call.1} parent=1 // loop_exit
      _
    %2753 = vsyncpa [#allocation3], 1
    %s2754 = scalar_lea.sflag [#allocation3], 1
    %2755 = vsyncpa %s2754, 1
    %2756 = vsyncpa [#allocation6], 1
    %s2757 = scalar_lea.sflag [#allocation6], 1
    %2758 = vsyncpa %s2757, 1
    %2759 = vsyncpa [#allocation9], 1
    %s2760 = scalar_lea.sflag [#allocation9], 1
    %2761 = vsyncpa %s2760, 1
    %2762 = vsyncpa [#allocation12], 1
    %2763 = vsyncpa [#allocation15], 1
    %2764 = vsyncpa [#allocation18], 1
    %2765 = vsyncpa [#allocation21], 1
    %2766 = vsyncpa [#allocation24], 1
    %2767 = vsyncpa [#allocation27], 1
    %2768 = vsyncpa [#allocation30], 1
    %2769 = vsyncpa [#allocation4], 1
    %s2770 = scalar_lea.sflag [#allocation4], 1
    %2771 = vsyncpa %s2770, 1

</llo_original>
